<compile_context>
chip_gen: v6e
topology: v6e:2x2x1
jax: 0.10.0
libtpu: 0.0.40
codegen_flags: <defaults>
</compile_context>

<pallas_src>
import functools

import jax
import jax.numpy as jnp
from jax.experimental import pallas as pl
from jax.experimental.pallas import tpu as pltpu

EPS = 1e-5  # nn.BatchNorm2d default eps


def _round_up(x, m):
    return (x + m - 1) // m * m


def _store_with_margins(ref, center, m, rc, rm, cp):
    # Write zero halo margins + the computed center rows into a (1, rm, cp) block.
    ref[0, pl.ds(0, m), :] = jnp.zeros((m, cp), jnp.float32)
    ref[0, pl.ds(m, rc), :] = center
    ref[0, pl.ds(m + rc, rm - m - rc), :] = jnp.zeros((rm - m - rc, cp), jnp.float32)


def _stage1_kernel(x_ref, mask_ref, w1_ref, b1_ref, w2_ref, b2_ref,
                   t2_ref, res_ref, st_ref, *, m, rc, rm, wp2, cp):
    """conv1 (1x1, ReLU) residual branch + conv2 (3x3, ReLU) + BN2 partial stats."""
    mask = mask_ref[...]                                          # (rc, cp) f32
    # conv1: 1x1 conv == pure channel matmul, ReLU, no BN (residual branch).
    xc = x_ref[0, pl.ds(m, rc), :].astype(jnp.bfloat16)
    acc1 = jnp.dot(xc, w1_ref[...], preferred_element_type=jnp.float32)
    res_c = jnp.maximum(acc1 + b1_ref[...], 0.0) * mask
    # conv2: 3x3 / pad 1 conv as 9 accumulated shifted MXU dots (in-kernel im2col).
    acc2 = jnp.zeros((rc, cp), jnp.float32)
    for d in range(9):
        kh, kw = d // 3, d % 3
        off = m + (kh - 1) * wp2 + (kw - 1)
        a = x_ref[0, pl.ds(off, rc), :].astype(jnp.bfloat16)
        acc2 = acc2 + jnp.dot(a, w2_ref[d], preferred_element_type=jnp.float32)
    # b2 carries +1 in the spare "mask" channel; * mask zeroes border/halo rows.
    t2_c = jnp.maximum(acc2 + b2_ref[...], 0.0) * mask
    # Per-image BN2 partial statistics (single pass: sum, sum of squares).
    st_ref[0, pl.ds(0, 1), :] = jnp.sum(t2_c, axis=0, keepdims=True)
    st_ref[0, pl.ds(1, 1), :] = jnp.sum(t2_c * t2_c, axis=0, keepdims=True)
    st_ref[0, pl.ds(2, 6), :] = jnp.zeros((6, cp), jnp.float32)
    _store_with_margins(t2_ref, t2_c, m, rc, rm, cp)
    _store_with_margins(res_ref, res_c, m, rc, rm, cp)


def _stage2_kernel(t2_ref, res_ref, mask_ref, w3_ref, b3_ref,
                   t3_ref, st_ref, *, m, rc, rm, wp2, cp):
    """conv3 (3x3, ReLU; BN2 pre-folded into w3) + partial stats for BN3/final BN."""
    mask = mask_ref[...]
    acc3 = jnp.zeros((rc, cp), jnp.float32)
    for d in range(9):
        kh, kw = d // 3, d % 3
        off = m + (kh - 1) * wp2 + (kw - 1)
        a = t2_ref[0, pl.ds(off, rc), :].astype(jnp.bfloat16)
        acc3 = acc3 + jnp.dot(a, w3_ref[d], preferred_element_type=jnp.float32)
    t3_c = jnp.maximum(acc3 + b3_ref[...], 0.0) * mask
    res_c = res_ref[0, pl.ds(m, rc), :]
    st_ref[0, pl.ds(0, 1), :] = jnp.sum(t3_c, axis=0, keepdims=True)
    st_ref[0, pl.ds(1, 1), :] = jnp.sum(t3_c * t3_c, axis=0, keepdims=True)
    st_ref[0, pl.ds(2, 1), :] = jnp.sum(res_c, axis=0, keepdims=True)
    st_ref[0, pl.ds(3, 1), :] = jnp.sum(res_c * res_c, axis=0, keepdims=True)
    st_ref[0, pl.ds(4, 1), :] = jnp.sum(t3_c * res_c, axis=0, keepdims=True)
    st_ref[0, pl.ds(5, 3), :] = jnp.zeros((3, cp), jnp.float32)
    _store_with_margins(t3_ref, t3_c, m, rc, rm, cp)


def _stage3_kernel(t3_ref, res_ref, ca_ref, cb_ref, cc_ref, o_ref):
    """out = A*t3 + B*res + C   (BN3 + residual add + final BN folded per channel)."""
    o_ref[0] = ca_ref[...] * t3_ref[0] + cb_ref[...] * res_ref[0] + cc_ref[...]


def init_params(key, c_in, c_out):
    ks = jax.random.split(key, 12)

    def rnd(k, shape, scale):
        return scale * jax.random.normal(k, shape, jnp.float32)

    # Conv weights stored in HWIO layout (== permuted PyTorch OIHW weights).
    return dict(
        w1=rnd(ks[0], (1, 1, c_in, c_out), 0.2),  b1=rnd(ks[1], (c_out,), 0.1),
        w2=rnd(ks[2], (3, 3, c_in, c_out), 0.2),  b2=rnd(ks[3], (c_out,), 0.1),
        w3=rnd(ks[4], (3, 3, c_out, c_out), 0.2), b3=rnd(ks[5], (c_out,), 0.1),
        g2=1.0 + rnd(ks[6], (c_out,), 0.1),  be2=rnd(ks[7], (c_out,), 0.1),
        g3=1.0 + rnd(ks[8], (c_out,), 0.1),  be3=rnd(ks[9], (c_out,), 0.1),
        gf=1.0 + rnd(ks[10], (c_out,), 0.1), bef=rnd(ks[11], (c_out,), 0.1),
    )


@jax.jit
def residual_block_forward(x_nchw, p):
    n, c_in, h, w = x_nchw.shape
    c_out = p["b1"].shape[0]
    cin_p = _round_up(c_in, 128)
    cp = _round_up(c_out + 1, 128)          # +1 spare lane-channel carries the mask
    wp2 = w + 2
    rp = (h + 2) * wp2                      # flattened, spatially padded rows/image
    rc = _round_up(rp, 8)                   # 8-aligned "center" region
    m = _round_up(w + 3, 8)                 # halo margin >= max 3x3 tap shift
    rm = 2 * m + rc
    cnt = jnp.float32(n * h * w)
    chan = jnp.arange(cp) < c_out

    # ---------------- host-side layout prep (plain JAX glue) ----------------
    x_nhwc = jnp.transpose(x_nchw, (0, 2, 3, 1)).astype(jnp.float32)
    xpad = jnp.pad(x_nhwc, ((0, 0), (1, 1), (1, 1), (0, 0))).reshape(n, rp, c_in)
    xb = jnp.pad(xpad, ((0, 0), (m, rm - m - rp), (0, cin_p - c_in)))

    hh = jnp.arange(h + 2)
    ww = jnp.arange(wp2)
    valid = ((hh >= 1) & (hh <= h))[:, None] & ((ww >= 1) & (ww <= w))[None, :]
    rowmask = jnp.pad(valid.reshape(rp, 1).astype(jnp.float32), ((0, rc - rp), (0, 0)))
    rowmask = rowmask * jnp.ones((1, cp), jnp.float32)            # (rc, cp)

    def pad_vec(v, extra=None, idx=None):
        out = jnp.zeros((cp,), jnp.float32).at[:c_out].set(v.astype(jnp.float32))
        if idx is not None:
            out = out.at[idx].set(extra)
        return out

    w1p = jnp.zeros((cin_p, cp), jnp.bfloat16).at[:c_in, :c_out].set(
        p["w1"].reshape(c_in, c_out).astype(jnp.bfloat16))
    w2p = jnp.zeros((9, cin_p, cp), jnp.bfloat16).at[:, :c_in, :c_out].set(
        p["w2"].reshape(9, c_in, c_out).astype(jnp.bfloat16))
    w3p = jnp.zeros((9, cp, cp), jnp.float32).at[:, :c_out, :c_out].set(
        p["w3"].reshape(9, c_out, c_out))
    b1p = pad_vec(p["b1"]).reshape(1, cp)
    b2p = pad_vec(p["b2"], extra=1.0, idx=c_out).reshape(1, cp)   # +1 -> mask channel
    b3p = pad_vec(p["b3"]).reshape(1, cp)
    g2p, be2p = pad_vec(p["g2"]), pad_vec(p["be2"])
    g3p, be3p = pad_vec(p["g3"]), pad_vec(p["be3"])
    gfp, befp = pad_vec(p["gf"]), pad_vec(p["bef"])

    cparams = pltpu.CompilerParams(dimension_semantics=("parallel",),
                                   vmem_limit_bytes=32 * 1024 * 1024)
    img_spec = lambda c: pl.BlockSpec((1, rm, c), lambda i: (i, 0, 0))
    full2d = lambda a: pl.BlockSpec(a.shape, lambda i: (0, 0))
    full3d = lambda a: pl.BlockSpec(a.shape, lambda i: (0, 0, 0))
    stat_spec = pl.BlockSpec((1, 8, cp), lambda i: (i, 0, 0))

    # ---- pass 1: conv1 (residual) + conv2 matmul/ReLU + BN2 partial stats ----
    k1 = functools.partial(_stage1_kernel, m=m, rc=rc, rm=rm, wp2=wp2, cp=cp)
    t2b, resb, st1 = pl.pallas_call(
        k1,
        grid=(n,),
        in_specs=[img_spec(cin_p), full2d(rowmask), full2d(w1p), full2d(b1p),
                  full3d(w2p), full2d(b2p)],
        out_specs=(img_spec(cp), img_spec(cp), stat_spec),
        out_shape=(jax.ShapeDtypeStruct((n, rm, cp), jnp.float32),
                   jax.ShapeDtypeStruct((n, rm, cp), jnp.float32),
                   jax.ShapeDtypeStruct((n, 8, cp), jnp.float32)),
        compiler_params=cparams,
    )(xb, rowmask, w1p, b1p, w2p, b2p)

    # ---- fold BN2 (batch stats) into conv3's weights (tiny per-channel math) ----
    sum2 = jnp.sum(st1[:, 0, :], axis=0)
    ssq2 = jnp.sum(st1[:, 1, :], axis=0)
    mean2 = sum2 / cnt
    var2 = jnp.maximum(ssq2 / cnt - mean2 * mean2, 0.0)
    a2 = jnp.where(chan, g2p * jax.lax.rsqrt(var2 + EPS), 0.0)
    c2 = jnp.where(chan, be2p - a2 * mean2, 0.0)
    w3a = w3p * a2[None, :, None]
    # BN2's additive constant enters conv3 only at valid tap positions -> route it
    # through the spare mask channel so the same matmul handles zero padding exactly.
    w3a = w3a.at[:, c_out, :].set(jnp.einsum("i,dio->do", c2, w3p))
    w3a = w3a.astype(jnp.bfloat16)

    # ---- pass 2: conv3 matmul/ReLU + partial stats for BN3 and the final BN ----
    k2 = functools.partial(_stage2_kernel, m=m, rc=rc, rm=rm, wp2=wp2, cp=cp)
    t3b, st2 = pl.pallas_call(
        k2,
        grid=(n,),
        in_specs=[img_spec(cp), img_spec(cp), full2d(rowmask),
                  full3d(w3a), full2d(b3p)],
        out_specs=(img_spec(cp), stat_spec),
        out_shape=(jax.ShapeDtypeStruct((n, rm, cp), jnp.float32),
                   jax.ShapeDtypeStruct((n, 8, cp), jnp.float32)),
        compiler_params=cparams,
    )(t2b, resb, rowmask, w3a, b3p)

    st = jnp.sum(st2, axis=0)
    mean3 = st[0] / cnt
    e_t3sq = st[1] / cnt
    var3 = jnp.maximum(e_t3sq - mean3 * mean3, 0.0)
    a3 = jnp.where(chan, g3p * jax.lax.rsqrt(var3 + EPS), 0.0)
    c3 = jnp.where(chan, be3p - a3 * mean3, 0.0)
    mean_res = st[2] / cnt
    e_res2 = st[3] / cnt
    e_cross = st[4] / cnt
    mean_s = a3 * mean3 + c3 + mean_res
    e_s2 = (a3 * a3 * e_t3sq + c3 * c3 + e_res2 + 2.0 * a3 * c3 * mean3
            + 2.0 * a3 * e_cross + 2.0 * c3 * mean_res)
    var_s = jnp.maximum(e_s2 - mean_s * mean_s, 0.0)
    af = jnp.where(chan, gfp * jax.lax.rsqrt(var_s + EPS), 0.0)
    cf = jnp.where(chan, befp - af * mean_s, 0.0)
    coef_a = (af * a3).reshape(1, cp)
    coef_b = af.reshape(1, cp)
    coef_c = (af * c3 + cf).reshape(1, cp)

    # ---- pass 3: BN3 + residual add + final BN, folded into one affine ----
    outb = pl.pallas_call(
        _stage3_kernel,
        grid=(n,),
        in_specs=[img_spec(cp), img_spec(cp), full2d(coef_a),
                  full2d(coef_b), full2d(coef_c)],
        out_specs=img_spec(cp),
        out_shape=jax.ShapeDtypeStruct((n, rm, cp), jnp.float32),
        compiler_params=cparams,
    )(t3b, resb, coef_a, coef_b, coef_c)

    out = outb[:, m:m + rp, :].reshape(n, h + 2, wp2, cp)[:, 1:h + 1, 1:w + 1, :c_out]
    return jnp.transpose(out, (0, 3, 1, 2))        # NHWC -> NCHW


def reference_forward(x_nchw, p):
    # Pure-JAX reference (lax.conv, f32) for numerical validation.
    x = jnp.transpose(x_nchw, (0, 2, 3, 1)).astype(jnp.float32)

    def conv(inp, wgt, b, padding):
        y = jax.lax.conv_general_dilated(
            inp, wgt, window_strides=(1, 1), padding=padding,
            dimension_numbers=("NHWC", "HWIO", "NHWC"))
        return y + b.reshape(1, 1, 1, -1)

    def bn(t, g, be):
        mu = jnp.mean(t, axis=(0, 1, 2), keepdims=True)
        v = jnp.mean((t - mu) ** 2, axis=(0, 1, 2), keepdims=True)
        return g.reshape(1, 1, 1, -1) * ((t - mu) * jax.lax.rsqrt(v + EPS)) \
            + be.reshape(1, 1, 1, -1)

    res = jax.nn.relu(conv(x, p["w1"], p["b1"], "VALID"))
    y2 = bn(jax.nn.relu(conv(x, p["w2"], p["b2"], "SAME")), p["g2"], p["be2"])
    y3 = bn(jax.nn.relu(conv(y2, p["w3"], p["b3"], "SAME")), p["g3"], p["be3"])
    out = bn(y3 + res, p["gf"], p["bef"])
    return jnp.transpose(out, (0, 3, 1, 2))


if __name__ == "__main__":
    key = jax.random.PRNGKey(0)
    k_x, k_p = jax.random.split(key)

    N, C_IN, C_OUT, H, W = 2, 4, 8, 16, 16
    x = jax.random.normal(k_x, (N, C_IN, H, W), jnp.float32)
    params = init_params(k_p, C_IN, C_OUT)

    out = residual_block_forward(x, params)
    out = jax.block_until_ready(out)

    ref = reference_forward(x, params)
    assert out.shape == (N, C_OUT, H, W), out.shape
    max_err = float(jnp.max(jnp.abs(out - ref)))
    # bf16 MXU operands (f32 accumulation / f32 VPU math) set the tolerance.
    assert jnp.allclose(out, ref, atol=5e-2, rtol=5e-2), f"max abs err {max_err}"

    print("KERNEL_OK")
</pallas_src>

<mosaic_0001>
module attributes {stable_mosaic.version = 11 : i64} {
  func.func @_stage1_kernel(%arg0: i32, %arg1: memref<1x376x128xf32, #tpu.memory_space<vmem>>, %arg2: memref<328x128xf32, #tpu.memory_space<vmem>>, %arg3: memref<128x128xbf16, #tpu.memory_space<vmem>>, %arg4: memref<1x128xf32, #tpu.memory_space<vmem>>, %arg5: memref<9x128x128xbf16, #tpu.memory_space<vmem>>, %arg6: memref<1x128xf32, #tpu.memory_space<vmem>>, %arg7: memref<1x376x128xf32, #tpu.memory_space<vmem>>, %arg8: memref<1x376x128xf32, #tpu.memory_space<vmem>>, %arg9: memref<1x8x128xf32, #tpu.memory_space<vmem>>) attributes {dimension_semantics = [#tpu.dimension_semantics<parallel>], iteration_bounds = array<i64: 2>, scalar_prefetch = 0 : i64, scratch_operands = 0 : i64, tpu.core_type = #tpu.core_type<tc>, window_params = [{transform_indices = @transform_0, window_bounds = array<i64: 1, 376, 128>}, {pipeline_mode = #tpu.pipeline_mode<synchronous>, transform_indices = @transform_1, window_bounds = array<i64: 328, 128>}, {pipeline_mode = #tpu.pipeline_mode<synchronous>, transform_indices = @transform_2, window_bounds = array<i64: 128, 128>}, {pipeline_mode = #tpu.pipeline_mode<synchronous>, transform_indices = @transform_3, window_bounds = array<i64: 1, 128>}, {pipeline_mode = #tpu.pipeline_mode<synchronous>, transform_indices = @transform_4, window_bounds = array<i64: 9, 128, 128>}, {pipeline_mode = #tpu.pipeline_mode<synchronous>, transform_indices = @transform_5, window_bounds = array<i64: 1, 128>}, {transform_indices = @transform_6, window_bounds = array<i64: 1, 376, 128>}, {transform_indices = @transform_7, window_bounds = array<i64: 1, 376, 128>}, {transform_indices = @transform_8, window_bounds = array<i64: 1, 8, 128>}]} {
    %c0 = arith.constant 0 : index
    %c0_0 = arith.constant 0 : index
    %0 = vector.load %arg2[%c0, %c0_0] : memref<328x128xf32, #tpu.memory_space<vmem>>, vector<328x128xf32>
    %c0_1 = arith.constant 0 : index
    %c24 = arith.constant 24 : index
    %c0_2 = arith.constant 0 : index
    %1 = vector.load %arg1[%c0_1, %c24, %c0_2] : memref<1x376x128xf32, #tpu.memory_space<vmem>>, vector<1x328x128xf32>
    %2 = vector.shape_cast %1 : vector<1x328x128xf32> to vector<328x128xf32>
    %3 = arith.truncf %2 : vector<328x128xf32> to vector<328x128xbf16>
    %c0_3 = arith.constant 0 : index
    %c0_4 = arith.constant 0 : index
    %4 = vector.load %arg3[%c0_3, %c0_4] : memref<128x128xbf16, #tpu.memory_space<vmem>>, vector<128x128xbf16>
    %cst = arith.constant dense<0.000000e+00> : vector<328x128xf32>
    %5 = tpu.matmul %3, %4, %cst {dimension_numbers = #tpu.dot_dimension_numbers<[1], [0], [0], [1], [0, 0, 1, 1], [], []>} : vector<328x128xbf16>, vector<128x128xbf16>, vector<328x128xf32> -> vector<328x128xf32>
    %c0_5 = arith.constant 0 : index
    %c0_6 = arith.constant 0 : index
    %6 = vector.load %arg4[%c0_5, %c0_6] : memref<1x128xf32, #tpu.memory_space<vmem>>, vector<1x128xf32>
    %7 = vector.broadcast %6 : vector<1x128xf32> to vector<328x128xf32>
    %8 = arith.addf %5, %7 : vector<328x128xf32>
    %cst_7 = arith.constant 0.000000e+00 : f32
    %9 = vector.broadcast %cst_7 : f32 to vector<328x128xf32>
    %10 = arith.maximumf %8, %9 : vector<328x128xf32>
    %11 = arith.mulf %10, %0 : vector<328x128xf32>
    %cst_8 = arith.constant 0.000000e+00 : f32
    %12 = vector.broadcast %cst_8 : f32 to vector<328x128xf32>
    %c0_9 = arith.constant 0 : index
    %c5 = arith.constant 5 : index
    %c0_10 = arith.constant 0 : index
    %13 = vector.load %arg1[%c0_9, %c5, %c0_10] : memref<1x376x128xf32, #tpu.memory_space<vmem>>, vector<1x328x128xf32>
    %14 = vector.shape_cast %13 : vector<1x328x128xf32> to vector<328x128xf32>
    %15 = arith.truncf %14 : vector<328x128xf32> to vector<328x128xbf16>
    %c0_11 = arith.constant 0 : index
    %c0_12 = arith.constant 0 : index
    %c0_13 = arith.constant 0 : index
    %16 = vector.load %arg5[%c0_11, %c0_12, %c0_13] : memref<9x128x128xbf16, #tpu.memory_space<vmem>>, vector<1x128x128xbf16>
    %17 = vector.shape_cast %16 : vector<1x128x128xbf16> to vector<128x128xbf16>
    %cst_14 = arith.constant dense<0.000000e+00> : vector<328x128xf32>
    %18 = tpu.matmul %15, %17, %cst_14 {dimension_numbers = #tpu.dot_dimension_numbers<[1], [0], [0], [1], [0, 0, 1, 1], [], []>} : vector<328x128xbf16>, vector<128x128xbf16>, vector<328x128xf32> -> vector<328x128xf32>
    %19 = arith.addf %12, %18 : vector<328x128xf32>
    %c0_15 = arith.constant 0 : index
    %c6 = arith.constant 6 : index
    %c0_16 = arith.constant 0 : index
    %20 = vector.load %arg1[%c0_15, %c6, %c0_16] : memref<1x376x128xf32, #tpu.memory_space<vmem>>, vector<1x328x128xf32>
    %21 = vector.shape_cast %20 : vector<1x328x128xf32> to vector<328x128xf32>
    %22 = arith.truncf %21 : vector<328x128xf32> to vector<328x128xbf16>
    %c1 = arith.constant 1 : index
    %c0_17 = arith.constant 0 : index
    %c0_18 = arith.constant 0 : index
    %23 = vector.load %arg5[%c1, %c0_17, %c0_18] : memref<9x128x128xbf16, #tpu.memory_space<vmem>>, vector<1x128x128xbf16>
    %24 = vector.shape_cast %23 : vector<1x128x128xbf16> to vector<128x128xbf16>
    %cst_19 = arith.constant dense<0.000000e+00> : vector<328x128xf32>
    %25 = tpu.matmul %22, %24, %cst_19 {dimension_numbers = #tpu.dot_dimension_numbers<[1], [0], [0], [1], [0, 0, 1, 1], [], []>} : vector<328x128xbf16>, vector<128x128xbf16>, vector<328x128xf32> -> vector<328x128xf32>
    %26 = arith.addf %19, %25 : vector<328x128xf32>
    %c0_20 = arith.constant 0 : index
    %c7 = arith.constant 7 : index
    %c0_21 = arith.constant 0 : index
    %27 = vector.load %arg1[%c0_20, %c7, %c0_21] : memref<1x376x128xf32, #tpu.memory_space<vmem>>, vector<1x328x128xf32>
    %28 = vector.shape_cast %27 : vector<1x328x128xf32> to vector<328x128xf32>
    %29 = arith.truncf %28 : vector<328x128xf32> to vector<328x128xbf16>
    %c2 = arith.constant 2 : index
    %c0_22 = arith.constant 0 : index
    %c0_23 = arith.constant 0 : index
    %30 = vector.load %arg5[%c2, %c0_22, %c0_23] : memref<9x128x128xbf16, #tpu.memory_space<vmem>>, vector<1x128x128xbf16>
    %31 = vector.shape_cast %30 : vector<1x128x128xbf16> to vector<128x128xbf16>
    %cst_24 = arith.constant dense<0.000000e+00> : vector<328x128xf32>
    %32 = tpu.matmul %29, %31, %cst_24 {dimension_numbers = #tpu.dot_dimension_numbers<[1], [0], [0], [1], [0, 0, 1, 1], [], []>} : vector<328x128xbf16>, vector<128x128xbf16>, vector<328x128xf32> -> vector<328x128xf32>
    %33 = arith.addf %26, %32 : vector<328x128xf32>
    %c0_25 = arith.constant 0 : index
    %c23 = arith.constant 23 : index
    %c0_26 = arith.constant 0 : index
    %34 = vector.load %arg1[%c0_25, %c23, %c0_26] : memref<1x376x128xf32, #tpu.memory_space<vmem>>, vector<1x328x128xf32>
    %35 = vector.shape_cast %34 : vector<1x328x128xf32> to vector<328x128xf32>
    %36 = arith.truncf %35 : vector<328x128xf32> to vector<328x128xbf16>
    %c3 = arith.constant 3 : index
    %c0_27 = arith.constant 0 : index
    %c0_28 = arith.constant 0 : index
    %37 = vector.load %arg5[%c3, %c0_27, %c0_28] : memref<9x128x128xbf16, #tpu.memory_space<vmem>>, vector<1x128x128xbf16>
    %38 = vector.shape_cast %37 : vector<1x128x128xbf16> to vector<128x128xbf16>
    %cst_29 = arith.constant dense<0.000000e+00> : vector<328x128xf32>
    %39 = tpu.matmul %36, %38, %cst_29 {dimension_numbers = #tpu.dot_dimension_numbers<[1], [0], [0], [1], [0, 0, 1, 1], [], []>} : vector<328x128xbf16>, vector<128x128xbf16>, vector<328x128xf32> -> vector<328x128xf32>
    %40 = arith.addf %33, %39 : vector<328x128xf32>
    %c0_30 = arith.constant 0 : index
    %c24_31 = arith.constant 24 : index
    %c0_32 = arith.constant 0 : index
    %41 = vector.load %arg1[%c0_30, %c24_31, %c0_32] : memref<1x376x128xf32, #tpu.memory_space<vmem>>, vector<1x328x128xf32>
    %42 = vector.shape_cast %41 : vector<1x328x128xf32> to vector<328x128xf32>
    %43 = arith.truncf %42 : vector<328x128xf32> to vector<328x128xbf16>
    %c4 = arith.constant 4 : index
    %c0_33 = arith.constant 0 : index
    %c0_34 = arith.constant 0 : index
    %44 = vector.load %arg5[%c4, %c0_33, %c0_34] : memref<9x128x128xbf16, #tpu.memory_space<vmem>>, vector<1x128x128xbf16>
    %45 = vector.shape_cast %44 : vector<1x128x128xbf16> to vector<128x128xbf16>
    %cst_35 = arith.constant dense<0.000000e+00> : vector<328x128xf32>
    %46 = tpu.matmul %43, %45, %cst_35 {dimension_numbers = #tpu.dot_dimension_numbers<[1], [0], [0], [1], [0, 0, 1, 1], [], []>} : vector<328x128xbf16>, vector<128x128xbf16>, vector<328x128xf32> -> vector<328x128xf32>
    %47 = arith.addf %40, %46 : vector<328x128xf32>
    %c0_36 = arith.constant 0 : index
    %c25 = arith.constant 25 : index
    %c0_37 = arith.constant 0 : index
    %48 = vector.load %arg1[%c0_36, %c25, %c0_37] : memref<1x376x128xf32, #tpu.memory_space<vmem>>, vector<1x328x128xf32>
    %49 = vector.shape_cast %48 : vector<1x328x128xf32> to vector<328x128xf32>
    %50 = arith.truncf %49 : vector<328x128xf32> to vector<328x128xbf16>
    %c5_38 = arith.constant 5 : index
    %c0_39 = arith.constant 0 : index
    %c0_40 = arith.constant 0 : index
    %51 = vector.load %arg5[%c5_38, %c0_39, %c0_40] : memref<9x128x128xbf16, #tpu.memory_space<vmem>>, vector<1x128x128xbf16>
    %52 = vector.shape_cast %51 : vector<1x128x128xbf16> to vector<128x128xbf16>
    %cst_41 = arith.constant dense<0.000000e+00> : vector<328x128xf32>
    %53 = tpu.matmul %50, %52, %cst_41 {dimension_numbers = #tpu.dot_dimension_numbers<[1], [0], [0], [1], [0, 0, 1, 1], [], []>} : vector<328x128xbf16>, vector<128x128xbf16>, vector<328x128xf32> -> vector<328x128xf32>
    %54 = arith.addf %47, %53 : vector<328x128xf32>
    %c0_42 = arith.constant 0 : index
    %c41 = arith.constant 41 : index
    %c0_43 = arith.constant 0 : index
    %55 = vector.load %arg1[%c0_42, %c41, %c0_43] : memref<1x376x128xf32, #tpu.memory_space<vmem>>, vector<1x328x128xf32>
    %56 = vector.shape_cast %55 : vector<1x328x128xf32> to vector<328x128xf32>
    %57 = arith.truncf %56 : vector<328x128xf32> to vector<328x128xbf16>
    %c6_44 = arith.constant 6 : index
    %c0_45 = arith.constant 0 : index
    %c0_46 = arith.constant 0 : index
    %58 = vector.load %arg5[%c6_44, %c0_45, %c0_46] : memref<9x128x128xbf16, #tpu.memory_space<vmem>>, vector<1x128x128xbf16>
    %59 = vector.shape_cast %58 : vector<1x128x128xbf16> to vector<128x128xbf16>
    %cst_47 = arith.constant dense<0.000000e+00> : vector<328x128xf32>
    %60 = tpu.matmul %57, %59, %cst_47 {dimension_numbers = #tpu.dot_dimension_numbers<[1], [0], [0], [1], [0, 0, 1, 1], [], []>} : vector<328x128xbf16>, vector<128x128xbf16>, vector<328x128xf32> -> vector<328x128xf32>
    %61 = arith.addf %54, %60 : vector<328x128xf32>
    %c0_48 = arith.constant 0 : index
    %c42 = arith.constant 42 : index
    %c0_49 = arith.constant 0 : index
    %62 = vector.load %arg1[%c0_48, %c42, %c0_49] : memref<1x376x128xf32, #tpu.memory_space<vmem>>, vector<1x328x128xf32>
    %63 = vector.shape_cast %62 : vector<1x328x128xf32> to vector<328x128xf32>
    %64 = arith.truncf %63 : vector<328x128xf32> to vector<328x128xbf16>
    %c7_50 = arith.constant 7 : index
    %c0_51 = arith.constant 0 : index
    %c0_52 = arith.constant 0 : index
    %65 = vector.load %arg5[%c7_50, %c0_51, %c0_52] : memref<9x128x128xbf16, #tpu.memory_space<vmem>>, vector<1x128x128xbf16>
    %66 = vector.shape_cast %65 : vector<1x128x128xbf16> to vector<128x128xbf16>
    %cst_53 = arith.constant dense<0.000000e+00> : vector<328x128xf32>
    %67 = tpu.matmul %64, %66, %cst_53 {dimension_numbers = #tpu.dot_dimension_numbers<[1], [0], [0], [1], [0, 0, 1, 1], [], []>} : vector<328x128xbf16>, vector<128x128xbf16>, vector<328x128xf32> -> vector<328x128xf32>
    %68 = arith.addf %61, %67 : vector<328x128xf32>
    %c0_54 = arith.constant 0 : index
    %c43 = arith.constant 43 : index
    %c0_55 = arith.constant 0 : index
    %69 = vector.load %arg1[%c0_54, %c43, %c0_55] : memref<1x376x128xf32, #tpu.memory_space<vmem>>, vector<1x328x128xf32>
    %70 = vector.shape_cast %69 : vector<1x328x128xf32> to vector<328x128xf32>
    %71 = arith.truncf %70 : vector<328x128xf32> to vector<328x128xbf16>
    %c8 = arith.constant 8 : index
    %c0_56 = arith.constant 0 : index
    %c0_57 = arith.constant 0 : index
    %72 = vector.load %arg5[%c8, %c0_56, %c0_57] : memref<9x128x128xbf16, #tpu.memory_space<vmem>>, vector<1x128x128xbf16>
    %73 = vector.shape_cast %72 : vector<1x128x128xbf16> to vector<128x128xbf16>
    %cst_58 = arith.constant dense<0.000000e+00> : vector<328x128xf32>
    %74 = tpu.matmul %71, %73, %cst_58 {dimension_numbers = #tpu.dot_dimension_numbers<[1], [0], [0], [1], [0, 0, 1, 1], [], []>} : vector<328x128xbf16>, vector<128x128xbf16>, vector<328x128xf32> -> vector<328x128xf32>
    %75 = arith.addf %68, %74 : vector<328x128xf32>
    %c0_59 = arith.constant 0 : index
    %c0_60 = arith.constant 0 : index
    %76 = vector.load %arg6[%c0_59, %c0_60] : memref<1x128xf32, #tpu.memory_space<vmem>>, vector<1x128xf32>
    %77 = vector.broadcast %76 : vector<1x128xf32> to vector<328x128xf32>
    %78 = arith.addf %75, %77 : vector<328x128xf32>
    %cst_61 = arith.constant 0.000000e+00 : f32
    %79 = vector.broadcast %cst_61 : f32 to vector<328x128xf32>
    %80 = arith.maximumf %78, %79 : vector<328x128xf32>
    %81 = arith.mulf %80, %0 : vector<328x128xf32>
    %cst_62 = arith.constant dense<0.000000e+00> : vector<128xf32>
    %82 = vector.multi_reduction <add>, %81, %cst_62 [0] : vector<328x128xf32> to vector<128xf32>
    %83 = vector.shape_cast %82 : vector<128xf32> to vector<1x128xf32>
    %c0_63 = arith.constant 0 : index
    %c0_64 = arith.constant 0 : index
    %c0_65 = arith.constant 0 : index
    %84 = vector.load %arg9[%c0_63, %c0_64, %c0_65] : memref<1x8x128xf32, #tpu.memory_space<vmem>>, vector<1x1x128xf32>
    %85 = vector.shape_cast %84 : vector<1x1x128xf32> to vector<1x128xf32>
    %86 = vector.shape_cast %83 : vector<1x128xf32> to vector<1x1x128xf32>
    tpu.vector_store %arg9[%c0_63, %c0_64, %c0_65], %86 {strides = array<i32>} : memref<1x8x128xf32, #tpu.memory_space<vmem>>, vector<1x1x128xf32>,
    %87 = arith.mulf %81, %81 : vector<328x128xf32>
    %cst_66 = arith.constant dense<0.000000e+00> : vector<128xf32>
    %88 = vector.multi_reduction <add>, %87, %cst_66 [0] : vector<328x128xf32> to vector<128xf32>
    %89 = vector.shape_cast %88 : vector<128xf32> to vector<1x128xf32>
    %c0_67 = arith.constant 0 : index
    %c1_68 = arith.constant 1 : index
    %c0_69 = arith.constant 0 : index
    %90 = vector.load %arg9[%c0_67, %c1_68, %c0_69] : memref<1x8x128xf32, #tpu.memory_space<vmem>>, vector<1x1x128xf32>
    %91 = vector.shape_cast %90 : vector<1x1x128xf32> to vector<1x128xf32>
    %92 = vector.shape_cast %89 : vector<1x128xf32> to vector<1x1x128xf32>
    tpu.vector_store %arg9[%c0_67, %c1_68, %c0_69], %92 {strides = array<i32>} : memref<1x8x128xf32, #tpu.memory_space<vmem>>, vector<1x1x128xf32>,
    %cst_70 = arith.constant 0.000000e+00 : f32
    %93 = vector.broadcast %cst_70 : f32 to vector<6x128xf32>
    %c0_71 = arith.constant 0 : index
    %c2_72 = arith.constant 2 : index
    %c0_73 = arith.constant 0 : index
    %94 = vector.load %arg9[%c0_71, %c2_72, %c0_73] : memref<1x8x128xf32, #tpu.memory_space<vmem>>, vector<1x6x128xf32>
    %95 = vector.shape_cast %94 : vector<1x6x128xf32> to vector<6x128xf32>
    %96 = vector.shape_cast %93 : vector<6x128xf32> to vector<1x6x128xf32>
    tpu.vector_store %arg9[%c0_71, %c2_72, %c0_73], %96 {strides = array<i32>} : memref<1x8x128xf32, #tpu.memory_space<vmem>>, vector<1x6x128xf32>,
    %cst_74 = arith.constant 0.000000e+00 : f32
    %97 = vector.broadcast %cst_74 : f32 to vector<24x128xf32>
    %c0_75 = arith.constant 0 : index
    %c0_76 = arith.constant 0 : index
    %c0_77 = arith.constant 0 : index
    %98 = vector.load %arg7[%c0_75, %c0_76, %c0_77] : memref<1x376x128xf32, #tpu.memory_space<vmem>>, vector<1x24x128xf32>
    %99 = vector.shape_cast %98 : vector<1x24x128xf32> to vector<24x128xf32>
    %100 = vector.shape_cast %97 : vector<24x128xf32> to vector<1x24x128xf32>
    tpu.vector_store %arg7[%c0_75, %c0_76, %c0_77], %100 {strides = array<i32>} : memref<1x376x128xf32, #tpu.memory_space<vmem>>, vector<1x24x128xf32>,
    %c0_78 = arith.constant 0 : index
    %c24_79 = arith.constant 24 : index
    %c0_80 = arith.constant 0 : index
    %101 = vector.load %arg7[%c0_78, %c24_79, %c0_80] : memref<1x376x128xf32, #tpu.memory_space<vmem>>, vector<1x328x128xf32>
    %102 = vector.shape_cast %101 : vector<1x328x128xf32> to vector<328x128xf32>
    %103 = vector.shape_cast %81 : vector<328x128xf32> to vector<1x328x128xf32>
    tpu.vector_store %arg7[%c0_78, %c24_79, %c0_80], %103 {strides = array<i32>} : memref<1x376x128xf32, #tpu.memory_space<vmem>>, vector<1x328x128xf32>,
    %cst_81 = arith.constant 0.000000e+00 : f32
    %104 = vector.broadcast %cst_81 : f32 to vector<24x128xf32>
    %c0_82 = arith.constant 0 : index
    %c352 = arith.constant 352 : index
    %c0_83 = arith.constant 0 : index
    %105 = vector.load %arg7[%c0_82, %c352, %c0_83] : memref<1x376x128xf32, #tpu.memory_space<vmem>>, vector<1x24x128xf32>
    %106 = vector.shape_cast %105 : vector<1x24x128xf32> to vector<24x128xf32>
    %107 = vector.shape_cast %104 : vector<24x128xf32> to vector<1x24x128xf32>
    tpu.vector_store %arg7[%c0_82, %c352, %c0_83], %107 {strides = array<i32>} : memref<1x376x128xf32, #tpu.memory_space<vmem>>, vector<1x24x128xf32>,
    %cst_84 = arith.constant 0.000000e+00 : f32
    %108 = vector.broadcast %cst_84 : f32 to vector<24x128xf32>
    %c0_85 = arith.constant 0 : index
    %c0_86 = arith.constant 0 : index
    %c0_87 = arith.constant 0 : index
    %109 = vector.load %arg8[%c0_85, %c0_86, %c0_87] : memref<1x376x128xf32, #tpu.memory_space<vmem>>, vector<1x24x128xf32>
    %110 = vector.shape_cast %109 : vector<1x24x128xf32> to vector<24x128xf32>
    %111 = vector.shape_cast %108 : vector<24x128xf32> to vector<1x24x128xf32>
    tpu.vector_store %arg8[%c0_85, %c0_86, %c0_87], %111 {strides = array<i32>} : memref<1x376x128xf32, #tpu.memory_space<vmem>>, vector<1x24x128xf32>,
    %c0_88 = arith.constant 0 : index
    %c24_89 = arith.constant 24 : index
    %c0_90 = arith.constant 0 : index
    %112 = vector.load %arg8[%c0_88, %c24_89, %c0_90] : memref<1x376x128xf32, #tpu.memory_space<vmem>>, vector<1x328x128xf32>
    %113 = vector.shape_cast %112 : vector<1x328x128xf32> to vector<328x128xf32>
    %114 = vector.shape_cast %11 : vector<328x128xf32> to vector<1x328x128xf32>
    tpu.vector_store %arg8[%c0_88, %c24_89, %c0_90], %114 {strides = array<i32>} : memref<1x376x128xf32, #tpu.memory_space<vmem>>, vector<1x328x128xf32>,
    %cst_91 = arith.constant 0.000000e+00 : f32
    %115 = vector.broadcast %cst_91 : f32 to vector<24x128xf32>
    %c0_92 = arith.constant 0 : index
    %c352_93 = arith.constant 352 : index
    %c0_94 = arith.constant 0 : index
    %116 = vector.load %arg8[%c0_92, %c352_93, %c0_94] : memref<1x376x128xf32, #tpu.memory_space<vmem>>, vector<1x24x128xf32>
    %117 = vector.shape_cast %116 : vector<1x24x128xf32> to vector<24x128xf32>
    %118 = vector.shape_cast %115 : vector<24x128xf32> to vector<1x24x128xf32>
    tpu.vector_store %arg8[%c0_92, %c352_93, %c0_94], %118 {strides = array<i32>} : memref<1x376x128xf32, #tpu.memory_space<vmem>>, vector<1x24x128xf32>,
    return
  }
  func.func @transform_0(%arg0: i32) -> (i32, i32, i32) {
    %c0_i32 = arith.constant 0 : i32
    %c0_i32_0 = arith.constant 0 : i32
    %c0_i32_1 = arith.constant 0 : i32
    return %arg0, %c0_i32, %c0_i32_0 : i32, i32, i32
  }
  func.func @transform_1(%arg0: i32) -> (i32, i32) {
    %c0_i32 = arith.constant 0 : i32
    %c0_i32_0 = arith.constant 0 : i32
    %c0_i32_1 = arith.constant 0 : i32
    return %c0_i32, %c0_i32_0 : i32, i32
  }
  func.func @transform_2(%arg0: i32) -> (i32, i32) {
    %c0_i32 = arith.constant 0 : i32
    %c0_i32_0 = arith.constant 0 : i32
    %c0_i32_1 = arith.constant 0 : i32
    return %c0_i32, %c0_i32_0 : i32, i32
  }
  func.func @transform_3(%arg0: i32) -> (i32, i32) {
    %c0_i32 = arith.constant 0 : i32
    %c0_i32_0 = arith.constant 0 : i32
    %c0_i32_1 = arith.constant 0 : i32
    return %c0_i32, %c0_i32_0 : i32, i32
  }
  func.func @transform_4(%arg0: i32) -> (i32, i32, i32) {
    %c0_i32 = arith.constant 0 : i32
    %c0_i32_0 = arith.constant 0 : i32
    %c0_i32_1 = arith.constant 0 : i32
    %c0_i32_2 = arith.constant 0 : i32
    return %c0_i32, %c0_i32_0, %c0_i32_1 : i32, i32, i32
  }
  func.func @transform_5(%arg0: i32) -> (i32, i32) {
    %c0_i32 = arith.constant 0 : i32
    %c0_i32_0 = arith.constant 0 : i32
    %c0_i32_1 = arith.constant 0 : i32
    return %c0_i32, %c0_i32_0 : i32, i32
  }
  func.func @transform_6(%arg0: i32) -> (i32, i32, i32) {
    %c0_i32 = arith.constant 0 : i32
    %c0_i32_0 = arith.constant 0 : i32
    %c0_i32_1 = arith.constant 0 : i32
    return %arg0, %c0_i32, %c0_i32_0 : i32, i32, i32
  }
  func.func @transform_7(%arg0: i32) -> (i32, i32, i32) {
    %c0_i32 = arith.constant 0 : i32
    %c0_i32_0 = arith.constant 0 : i32
    %c0_i32_1 = arith.constant 0 : i32
    return %arg0, %c0_i32, %c0_i32_0 : i32, i32, i32
  }
  func.func @transform_8(%arg0: i32) -> (i32, i32, i32) {
    %c0_i32 = arith.constant 0 : i32
    %c0_i32_0 = arith.constant 0 : i32
    %c0_i32_1 = arith.constant 0 : i32
    return %arg0, %c0_i32, %c0_i32_0 : i32, i32, i32
  }
}

module attributes {stable_mosaic.version = 11 : i64} {
  func.func @_stage2_kernel(%arg0: i32, %arg1: memref<1x376x128xf32, #tpu.memory_space<vmem>>, %arg2: memref<1x376x128xf32, #tpu.memory_space<vmem>>, %arg3: memref<328x128xf32, #tpu.memory_space<vmem>>, %arg4: memref<9x128x128xbf16, #tpu.memory_space<vmem>>, %arg5: memref<1x128xf32, #tpu.memory_space<vmem>>, %arg6: memref<1x376x128xf32, #tpu.memory_space<vmem>>, %arg7: memref<1x8x128xf32, #tpu.memory_space<vmem>>) attributes {dimension_semantics = [#tpu.dimension_semantics<parallel>], iteration_bounds = array<i64: 2>, scalar_prefetch = 0 : i64, scratch_operands = 0 : i64, tpu.core_type = #tpu.core_type<tc>, window_params = [{transform_indices = @transform_0, window_bounds = array<i64: 1, 376, 128>}, {transform_indices = @transform_1, window_bounds = array<i64: 1, 376, 128>}, {pipeline_mode = #tpu.pipeline_mode<synchronous>, transform_indices = @transform_2, window_bounds = array<i64: 328, 128>}, {pipeline_mode = #tpu.pipeline_mode<synchronous>, transform_indices = @transform_3, window_bounds = array<i64: 9, 128, 128>}, {pipeline_mode = #tpu.pipeline_mode<synchronous>, transform_indices = @transform_4, window_bounds = array<i64: 1, 128>}, {transform_indices = @transform_5, window_bounds = array<i64: 1, 376, 128>}, {transform_indices = @transform_6, window_bounds = array<i64: 1, 8, 128>}]} {
    %c0 = arith.constant 0 : index
    %c0_0 = arith.constant 0 : index
    %0 = vector.load %arg3[%c0, %c0_0] : memref<328x128xf32, #tpu.memory_space<vmem>>, vector<328x128xf32>
    %cst = arith.constant 0.000000e+00 : f32
    %1 = vector.broadcast %cst : f32 to vector<328x128xf32>
    %c0_1 = arith.constant 0 : index
    %c5 = arith.constant 5 : index
    %c0_2 = arith.constant 0 : index
    %2 = vector.load %arg1[%c0_1, %c5, %c0_2] : memref<1x376x128xf32, #tpu.memory_space<vmem>>, vector<1x328x128xf32>
    %3 = vector.shape_cast %2 : vector<1x328x128xf32> to vector<328x128xf32>
    %4 = arith.truncf %3 : vector<328x128xf32> to vector<328x128xbf16>
    %c0_3 = arith.constant 0 : index
    %c0_4 = arith.constant 0 : index
    %c0_5 = arith.constant 0 : index
    %5 = vector.load %arg4[%c0_3, %c0_4, %c0_5] : memref<9x128x128xbf16, #tpu.memory_space<vmem>>, vector<1x128x128xbf16>
    %6 = vector.shape_cast %5 : vector<1x128x128xbf16> to vector<128x128xbf16>
    %cst_6 = arith.constant dense<0.000000e+00> : vector<328x128xf32>
    %7 = tpu.matmul %4, %6, %cst_6 {dimension_numbers = #tpu.dot_dimension_numbers<[1], [0], [0], [1], [0, 0, 1, 1], [], []>} : vector<328x128xbf16>, vector<128x128xbf16>, vector<328x128xf32> -> vector<328x128xf32>
    %8 = arith.addf %1, %7 : vector<328x128xf32>
    %c0_7 = arith.constant 0 : index
    %c6 = arith.constant 6 : index
    %c0_8 = arith.constant 0 : index
    %9 = vector.load %arg1[%c0_7, %c6, %c0_8] : memref<1x376x128xf32, #tpu.memory_space<vmem>>, vector<1x328x128xf32>
    %10 = vector.shape_cast %9 : vector<1x328x128xf32> to vector<328x128xf32>
    %11 = arith.truncf %10 : vector<328x128xf32> to vector<328x128xbf16>
    %c1 = arith.constant 1 : index
    %c0_9 = arith.constant 0 : index
    %c0_10 = arith.constant 0 : index
    %12 = vector.load %arg4[%c1, %c0_9, %c0_10] : memref<9x128x128xbf16, #tpu.memory_space<vmem>>, vector<1x128x128xbf16>
    %13 = vector.shape_cast %12 : vector<1x128x128xbf16> to vector<128x128xbf16>
    %cst_11 = arith.constant dense<0.000000e+00> : vector<328x128xf32>
    %14 = tpu.matmul %11, %13, %cst_11 {dimension_numbers = #tpu.dot_dimension_numbers<[1], [0], [0], [1], [0, 0, 1, 1], [], []>} : vector<328x128xbf16>, vector<128x128xbf16>, vector<328x128xf32> -> vector<328x128xf32>
    %15 = arith.addf %8, %14 : vector<328x128xf32>
    %c0_12 = arith.constant 0 : index
    %c7 = arith.constant 7 : index
    %c0_13 = arith.constant 0 : index
    %16 = vector.load %arg1[%c0_12, %c7, %c0_13] : memref<1x376x128xf32, #tpu.memory_space<vmem>>, vector<1x328x128xf32>
    %17 = vector.shape_cast %16 : vector<1x328x128xf32> to vector<328x128xf32>
    %18 = arith.truncf %17 : vector<328x128xf32> to vector<328x128xbf16>
    %c2 = arith.constant 2 : index
    %c0_14 = arith.constant 0 : index
    %c0_15 = arith.constant 0 : index
    %19 = vector.load %arg4[%c2, %c0_14, %c0_15] : memref<9x128x128xbf16, #tpu.memory_space<vmem>>, vector<1x128x128xbf16>
    %20 = vector.shape_cast %19 : vector<1x128x128xbf16> to vector<128x128xbf16>
    %cst_16 = arith.constant dense<0.000000e+00> : vector<328x128xf32>
    %21 = tpu.matmul %18, %20, %cst_16 {dimension_numbers = #tpu.dot_dimension_numbers<[1], [0], [0], [1], [0, 0, 1, 1], [], []>} : vector<328x128xbf16>, vector<128x128xbf16>, vector<328x128xf32> -> vector<328x128xf32>
    %22 = arith.addf %15, %21 : vector<328x128xf32>
    %c0_17 = arith.constant 0 : index
    %c23 = arith.constant 23 : index
    %c0_18 = arith.constant 0 : index
    %23 = vector.load %arg1[%c0_17, %c23, %c0_18] : memref<1x376x128xf32, #tpu.memory_space<vmem>>, vector<1x328x128xf32>
    %24 = vector.shape_cast %23 : vector<1x328x128xf32> to vector<328x128xf32>
    %25 = arith.truncf %24 : vector<328x128xf32> to vector<328x128xbf16>
    %c3 = arith.constant 3 : index
    %c0_19 = arith.constant 0 : index
    %c0_20 = arith.constant 0 : index
    %26 = vector.load %arg4[%c3, %c0_19, %c0_20] : memref<9x128x128xbf16, #tpu.memory_space<vmem>>, vector<1x128x128xbf16>
    %27 = vector.shape_cast %26 : vector<1x128x128xbf16> to vector<128x128xbf16>
    %cst_21 = arith.constant dense<0.000000e+00> : vector<328x128xf32>
    %28 = tpu.matmul %25, %27, %cst_21 {dimension_numbers = #tpu.dot_dimension_numbers<[1], [0], [0], [1], [0, 0, 1, 1], [], []>} : vector<328x128xbf16>, vector<128x128xbf16>, vector<328x128xf32> -> vector<328x128xf32>
    %29 = arith.addf %22, %28 : vector<328x128xf32>
    %c0_22 = arith.constant 0 : index
    %c24 = arith.constant 24 : index
    %c0_23 = arith.constant 0 : index
    %30 = vector.load %arg1[%c0_22, %c24, %c0_23] : memref<1x376x128xf32, #tpu.memory_space<vmem>>, vector<1x328x128xf32>
    %31 = vector.shape_cast %30 : vector<1x328x128xf32> to vector<328x128xf32>
    %32 = arith.truncf %31 : vector<328x128xf32> to vector<328x128xbf16>
    %c4 = arith.constant 4 : index
    %c0_24 = arith.constant 0 : index
    %c0_25 = arith.constant 0 : index
    %33 = vector.load %arg4[%c4, %c0_24, %c0_25] : memref<9x128x128xbf16, #tpu.memory_space<vmem>>, vector<1x128x128xbf16>
    %34 = vector.shape_cast %33 : vector<1x128x128xbf16> to vector<128x128xbf16>
    %cst_26 = arith.constant dense<0.000000e+00> : vector<328x128xf32>
    %35 = tpu.matmul %32, %34, %cst_26 {dimension_numbers = #tpu.dot_dimension_numbers<[1], [0], [0], [1], [0, 0, 1, 1], [], []>} : vector<328x128xbf16>, vector<128x128xbf16>, vector<328x128xf32> -> vector<328x128xf32>
    %36 = arith.addf %29, %35 : vector<328x128xf32>
    %c0_27 = arith.constant 0 : index
    %c25 = arith.constant 25 : index
    %c0_28 = arith.constant 0 : index
    %37 = vector.load %arg1[%c0_27, %c25, %c0_28] : memref<1x376x128xf32, #tpu.memory_space<vmem>>, vector<1x328x128xf32>
    %38 = vector.shape_cast %37 : vector<1x328x128xf32> to vector<328x128xf32>
    %39 = arith.truncf %38 : vector<328x128xf32> to vector<328x128xbf16>
    %c5_29 = arith.constant 5 : index
    %c0_30 = arith.constant 0 : index
    %c0_31 = arith.constant 0 : index
    %40 = vector.load %arg4[%c5_29, %c0_30, %c0_31] : memref<9x128x128xbf16, #tpu.memory_space<vmem>>, vector<1x128x128xbf16>
    %41 = vector.shape_cast %40 : vector<1x128x128xbf16> to vector<128x128xbf16>
    %cst_32 = arith.constant dense<0.000000e+00> : vector<328x128xf32>
    %42 = tpu.matmul %39, %41, %cst_32 {dimension_numbers = #tpu.dot_dimension_numbers<[1], [0], [0], [1], [0, 0, 1, 1], [], []>} : vector<328x128xbf16>, vector<128x128xbf16>, vector<328x128xf32> -> vector<328x128xf32>
    %43 = arith.addf %36, %42 : vector<328x128xf32>
    %c0_33 = arith.constant 0 : index
    %c41 = arith.constant 41 : index
    %c0_34 = arith.constant 0 : index
    %44 = vector.load %arg1[%c0_33, %c41, %c0_34] : memref<1x376x128xf32, #tpu.memory_space<vmem>>, vector<1x328x128xf32>
    %45 = vector.shape_cast %44 : vector<1x328x128xf32> to vector<328x128xf32>
    %46 = arith.truncf %45 : vector<328x128xf32> to vector<328x128xbf16>
    %c6_35 = arith.constant 6 : index
    %c0_36 = arith.constant 0 : index
    %c0_37 = arith.constant 0 : index
    %47 = vector.load %arg4[%c6_35, %c0_36, %c0_37] : memref<9x128x128xbf16, #tpu.memory_space<vmem>>, vector<1x128x128xbf16>
    %48 = vector.shape_cast %47 : vector<1x128x128xbf16> to vector<128x128xbf16>
    %cst_38 = arith.constant dense<0.000000e+00> : vector<328x128xf32>
    %49 = tpu.matmul %46, %48, %cst_38 {dimension_numbers = #tpu.dot_dimension_numbers<[1], [0], [0], [1], [0, 0, 1, 1], [], []>} : vector<328x128xbf16>, vector<128x128xbf16>, vector<328x128xf32> -> vector<328x128xf32>
    %50 = arith.addf %43, %49 : vector<328x128xf32>
    %c0_39 = arith.constant 0 : index
    %c42 = arith.constant 42 : index
    %c0_40 = arith.constant 0 : index
    %51 = vector.load %arg1[%c0_39, %c42, %c0_40] : memref<1x376x128xf32, #tpu.memory_space<vmem>>, vector<1x328x128xf32>
    %52 = vector.shape_cast %51 : vector<1x328x128xf32> to vector<328x128xf32>
    %53 = arith.truncf %52 : vector<328x128xf32> to vector<328x128xbf16>
    %c7_41 = arith.constant 7 : index
    %c0_42 = arith.constant 0 : index
    %c0_43 = arith.constant 0 : index
    %54 = vector.load %arg4[%c7_41, %c0_42, %c0_43] : memref<9x128x128xbf16, #tpu.memory_space<vmem>>, vector<1x128x128xbf16>
    %55 = vector.shape_cast %54 : vector<1x128x128xbf16> to vector<128x128xbf16>
    %cst_44 = arith.constant dense<0.000000e+00> : vector<328x128xf32>
    %56 = tpu.matmul %53, %55, %cst_44 {dimension_numbers = #tpu.dot_dimension_numbers<[1], [0], [0], [1], [0, 0, 1, 1], [], []>} : vector<328x128xbf16>, vector<128x128xbf16>, vector<328x128xf32> -> vector<328x128xf32>
    %57 = arith.addf %50, %56 : vector<328x128xf32>
    %c0_45 = arith.constant 0 : index
    %c43 = arith.constant 43 : index
    %c0_46 = arith.constant 0 : index
    %58 = vector.load %arg1[%c0_45, %c43, %c0_46] : memref<1x376x128xf32, #tpu.memory_space<vmem>>, vector<1x328x128xf32>
    %59 = vector.shape_cast %58 : vector<1x328x128xf32> to vector<328x128xf32>
    %60 = arith.truncf %59 : vector<328x128xf32> to vector<328x128xbf16>
    %c8 = arith.constant 8 : index
    %c0_47 = arith.constant 0 : index
    %c0_48 = arith.constant 0 : index
    %61 = vector.load %arg4[%c8, %c0_47, %c0_48] : memref<9x128x128xbf16, #tpu.memory_space<vmem>>, vector<1x128x128xbf16>
    %62 = vector.shape_cast %61 : vector<1x128x128xbf16> to vector<128x128xbf16>
    %cst_49 = arith.constant dense<0.000000e+00> : vector<328x128xf32>
    %63 = tpu.matmul %60, %62, %cst_49 {dimension_numbers = #tpu.dot_dimension_numbers<[1], [0], [0], [1], [0, 0, 1, 1], [], []>} : vector<328x128xbf16>, vector<128x128xbf16>, vector<328x128xf32> -> vector<328x128xf32>
    %64 = arith.addf %57, %63 : vector<328x128xf32>
    %c0_50 = arith.constant 0 : index
    %c0_51 = arith.constant 0 : index
    %65 = vector.load %arg5[%c0_50, %c0_51] : memref<1x128xf32, #tpu.memory_space<vmem>>, vector<1x128xf32>
    %66 = vector.broadcast %65 : vector<1x128xf32> to vector<328x128xf32>
    %67 = arith.addf %64, %66 : vector<328x128xf32>
    %cst_52 = arith.constant 0.000000e+00 : f32
    %68 = vector.broadcast %cst_52 : f32 to vector<328x128xf32>
    %69 = arith.maximumf %67, %68 : vector<328x128xf32>
    %70 = arith.mulf %69, %0 : vector<328x128xf32>
    %c0_53 = arith.constant 0 : index
    %c24_54 = arith.constant 24 : index
    %c0_55 = arith.constant 0 : index
    %71 = vector.load %arg2[%c0_53, %c24_54, %c0_55] : memref<1x376x128xf32, #tpu.memory_space<vmem>>, vector<1x328x128xf32>
    %72 = vector.shape_cast %71 : vector<1x328x128xf32> to vector<328x128xf32>
    %cst_56 = arith.constant dense<0.000000e+00> : vector<128xf32>
    %73 = vector.multi_reduction <add>, %70, %cst_56 [0] : vector<328x128xf32> to vector<128xf32>
    %74 = vector.shape_cast %73 : vector<128xf32> to vector<1x128xf32>
    %c0_57 = arith.constant 0 : index
    %c0_58 = arith.constant 0 : index
    %c0_59 = arith.constant 0 : index
    %75 = vector.load %arg7[%c0_57, %c0_58, %c0_59] : memref<1x8x128xf32, #tpu.memory_space<vmem>>, vector<1x1x128xf32>
    %76 = vector.shape_cast %75 : vector<1x1x128xf32> to vector<1x128xf32>
    %77 = vector.shape_cast %74 : vector<1x128xf32> to vector<1x1x128xf32>
    tpu.vector_store %arg7[%c0_57, %c0_58, %c0_59], %77 {strides = array<i32>} : memref<1x8x128xf32, #tpu.memory_space<vmem>>, vector<1x1x128xf32>,
    %78 = arith.mulf %70, %70 : vector<328x128xf32>
    %cst_60 = arith.constant dense<0.000000e+00> : vector<128xf32>
    %79 = vector.multi_reduction <add>, %78, %cst_60 [0] : vector<328x128xf32> to vector<128xf32>
    %80 = vector.shape_cast %79 : vector<128xf32> to vector<1x128xf32>
    %c0_61 = arith.constant 0 : index
    %c1_62 = arith.constant 1 : index
    %c0_63 = arith.constant 0 : index
    %81 = vector.load %arg7[%c0_61, %c1_62, %c0_63] : memref<1x8x128xf32, #tpu.memory_space<vmem>>, vector<1x1x128xf32>
    %82 = vector.shape_cast %81 : vector<1x1x128xf32> to vector<1x128xf32>
    %83 = vector.shape_cast %80 : vector<1x128xf32> to vector<1x1x128xf32>
    tpu.vector_store %arg7[%c0_61, %c1_62, %c0_63], %83 {strides = array<i32>} : memref<1x8x128xf32, #tpu.memory_space<vmem>>, vector<1x1x128xf32>,
    %cst_64 = arith.constant dense<0.000000e+00> : vector<128xf32>
    %84 = vector.multi_reduction <add>, %72, %cst_64 [0] : vector<328x128xf32> to vector<128xf32>
    %85 = vector.shape_cast %84 : vector<128xf32> to vector<1x128xf32>
    %c0_65 = arith.constant 0 : index
    %c2_66 = arith.constant 2 : index
    %c0_67 = arith.constant 0 : index
    %86 = vector.load %arg7[%c0_65, %c2_66, %c0_67] : memref<1x8x128xf32, #tpu.memory_space<vmem>>, vector<1x1x128xf32>
    %87 = vector.shape_cast %86 : vector<1x1x128xf32> to vector<1x128xf32>
    %88 = vector.shape_cast %85 : vector<1x128xf32> to vector<1x1x128xf32>
    tpu.vector_store %arg7[%c0_65, %c2_66, %c0_67], %88 {strides = array<i32>} : memref<1x8x128xf32, #tpu.memory_space<vmem>>, vector<1x1x128xf32>,
    %89 = arith.mulf %72, %72 : vector<328x128xf32>
    %cst_68 = arith.constant dense<0.000000e+00> : vector<128xf32>
    %90 = vector.multi_reduction <add>, %89, %cst_68 [0] : vector<328x128xf32> to vector<128xf32>
    %91 = vector.shape_cast %90 : vector<128xf32> to vector<1x128xf32>
    %c0_69 = arith.constant 0 : index
    %c3_70 = arith.constant 3 : index
    %c0_71 = arith.constant 0 : index
    %92 = vector.load %arg7[%c0_69, %c3_70, %c0_71] : memref<1x8x128xf32, #tpu.memory_space<vmem>>, vector<1x1x128xf32>
    %93 = vector.shape_cast %92 : vector<1x1x128xf32> to vector<1x128xf32>
    %94 = vector.shape_cast %91 : vector<1x128xf32> to vector<1x1x128xf32>
    tpu.vector_store %arg7[%c0_69, %c3_70, %c0_71], %94 {strides = array<i32>} : memref<1x8x128xf32, #tpu.memory_space<vmem>>, vector<1x1x128xf32>,
    %95 = arith.mulf %70, %72 : vector<328x128xf32>
    %cst_72 = arith.constant dense<0.000000e+00> : vector<128xf32>
    %96 = vector.multi_reduction <add>, %95, %cst_72 [0] : vector<328x128xf32> to vector<128xf32>
    %97 = vector.shape_cast %96 : vector<128xf32> to vector<1x128xf32>
    %c0_73 = arith.constant 0 : index
    %c4_74 = arith.constant 4 : index
    %c0_75 = arith.constant 0 : index
    %98 = vector.load %arg7[%c0_73, %c4_74, %c0_75] : memref<1x8x128xf32, #tpu.memory_space<vmem>>, vector<1x1x128xf32>
    %99 = vector.shape_cast %98 : vector<1x1x128xf32> to vector<1x128xf32>
    %100 = vector.shape_cast %97 : vector<1x128xf32> to vector<1x1x128xf32>
    tpu.vector_store %arg7[%c0_73, %c4_74, %c0_75], %100 {strides = array<i32>} : memref<1x8x128xf32, #tpu.memory_space<vmem>>, vector<1x1x128xf32>,
    %cst_76 = arith.constant 0.000000e+00 : f32
    %101 = vector.broadcast %cst_76 : f32 to vector<3x128xf32>
    %c0_77 = arith.constant 0 : index
    %c5_78 = arith.constant 5 : index
    %c0_79 = arith.constant 0 : index
    %102 = vector.load %arg7[%c0_77, %c5_78, %c0_79] : memref<1x8x128xf32, #tpu.memory_space<vmem>>, vector<1x3x128xf32>
    %103 = vector.shape_cast %102 : vector<1x3x128xf32> to vector<3x128xf32>
    %104 = vector.shape_cast %101 : vector<3x128xf32> to vector<1x3x128xf32>
    tpu.vector_store %arg7[%c0_77, %c5_78, %c0_79], %104 {strides = array<i32>} : memref<1x8x128xf32, #tpu.memory_space<vmem>>, vector<1x3x128xf32>,
    %cst_80 = arith.constant 0.000000e+00 : f32
    %105 = vector.broadcast %cst_80 : f32 to vector<24x128xf32>
    %c0_81 = arith.constant 0 : index
    %c0_82 = arith.constant 0 : index
    %c0_83 = arith.constant 0 : index
    %106 = vector.load %arg6[%c0_81, %c0_82, %c0_83] : memref<1x376x128xf32, #tpu.memory_space<vmem>>, vector<1x24x128xf32>
    %107 = vector.shape_cast %106 : vector<1x24x128xf32> to vector<24x128xf32>
    %108 = vector.shape_cast %105 : vector<24x128xf32> to vector<1x24x128xf32>
    tpu.vector_store %arg6[%c0_81, %c0_82, %c0_83], %108 {strides = array<i32>} : memref<1x376x128xf32, #tpu.memory_space<vmem>>, vector<1x24x128xf32>,
    %c0_84 = arith.constant 0 : index
    %c24_85 = arith.constant 24 : index
    %c0_86 = arith.constant 0 : index
    %109 = vector.load %arg6[%c0_84, %c24_85, %c0_86] : memref<1x376x128xf32, #tpu.memory_space<vmem>>, vector<1x328x128xf32>
    %110 = vector.shape_cast %109 : vector<1x328x128xf32> to vector<328x128xf32>
    %111 = vector.shape_cast %70 : vector<328x128xf32> to vector<1x328x128xf32>
    tpu.vector_store %arg6[%c0_84, %c24_85, %c0_86], %111 {strides = array<i32>} : memref<1x376x128xf32, #tpu.memory_space<vmem>>, vector<1x328x128xf32>,
    %cst_87 = arith.constant 0.000000e+00 : f32
    %112 = vector.broadcast %cst_87 : f32 to vector<24x128xf32>
    %c0_88 = arith.constant 0 : index
    %c352 = arith.constant 352 : index
    %c0_89 = arith.constant 0 : index
    %113 = vector.load %arg6[%c0_88, %c352, %c0_89] : memref<1x376x128xf32, #tpu.memory_space<vmem>>, vector<1x24x128xf32>
    %114 = vector.shape_cast %113 : vector<1x24x128xf32> to vector<24x128xf32>
    %115 = vector.shape_cast %112 : vector<24x128xf32> to vector<1x24x128xf32>
    tpu.vector_store %arg6[%c0_88, %c352, %c0_89], %115 {strides = array<i32>} : memref<1x376x128xf32, #tpu.memory_space<vmem>>, vector<1x24x128xf32>,
    return
  }
  func.func @transform_0(%arg0: i32) -> (i32, i32, i32) {
    %c0_i32 = arith.constant 0 : i32
    %c0_i32_0 = arith.constant 0 : i32
    %c0_i32_1 = arith.constant 0 : i32
    return %arg0, %c0_i32, %c0_i32_0 : i32, i32, i32
  }
  func.func @transform_1(%arg0: i32) -> (i32, i32, i32) {
    %c0_i32 = arith.constant 0 : i32
    %c0_i32_0 = arith.constant 0 : i32
    %c0_i32_1 = arith.constant 0 : i32
    return %arg0, %c0_i32, %c0_i32_0 : i32, i32, i32
  }
  func.func @transform_2(%arg0: i32) -> (i32, i32) {
    %c0_i32 = arith.constant 0 : i32
    %c0_i32_0 = arith.constant 0 : i32
    %c0_i32_1 = arith.constant 0 : i32
    return %c0_i32, %c0_i32_0 : i32, i32
  }
  func.func @transform_3(%arg0: i32) -> (i32, i32, i32) {
    %c0_i32 = arith.constant 0 : i32
    %c0_i32_0 = arith.constant 0 : i32
    %c0_i32_1 = arith.constant 0 : i32
    %c0_i32_2 = arith.constant 0 : i32
    return %c0_i32, %c0_i32_0, %c0_i32_1 : i32, i32, i32
  }
  func.func @transform_4(%arg0: i32) -> (i32, i32) {
    %c0_i32 = arith.constant 0 : i32
    %c0_i32_0 = arith.constant 0 : i32
    %c0_i32_1 = arith.constant 0 : i32
    return %c0_i32, %c0_i32_0 : i32, i32
  }
  func.func @transform_5(%arg0: i32) -> (i32, i32, i32) {
    %c0_i32 = arith.constant 0 : i32
    %c0_i32_0 = arith.constant 0 : i32
    %c0_i32_1 = arith.constant 0 : i32
    return %arg0, %c0_i32, %c0_i32_0 : i32, i32, i32
  }
  func.func @transform_6(%arg0: i32) -> (i32, i32, i32) {
    %c0_i32 = arith.constant 0 : i32
    %c0_i32_0 = arith.constant 0 : i32
    %c0_i32_1 = arith.constant 0 : i32
    return %arg0, %c0_i32, %c0_i32_0 : i32, i32, i32
  }
}

module attributes {stable_mosaic.version = 11 : i64} {
  func.func @_stage3_kernel(%arg0: i32, %arg1: memref<1x376x128xf32, #tpu.memory_space<vmem>>, %arg2: memref<1x376x128xf32, #tpu.memory_space<vmem>>, %arg3: memref<1x128xf32, #tpu.memory_space<vmem>>, %arg4: memref<1x128xf32, #tpu.memory_space<vmem>>, %arg5: memref<1x128xf32, #tpu.memory_space<vmem>>, %arg6: memref<1x376x128xf32, #tpu.memory_space<vmem>>) attributes {dimension_semantics = [#tpu.dimension_semantics<parallel>], iteration_bounds = array<i64: 2>, scalar_prefetch = 0 : i64, scratch_operands = 0 : i64, tpu.core_type = #tpu.core_type<tc>, window_params = [{transform_indices = @transform_0, window_bounds = array<i64: 1, 376, 128>}, {transform_indices = @transform_1, window_bounds = array<i64: 1, 376, 128>}, {pipeline_mode = #tpu.pipeline_mode<synchronous>, transform_indices = @transform_2, window_bounds = array<i64: 1, 128>}, {pipeline_mode = #tpu.pipeline_mode<synchronous>, transform_indices = @transform_3, window_bounds = array<i64: 1, 128>}, {pipeline_mode = #tpu.pipeline_mode<synchronous>, transform_indices = @transform_4, window_bounds = array<i64: 1, 128>}, {transform_indices = @transform_5, window_bounds = array<i64: 1, 376, 128>}]} {
    %c0 = arith.constant 0 : index
    %c0_0 = arith.constant 0 : index
    %0 = vector.load %arg3[%c0, %c0_0] : memref<1x128xf32, #tpu.memory_space<vmem>>, vector<1x128xf32>
    %c0_1 = arith.constant 0 : index
    %c0_2 = arith.constant 0 : index
    %c0_3 = arith.constant 0 : index
    %1 = vector.load %arg1[%c0_1, %c0_2, %c0_3] : memref<1x376x128xf32, #tpu.memory_space<vmem>>, vector<1x376x128xf32>
    %2 = vector.shape_cast %1 : vector<1x376x128xf32> to vector<376x128xf32>
    %3 = vector.broadcast %0 : vector<1x128xf32> to vector<376x128xf32>
    %4 = arith.mulf %3, %2 : vector<376x128xf32>
    %c0_4 = arith.constant 0 : index
    %c0_5 = arith.constant 0 : index
    %5 = vector.load %arg4[%c0_4, %c0_5] : memref<1x128xf32, #tpu.memory_space<vmem>>, vector<1x128xf32>
    %c0_6 = arith.constant 0 : index
    %c0_7 = arith.constant 0 : index
    %c0_8 = arith.constant 0 : index
    %6 = vector.load %arg2[%c0_6, %c0_7, %c0_8] : memref<1x376x128xf32, #tpu.memory_space<vmem>>, vector<1x376x128xf32>
    %7 = vector.shape_cast %6 : vector<1x376x128xf32> to vector<376x128xf32>
    %8 = vector.broadcast %5 : vector<1x128xf32> to vector<376x128xf32>
    %9 = arith.mulf %8, %7 : vector<376x128xf32>
    %10 = arith.addf %4, %9 : vector<376x128xf32>
    %c0_9 = arith.constant 0 : index
    %c0_10 = arith.constant 0 : index
    %11 = vector.load %arg5[%c0_9, %c0_10] : memref<1x128xf32, #tpu.memory_space<vmem>>, vector<1x128xf32>
    %12 = vector.broadcast %11 : vector<1x128xf32> to vector<376x128xf32>
    %13 = arith.addf %10, %12 : vector<376x128xf32>
    %c0_11 = arith.constant 0 : index
    %c0_12 = arith.constant 0 : index
    %c0_13 = arith.constant 0 : index
    %14 = vector.load %arg6[%c0_11, %c0_12, %c0_13] : memref<1x376x128xf32, #tpu.memory_space<vmem>>, vector<1x376x128xf32>
    %15 = vector.shape_cast %14 : vector<1x376x128xf32> to vector<376x128xf32>
    %16 = vector.shape_cast %13 : vector<376x128xf32> to vector<1x376x128xf32>
    tpu.vector_store %arg6[%c0_11, %c0_12, %c0_13], %16 {strides = array<i32>} : memref<1x376x128xf32, #tpu.memory_space<vmem>>, vector<1x376x128xf32>,
    return
  }
  func.func @transform_0(%arg0: i32) -> (i32, i32, i32) {
    %c0_i32 = arith.constant 0 : i32
    %c0_i32_0 = arith.constant 0 : i32
    %c0_i32_1 = arith.constant 0 : i32
    return %arg0, %c0_i32, %c0_i32_0 : i32, i32, i32
  }
  func.func @transform_1(%arg0: i32) -> (i32, i32, i32) {
    %c0_i32 = arith.constant 0 : i32
    %c0_i32_0 = arith.constant 0 : i32
    %c0_i32_1 = arith.constant 0 : i32
    return %arg0, %c0_i32, %c0_i32_0 : i32, i32, i32
  }
  func.func @transform_2(%arg0: i32) -> (i32, i32) {
    %c0_i32 = arith.constant 0 : i32
    %c0_i32_0 = arith.constant 0 : i32
    %c0_i32_1 = arith.constant 0 : i32
    return %c0_i32, %c0_i32_0 : i32, i32
  }
  func.func @transform_3(%arg0: i32) -> (i32, i32) {
    %c0_i32 = arith.constant 0 : i32
    %c0_i32_0 = arith.constant 0 : i32
    %c0_i32_1 = arith.constant 0 : i32
    return %c0_i32, %c0_i32_0 : i32, i32
  }
  func.func @transform_4(%arg0: i32) -> (i32, i32) {
    %c0_i32 = arith.constant 0 : i32
    %c0_i32_0 = arith.constant 0 : i32
    %c0_i32_1 = arith.constant 0 : i32
    return %c0_i32, %c0_i32_0 : i32, i32
  }
  func.func @transform_5(%arg0: i32) -> (i32, i32, i32) {
    %c0_i32 = arith.constant 0 : i32
    %c0_i32_0 = arith.constant 0 : i32
    %c0_i32_1 = arith.constant 0 : i32
    return %arg0, %c0_i32, %c0_i32_0 : i32, i32, i32
  }
}

</mosaic_0001>

<llo_original>
// kernel: mul.31
$region0: #{mul.31}
  #allocation0 [shape = 's32[1]{0}', space=sflag, size = 0x4, scoped, tag = 'scoped memory for mul.31']
  %s0 = inlined_call_operand.vmem [shape: f32[328], index: 0, kind: input, shape index: {}]
  %s1 = inlined_call_operand.vmem [shape: f32[328,128], index: 1, kind: output, shape index: {}]
  // Predicated region
  $region2: #{mul.31} parent=0 // pred_check
    _
  $region3: #{mul.31} parent=0 // pred_check_branch
    %3 = sbr.rel (0) target = $region5
  $region4: #{mul.31} parent=0 // pred_region
    _
  $region5: #{mul.31} parent=0 // pred_fallthru
    _
  %v4 = vld [vmem:[%s0] ss:$0 sm:$0xff]
  %6 = vbcast.lane.b32.xlu0 %v4, 256
  %v7 = vpop.permute.xlu0 %6
  %8 = vst [vmem:[%s1] sm:$0xff] %v7
  %v9 = vld [vmem:[%s0] ss:$0 sm:$0xff]
  %s11 = sor.u32 256, 8
  %12 = vbcast.lane.b32.xlu0 %v9, %s11
  %v13 = vpop.permute.xlu0 %12
  %s14 = scalar_lea.vmem %s1, 8
  %15 = vst [vmem:[%s14] sm:$0xff] %v13
  %v16 = vld [vmem:[%s0] ss:$0 sm:$0xff]
  %s18 = sor.u32 256, 16
  %19 = vbcast.lane.b32.xlu0 %v16, %s18
  %v20 = vpop.permute.xlu0 %19
  %s21 = scalar_lea.vmem %s1, 16
  %22 = vst [vmem:[%s21] sm:$0xff] %v20
  %v23 = vld [vmem:[%s0] ss:$0 sm:$0xff]
  %s25 = sor.u32 256, 24
  %26 = vbcast.lane.b32.xlu0 %v23, %s25
  %v27 = vpop.permute.xlu0 %26
  %s28 = scalar_lea.vmem %s1, 24
  %29 = vst [vmem:[%s28] sm:$0xff] %v27
  %v30 = vld [vmem:[%s0] ss:$0 sm:$0xff]
  %s32 = sor.u32 256, 32
  %33 = vbcast.lane.b32.xlu0 %v30, %s32
  %v34 = vpop.permute.xlu0 %33
  %s35 = scalar_lea.vmem %s1, 32
  %36 = vst [vmem:[%s35] sm:$0xff] %v34
  %v37 = vld [vmem:[%s0] ss:$0 sm:$0xff]
  %s39 = sor.u32 256, 40
  %40 = vbcast.lane.b32.xlu0 %v37, %s39
  %v41 = vpop.permute.xlu0 %40
  %s42 = scalar_lea.vmem %s1, 40
  %43 = vst [vmem:[%s42] sm:$0xff] %v41
  %v44 = vld [vmem:[%s0] ss:$0 sm:$0xff]
  %s46 = sor.u32 256, 48
  %47 = vbcast.lane.b32.xlu0 %v44, %s46
  %v48 = vpop.permute.xlu0 %47
  %s49 = scalar_lea.vmem %s1, 48
  %50 = vst [vmem:[%s49] sm:$0xff] %v48
  %v51 = vld [vmem:[%s0] ss:$0 sm:$0xff]
  %s53 = sor.u32 256, 56
  %54 = vbcast.lane.b32.xlu0 %v51, %s53
  %v55 = vpop.permute.xlu0 %54
  %s56 = scalar_lea.vmem %s1, 56
  %57 = vst [vmem:[%s56] sm:$0xff] %v55
  %v58 = vld [vmem:[%s0] ss:$0 sm:$0xff]
  %s60 = sor.u32 256, 64
  %61 = vbcast.lane.b32.xlu0 %v58, %s60
  %v62 = vpop.permute.xlu0 %61
  %s63 = scalar_lea.vmem %s1, 64
  %64 = vst [vmem:[%s63] sm:$0xff] %v62
  %v65 = vld [vmem:[%s0] ss:$0 sm:$0xff]
  %s67 = sor.u32 256, 72
  %68 = vbcast.lane.b32.xlu0 %v65, %s67
  %v69 = vpop.permute.xlu0 %68
  %s70 = scalar_lea.vmem %s1, 72
  %71 = vst [vmem:[%s70] sm:$0xff] %v69
  %v72 = vld [vmem:[%s0] ss:$0 sm:$0xff]
  %s74 = sor.u32 256, 80
  %75 = vbcast.lane.b32.xlu0 %v72, %s74
  %v76 = vpop.permute.xlu0 %75
  %s77 = scalar_lea.vmem %s1, 80
  %78 = vst [vmem:[%s77] sm:$0xff] %v76
  %v79 = vld [vmem:[%s0] ss:$0 sm:$0xff]
  %s81 = sor.u32 256, 88
  %82 = vbcast.lane.b32.xlu0 %v79, %s81
  %v83 = vpop.permute.xlu0 %82
  %s84 = scalar_lea.vmem %s1, 88
  %85 = vst [vmem:[%s84] sm:$0xff] %v83
  %v86 = vld [vmem:[%s0] ss:$0 sm:$0xff]
  %s88 = sor.u32 256, 96
  %89 = vbcast.lane.b32.xlu0 %v86, %s88
  %v90 = vpop.permute.xlu0 %89
  %s91 = scalar_lea.vmem %s1, 96
  %92 = vst [vmem:[%s91] sm:$0xff] %v90
  %v93 = vld [vmem:[%s0] ss:$0 sm:$0xff]
  %s95 = sor.u32 256, 104
  %96 = vbcast.lane.b32.xlu0 %v93, %s95
  %v97 = vpop.permute.xlu0 %96
  %s98 = scalar_lea.vmem %s1, 104
  %99 = vst [vmem:[%s98] sm:$0xff] %v97
  %v100 = vld [vmem:[%s0] ss:$0 sm:$0xff]
  %s102 = sor.u32 256, 112
  %103 = vbcast.lane.b32.xlu0 %v100, %s102
  %v104 = vpop.permute.xlu0 %103
  %s105 = scalar_lea.vmem %s1, 112
  %106 = vst [vmem:[%s105] sm:$0xff] %v104
  %v107 = vld [vmem:[%s0] ss:$0 sm:$0xff]
  %s109 = sor.u32 256, 120
  %110 = vbcast.lane.b32.xlu0 %v107, %s109
  %v111 = vpop.permute.xlu0 %110
  %s112 = scalar_lea.vmem %s1, 120
  %113 = vst [vmem:[%s112] sm:$0xff] %v111
  %s114 = scalar_lea.vmem %s0, 1
  %v115 = vld [vmem:[%s114] ss:$0 sm:$0xff]
  %117 = vbcast.lane.b32.xlu0 %v115, 256
  %v118 = vpop.permute.xlu0 %117
  %s119 = scalar_lea.vmem %s1, 128
  %120 = vst [vmem:[%s119] sm:$0xff] %v118
  %s121 = scalar_lea.vmem %s0, 1
  %v122 = vld [vmem:[%s121] ss:$0 sm:$0xff]
  %s124 = sor.u32 256, 8
  %125 = vbcast.lane.b32.xlu0 %v122, %s124
  %v126 = vpop.permute.xlu0 %125
  %s127 = scalar_lea.vmem %s1, 136
  %128 = vst [vmem:[%s127] sm:$0xff] %v126
  %s129 = scalar_lea.vmem %s0, 1
  %v130 = vld [vmem:[%s129] ss:$0 sm:$0xff]
  %s132 = sor.u32 256, 16
  %133 = vbcast.lane.b32.xlu0 %v130, %s132
  %v134 = vpop.permute.xlu0 %133
  %s135 = scalar_lea.vmem %s1, 144
  %136 = vst [vmem:[%s135] sm:$0xff] %v134
  %s137 = scalar_lea.vmem %s0, 1
  %v138 = vld [vmem:[%s137] ss:$0 sm:$0xff]
  %s140 = sor.u32 256, 24
  %141 = vbcast.lane.b32.xlu0 %v138, %s140
  %v142 = vpop.permute.xlu0 %141
  %s143 = scalar_lea.vmem %s1, 152
  %144 = vst [vmem:[%s143] sm:$0xff] %v142
  %s145 = scalar_lea.vmem %s0, 1
  %v146 = vld [vmem:[%s145] ss:$0 sm:$0xff]
  %s148 = sor.u32 256, 32
  %149 = vbcast.lane.b32.xlu0 %v146, %s148
  %v150 = vpop.permute.xlu0 %149
  %s151 = scalar_lea.vmem %s1, 160
  %152 = vst [vmem:[%s151] sm:$0xff] %v150
  %s153 = scalar_lea.vmem %s0, 1
  %v154 = vld [vmem:[%s153] ss:$0 sm:$0xff]
  %s156 = sor.u32 256, 40
  %157 = vbcast.lane.b32.xlu0 %v154, %s156
  %v158 = vpop.permute.xlu0 %157
  %s159 = scalar_lea.vmem %s1, 168
  %160 = vst [vmem:[%s159] sm:$0xff] %v158
  %s161 = scalar_lea.vmem %s0, 1
  %v162 = vld [vmem:[%s161] ss:$0 sm:$0xff]
  %s164 = sor.u32 256, 48
  %165 = vbcast.lane.b32.xlu0 %v162, %s164
  %v166 = vpop.permute.xlu0 %165
  %s167 = scalar_lea.vmem %s1, 176
  %168 = vst [vmem:[%s167] sm:$0xff] %v166
  %s169 = scalar_lea.vmem %s0, 1
  %v170 = vld [vmem:[%s169] ss:$0 sm:$0xff]
  %s172 = sor.u32 256, 56
  %173 = vbcast.lane.b32.xlu0 %v170, %s172
  %v174 = vpop.permute.xlu0 %173
  %s175 = scalar_lea.vmem %s1, 184
  %176 = vst [vmem:[%s175] sm:$0xff] %v174
  %s177 = scalar_lea.vmem %s0, 1
  %v178 = vld [vmem:[%s177] ss:$0 sm:$0xff]
  %s180 = sor.u32 256, 64
  %181 = vbcast.lane.b32.xlu0 %v178, %s180
  %v182 = vpop.permute.xlu0 %181
  %s183 = scalar_lea.vmem %s1, 192
  %184 = vst [vmem:[%s183] sm:$0xff] %v182
  %s185 = scalar_lea.vmem %s0, 1
  %v186 = vld [vmem:[%s185] ss:$0 sm:$0xff]
  %s188 = sor.u32 256, 72
  %189 = vbcast.lane.b32.xlu0 %v186, %s188
  %v190 = vpop.permute.xlu0 %189
  %s191 = scalar_lea.vmem %s1, 200
  %192 = vst [vmem:[%s191] sm:$0xff] %v190
  %s193 = scalar_lea.vmem %s0, 1
  %v194 = vld [vmem:[%s193] ss:$0 sm:$0xff]
  %s196 = sor.u32 256, 80
  %197 = vbcast.lane.b32.xlu0 %v194, %s196
  %v198 = vpop.permute.xlu0 %197
  %s199 = scalar_lea.vmem %s1, 208
  %200 = vst [vmem:[%s199] sm:$0xff] %v198
  %s201 = scalar_lea.vmem %s0, 1
  %v202 = vld [vmem:[%s201] ss:$0 sm:$0xff]
  %s204 = sor.u32 256, 88
  %205 = vbcast.lane.b32.xlu0 %v202, %s204
  %v206 = vpop.permute.xlu0 %205
  %s207 = scalar_lea.vmem %s1, 216
  %208 = vst [vmem:[%s207] sm:$0xff] %v206
  %s209 = scalar_lea.vmem %s0, 1
  %v210 = vld [vmem:[%s209] ss:$0 sm:$0xff]
  %s212 = sor.u32 256, 96
  %213 = vbcast.lane.b32.xlu0 %v210, %s212
  %v214 = vpop.permute.xlu0 %213
  %s215 = scalar_lea.vmem %s1, 224
  %216 = vst [vmem:[%s215] sm:$0xff] %v214
  %s217 = scalar_lea.vmem %s0, 1
  %v218 = vld [vmem:[%s217] ss:$0 sm:$0xff]
  %s220 = sor.u32 256, 104
  %221 = vbcast.lane.b32.xlu0 %v218, %s220
  %v222 = vpop.permute.xlu0 %221
  %s223 = scalar_lea.vmem %s1, 232
  %224 = vst [vmem:[%s223] sm:$0xff] %v222
  %s225 = scalar_lea.vmem %s0, 1
  %v226 = vld [vmem:[%s225] ss:$0 sm:$0xff]
  %s228 = sor.u32 256, 112
  %229 = vbcast.lane.b32.xlu0 %v226, %s228
  %v230 = vpop.permute.xlu0 %229
  %s231 = scalar_lea.vmem %s1, 240
  %232 = vst [vmem:[%s231] sm:$0xff] %v230
  %s233 = scalar_lea.vmem %s0, 1
  %v234 = vld [vmem:[%s233] ss:$0 sm:$0xff]
  %s236 = sor.u32 256, 120
  %237 = vbcast.lane.b32.xlu0 %v234, %s236
  %v238 = vpop.permute.xlu0 %237
  %s239 = scalar_lea.vmem %s1, 248
  %240 = vst [vmem:[%s239] sm:$0xff] %v238
  %s241 = scalar_lea.vmem %s0, 2
  %v242 = vld [vmem:[%s241] ss:$0 sm:$0xff]
  %244 = vbcast.lane.b32.xlu0 %v242, 256
  %v245 = vpop.permute.xlu0 %244
  %s246 = scalar_lea.vmem %s1, 256
  %247 = vst [vmem:[%s246] sm:$0xff] %v245
  %s248 = scalar_lea.vmem %s0, 2
  %v249 = vld [vmem:[%s248] ss:$0 sm:$0xff]
  %s251 = sor.u32 256, 8
  %252 = vbcast.lane.b32.xlu0 %v249, %s251
  %v253 = vpop.permute.xlu0 %252
  %s254 = scalar_lea.vmem %s1, 264
  %255 = vst [vmem:[%s254] sm:$0xff] %v253
  %s256 = scalar_lea.vmem %s0, 2
  %v257 = vld [vmem:[%s256] ss:$0 sm:$0xff]
  %s259 = sor.u32 256, 16
  %260 = vbcast.lane.b32.xlu0 %v257, %s259
  %v261 = vpop.permute.xlu0 %260
  %s262 = scalar_lea.vmem %s1, 272
  %263 = vst [vmem:[%s262] sm:$0xff] %v261
  %s264 = scalar_lea.vmem %s0, 2
  %v265 = vld [vmem:[%s264] ss:$0 sm:$0xff]
  %s267 = sor.u32 256, 24
  %268 = vbcast.lane.b32.xlu0 %v265, %s267
  %v269 = vpop.permute.xlu0 %268
  %s270 = scalar_lea.vmem %s1, 280
  %271 = vst [vmem:[%s270] sm:$0xff] %v269
  %s272 = scalar_lea.vmem %s0, 2
  %v273 = vld [vmem:[%s272] ss:$0 sm:$0xff]
  %s275 = sor.u32 256, 32
  %276 = vbcast.lane.b32.xlu0 %v273, %s275
  %v277 = vpop.permute.xlu0 %276
  %s278 = scalar_lea.vmem %s1, 288
  %279 = vst [vmem:[%s278] sm:$0xff] %v277
  %s280 = scalar_lea.vmem %s0, 2
  %v281 = vld [vmem:[%s280] ss:$0 sm:$0xff]
  %s283 = sor.u32 256, 40
  %284 = vbcast.lane.b32.xlu0 %v281, %s283
  %v285 = vpop.permute.xlu0 %284
  %s286 = scalar_lea.vmem %s1, 296
  %287 = vst [vmem:[%s286] sm:$0xff] %v285
  %s288 = scalar_lea.vmem %s0, 2
  %v289 = vld [vmem:[%s288] ss:$0 sm:$0xff]
  %s291 = sor.u32 256, 48
  %292 = vbcast.lane.b32.xlu0 %v289, %s291
  %v293 = vpop.permute.xlu0 %292
  %s294 = scalar_lea.vmem %s1, 304
  %295 = vst [vmem:[%s294] sm:$0xff] %v293
  %s296 = scalar_lea.vmem %s0, 2
  %v297 = vld [vmem:[%s296] ss:$0 sm:$0xff]
  %s299 = sor.u32 256, 56
  %300 = vbcast.lane.b32.xlu0 %v297, %s299
  %v301 = vpop.permute.xlu0 %300
  %s302 = scalar_lea.vmem %s1, 312
  %303 = vst [vmem:[%s302] sm:$0xff] %v301
  %s304 = scalar_lea.vmem %s0, 2
  %v305 = vld [vmem:[%s304] ss:$0 sm:$0xff]
  %s307 = sor.u32 256, 64
  %308 = vbcast.lane.b32.xlu0 %v305, %s307
  %v309 = vpop.permute.xlu0 %308
  %s310 = scalar_lea.vmem %s1, 320
  %311 = vst [vmem:[%s310] sm:$0xff] %v309

// kernel: residual_block_forward.5
$region0: #{residual_block_forward.5}
  #allocation0 [shape = 'u32[]', space=smem, size = 0x4, offset = 0x4, fixed_abs, tag = 'smem constant byte address 0x4 - core index']
  #allocation1 [shape = 'u32[144,128]{1,0:T(1,128)}', space=vmem, size = 0x12000, scoped, tag = 'internal scratch']
  %s0 = inlined_call_operand.vmem [shape: f32[2,376,128], index: 0, kind: input, shape index: {}]
  %s1 = inlined_call_operand.vmem [shape: f32[2,376,128], index: 1, kind: input, shape index: {}]
  %s2 = inlined_call_operand.vmem [shape: f32[1,128], index: 2, kind: input, shape index: {}]
  %s3 = inlined_call_operand.vmem [shape: f32[1,128], index: 3, kind: input, shape index: {}]
  %s4 = inlined_call_operand.vmem [shape: f32[1,128], index: 4, kind: input, shape index: {}]
  %s5 = inlined_call_operand.vmem [shape: f32[2,376,128], index: 5, kind: output, shape index: {}]
  %s6 = sld [smem:[#allocation0]]
  $region53: #{residual_block_forward.5} parent=0
    _
  %s8 = ssub.s32 1, %s6
  %s9 = scalar_select 0, %s8, %s6
  loop: start=0, step=1, limit=4
  $region2: #{residual_block_forward.5} parent=0 // loop_pre_header
    _
  $region3: #{residual_block_forward.5} parent=0 // loop_header
    %s11 = sphi 0, %s15
    %p12 = scmp.ge.s32.totalorder %s11, 4
    %s21 = sphi 0, %s23
    %s24 = sphi 0, %s21
    %s25 = sphi 0, %s24
    %s41 = sphi 0, %s25
    %s47 = sphi 0, %s49
    %s50 = sphi 0, %s47
    %s51 = sphi 0, %s50
    %s67 = sphi 0, %s51
    %s71 = sphi 0, %s71
    %s73 = sphi 0, %s71
    %s74 = sphi 0, %s73
    %s88 = sphi 0, %s74
    %s92 = sphi 0, %s92
    %s94 = sphi 0, %s92
    %s95 = sphi 0, %s94
    %s109 = sphi 0, %s95
    %s113 = sphi 0, %s113
    %s115 = sphi 0, %s113
    %s116 = sphi 0, %s115
    %s130 = sphi 0, %s116
    %s136 = sphi 0, %s138
    %s139 = sphi 0, %s136
    %s140 = sphi 0, %s139
    %s156 = sphi 0, %s140
  $region4: #{residual_block_forward.5} parent=0 // loop_header_branch
    %14 = sbr.rel (%p12) target = $region8
  $region5: #{residual_block_forward.5} parent=0 // loop_body
    %s16 = ssub.s32 %s11, 1
    %s17 = ssub.s32 %s11, 2
    %s18 = sadd.s32 %s11, 1
    %s19 = ssub.s32 %s11, %s18
    %p20 = scmp.eq.s32.totalorder %s19, 0
    %s22 = sadd.s32 %s21, 1
    %s23 = scalar_select %p20, %s21, %s22
    %p26 = pneg %p20
    %p27 = scmp.eq.s32.totalorder %s11, 1
    %p28 = por %p26, %p27
    %p29 = scmp.ne.s32.totalorder %s21, %s24
    %p30 = scmp.eq.s32.totalorder %s11, 0
    %p31 = por %p29, %p30
    %p32 = scmp.ne.s32.totalorder %s21, %s24
    %p33 = scmp.eq.s32.totalorder %s16, 1
    %p34 = por %p32, %p33
    %p35 = scmp.ne.s32.totalorder %s24, %s25
    %p36 = scmp.eq.s32.totalorder %s16, 0
    %p37 = por %p35, %p36
    %p38 = scmp.ne.s32.totalorder %s24, %s25
    %p39 = scmp.eq.s32.totalorder %s17, 1
    %p40 = por %p38, %p39
    %p42 = scmp.ne.s32.totalorder %s25, %s41
    %p43 = scmp.eq.s32.totalorder %s17, 0
    %p44 = por %p42, %p43
    %s45 = ssub.s32 %s11, %s18
    %p46 = scmp.eq.s32.totalorder %s45, 0
    %s48 = sadd.s32 %s47, 1
    %s49 = scalar_select %p46, %s47, %s48
    %p52 = pneg %p46
    %p53 = scmp.eq.s32.totalorder %s11, 1
    %p54 = por %p52, %p53
    %p55 = scmp.ne.s32.totalorder %s47, %s50
    %p56 = scmp.eq.s32.totalorder %s11, 0
    %p57 = por %p55, %p56
    %p58 = scmp.ne.s32.totalorder %s47, %s50
    %p59 = scmp.eq.s32.totalorder %s16, 1
    %p60 = por %p58, %p59
    %p61 = scmp.ne.s32.totalorder %s50, %s51
    %p62 = scmp.eq.s32.totalorder %s16, 0
    %p63 = por %p61, %p62
    %p64 = scmp.ne.s32.totalorder %s50, %s51
    %p65 = scmp.eq.s32.totalorder %s17, 1
    %p66 = por %p64, %p65
    %p68 = scmp.ne.s32.totalorder %s51, %s67
    %p69 = scmp.eq.s32.totalorder %s17, 0
    %p70 = por %p68, %p69
    %s72 = sadd.s32 %s71, 1
    %p75 = scmp.eq.s32.totalorder %s11, 1
    %p76 = scmp.ne.s32.totalorder %s71, %s73
    %p77 = scmp.eq.s32.totalorder %s11, 0
    %p78 = por %p76, %p77
    %p79 = scmp.ne.s32.totalorder %s71, %s73
    %p80 = scmp.eq.s32.totalorder %s16, 1
    %p81 = por %p79, %p80
    %p82 = scmp.ne.s32.totalorder %s73, %s74
    %p83 = scmp.eq.s32.totalorder %s16, 0
    %p84 = por %p82, %p83
    %p85 = scmp.ne.s32.totalorder %s73, %s74
    %p86 = scmp.eq.s32.totalorder %s17, 1
    %p87 = por %p85, %p86
    %p89 = scmp.ne.s32.totalorder %s74, %s88
    %p90 = scmp.eq.s32.totalorder %s17, 0
    %p91 = por %p89, %p90
    %s93 = sadd.s32 %s92, 1
    %p96 = scmp.eq.s32.totalorder %s11, 1
    %p97 = scmp.ne.s32.totalorder %s92, %s94
    %p98 = scmp.eq.s32.totalorder %s11, 0
    %p99 = por %p97, %p98
    %p100 = scmp.ne.s32.totalorder %s92, %s94
    %p101 = scmp.eq.s32.totalorder %s16, 1
    %p102 = por %p100, %p101
    %p103 = scmp.ne.s32.totalorder %s94, %s95
    %p104 = scmp.eq.s32.totalorder %s16, 0
    %p105 = por %p103, %p104
    %p106 = scmp.ne.s32.totalorder %s94, %s95
    %p107 = scmp.eq.s32.totalorder %s17, 1
    %p108 = por %p106, %p107
    %p110 = scmp.ne.s32.totalorder %s95, %s109
    %p111 = scmp.eq.s32.totalorder %s17, 0
    %p112 = por %p110, %p111
    %s114 = sadd.s32 %s113, 1
    %p117 = scmp.eq.s32.totalorder %s11, 1
    %p118 = scmp.ne.s32.totalorder %s113, %s115
    %p119 = scmp.eq.s32.totalorder %s11, 0
    %p120 = por %p118, %p119
    %p121 = scmp.ne.s32.totalorder %s113, %s115
    %p122 = scmp.eq.s32.totalorder %s16, 1
    %p123 = por %p121, %p122
    %p124 = scmp.ne.s32.totalorder %s115, %s116
    %p125 = scmp.eq.s32.totalorder %s16, 0
    %p126 = por %p124, %p125
    %p127 = scmp.ne.s32.totalorder %s115, %s116
    %p128 = scmp.eq.s32.totalorder %s17, 1
    %p129 = por %p127, %p128
    %p131 = scmp.ne.s32.totalorder %s116, %s130
    %p132 = scmp.eq.s32.totalorder %s17, 0
    %p133 = por %p131, %p132
    %s134 = ssub.s32 %s11, %s18
    %p135 = scmp.eq.s32.totalorder %s134, 0
    %s137 = sadd.s32 %s136, 1
    %s138 = scalar_select %p135, %s136, %s137
    %p141 = pneg %p135
    %p142 = scmp.eq.s32.totalorder %s11, 1
    %p143 = por %p141, %p142
    %p144 = scmp.ne.s32.totalorder %s136, %s139
    %p145 = scmp.eq.s32.totalorder %s11, 0
    %p146 = por %p144, %p145
    %p147 = scmp.ne.s32.totalorder %s136, %s139
    %p148 = scmp.eq.s32.totalorder %s16, 1
    %p149 = por %p147, %p148
    %p150 = scmp.ne.s32.totalorder %s139, %s140
    %p151 = scmp.eq.s32.totalorder %s16, 0
    %p152 = por %p150, %p151
    %p153 = scmp.ne.s32.totalorder %s139, %s140
    %p154 = scmp.eq.s32.totalorder %s17, 1
    %p155 = por %p153, %p154
    %p157 = scmp.ne.s32.totalorder %s140, %s156
    %p158 = scmp.eq.s32.totalorder %s17, 0
    %p159 = por %p157, %p158
    %p160 = scmp.le.s32.totalorder 1, %s11
    %p161 = scmp.lt.s32.totalorder %s11, 3
    %p162 = pnand %p160, %p161
    %p163 = pneg %p162
    // Predicated region
    $region9: #{residual_block_forward.5} parent=5 // pred_check
      _
    $region10: #{residual_block_forward.5} parent=5 // pred_check_branch
      %165 = sbr.rel (%p162) target = $region12
    $region11: #{residual_block_forward.5} parent=5 // pred_region
      %s166 = ssub.s32 %s11, 1
      // Predicated region
      $region13: #{residual_block_forward.5} parent=11 // pred_check
        %p167 = pneg %p84
      $region14: #{residual_block_forward.5} parent=11 // pred_check_branch
        %169 = sbr.rel (%p167) target = $region16
      $region15: #{residual_block_forward.5} parent=11 // pred_region
        _
      $region16: #{residual_block_forward.5} parent=11 // pred_fallthru
        _
      // Predicated region
      $region17: #{residual_block_forward.5} parent=11 // pred_check
        %p170 = pneg %p105
      $region18: #{residual_block_forward.5} parent=11 // pred_check_branch
        %172 = sbr.rel (%p170) target = $region20
      $region19: #{residual_block_forward.5} parent=11 // pred_region
        _
      $region20: #{residual_block_forward.5} parent=11 // pred_fallthru
        _
      // Predicated region
      $region21: #{residual_block_forward.5} parent=11 // pred_check
        %p173 = pneg %p126
      $region22: #{residual_block_forward.5} parent=11 // pred_check_branch
        %175 = sbr.rel (%p173) target = $region24
      $region23: #{residual_block_forward.5} parent=11 // pred_region
        _
      $region24: #{residual_block_forward.5} parent=11 // pred_fallthru
        _
    $region12: #{residual_block_forward.5} parent=5 // pred_fallthru
      _
    %p176 = scmp.lt.s32.totalorder %s11, 2
    // Predicated region
    $region25: #{residual_block_forward.5} parent=5 // pred_check
      %p177 = pneg %p176
    $region26: #{residual_block_forward.5} parent=5 // pred_check_branch
      %179 = sbr.rel (%p177) target = $region28
    $region27: #{residual_block_forward.5} parent=5 // pred_region
      // Predicated region
      $region29: #{residual_block_forward.5} parent=27 // pred_check
        %p180 = pneg %p31
      $region30: #{residual_block_forward.5} parent=27 // pred_check_branch
        %182 = sbr.rel (%p180) target = $region32
      $region31: #{residual_block_forward.5} parent=27 // pred_region
        %p183 = scmp.lt.s32.totalorder %s11, 1
        %s184 = scalar_select %p183, %s11, 1
        %s185 = smul.addr %s184, 47
        %s186 = smul.addr %s185, 8
        %s187 = scalar_lea.vmem %s0, %s186
      $region32: #{residual_block_forward.5} parent=27 // pred_fallthru
        _
      // Predicated region
      $region33: #{residual_block_forward.5} parent=27 // pred_check
        %p188 = pneg %p57
      $region34: #{residual_block_forward.5} parent=27 // pred_check_branch
        %190 = sbr.rel (%p188) target = $region36
      $region35: #{residual_block_forward.5} parent=27 // pred_region
        %p191 = scmp.lt.s32.totalorder %s11, 1
        %s192 = scalar_select %p191, %s11, 1
        %s193 = smul.addr %s192, 47
        %s194 = smul.addr %s193, 8
        %s195 = scalar_lea.vmem %s1, %s194
      $region36: #{residual_block_forward.5} parent=27 // pred_fallthru
        _
    $region28: #{residual_block_forward.5} parent=5 // pred_fallthru
      _
    %p196 = scmp.le.s32.totalorder 1, %s11
    %p197 = scmp.lt.s32.totalorder %s11, 3
    %p198 = pnand %p196, %p197
    %p199 = pneg %p198
    // Predicated region
    $region37: #{residual_block_forward.5} parent=5 // pred_check
      _
    $region38: #{residual_block_forward.5} parent=5 // pred_check_branch
      %201 = sbr.rel (%p198) target = $region40
    $region39: #{residual_block_forward.5} parent=5 // pred_region
      %s202 = ssub.s32 %s11, 1
      %p203 = scmp.lt.s32.totalorder %s16, 1
      %s204 = scalar_select %p203, %s16, 1
      %s205 = smul.addr %s204, 47
      %s206 = smul.addr %s205, 8
      %s207 = scalar_lea.vmem %s0, %s206
      %p208 = pneg %p37
      %p209 = pneg %p34
      %p210 = scmp.lt.s32.totalorder %s16, 1
      %s211 = scalar_select %p210, %s16, 1
      %s212 = smul.addr %s211, 47
      %s213 = smul.addr %s212, 8
      %s214 = scalar_lea.vmem %s1, %s213
      %p215 = pneg %p63
      %p216 = pneg %p60
      %p217 = pneg %p84
      %p218 = pneg %p81
      %p219 = pneg %p105
      %p220 = pneg %p102
      %p221 = pneg %p126
      %p222 = pneg %p123
      %p223 = pneg %p152
      %p224 = pneg %p149
      %p225 = scmp.lt.s32.totalorder %s16, 1
      %s226 = scalar_select %p225, %s16, 1
      %s227 = smul.addr %s226, 47
      %s228 = smul.addr %s227, 8
      %s229 = scalar_lea.vmem %s5, %s228
      %p230 = scmp.lt.s32.totalorder %s16, 1
      %s231 = scalar_select %p230, %s16, 1
      %s232 = smul.addr %s231, 47
      %s233 = smul.addr %s232, 8
      %s234 = scalar_lea.vmem %s0, %s233
      %p235 = scmp.lt.s32.totalorder %s16, 1
      %s236 = scalar_select %p235, %s16, 1
      %s237 = smul.addr %s236, 47
      %s238 = smul.addr %s237, 8
      %s239 = scalar_lea.vmem %s1, %s238
      %p240 = scmp.lt.s32.totalorder %s16, 1
      %s241 = scalar_select %p240, %s16, 1
      %s242 = smul.addr %s241, 47
      %s243 = smul.addr %s242, 8
      %s244 = scalar_lea.vmem %s5, %s243
      %v245 = vld [vmem:[%s2] sm:$0x1]
      %v246 = vld [vmem:[%s234] sm:$0xff]
      %v247 = vld [vmem:[%s234 + $0x8] sm:$0xff]
      %v248 = vld [vmem:[%s234 + $0x10] sm:$0xff]
      %v249 = vld [vmem:[%s234 + $0x18] sm:$0xff]
      %v250 = vld [vmem:[%s234 + $0x20] sm:$0xff]
      %v251 = vld [vmem:[%s234 + $0x28] sm:$0xff]
      %v252 = vld [vmem:[%s234 + $0x30] sm:$0xff]
      %v253 = vld [vmem:[%s234 + $0x38] sm:$0xff]
      %v254 = vld [vmem:[%s234 + $0x40] sm:$0xff]
      %v255 = vld [vmem:[%s234 + $0x48] sm:$0xff]
      %v256 = vld [vmem:[%s234 + $0x50] sm:$0xff]
      %v257 = vld [vmem:[%s234 + $0x58] sm:$0xff]
      %v258 = vld [vmem:[%s234 + $0x60] sm:$0xff]
      %v259 = vld [vmem:[%s234 + $0x68] sm:$0xff]
      %v260 = vld [vmem:[%s234 + $0x70] sm:$0xff]
      %v261 = vld [vmem:[%s234 + $0x78] sm:$0xff]
      %v262 = vld [vmem:[%s234 + $0x80] sm:$0xff]
      %v263 = vld [vmem:[%s234 + $0x88] sm:$0xff]
      %v264 = vld [vmem:[%s234 + $0x90] sm:$0xff]
      %v265 = vld [vmem:[%s234 + $0x98] sm:$0xff]
      %v266 = vld [vmem:[%s234 + $0xa0] sm:$0xff]
      %v267 = vld [vmem:[%s234 + $0xa8] sm:$0xff]
      %v268 = vld [vmem:[%s234 + $0xb0] sm:$0xff]
      %v269 = vld [vmem:[%s234 + $0xb8] sm:$0xff]
      %v270 = vld [vmem:[%s234 + $0xc0] sm:$0xff]
      %v271 = vld [vmem:[%s234 + $0xc8] sm:$0xff]
      %v272 = vld [vmem:[%s234 + $0xd0] sm:$0xff]
      %v273 = vld [vmem:[%s234 + $0xd8] sm:$0xff]
      %v274 = vld [vmem:[%s234 + $0xe0] sm:$0xff]
      %v275 = vld [vmem:[%s234 + $0xe8] sm:$0xff]
      %v276 = vld [vmem:[%s234 + $0xf0] sm:$0xff]
      %v277 = vld [vmem:[%s234 + $0xf8] sm:$0xff]
      %v278 = vld [vmem:[%s234 + $0x100] sm:$0xff]
      %v279 = vld [vmem:[%s234 + $0x108] sm:$0xff]
      %v280 = vld [vmem:[%s234 + $0x110] sm:$0xff]
      %v281 = vld [vmem:[%s234 + $0x118] sm:$0xff]
      %v282 = vld [vmem:[%s234 + $0x120] sm:$0xff]
      %v283 = vld [vmem:[%s234 + $0x128] sm:$0xff]
      %v284 = vld [vmem:[%s234 + $0x130] sm:$0xff]
      %v285 = vld [vmem:[%s234 + $0x138] sm:$0xff]
      %v286 = vld [vmem:[%s234 + $0x140] sm:$0xff]
      %v287 = vld [vmem:[%s234 + $0x148] sm:$0xff]
      %v288 = vld [vmem:[%s234 + $0x150] sm:$0xff]
      %v289 = vld [vmem:[%s234 + $0x158] sm:$0xff]
      %v290 = vld [vmem:[%s234 + $0x160] sm:$0xff]
      %v291 = vld [vmem:[%s234 + $0x168] sm:$0xff]
      %v292 = vld [vmem:[%s234 + $0x170] sm:$0xff]
      %v294 = vlaneseq
      %v295 = vshrl.u32 %v294, 7
      %v296 = vsub.s32 0, %v295
      %v297 = vrot.slane %v245, %v296
      %v299 = vmul.f32 %v297, %v246
      %v300 = vmul.f32 %v297, %v247
      %v301 = vmul.f32 %v297, %v248
      %v302 = vmul.f32 %v297, %v249
      %v303 = vmul.f32 %v297, %v250
      %v304 = vmul.f32 %v297, %v251
      %v305 = vmul.f32 %v297, %v252
      %v306 = vmul.f32 %v297, %v253
      %v307 = vmul.f32 %v297, %v254
      %v308 = vmul.f32 %v297, %v255
      %v309 = vmul.f32 %v297, %v256
      %v310 = vmul.f32 %v297, %v257
      %v311 = vmul.f32 %v297, %v258
      %v312 = vmul.f32 %v297, %v259
      %v313 = vmul.f32 %v297, %v260
      %v314 = vmul.f32 %v297, %v261
      %v315 = vmul.f32 %v297, %v262
      %v316 = vmul.f32 %v297, %v263
      %v317 = vmul.f32 %v297, %v264
      %v318 = vmul.f32 %v297, %v265
      %v319 = vmul.f32 %v297, %v266
      %v320 = vmul.f32 %v297, %v267
      %v321 = vmul.f32 %v297, %v268
      %v322 = vmul.f32 %v297, %v269
      %v323 = vmul.f32 %v297, %v270
      %v324 = vmul.f32 %v297, %v271
      %v325 = vmul.f32 %v297, %v272
      %v326 = vmul.f32 %v297, %v273
      %v327 = vmul.f32 %v297, %v274
      %v328 = vmul.f32 %v297, %v275
      %v329 = vmul.f32 %v297, %v276
      %v330 = vmul.f32 %v297, %v277
      %v331 = vmul.f32 %v297, %v278
      %v332 = vmul.f32 %v297, %v279
      %v333 = vmul.f32 %v297, %v280
      %v334 = vmul.f32 %v297, %v281
      %v335 = vmul.f32 %v297, %v282
      %v336 = vmul.f32 %v297, %v283
      %v337 = vmul.f32 %v297, %v284
      %v338 = vmul.f32 %v297, %v285
      %v339 = vmul.f32 %v297, %v286
      %v340 = vmul.f32 %v297, %v287
      %v341 = vmul.f32 %v297, %v288
      %v342 = vmul.f32 %v297, %v289
      %v343 = vmul.f32 %v297, %v290
      %v344 = vmul.f32 %v297, %v291
      %v345 = vmul.f32 %v297, %v292
      %v346 = vld [vmem:[%s3] sm:$0x1]
      %v347 = vld [vmem:[%s239] sm:$0xff]
      %v348 = vld [vmem:[%s239 + $0x8] sm:$0xff]
      %v349 = vld [vmem:[%s239 + $0x10] sm:$0xff]
      %v350 = vld [vmem:[%s239 + $0x18] sm:$0xff]
      %v351 = vld [vmem:[%s239 + $0x20] sm:$0xff]
      %v352 = vld [vmem:[%s239 + $0x28] sm:$0xff]
      %v353 = vld [vmem:[%s239 + $0x30] sm:$0xff]
      %v354 = vld [vmem:[%s239 + $0x38] sm:$0xff]
      %v355 = vld [vmem:[%s239 + $0x40] sm:$0xff]
      %v356 = vld [vmem:[%s239 + $0x48] sm:$0xff]
      %v357 = vld [vmem:[%s239 + $0x50] sm:$0xff]
      %v358 = vld [vmem:[%s239 + $0x58] sm:$0xff]
      %v359 = vld [vmem:[%s239 + $0x60] sm:$0xff]
      %v360 = vld [vmem:[%s239 + $0x68] sm:$0xff]
      %v361 = vld [vmem:[%s239 + $0x70] sm:$0xff]
      %v362 = vld [vmem:[%s239 + $0x78] sm:$0xff]
      %v363 = vld [vmem:[%s239 + $0x80] sm:$0xff]
      %v364 = vld [vmem:[%s239 + $0x88] sm:$0xff]
      %v365 = vld [vmem:[%s239 + $0x90] sm:$0xff]
      %v366 = vld [vmem:[%s239 + $0x98] sm:$0xff]
      %v367 = vld [vmem:[%s239 + $0xa0] sm:$0xff]
      %v368 = vld [vmem:[%s239 + $0xa8] sm:$0xff]
      %v369 = vld [vmem:[%s239 + $0xb0] sm:$0xff]
      %v370 = vld [vmem:[%s239 + $0xb8] sm:$0xff]
      %v371 = vld [vmem:[%s239 + $0xc0] sm:$0xff]
      %v372 = vld [vmem:[%s239 + $0xc8] sm:$0xff]
      %v373 = vld [vmem:[%s239 + $0xd0] sm:$0xff]
      %v374 = vld [vmem:[%s239 + $0xd8] sm:$0xff]
      %v375 = vld [vmem:[%s239 + $0xe0] sm:$0xff]
      %v376 = vld [vmem:[%s239 + $0xe8] sm:$0xff]
      %v377 = vld [vmem:[%s239 + $0xf0] sm:$0xff]
      %v378 = vld [vmem:[%s239 + $0xf8] sm:$0xff]
      %v379 = vld [vmem:[%s239 + $0x100] sm:$0xff]
      %v380 = vld [vmem:[%s239 + $0x108] sm:$0xff]
      %v381 = vld [vmem:[%s239 + $0x110] sm:$0xff]
      %v382 = vld [vmem:[%s239 + $0x118] sm:$0xff]
      %v383 = vld [vmem:[%s239 + $0x120] sm:$0xff]
      %v384 = vld [vmem:[%s239 + $0x128] sm:$0xff]
      %v385 = vld [vmem:[%s239 + $0x130] sm:$0xff]
      %v386 = vld [vmem:[%s239 + $0x138] sm:$0xff]
      %v387 = vld [vmem:[%s239 + $0x140] sm:$0xff]
      %v388 = vld [vmem:[%s239 + $0x148] sm:$0xff]
      %v389 = vld [vmem:[%s239 + $0x150] sm:$0xff]
      %v390 = vld [vmem:[%s239 + $0x158] sm:$0xff]
      %v391 = vld [vmem:[%s239 + $0x160] sm:$0xff]
      %v392 = vld [vmem:[%s239 + $0x168] sm:$0xff]
      %v393 = vld [vmem:[%s239 + $0x170] sm:$0xff]
      %v395 = vlaneseq
      %v396 = vshrl.u32 %v395, 7
      %v397 = vsub.s32 0, %v396
      %v398 = vrot.slane %v346, %v397
      %v400 = vmul.f32 %v398, %v347
      %v401 = vmul.f32 %v398, %v348
      %v402 = vmul.f32 %v398, %v349
      %v403 = vmul.f32 %v398, %v350
      %v404 = vmul.f32 %v398, %v351
      %v405 = vmul.f32 %v398, %v352
      %v406 = vmul.f32 %v398, %v353
      %v407 = vmul.f32 %v398, %v354
      %v408 = vmul.f32 %v398, %v355
      %v409 = vmul.f32 %v398, %v356
      %v410 = vmul.f32 %v398, %v357
      %v411 = vmul.f32 %v398, %v358
      %v412 = vmul.f32 %v398, %v359
      %v413 = vmul.f32 %v398, %v360
      %v414 = vmul.f32 %v398, %v361
      %v415 = vmul.f32 %v398, %v362
      %v416 = vmul.f32 %v398, %v363
      %v417 = vmul.f32 %v398, %v364
      %v418 = vmul.f32 %v398, %v365
      %v419 = vmul.f32 %v398, %v366
      %v420 = vmul.f32 %v398, %v367
      %v421 = vmul.f32 %v398, %v368
      %v422 = vmul.f32 %v398, %v369
      %v423 = vmul.f32 %v398, %v370
      %v424 = vmul.f32 %v398, %v371
      %v425 = vmul.f32 %v398, %v372
      %v426 = vmul.f32 %v398, %v373
      %v427 = vmul.f32 %v398, %v374
      %v428 = vmul.f32 %v398, %v375
      %v429 = vmul.f32 %v398, %v376
      %v430 = vmul.f32 %v398, %v377
      %v431 = vmul.f32 %v398, %v378
      %v432 = vmul.f32 %v398, %v379
      %v433 = vmul.f32 %v398, %v380
      %v434 = vmul.f32 %v398, %v381
      %v435 = vmul.f32 %v398, %v382
      %v436 = vmul.f32 %v398, %v383
      %v437 = vmul.f32 %v398, %v384
      %v438 = vmul.f32 %v398, %v385
      %v439 = vmul.f32 %v398, %v386
      %v440 = vmul.f32 %v398, %v387
      %v441 = vmul.f32 %v398, %v388
      %v442 = vmul.f32 %v398, %v389
      %v443 = vmul.f32 %v398, %v390
      %v444 = vmul.f32 %v398, %v391
      %v445 = vmul.f32 %v398, %v392
      %v446 = vmul.f32 %v398, %v393
      %v447 = vadd.f32 %v299, %v400
      %v448 = vadd.f32 %v300, %v401
      %v449 = vadd.f32 %v301, %v402
      %v450 = vadd.f32 %v302, %v403
      %v451 = vadd.f32 %v303, %v404
      %v452 = vadd.f32 %v304, %v405
      %v453 = vadd.f32 %v305, %v406
      %v454 = vadd.f32 %v306, %v407
      %v455 = vadd.f32 %v307, %v408
      %v456 = vadd.f32 %v308, %v409
      %v457 = vadd.f32 %v309, %v410
      %v458 = vadd.f32 %v310, %v411
      %v459 = vadd.f32 %v311, %v412
      %v460 = vadd.f32 %v312, %v413
      %v461 = vadd.f32 %v313, %v414
      %v462 = vadd.f32 %v314, %v415
      %v463 = vadd.f32 %v315, %v416
      %v464 = vadd.f32 %v316, %v417
      %v465 = vadd.f32 %v317, %v418
      %v466 = vadd.f32 %v318, %v419
      %v467 = vadd.f32 %v319, %v420
      %v468 = vadd.f32 %v320, %v421
      %v469 = vadd.f32 %v321, %v422
      %v470 = vadd.f32 %v322, %v423
      %v471 = vadd.f32 %v323, %v424
      %v472 = vadd.f32 %v324, %v425
      %v473 = vadd.f32 %v325, %v426
      %v474 = vadd.f32 %v326, %v427
      %v475 = vadd.f32 %v327, %v428
      %v476 = vadd.f32 %v328, %v429
      %v477 = vadd.f32 %v329, %v430
      %v478 = vadd.f32 %v330, %v431
      %v479 = vadd.f32 %v331, %v432
      %v480 = vadd.f32 %v332, %v433
      %v481 = vadd.f32 %v333, %v434
      %v482 = vadd.f32 %v334, %v435
      %v483 = vadd.f32 %v335, %v436
      %v484 = vadd.f32 %v336, %v437
      %v485 = vadd.f32 %v337, %v438
      %v486 = vadd.f32 %v338, %v439
      %v487 = vadd.f32 %v339, %v440
      %v488 = vadd.f32 %v340, %v441
      %v489 = vadd.f32 %v341, %v442
      %v490 = vadd.f32 %v342, %v443
      %v491 = vadd.f32 %v343, %v444
      %v492 = vadd.f32 %v344, %v445
      %v493 = vadd.f32 %v345, %v446
      %v494 = vld [vmem:[%s4] sm:$0x1]
      %v496 = vlaneseq
      %v497 = vshrl.u32 %v496, 7
      %v498 = vsub.s32 0, %v497
      %v499 = vrot.slane %v494, %v498
      %v501 = vadd.f32 %v447, %v499
      %v502 = vadd.f32 %v448, %v499
      %v503 = vadd.f32 %v449, %v499
      %v504 = vadd.f32 %v450, %v499
      %v505 = vadd.f32 %v451, %v499
      %v506 = vadd.f32 %v452, %v499
      %v507 = vadd.f32 %v453, %v499
      %v508 = vadd.f32 %v454, %v499
      %v509 = vadd.f32 %v455, %v499
      %v510 = vadd.f32 %v456, %v499
      %v511 = vadd.f32 %v457, %v499
      %v512 = vadd.f32 %v458, %v499
      %v513 = vadd.f32 %v459, %v499
      %v514 = vadd.f32 %v460, %v499
      %v515 = vadd.f32 %v461, %v499
      %v516 = vadd.f32 %v462, %v499
      %v517 = vadd.f32 %v463, %v499
      %v518 = vadd.f32 %v464, %v499
      %v519 = vadd.f32 %v465, %v499
      %v520 = vadd.f32 %v466, %v499
      %v521 = vadd.f32 %v467, %v499
      %v522 = vadd.f32 %v468, %v499
      %v523 = vadd.f32 %v469, %v499
      %v524 = vadd.f32 %v470, %v499
      %v525 = vadd.f32 %v471, %v499
      %v526 = vadd.f32 %v472, %v499
      %v527 = vadd.f32 %v473, %v499
      %v528 = vadd.f32 %v474, %v499
      %v529 = vadd.f32 %v475, %v499
      %v530 = vadd.f32 %v476, %v499
      %v531 = vadd.f32 %v477, %v499
      %v532 = vadd.f32 %v478, %v499
      %v533 = vadd.f32 %v479, %v499
      %v534 = vadd.f32 %v480, %v499
      %v535 = vadd.f32 %v481, %v499
      %v536 = vadd.f32 %v482, %v499
      %v537 = vadd.f32 %v483, %v499
      %v538 = vadd.f32 %v484, %v499
      %v539 = vadd.f32 %v485, %v499
      %v540 = vadd.f32 %v486, %v499
      %v541 = vadd.f32 %v487, %v499
      %v542 = vadd.f32 %v488, %v499
      %v543 = vadd.f32 %v489, %v499
      %v544 = vadd.f32 %v490, %v499
      %v545 = vadd.f32 %v491, %v499
      %v546 = vadd.f32 %v492, %v499
      %v547 = vadd.f32 %v493, %v499
      %548 = vst [vmem:[%s244] sm:$0xff] %v501
      %549 = vst [vmem:[%s244 + $0x8] sm:$0xff] %v502
      %550 = vst [vmem:[%s244 + $0x10] sm:$0xff] %v503
      %551 = vst [vmem:[%s244 + $0x18] sm:$0xff] %v504
      %552 = vst [vmem:[%s244 + $0x20] sm:$0xff] %v505
      %553 = vst [vmem:[%s244 + $0x28] sm:$0xff] %v506
      %554 = vst [vmem:[%s244 + $0x30] sm:$0xff] %v507
      %555 = vst [vmem:[%s244 + $0x38] sm:$0xff] %v508
      %556 = vst [vmem:[%s244 + $0x40] sm:$0xff] %v509
      %557 = vst [vmem:[%s244 + $0x48] sm:$0xff] %v510
      %558 = vst [vmem:[%s244 + $0x50] sm:$0xff] %v511
      %559 = vst [vmem:[%s244 + $0x58] sm:$0xff] %v512
      %560 = vst [vmem:[%s244 + $0x60] sm:$0xff] %v513
      %561 = vst [vmem:[%s244 + $0x68] sm:$0xff] %v514
      %562 = vst [vmem:[%s244 + $0x70] sm:$0xff] %v515
      %563 = vst [vmem:[%s244 + $0x78] sm:$0xff] %v516
      %564 = vst [vmem:[%s244 + $0x80] sm:$0xff] %v517
      %565 = vst [vmem:[%s244 + $0x88] sm:$0xff] %v518
      %566 = vst [vmem:[%s244 + $0x90] sm:$0xff] %v519
      %567 = vst [vmem:[%s244 + $0x98] sm:$0xff] %v520
      %568 = vst [vmem:[%s244 + $0xa0] sm:$0xff] %v521
      %569 = vst [vmem:[%s244 + $0xa8] sm:$0xff] %v522
      %570 = vst [vmem:[%s244 + $0xb0] sm:$0xff] %v523
      %571 = vst [vmem:[%s244 + $0xb8] sm:$0xff] %v524
      %572 = vst [vmem:[%s244 + $0xc0] sm:$0xff] %v525
      %573 = vst [vmem:[%s244 + $0xc8] sm:$0xff] %v526
      %574 = vst [vmem:[%s244 + $0xd0] sm:$0xff] %v527
      %575 = vst [vmem:[%s244 + $0xd8] sm:$0xff] %v528
      %576 = vst [vmem:[%s244 + $0xe0] sm:$0xff] %v529
      %577 = vst [vmem:[%s244 + $0xe8] sm:$0xff] %v530
      %578 = vst [vmem:[%s244 + $0xf0] sm:$0xff] %v531
      %579 = vst [vmem:[%s244 + $0xf8] sm:$0xff] %v532
      %580 = vst [vmem:[%s244 + $0x100] sm:$0xff] %v533
      %581 = vst [vmem:[%s244 + $0x108] sm:$0xff] %v534
      %582 = vst [vmem:[%s244 + $0x110] sm:$0xff] %v535
      %583 = vst [vmem:[%s244 + $0x118] sm:$0xff] %v536
      %584 = vst [vmem:[%s244 + $0x120] sm:$0xff] %v537
      %585 = vst [vmem:[%s244 + $0x128] sm:$0xff] %v538
      %586 = vst [vmem:[%s244 + $0x130] sm:$0xff] %v539
      %587 = vst [vmem:[%s244 + $0x138] sm:$0xff] %v540
      %588 = vst [vmem:[%s244 + $0x140] sm:$0xff] %v541
      %589 = vst [vmem:[%s244 + $0x148] sm:$0xff] %v542
      %590 = vst [vmem:[%s244 + $0x150] sm:$0xff] %v543
      %591 = vst [vmem:[%s244 + $0x158] sm:$0xff] %v544
      %592 = vst [vmem:[%s244 + $0x160] sm:$0xff] %v545
      %593 = vst [vmem:[%s244 + $0x168] sm:$0xff] %v546
      %594 = vst [vmem:[%s244 + $0x170] sm:$0xff] %v547
      %p595 = scmp.lt.s32.totalorder %s16, 1
      %s596 = scalar_select %p595, %s16, 1
      %s597 = smul.addr %s596, 47
      %s598 = smul.addr %s597, 8
      %s599 = scalar_lea.vmem %s5, %s598
      // Predicated region
      $region41: #{residual_block_forward.5} parent=39 // pred_check
        %p600 = pneg %p149
      $region42: #{residual_block_forward.5} parent=39 // pred_check_branch
        %602 = sbr.rel (%p600) target = $region44
      $region43: #{residual_block_forward.5} parent=39 // pred_region
        _
      $region44: #{residual_block_forward.5} parent=39 // pred_fallthru
        _
    $region40: #{residual_block_forward.5} parent=5 // pred_fallthru
      _
    %p603 = scmp.le.s32.totalorder 2, %s11
    // Predicated region
    $region45: #{residual_block_forward.5} parent=5 // pred_check
      %p604 = pneg %p603
    $region46: #{residual_block_forward.5} parent=5 // pred_check_branch
      %606 = sbr.rel (%p604) target = $region48
    $region47: #{residual_block_forward.5} parent=5 // pred_region
      %s607 = ssub.s32 %s11, 2
      // Predicated region
      $region49: #{residual_block_forward.5} parent=47 // pred_check
        %p608 = pneg %p155
      $region50: #{residual_block_forward.5} parent=47 // pred_check_branch
        %610 = sbr.rel (%p608) target = $region52
      $region51: #{residual_block_forward.5} parent=47 // pred_region
        %p611 = scmp.lt.s32.totalorder %s17, 1
        %s612 = scalar_select %p611, %s17, 1
        %s613 = smul.addr %s612, 47
        %s614 = smul.addr %s613, 8
        %s615 = scalar_lea.vmem %s5, %s614
      $region52: #{residual_block_forward.5} parent=47 // pred_fallthru
        _
    $region48: #{residual_block_forward.5} parent=5 // pred_fallthru
      _
  $region6: #{residual_block_forward.5} parent=0 // loop_footer
    %s15 = sadd.s32 1, %s11
  $region7: #{residual_block_forward.5} parent=0 // loop_footer_branch
    %10 = sbr.rel target = $region3
  $region8: #{residual_block_forward.5} parent=0 // loop_exit
    _

// kernel: residual_block_forward.4
$region0: #{residual_block_forward.4}
  #allocation0 [shape = 'u32[]', space=smem, size = 0x4, offset = 0x4, fixed_abs, tag = 'smem constant byte address 0x4 - core index']
  #allocation1 [shape = 'u32[144,128]{1,0:T(1,128)}', space=vmem, size = 0x12000, scoped, tag = 'internal scratch']
  %s0 = inlined_call_operand.vmem [shape: f32[2,376,128], index: 0, kind: input, shape index: {}]
  %s1 = inlined_call_operand.vmem [shape: f32[2,376,128], index: 1, kind: input, shape index: {}]
  %s2 = inlined_call_operand.vmem [shape: f32[328,128], index: 2, kind: input, shape index: {}]
  %s3 = inlined_call_operand.vmem [shape: bf16[9,128,128], index: 3, kind: input, shape index: {}]
  %s4 = inlined_call_operand.vmem [shape: f32[1,128], index: 4, kind: input, shape index: {}]
  %s5 = inlined_call_operand.vmem [shape: f32[2,376,128], index: 5, kind: output, shape index: {0}]
  %s6 = inlined_call_operand.vmem [shape: f32[2,8,128], index: 6, kind: output, shape index: {1}]
  %7 = xla_tuple %s5, %s6
  %s8 = sld [smem:[#allocation0]]
  $region61: #{residual_block_forward.4} parent=0
    _
  %s10 = ssub.s32 1, %s8
  %s11 = scalar_select 0, %s10, %s8
  loop: start=0, step=1, limit=4
  $region2: #{residual_block_forward.4} parent=0 // loop_pre_header
    _
  $region3: #{residual_block_forward.4} parent=0 // loop_header
    %s13 = sphi 0, %s17
    %p14 = scmp.ge.s32.totalorder %s13, 4
    %s23 = sphi 0, %s25
    %s26 = sphi 0, %s23
    %s27 = sphi 0, %s26
    %s43 = sphi 0, %s27
    %s49 = sphi 0, %s51
    %s52 = sphi 0, %s49
    %s53 = sphi 0, %s52
    %s69 = sphi 0, %s53
    %s73 = sphi 0, %s73
    %s75 = sphi 0, %s73
    %s76 = sphi 0, %s75
    %s90 = sphi 0, %s76
    %s94 = sphi 0, %s94
    %s96 = sphi 0, %s94
    %s97 = sphi 0, %s96
    %s111 = sphi 0, %s97
    %s115 = sphi 0, %s115
    %s117 = sphi 0, %s115
    %s118 = sphi 0, %s117
    %s132 = sphi 0, %s118
    %s138 = sphi 0, %s140
    %s141 = sphi 0, %s138
    %s142 = sphi 0, %s141
    %s158 = sphi 0, %s142
    %s164 = sphi 0, %s166
    %s167 = sphi 0, %s164
    %s168 = sphi 0, %s167
    %s184 = sphi 0, %s168
  $region4: #{residual_block_forward.4} parent=0 // loop_header_branch
    %16 = sbr.rel (%p14) target = $region8
  $region5: #{residual_block_forward.4} parent=0 // loop_body
    %s18 = ssub.s32 %s13, 1
    %s19 = ssub.s32 %s13, 2
    %s20 = sadd.s32 %s13, 1
    %s21 = ssub.s32 %s13, %s20
    %p22 = scmp.eq.s32.totalorder %s21, 0
    %s24 = sadd.s32 %s23, 1
    %s25 = scalar_select %p22, %s23, %s24
    %p28 = pneg %p22
    %p29 = scmp.eq.s32.totalorder %s13, 1
    %p30 = por %p28, %p29
    %p31 = scmp.ne.s32.totalorder %s23, %s26
    %p32 = scmp.eq.s32.totalorder %s13, 0
    %p33 = por %p31, %p32
    %p34 = scmp.ne.s32.totalorder %s23, %s26
    %p35 = scmp.eq.s32.totalorder %s18, 1
    %p36 = por %p34, %p35
    %p37 = scmp.ne.s32.totalorder %s26, %s27
    %p38 = scmp.eq.s32.totalorder %s18, 0
    %p39 = por %p37, %p38
    %p40 = scmp.ne.s32.totalorder %s26, %s27
    %p41 = scmp.eq.s32.totalorder %s19, 1
    %p42 = por %p40, %p41
    %p44 = scmp.ne.s32.totalorder %s27, %s43
    %p45 = scmp.eq.s32.totalorder %s19, 0
    %p46 = por %p44, %p45
    %s47 = ssub.s32 %s13, %s20
    %p48 = scmp.eq.s32.totalorder %s47, 0
    %s50 = sadd.s32 %s49, 1
    %s51 = scalar_select %p48, %s49, %s50
    %p54 = pneg %p48
    %p55 = scmp.eq.s32.totalorder %s13, 1
    %p56 = por %p54, %p55
    %p57 = scmp.ne.s32.totalorder %s49, %s52
    %p58 = scmp.eq.s32.totalorder %s13, 0
    %p59 = por %p57, %p58
    %p60 = scmp.ne.s32.totalorder %s49, %s52
    %p61 = scmp.eq.s32.totalorder %s18, 1
    %p62 = por %p60, %p61
    %p63 = scmp.ne.s32.totalorder %s52, %s53
    %p64 = scmp.eq.s32.totalorder %s18, 0
    %p65 = por %p63, %p64
    %p66 = scmp.ne.s32.totalorder %s52, %s53
    %p67 = scmp.eq.s32.totalorder %s19, 1
    %p68 = por %p66, %p67
    %p70 = scmp.ne.s32.totalorder %s53, %s69
    %p71 = scmp.eq.s32.totalorder %s19, 0
    %p72 = por %p70, %p71
    %s74 = sadd.s32 %s73, 1
    %p77 = scmp.eq.s32.totalorder %s13, 1
    %p78 = scmp.ne.s32.totalorder %s73, %s75
    %p79 = scmp.eq.s32.totalorder %s13, 0
    %p80 = por %p78, %p79
    %p81 = scmp.ne.s32.totalorder %s73, %s75
    %p82 = scmp.eq.s32.totalorder %s18, 1
    %p83 = por %p81, %p82
    %p84 = scmp.ne.s32.totalorder %s75, %s76
    %p85 = scmp.eq.s32.totalorder %s18, 0
    %p86 = por %p84, %p85
    %p87 = scmp.ne.s32.totalorder %s75, %s76
    %p88 = scmp.eq.s32.totalorder %s19, 1
    %p89 = por %p87, %p88
    %p91 = scmp.ne.s32.totalorder %s76, %s90
    %p92 = scmp.eq.s32.totalorder %s19, 0
    %p93 = por %p91, %p92
    %s95 = sadd.s32 %s94, 1
    %p98 = scmp.eq.s32.totalorder %s13, 1
    %p99 = scmp.ne.s32.totalorder %s94, %s96
    %p100 = scmp.eq.s32.totalorder %s13, 0
    %p101 = por %p99, %p100
    %p102 = scmp.ne.s32.totalorder %s94, %s96
    %p103 = scmp.eq.s32.totalorder %s18, 1
    %p104 = por %p102, %p103
    %p105 = scmp.ne.s32.totalorder %s96, %s97
    %p106 = scmp.eq.s32.totalorder %s18, 0
    %p107 = por %p105, %p106
    %p108 = scmp.ne.s32.totalorder %s96, %s97
    %p109 = scmp.eq.s32.totalorder %s19, 1
    %p110 = por %p108, %p109
    %p112 = scmp.ne.s32.totalorder %s97, %s111
    %p113 = scmp.eq.s32.totalorder %s19, 0
    %p114 = por %p112, %p113
    %s116 = sadd.s32 %s115, 1
    %p119 = scmp.eq.s32.totalorder %s13, 1
    %p120 = scmp.ne.s32.totalorder %s115, %s117
    %p121 = scmp.eq.s32.totalorder %s13, 0
    %p122 = por %p120, %p121
    %p123 = scmp.ne.s32.totalorder %s115, %s117
    %p124 = scmp.eq.s32.totalorder %s18, 1
    %p125 = por %p123, %p124
    %p126 = scmp.ne.s32.totalorder %s117, %s118
    %p127 = scmp.eq.s32.totalorder %s18, 0
    %p128 = por %p126, %p127
    %p129 = scmp.ne.s32.totalorder %s117, %s118
    %p130 = scmp.eq.s32.totalorder %s19, 1
    %p131 = por %p129, %p130
    %p133 = scmp.ne.s32.totalorder %s118, %s132
    %p134 = scmp.eq.s32.totalorder %s19, 0
    %p135 = por %p133, %p134
    %s136 = ssub.s32 %s13, %s20
    %p137 = scmp.eq.s32.totalorder %s136, 0
    %s139 = sadd.s32 %s138, 1
    %s140 = scalar_select %p137, %s138, %s139
    %p143 = pneg %p137
    %p144 = scmp.eq.s32.totalorder %s13, 1
    %p145 = por %p143, %p144
    %p146 = scmp.ne.s32.totalorder %s138, %s141
    %p147 = scmp.eq.s32.totalorder %s13, 0
    %p148 = por %p146, %p147
    %p149 = scmp.ne.s32.totalorder %s138, %s141
    %p150 = scmp.eq.s32.totalorder %s18, 1
    %p151 = por %p149, %p150
    %p152 = scmp.ne.s32.totalorder %s141, %s142
    %p153 = scmp.eq.s32.totalorder %s18, 0
    %p154 = por %p152, %p153
    %p155 = scmp.ne.s32.totalorder %s141, %s142
    %p156 = scmp.eq.s32.totalorder %s19, 1
    %p157 = por %p155, %p156
    %p159 = scmp.ne.s32.totalorder %s142, %s158
    %p160 = scmp.eq.s32.totalorder %s19, 0
    %p161 = por %p159, %p160
    %s162 = ssub.s32 %s13, %s20
    %p163 = scmp.eq.s32.totalorder %s162, 0
    %s165 = sadd.s32 %s164, 1
    %s166 = scalar_select %p163, %s164, %s165
    %p169 = pneg %p163
    %p170 = scmp.eq.s32.totalorder %s13, 1
    %p171 = por %p169, %p170
    %p172 = scmp.ne.s32.totalorder %s164, %s167
    %p173 = scmp.eq.s32.totalorder %s13, 0
    %p174 = por %p172, %p173
    %p175 = scmp.ne.s32.totalorder %s164, %s167
    %p176 = scmp.eq.s32.totalorder %s18, 1
    %p177 = por %p175, %p176
    %p178 = scmp.ne.s32.totalorder %s167, %s168
    %p179 = scmp.eq.s32.totalorder %s18, 0
    %p180 = por %p178, %p179
    %p181 = scmp.ne.s32.totalorder %s167, %s168
    %p182 = scmp.eq.s32.totalorder %s19, 1
    %p183 = por %p181, %p182
    %p185 = scmp.ne.s32.totalorder %s168, %s184
    %p186 = scmp.eq.s32.totalorder %s19, 0
    %p187 = por %p185, %p186
    %p188 = scmp.le.s32.totalorder 1, %s13
    %p189 = scmp.lt.s32.totalorder %s13, 3
    %p190 = pnand %p188, %p189
    %p191 = pneg %p190
    // Predicated region
    $region9: #{residual_block_forward.4} parent=5 // pred_check
      _
    $region10: #{residual_block_forward.4} parent=5 // pred_check_branch
      %193 = sbr.rel (%p190) target = $region12
    $region11: #{residual_block_forward.4} parent=5 // pred_region
      %s194 = ssub.s32 %s13, 1
      // Predicated region
      $region13: #{residual_block_forward.4} parent=11 // pred_check
        %p195 = pneg %p86
      $region14: #{residual_block_forward.4} parent=11 // pred_check_branch
        %197 = sbr.rel (%p195) target = $region16
      $region15: #{residual_block_forward.4} parent=11 // pred_region
        _
      $region16: #{residual_block_forward.4} parent=11 // pred_fallthru
        _
      // Predicated region
      $region17: #{residual_block_forward.4} parent=11 // pred_check
        %p198 = pneg %p107
      $region18: #{residual_block_forward.4} parent=11 // pred_check_branch
        %200 = sbr.rel (%p198) target = $region20
      $region19: #{residual_block_forward.4} parent=11 // pred_region
        _
      $region20: #{residual_block_forward.4} parent=11 // pred_fallthru
        _
      // Predicated region
      $region21: #{residual_block_forward.4} parent=11 // pred_check
        %p201 = pneg %p128
      $region22: #{residual_block_forward.4} parent=11 // pred_check_branch
        %203 = sbr.rel (%p201) target = $region24
      $region23: #{residual_block_forward.4} parent=11 // pred_region
        _
      $region24: #{residual_block_forward.4} parent=11 // pred_fallthru
        _
    $region12: #{residual_block_forward.4} parent=5 // pred_fallthru
      _
    %p204 = scmp.lt.s32.totalorder %s13, 2
    // Predicated region
    $region25: #{residual_block_forward.4} parent=5 // pred_check
      %p205 = pneg %p204
    $region26: #{residual_block_forward.4} parent=5 // pred_check_branch
      %207 = sbr.rel (%p205) target = $region28
    $region27: #{residual_block_forward.4} parent=5 // pred_region
      // Predicated region
      $region29: #{residual_block_forward.4} parent=27 // pred_check
        %p208 = pneg %p33
      $region30: #{residual_block_forward.4} parent=27 // pred_check_branch
        %210 = sbr.rel (%p208) target = $region32
      $region31: #{residual_block_forward.4} parent=27 // pred_region
        %p211 = scmp.lt.s32.totalorder %s13, 1
        %s212 = scalar_select %p211, %s13, 1
        %s213 = smul.addr %s212, 47
        %s214 = smul.addr %s213, 8
        %s215 = scalar_lea.vmem %s0, %s214
      $region32: #{residual_block_forward.4} parent=27 // pred_fallthru
        _
      // Predicated region
      $region33: #{residual_block_forward.4} parent=27 // pred_check
        %p216 = pneg %p59
      $region34: #{residual_block_forward.4} parent=27 // pred_check_branch
        %218 = sbr.rel (%p216) target = $region36
      $region35: #{residual_block_forward.4} parent=27 // pred_region
        %p219 = scmp.lt.s32.totalorder %s13, 1
        %s220 = scalar_select %p219, %s13, 1
        %s221 = smul.addr %s220, 47
        %s222 = smul.addr %s221, 8
        %s223 = scalar_lea.vmem %s1, %s222
      $region36: #{residual_block_forward.4} parent=27 // pred_fallthru
        _
    $region28: #{residual_block_forward.4} parent=5 // pred_fallthru
      _
    %p224 = scmp.le.s32.totalorder 1, %s13
    %p225 = scmp.lt.s32.totalorder %s13, 3
    %p226 = pnand %p224, %p225
    %p227 = pneg %p226
    // Predicated region
    $region37: #{residual_block_forward.4} parent=5 // pred_check
      _
    $region38: #{residual_block_forward.4} parent=5 // pred_check_branch
      %229 = sbr.rel (%p226) target = $region40
    $region39: #{residual_block_forward.4} parent=5 // pred_region
      %s230 = ssub.s32 %s13, 1
      %p231 = scmp.lt.s32.totalorder %s18, 1
      %s232 = scalar_select %p231, %s18, 1
      %s233 = smul.addr %s232, 47
      %s234 = smul.addr %s233, 8
      %s235 = scalar_lea.vmem %s0, %s234
      %p236 = pneg %p39
      %p237 = pneg %p36
      %p238 = scmp.lt.s32.totalorder %s18, 1
      %s239 = scalar_select %p238, %s18, 1
      %s240 = smul.addr %s239, 47
      %s241 = smul.addr %s240, 8
      %s242 = scalar_lea.vmem %s1, %s241
      %p243 = pneg %p65
      %p244 = pneg %p62
      %p245 = pneg %p86
      %p246 = pneg %p83
      %p247 = pneg %p107
      %p248 = pneg %p104
      %p249 = pneg %p128
      %p250 = pneg %p125
      %p251 = pneg %p154
      %p252 = pneg %p151
      %p253 = scmp.lt.s32.totalorder %s18, 1
      %s254 = scalar_select %p253, %s18, 1
      %s255 = smul.addr %s254, 47
      %s256 = smul.addr %s255, 8
      %s257 = scalar_lea.vmem %s5, %s256
      %p258 = pneg %p180
      %p259 = pneg %p177
      %p260 = scmp.lt.s32.totalorder %s18, 1
      %s261 = scalar_select %p260, %s18, 1
      %s262 = smul.addr %s261, 8
      %s263 = scalar_lea.vmem %s6, %s262
      %p264 = scmp.lt.s32.totalorder %s18, 1
      %s265 = scalar_select %p264, %s18, 1
      %s266 = smul.addr %s265, 47
      %s267 = smul.addr %s266, 8
      %s268 = scalar_lea.vmem %s0, %s267
      %p269 = scmp.lt.s32.totalorder %s18, 1
      %s270 = scalar_select %p269, %s18, 1
      %s271 = smul.addr %s270, 47
      %s272 = smul.addr %s271, 8
      %s273 = scalar_lea.vmem %s1, %s272
      %p274 = scmp.lt.s32.totalorder %s18, 1
      %s275 = scalar_select %p274, %s18, 1
      %s276 = smul.addr %s275, 47
      %s277 = smul.addr %s276, 8
      %s278 = scalar_lea.vmem %s5, %s277
      %p279 = scmp.lt.s32.totalorder %s18, 1
      %s280 = scalar_select %p279, %s18, 1
      %s281 = smul.addr %s280, 8
      %s282 = scalar_lea.vmem %s6, %s281
      %v284 = vld [vmem:[%s2] sm:$0xff]
      %v285 = vld [vmem:[%s2 + $0x8] sm:$0xff]
      %v286 = vld [vmem:[%s2 + $0x10] sm:$0xff]
      %v287 = vld [vmem:[%s2 + $0x18] sm:$0xff]
      %v288 = vld [vmem:[%s2 + $0x20] sm:$0xff]
      %v289 = vld [vmem:[%s2 + $0x28] sm:$0xff]
      %v290 = vld [vmem:[%s2 + $0x30] sm:$0xff]
      %v291 = vld [vmem:[%s2 + $0x38] sm:$0xff]
      %v292 = vld [vmem:[%s2 + $0x40] sm:$0xff]
      %v293 = vld [vmem:[%s2 + $0x48] sm:$0xff]
      %v294 = vld [vmem:[%s2 + $0x50] sm:$0xff]
      %v295 = vld [vmem:[%s2 + $0x58] sm:$0xff]
      %v296 = vld [vmem:[%s2 + $0x60] sm:$0xff]
      %v297 = vld [vmem:[%s2 + $0x68] sm:$0xff]
      %v298 = vld [vmem:[%s2 + $0x70] sm:$0xff]
      %v299 = vld [vmem:[%s2 + $0x78] sm:$0xff]
      %v300 = vld [vmem:[%s2 + $0x80] sm:$0xff]
      %v301 = vld [vmem:[%s2 + $0x88] sm:$0xff]
      %v302 = vld [vmem:[%s2 + $0x90] sm:$0xff]
      %v303 = vld [vmem:[%s2 + $0x98] sm:$0xff]
      %v304 = vld [vmem:[%s2 + $0xa0] sm:$0xff]
      %v305 = vld [vmem:[%s2 + $0xa8] sm:$0xff]
      %v306 = vld [vmem:[%s2 + $0xb0] sm:$0xff]
      %v307 = vld [vmem:[%s2 + $0xb8] sm:$0xff]
      %v308 = vld [vmem:[%s2 + $0xc0] sm:$0xff]
      %v309 = vld [vmem:[%s2 + $0xc8] sm:$0xff]
      %v310 = vld [vmem:[%s2 + $0xd0] sm:$0xff]
      %v311 = vld [vmem:[%s2 + $0xd8] sm:$0xff]
      %v312 = vld [vmem:[%s2 + $0xe0] sm:$0xff]
      %v313 = vld [vmem:[%s2 + $0xe8] sm:$0xff]
      %v314 = vld [vmem:[%s2 + $0xf0] sm:$0xff]
      %v315 = vld [vmem:[%s2 + $0xf8] sm:$0xff]
      %v316 = vld [vmem:[%s2 + $0x100] sm:$0xff]
      %v317 = vld [vmem:[%s2 + $0x108] sm:$0xff]
      %v318 = vld [vmem:[%s2 + $0x110] sm:$0xff]
      %v319 = vld [vmem:[%s2 + $0x118] sm:$0xff]
      %v320 = vld [vmem:[%s2 + $0x120] sm:$0xff]
      %v321 = vld [vmem:[%s2 + $0x128] sm:$0xff]
      %v322 = vld [vmem:[%s2 + $0x130] sm:$0xff]
      %v323 = vld [vmem:[%s2 + $0x138] sm:$0xff]
      %v324 = vld [vmem:[%s2 + $0x140] sm:$0xff]
      %v325 = vld [vmem:[%s268 + $0x5] sm:$0xff]
      %v326 = vld [vmem:[%s268 + $0xd] sm:$0xff]
      %v327 = vld [vmem:[%s268 + $0x15] sm:$0xff]
      %v328 = vld [vmem:[%s268 + $0x1d] sm:$0xff]
      %v329 = vld [vmem:[%s268 + $0x25] sm:$0xff]
      %v330 = vld [vmem:[%s268 + $0x2d] sm:$0xff]
      %v331 = vld [vmem:[%s268 + $0x35] sm:$0xff]
      %v332 = vld [vmem:[%s268 + $0x3d] sm:$0xff]
      %v333 = vld [vmem:[%s268 + $0x45] sm:$0xff]
      %v334 = vld [vmem:[%s268 + $0x4d] sm:$0xff]
      %v335 = vld [vmem:[%s268 + $0x55] sm:$0xff]
      %v336 = vld [vmem:[%s268 + $0x5d] sm:$0xff]
      %v337 = vld [vmem:[%s268 + $0x65] sm:$0xff]
      %v338 = vld [vmem:[%s268 + $0x6d] sm:$0xff]
      %v339 = vld [vmem:[%s268 + $0x75] sm:$0xff]
      %v340 = vld [vmem:[%s268 + $0x7d] sm:$0xff]
      %v341 = vld [vmem:[%s268 + $0x85] sm:$0xff]
      %v342 = vld [vmem:[%s268 + $0x8d] sm:$0xff]
      %v343 = vld [vmem:[%s268 + $0x95] sm:$0xff]
      %v344 = vld [vmem:[%s268 + $0x9d] sm:$0xff]
      %v345 = vld [vmem:[%s268 + $0xa5] sm:$0xff]
      %v346 = vld [vmem:[%s268 + $0xad] sm:$0xff]
      %v347 = vld [vmem:[%s268 + $0xb5] sm:$0xff]
      %v348 = vld [vmem:[%s268 + $0xbd] sm:$0xff]
      %v349 = vld [vmem:[%s268 + $0xc5] sm:$0xff]
      %v350 = vld [vmem:[%s268 + $0xcd] sm:$0xff]
      %v351 = vld [vmem:[%s268 + $0xd5] sm:$0xff]
      %v352 = vld [vmem:[%s268 + $0xdd] sm:$0xff]
      %v353 = vld [vmem:[%s268 + $0xe5] sm:$0xff]
      %v354 = vld [vmem:[%s268 + $0xed] sm:$0xff]
      %v355 = vld [vmem:[%s268 + $0xf5] sm:$0xff]
      %v356 = vld [vmem:[%s268 + $0xfd] sm:$0xff]
      %v357 = vld [vmem:[%s268 + $0x105] sm:$0xff]
      %v358 = vld [vmem:[%s268 + $0x10d] sm:$0xff]
      %v359 = vld [vmem:[%s268 + $0x115] sm:$0xff]
      %v360 = vld [vmem:[%s268 + $0x11d] sm:$0xff]
      %v361 = vld [vmem:[%s268 + $0x125] sm:$0xff]
      %v362 = vld [vmem:[%s268 + $0x12d] sm:$0xff]
      %v363 = vld [vmem:[%s268 + $0x135] sm:$0xff]
      %v364 = vld [vmem:[%s268 + $0x13d] sm:$0xff]
      %v365 = vld [vmem:[%s268 + $0x145] sm:$0xff]
      %v366 = vpack.c.bf16 %v326, %v325
      %v367 = vpack.c.bf16 %v328, %v327
      %v368 = vpack.c.bf16 %v330, %v329
      %v369 = vpack.c.bf16 %v332, %v331
      %v370 = vpack.c.bf16 %v334, %v333
      %v371 = vpack.c.bf16 %v336, %v335
      %v372 = vpack.c.bf16 %v338, %v337
      %v373 = vpack.c.bf16 %v340, %v339
      %v374 = vpack.c.bf16 %v342, %v341
      %v375 = vpack.c.bf16 %v344, %v343
      %v376 = vpack.c.bf16 %v346, %v345
      %v377 = vpack.c.bf16 %v348, %v347
      %v378 = vpack.c.bf16 %v350, %v349
      %v379 = vpack.c.bf16 %v352, %v351
      %v380 = vpack.c.bf16 %v354, %v353
      %v381 = vpack.c.bf16 %v356, %v355
      %v382 = vpack.c.bf16 %v358, %v357
      %v383 = vpack.c.bf16 %v360, %v359
      %v384 = vpack.c.bf16 %v362, %v361
      %v385 = vpack.c.bf16 %v364, %v363
      %v386 = vpack.c.bf16 %v365, %v365
      %v387 = vld [vmem:[%s3] sm:$0xf]
      %v388 = vld [vmem:[%s3 + $0x4] sm:$0xf]
      %v389 = vld [vmem:[%s3 + $0x8] sm:$0xf]
      %v390 = vld [vmem:[%s3 + $0xc] sm:$0xf]
      %v391 = vld [vmem:[%s3 + $0x10] sm:$0xf]
      %v392 = vld [vmem:[%s3 + $0x14] sm:$0xf]
      %v393 = vld [vmem:[%s3 + $0x18] sm:$0xf]
      %v394 = vld [vmem:[%s3 + $0x1c] sm:$0xf]
      %v395 = vld [vmem:[%s3 + $0x20] sm:$0xf]
      %v396 = vld [vmem:[%s3 + $0x24] sm:$0xf]
      %v397 = vld [vmem:[%s3 + $0x28] sm:$0xf]
      %v398 = vld [vmem:[%s3 + $0x2c] sm:$0xf]
      %v399 = vld [vmem:[%s3 + $0x30] sm:$0xf]
      %v400 = vld [vmem:[%s3 + $0x34] sm:$0xf]
      %v401 = vld [vmem:[%s3 + $0x38] sm:$0xf]
      %v402 = vld [vmem:[%s3 + $0x3c] sm:$0xf]
      %v403 = vld [vmem:[%s268 + $0x6] sm:$0xff]
      %v404 = vld [vmem:[%s268 + $0xe] sm:$0xff]
      %v405 = vld [vmem:[%s268 + $0x16] sm:$0xff]
      %v406 = vld [vmem:[%s268 + $0x1e] sm:$0xff]
      %v407 = vld [vmem:[%s268 + $0x26] sm:$0xff]
      %v408 = vld [vmem:[%s268 + $0x2e] sm:$0xff]
      %v409 = vld [vmem:[%s268 + $0x36] sm:$0xff]
      %v410 = vld [vmem:[%s268 + $0x3e] sm:$0xff]
      %v411 = vld [vmem:[%s268 + $0x46] sm:$0xff]
      %v412 = vld [vmem:[%s268 + $0x4e] sm:$0xff]
      %v413 = vld [vmem:[%s268 + $0x56] sm:$0xff]
      %v414 = vld [vmem:[%s268 + $0x5e] sm:$0xff]
      %v415 = vld [vmem:[%s268 + $0x66] sm:$0xff]
      %v416 = vld [vmem:[%s268 + $0x6e] sm:$0xff]
      %v417 = vld [vmem:[%s268 + $0x76] sm:$0xff]
      %v418 = vld [vmem:[%s268 + $0x7e] sm:$0xff]
      %v419 = vld [vmem:[%s268 + $0x86] sm:$0xff]
      %v420 = vld [vmem:[%s268 + $0x8e] sm:$0xff]
      %v421 = vld [vmem:[%s268 + $0x96] sm:$0xff]
      %v422 = vld [vmem:[%s268 + $0x9e] sm:$0xff]
      %v423 = vld [vmem:[%s268 + $0xa6] sm:$0xff]
      %v424 = vld [vmem:[%s268 + $0xae] sm:$0xff]
      %v425 = vld [vmem:[%s268 + $0xb6] sm:$0xff]
      %v426 = vld [vmem:[%s268 + $0xbe] sm:$0xff]
      %v427 = vld [vmem:[%s268 + $0xc6] sm:$0xff]
      %v428 = vld [vmem:[%s268 + $0xce] sm:$0xff]
      %v429 = vld [vmem:[%s268 + $0xd6] sm:$0xff]
      %v430 = vld [vmem:[%s268 + $0xde] sm:$0xff]
      %v431 = vld [vmem:[%s268 + $0xe6] sm:$0xff]
      %v432 = vld [vmem:[%s268 + $0xee] sm:$0xff]
      %v433 = vld [vmem:[%s268 + $0xf6] sm:$0xff]
      %v434 = vld [vmem:[%s268 + $0xfe] sm:$0xff]
      %v435 = vld [vmem:[%s268 + $0x106] sm:$0xff]
      %v436 = vld [vmem:[%s268 + $0x10e] sm:$0xff]
      %v437 = vld [vmem:[%s268 + $0x116] sm:$0xff]
      %v438 = vld [vmem:[%s268 + $0x11e] sm:$0xff]
      %v439 = vld [vmem:[%s268 + $0x126] sm:$0xff]
      %v440 = vld [vmem:[%s268 + $0x12e] sm:$0xff]
      %v441 = vld [vmem:[%s268 + $0x136] sm:$0xff]
      %v442 = vld [vmem:[%s268 + $0x13e] sm:$0xff]
      %v443 = vld [vmem:[%s268 + $0x146] sm:$0xff]
      %v444 = vpack.c.bf16 %v404, %v403
      %v445 = vpack.c.bf16 %v406, %v405
      %v446 = vpack.c.bf16 %v408, %v407
      %v447 = vpack.c.bf16 %v410, %v409
      %v448 = vpack.c.bf16 %v412, %v411
      %v449 = vpack.c.bf16 %v414, %v413
      %v450 = vpack.c.bf16 %v416, %v415
      %v451 = vpack.c.bf16 %v418, %v417
      %v452 = vpack.c.bf16 %v420, %v419
      %v453 = vpack.c.bf16 %v422, %v421
      %v454 = vpack.c.bf16 %v424, %v423
      %v455 = vpack.c.bf16 %v426, %v425
      %v456 = vpack.c.bf16 %v428, %v427
      %v457 = vpack.c.bf16 %v430, %v429
      %v458 = vpack.c.bf16 %v432, %v431
      %v459 = vpack.c.bf16 %v434, %v433
      %v460 = vpack.c.bf16 %v436, %v435
      %v461 = vpack.c.bf16 %v438, %v437
      %v462 = vpack.c.bf16 %v440, %v439
      %v463 = vpack.c.bf16 %v442, %v441
      %v464 = vpack.c.bf16 %v443, %v443
      %s465 = scalar_lea.vmem %s3, 64
      %v466 = vld [vmem:[%s465] sm:$0xf]
      %v467 = vld [vmem:[%s465 + $0x4] sm:$0xf]
      %v468 = vld [vmem:[%s465 + $0x8] sm:$0xf]
      %v469 = vld [vmem:[%s465 + $0xc] sm:$0xf]
      %v470 = vld [vmem:[%s465 + $0x10] sm:$0xf]
      %v471 = vld [vmem:[%s465 + $0x14] sm:$0xf]
      %v472 = vld [vmem:[%s465 + $0x18] sm:$0xf]
      %v473 = vld [vmem:[%s465 + $0x1c] sm:$0xf]
      %v474 = vld [vmem:[%s465 + $0x20] sm:$0xf]
      %v475 = vld [vmem:[%s465 + $0x24] sm:$0xf]
      %v476 = vld [vmem:[%s465 + $0x28] sm:$0xf]
      %v477 = vld [vmem:[%s465 + $0x2c] sm:$0xf]
      %v478 = vld [vmem:[%s465 + $0x30] sm:$0xf]
      %v479 = vld [vmem:[%s465 + $0x34] sm:$0xf]
      %v480 = vld [vmem:[%s465 + $0x38] sm:$0xf]
      %v481 = vld [vmem:[%s465 + $0x3c] sm:$0xf]
      %v498 = vunpack.c.l.b16 %v466
      %v499 = vunpack.c.l.b16 %v467
      %v500 = vunpack.c.l.b16 %v468
      %v501 = vunpack.c.l.b16 %v469
      %v502 = vunpack.c.l.b16 %v470
      %v503 = vunpack.c.l.b16 %v471
      %v504 = vunpack.c.l.b16 %v472
      %v505 = vunpack.c.l.b16 %v473
      %v506 = vunpack.c.l.b16 %v474
      %v507 = vunpack.c.l.b16 %v475
      %v508 = vunpack.c.l.b16 %v476
      %v509 = vunpack.c.l.b16 %v477
      %v510 = vunpack.c.l.b16 %v478
      %v511 = vunpack.c.l.b16 %v479
      %v512 = vunpack.c.l.b16 %v480
      %v513 = vunpack.c.l.b16 %v481
      %v514 = vpack.c.b16 %v499, %v498
      %v515 = vpack.c.b16 %v501, %v500
      %v516 = vpack.c.b16 %v503, %v502
      %v517 = vpack.c.b16 %v505, %v504
      %v518 = vpack.c.b16 %v507, %v506
      %v519 = vpack.c.b16 %v509, %v508
      %v520 = vpack.c.b16 %v511, %v510
      %v521 = vpack.c.b16 %v513, %v512
      %530 = vmatprep.subr.bf16.mxu0 0
      %531 = vmatpush1.bf16.msra.mxu0 %v521
      %532 = vmatprep.subr.bf16.mxu0 0
      %533 = vmatpush1.bf16.msra.mxu0 %v520
      %534 = vmatprep.subr.bf16.mxu0 0
      %535 = vmatpush1.bf16.msra.mxu0 %v519
      %536 = vmatprep.subr.bf16.mxu0 0
      %537 = vmatpush1.bf16.msra.mxu0 %v518
      %538 = vmatprep.subr.bf16.mxu0 0
      %539 = vmatpush1.bf16.msra.mxu0 %v517
      %540 = vmatprep.subr.bf16.mxu0 0
      %541 = vmatpush1.bf16.msra.mxu0 %v516
      %542 = vmatprep.subr.bf16.mxu0 0
      %543 = vmatpush1.bf16.msra.mxu0 %v515
      %544 = vmatprep.subr.bf16.mxu0 0
      %545 = vmatpush1.bf16.msra.mxu0 %v514
      %546 = vmatprep.subr.bf16.mxu0 0
      %547 = vmatpush2.bf16.msra.mxu0 0
      %548 = vmatprep.subr.bf16.mxu0 0
      %549 = vmatpush2.bf16.msra.mxu0 0
      %550 = vmatprep.subr.bf16.mxu0 0
      %551 = vmatpush2.bf16.msra.mxu0 0
      %552 = vmatprep.subr.bf16.mxu0 0
      %553 = vmatpush2.bf16.msra.mxu0 0
      %554 = vmatprep.subr.bf16.mxu0 0
      %555 = vmatpush2.bf16.msra.mxu0 0
      %556 = vmatprep.subr.bf16.mxu0 0
      %557 = vmatpush2.bf16.msra.mxu0 0
      %558 = vmatprep.subr.bf16.mxu0 0
      %559 = vmatpush2.bf16.msra.mxu0 0
      %560 = vmatprep.subr.bf16.mxu0 0
      %561 = vmatpush2.bf16.msra.mxu0 0
      %562 = vmatprep.mubr.bf16.mxu0 0
      %563 = vmatmul.mubr.bf16.gmra.mxu0 %v444
      %v564 = vpop.f32.mrf.mxu0
      %v565 = vadd.f32 0.0, %v564
      %v566 = vpop.f32.mrf.mxu0
      %v567 = vpop.f32.mrf.mxu0
      %v568 = vadd.f32 0.0, %v567
      %v569 = vpop.f32.mrf.mxu0
      %570 = vmatprep.mubr.bf16.mxu0 0
      %571 = vmatmul.mubr.bf16.gmra.mxu0 %v445
      %v572 = vpop.f32.mrf.mxu0
      %v573 = vadd.f32 0.0, %v572
      %v574 = vpop.f32.mrf.mxu0
      %v575 = vpop.f32.mrf.mxu0
      %v576 = vadd.f32 0.0, %v575
      %v577 = vpop.f32.mrf.mxu0
      %578 = vmatprep.mubr.bf16.mxu0 0
      %579 = vmatmul.mubr.bf16.gmra.mxu0 %v446
      %v580 = vpop.f32.mrf.mxu0
      %v581 = vadd.f32 0.0, %v580
      %v582 = vpop.f32.mrf.mxu0
      %v583 = vpop.f32.mrf.mxu0
      %v584 = vadd.f32 0.0, %v583
      %v585 = vpop.f32.mrf.mxu0
      %586 = vmatprep.mubr.bf16.mxu0 0
      %587 = vmatmul.mubr.bf16.gmra.mxu0 %v447
      %v588 = vpop.f32.mrf.mxu0
      %v589 = vadd.f32 0.0, %v588
      %v590 = vpop.f32.mrf.mxu0
      %v591 = vpop.f32.mrf.mxu0
      %v592 = vadd.f32 0.0, %v591
      %v593 = vpop.f32.mrf.mxu0
      %594 = vmatprep.mubr.bf16.mxu0 0
      %595 = vmatmul.mubr.bf16.gmra.mxu0 %v448
      %v596 = vpop.f32.mrf.mxu0
      %v597 = vadd.f32 0.0, %v596
      %v598 = vpop.f32.mrf.mxu0
      %v599 = vpop.f32.mrf.mxu0
      %v600 = vadd.f32 0.0, %v599
      %v601 = vpop.f32.mrf.mxu0
      %602 = vmatprep.mubr.bf16.mxu0 0
      %603 = vmatmul.mubr.bf16.gmra.mxu0 %v449
      %v604 = vpop.f32.mrf.mxu0
      %v605 = vadd.f32 0.0, %v604
      %v606 = vpop.f32.mrf.mxu0
      %v607 = vpop.f32.mrf.mxu0
      %v608 = vadd.f32 0.0, %v607
      %v609 = vpop.f32.mrf.mxu0
      %610 = vmatprep.mubr.bf16.mxu0 0
      %611 = vmatmul.mubr.bf16.gmra.mxu0 %v450
      %v612 = vpop.f32.mrf.mxu0
      %v613 = vadd.f32 0.0, %v612
      %v614 = vpop.f32.mrf.mxu0
      %v615 = vpop.f32.mrf.mxu0
      %v616 = vadd.f32 0.0, %v615
      %v617 = vpop.f32.mrf.mxu0
      %618 = vmatprep.mubr.bf16.mxu0 0
      %619 = vmatmul.mubr.bf16.gmra.mxu0 %v451
      %v620 = vpop.f32.mrf.mxu0
      %v621 = vadd.f32 0.0, %v620
      %v622 = vpop.f32.mrf.mxu0
      %v623 = vpop.f32.mrf.mxu0
      %v624 = vadd.f32 0.0, %v623
      %v625 = vpop.f32.mrf.mxu0
      %626 = vmatprep.mubr.bf16.mxu0 0
      %627 = vmatmul.mubr.bf16.gmra.mxu0 %v452
      %v628 = vpop.f32.mrf.mxu0
      %v629 = vadd.f32 0.0, %v628
      %v630 = vpop.f32.mrf.mxu0
      %v631 = vpop.f32.mrf.mxu0
      %v632 = vadd.f32 0.0, %v631
      %v633 = vpop.f32.mrf.mxu0
      %634 = vmatprep.mubr.bf16.mxu0 0
      %635 = vmatmul.mubr.bf16.gmra.mxu0 %v453
      %v636 = vpop.f32.mrf.mxu0
      %v637 = vadd.f32 0.0, %v636
      %v638 = vpop.f32.mrf.mxu0
      %v639 = vpop.f32.mrf.mxu0
      %v640 = vadd.f32 0.0, %v639
      %v641 = vpop.f32.mrf.mxu0
      %642 = vmatprep.mubr.bf16.mxu0 0
      %643 = vmatmul.mubr.bf16.gmra.mxu0 %v454
      %v644 = vpop.f32.mrf.mxu0
      %v645 = vadd.f32 0.0, %v644
      %v646 = vpop.f32.mrf.mxu0
      %v647 = vpop.f32.mrf.mxu0
      %v648 = vadd.f32 0.0, %v647
      %v649 = vpop.f32.mrf.mxu0
      %650 = vmatprep.mubr.bf16.mxu0 0
      %651 = vmatmul.mubr.bf16.gmra.mxu0 %v455
      %v652 = vpop.f32.mrf.mxu0
      %v653 = vadd.f32 0.0, %v652
      %v654 = vpop.f32.mrf.mxu0
      %v655 = vpop.f32.mrf.mxu0
      %v656 = vadd.f32 0.0, %v655
      %v657 = vpop.f32.mrf.mxu0
      %658 = vmatprep.mubr.bf16.mxu0 0
      %659 = vmatmul.mubr.bf16.gmra.mxu0 %v456
      %v660 = vpop.f32.mrf.mxu0
      %v661 = vadd.f32 0.0, %v660
      %v662 = vpop.f32.mrf.mxu0
      %v663 = vpop.f32.mrf.mxu0
      %v664 = vadd.f32 0.0, %v663
      %v665 = vpop.f32.mrf.mxu0
      %666 = vmatprep.mubr.bf16.mxu0 0
      %667 = vmatmul.mubr.bf16.gmra.mxu0 %v457
      %v668 = vpop.f32.mrf.mxu0
      %v669 = vadd.f32 0.0, %v668
      %v670 = vpop.f32.mrf.mxu0
      %v671 = vpop.f32.mrf.mxu0
      %v672 = vadd.f32 0.0, %v671
      %v673 = vpop.f32.mrf.mxu0
      %674 = vmatprep.mubr.bf16.mxu0 0
      %675 = vmatmul.mubr.bf16.gmra.mxu0 %v458
      %v676 = vpop.f32.mrf.mxu0
      %v677 = vadd.f32 0.0, %v676
      %v678 = vpop.f32.mrf.mxu0
      %v679 = vpop.f32.mrf.mxu0
      %v680 = vadd.f32 0.0, %v679
      %v681 = vpop.f32.mrf.mxu0
      %682 = vmatprep.mubr.bf16.mxu0 0
      %683 = vmatmul.mubr.bf16.gmra.mxu0 %v459
      %v684 = vpop.f32.mrf.mxu0
      %v685 = vadd.f32 0.0, %v684
      %v686 = vpop.f32.mrf.mxu0
      %v687 = vpop.f32.mrf.mxu0
      %v688 = vadd.f32 0.0, %v687
      %v689 = vpop.f32.mrf.mxu0
      %690 = vmatprep.mubr.bf16.mxu0 0
      %691 = vmatmul.mubr.bf16.gmra.mxu0 %v460
      %v692 = vpop.f32.mrf.mxu0
      %v693 = vadd.f32 0.0, %v692
      %v694 = vpop.f32.mrf.mxu0
      %v695 = vpop.f32.mrf.mxu0
      %v696 = vadd.f32 0.0, %v695
      %v697 = vpop.f32.mrf.mxu0
      %698 = vmatprep.mubr.bf16.mxu0 0
      %699 = vmatmul.mubr.bf16.gmra.mxu0 %v461
      %v700 = vpop.f32.mrf.mxu0
      %v701 = vadd.f32 0.0, %v700
      %v702 = vpop.f32.mrf.mxu0
      %v703 = vpop.f32.mrf.mxu0
      %v704 = vadd.f32 0.0, %v703
      %v705 = vpop.f32.mrf.mxu0
      %706 = vmatprep.mubr.bf16.mxu0 0
      %707 = vmatmul.mubr.bf16.gmra.mxu0 %v462
      %v708 = vpop.f32.mrf.mxu0
      %v709 = vadd.f32 0.0, %v708
      %v710 = vpop.f32.mrf.mxu0
      %v711 = vpop.f32.mrf.mxu0
      %v712 = vadd.f32 0.0, %v711
      %v713 = vpop.f32.mrf.mxu0
      %714 = vmatprep.mubr.bf16.mxu0 0
      %715 = vmatmul.mubr.bf16.gmra.mxu0 %v463
      %v716 = vpop.f32.mrf.mxu0
      %v717 = vadd.f32 0.0, %v716
      %v718 = vpop.f32.mrf.mxu0
      %v719 = vpop.f32.mrf.mxu0
      %v720 = vadd.f32 0.0, %v719
      %v721 = vpop.f32.mrf.mxu0
      %722 = vmatprep.mubr.bf16.mxu0 0
      %723 = vmatmul.mubr.bf16.gmra.mxu0 %v464
      %v724 = vpop.f32.mrf.mxu0
      %v725 = vadd.f32 0.0, %v724
      %v726 = vpop.f32.mrf.mxu0
      %v727 = vpop.f32.mrf.mxu0
      %v728 = vpop.f32.mrf.mxu0
      %729 = vdwg.mxu0
      %v746 = vunpack.c.l.b16 %v387
      %v747 = vunpack.c.l.b16 %v388
      %v748 = vunpack.c.l.b16 %v389
      %v749 = vunpack.c.l.b16 %v390
      %v750 = vunpack.c.l.b16 %v391
      %v751 = vunpack.c.l.b16 %v392
      %v752 = vunpack.c.l.b16 %v393
      %v753 = vunpack.c.l.b16 %v394
      %v754 = vunpack.c.l.b16 %v395
      %v755 = vunpack.c.l.b16 %v396
      %v756 = vunpack.c.l.b16 %v397
      %v757 = vunpack.c.l.b16 %v398
      %v758 = vunpack.c.l.b16 %v399
      %v759 = vunpack.c.l.b16 %v400
      %v760 = vunpack.c.l.b16 %v401
      %v761 = vunpack.c.l.b16 %v402
      %v762 = vpack.c.b16 %v747, %v746
      %v763 = vpack.c.b16 %v749, %v748
      %v764 = vpack.c.b16 %v751, %v750
      %v765 = vpack.c.b16 %v753, %v752
      %v766 = vpack.c.b16 %v755, %v754
      %v767 = vpack.c.b16 %v757, %v756
      %v768 = vpack.c.b16 %v759, %v758
      %v769 = vpack.c.b16 %v761, %v760
      %778 = vmatprep.subr.bf16.mxu0 0
      %779 = vmatpush1.bf16.msra.mxu0 %v769
      %780 = vmatprep.subr.bf16.mxu0 0
      %781 = vmatpush1.bf16.msra.mxu0 %v768
      %782 = vmatprep.subr.bf16.mxu0 0
      %783 = vmatpush1.bf16.msra.mxu0 %v767
      %784 = vmatprep.subr.bf16.mxu0 0
      %785 = vmatpush1.bf16.msra.mxu0 %v766
      %786 = vmatprep.subr.bf16.mxu0 0
      %787 = vmatpush1.bf16.msra.mxu0 %v765
      %788 = vmatprep.subr.bf16.mxu0 0
      %789 = vmatpush1.bf16.msra.mxu0 %v764
      %790 = vmatprep.subr.bf16.mxu0 0
      %791 = vmatpush1.bf16.msra.mxu0 %v763
      %792 = vmatprep.subr.bf16.mxu0 0
      %793 = vmatpush1.bf16.msra.mxu0 %v762
      %794 = vmatprep.subr.bf16.mxu0 0
      %795 = vmatpush2.bf16.msra.mxu0 0
      %796 = vmatprep.subr.bf16.mxu0 0
      %797 = vmatpush2.bf16.msra.mxu0 0
      %798 = vmatprep.subr.bf16.mxu0 0
      %799 = vmatpush2.bf16.msra.mxu0 0
      %800 = vmatprep.subr.bf16.mxu0 0
      %801 = vmatpush2.bf16.msra.mxu0 0
      %802 = vmatprep.subr.bf16.mxu0 0
      %803 = vmatpush2.bf16.msra.mxu0 0
      %804 = vmatprep.subr.bf16.mxu0 0
      %805 = vmatpush2.bf16.msra.mxu0 0
      %806 = vmatprep.subr.bf16.mxu0 0
      %807 = vmatpush2.bf16.msra.mxu0 0
      %808 = vmatprep.subr.bf16.mxu0 0
      %809 = vmatpush2.bf16.msra.mxu0 0
      %810 = vmatprep.mubr.bf16.mxu0 0
      %811 = vmatmul.mubr.bf16.gmra.mxu0 %v366
      %v812 = vpop.f32.mrf.mxu0
      %v813 = vadd.f32 %v565, %v812
      %v814 = vpop.f32.mrf.mxu0
      %v815 = vpop.f32.mrf.mxu0
      %v816 = vadd.f32 %v568, %v815
      %v817 = vpop.f32.mrf.mxu0
      %818 = vmatprep.mubr.bf16.mxu0 0
      %819 = vmatmul.mubr.bf16.gmra.mxu0 %v367
      %v820 = vpop.f32.mrf.mxu0
      %v821 = vadd.f32 %v573, %v820
      %v822 = vpop.f32.mrf.mxu0
      %v823 = vpop.f32.mrf.mxu0
      %v824 = vadd.f32 %v576, %v823
      %v825 = vpop.f32.mrf.mxu0
      %826 = vmatprep.mubr.bf16.mxu0 0
      %827 = vmatmul.mubr.bf16.gmra.mxu0 %v368
      %v828 = vpop.f32.mrf.mxu0
      %v829 = vadd.f32 %v581, %v828
      %v830 = vpop.f32.mrf.mxu0
      %v831 = vpop.f32.mrf.mxu0
      %v832 = vadd.f32 %v584, %v831
      %v833 = vpop.f32.mrf.mxu0
      %834 = vmatprep.mubr.bf16.mxu0 0
      %835 = vmatmul.mubr.bf16.gmra.mxu0 %v369
      %v836 = vpop.f32.mrf.mxu0
      %v837 = vadd.f32 %v589, %v836
      %v838 = vpop.f32.mrf.mxu0
      %v839 = vpop.f32.mrf.mxu0
      %v840 = vadd.f32 %v592, %v839
      %v841 = vpop.f32.mrf.mxu0
      %842 = vmatprep.mubr.bf16.mxu0 0
      %843 = vmatmul.mubr.bf16.gmra.mxu0 %v370
      %v844 = vpop.f32.mrf.mxu0
      %v845 = vadd.f32 %v597, %v844
      %v846 = vpop.f32.mrf.mxu0
      %v847 = vpop.f32.mrf.mxu0
      %v848 = vadd.f32 %v600, %v847
      %v849 = vpop.f32.mrf.mxu0
      %850 = vmatprep.mubr.bf16.mxu0 0
      %851 = vmatmul.mubr.bf16.gmra.mxu0 %v371
      %v852 = vpop.f32.mrf.mxu0
      %v853 = vadd.f32 %v605, %v852
      %v854 = vpop.f32.mrf.mxu0
      %v855 = vpop.f32.mrf.mxu0
      %v856 = vadd.f32 %v608, %v855
      %v857 = vpop.f32.mrf.mxu0
      %858 = vmatprep.mubr.bf16.mxu0 0
      %859 = vmatmul.mubr.bf16.gmra.mxu0 %v372
      %v860 = vpop.f32.mrf.mxu0
      %v861 = vadd.f32 %v613, %v860
      %v862 = vpop.f32.mrf.mxu0
      %v863 = vpop.f32.mrf.mxu0
      %v864 = vadd.f32 %v616, %v863
      %v865 = vpop.f32.mrf.mxu0
      %866 = vmatprep.mubr.bf16.mxu0 0
      %867 = vmatmul.mubr.bf16.gmra.mxu0 %v373
      %v868 = vpop.f32.mrf.mxu0
      %v869 = vadd.f32 %v621, %v868
      %v870 = vpop.f32.mrf.mxu0
      %v871 = vpop.f32.mrf.mxu0
      %v872 = vadd.f32 %v624, %v871
      %v873 = vpop.f32.mrf.mxu0
      %874 = vmatprep.mubr.bf16.mxu0 0
      %875 = vmatmul.mubr.bf16.gmra.mxu0 %v374
      %v876 = vpop.f32.mrf.mxu0
      %v877 = vadd.f32 %v629, %v876
      %v878 = vpop.f32.mrf.mxu0
      %v879 = vpop.f32.mrf.mxu0
      %v880 = vadd.f32 %v632, %v879
      %v881 = vpop.f32.mrf.mxu0
      %882 = vmatprep.mubr.bf16.mxu0 0
      %883 = vmatmul.mubr.bf16.gmra.mxu0 %v375
      %v884 = vpop.f32.mrf.mxu0
      %v885 = vadd.f32 %v637, %v884
      %v886 = vpop.f32.mrf.mxu0
      %v887 = vpop.f32.mrf.mxu0
      %v888 = vadd.f32 %v640, %v887
      %v889 = vpop.f32.mrf.mxu0
      %890 = vmatprep.mubr.bf16.mxu0 0
      %891 = vmatmul.mubr.bf16.gmra.mxu0 %v376
      %v892 = vpop.f32.mrf.mxu0
      %v893 = vadd.f32 %v645, %v892
      %v894 = vpop.f32.mrf.mxu0
      %v895 = vpop.f32.mrf.mxu0
      %v896 = vadd.f32 %v648, %v895
      %v897 = vpop.f32.mrf.mxu0
      %898 = vmatprep.mubr.bf16.mxu0 0
      %899 = vmatmul.mubr.bf16.gmra.mxu0 %v377
      %v900 = vpop.f32.mrf.mxu0
      %v901 = vadd.f32 %v653, %v900
      %v902 = vpop.f32.mrf.mxu0
      %v903 = vpop.f32.mrf.mxu0
      %v904 = vadd.f32 %v656, %v903
      %v905 = vpop.f32.mrf.mxu0
      %906 = vmatprep.mubr.bf16.mxu0 0
      %907 = vmatmul.mubr.bf16.gmra.mxu0 %v378
      %v908 = vpop.f32.mrf.mxu0
      %v909 = vadd.f32 %v661, %v908
      %v910 = vpop.f32.mrf.mxu0
      %v911 = vpop.f32.mrf.mxu0
      %v912 = vadd.f32 %v664, %v911
      %v913 = vpop.f32.mrf.mxu0
      %914 = vmatprep.mubr.bf16.mxu0 0
      %915 = vmatmul.mubr.bf16.gmra.mxu0 %v379
      %v916 = vpop.f32.mrf.mxu0
      %v917 = vadd.f32 %v669, %v916
      %v918 = vpop.f32.mrf.mxu0
      %v919 = vpop.f32.mrf.mxu0
      %v920 = vadd.f32 %v672, %v919
      %v921 = vpop.f32.mrf.mxu0
      %922 = vmatprep.mubr.bf16.mxu0 0
      %923 = vmatmul.mubr.bf16.gmra.mxu0 %v380
      %v924 = vpop.f32.mrf.mxu0
      %v925 = vadd.f32 %v677, %v924
      %v926 = vpop.f32.mrf.mxu0
      %v927 = vpop.f32.mrf.mxu0
      %v928 = vadd.f32 %v680, %v927
      %v929 = vpop.f32.mrf.mxu0
      %930 = vmatprep.mubr.bf16.mxu0 0
      %931 = vmatmul.mubr.bf16.gmra.mxu0 %v381
      %v932 = vpop.f32.mrf.mxu0
      %v933 = vadd.f32 %v685, %v932
      %v934 = vpop.f32.mrf.mxu0
      %v935 = vpop.f32.mrf.mxu0
      %v936 = vadd.f32 %v688, %v935
      %v937 = vpop.f32.mrf.mxu0
      %938 = vmatprep.mubr.bf16.mxu0 0
      %939 = vmatmul.mubr.bf16.gmra.mxu0 %v382
      %v940 = vpop.f32.mrf.mxu0
      %v941 = vadd.f32 %v693, %v940
      %v942 = vpop.f32.mrf.mxu0
      %v943 = vpop.f32.mrf.mxu0
      %v944 = vadd.f32 %v696, %v943
      %v945 = vpop.f32.mrf.mxu0
      %946 = vmatprep.mubr.bf16.mxu0 0
      %947 = vmatmul.mubr.bf16.gmra.mxu0 %v383
      %v948 = vpop.f32.mrf.mxu0
      %v949 = vadd.f32 %v701, %v948
      %v950 = vpop.f32.mrf.mxu0
      %v951 = vpop.f32.mrf.mxu0
      %v952 = vadd.f32 %v704, %v951
      %v953 = vpop.f32.mrf.mxu0
      %954 = vmatprep.mubr.bf16.mxu0 0
      %955 = vmatmul.mubr.bf16.gmra.mxu0 %v384
      %v956 = vpop.f32.mrf.mxu0
      %v957 = vadd.f32 %v709, %v956
      %v958 = vpop.f32.mrf.mxu0
      %v959 = vpop.f32.mrf.mxu0
      %v960 = vadd.f32 %v712, %v959
      %v961 = vpop.f32.mrf.mxu0
      %962 = vmatprep.mubr.bf16.mxu0 0
      %963 = vmatmul.mubr.bf16.gmra.mxu0 %v385
      %v964 = vpop.f32.mrf.mxu0
      %v965 = vadd.f32 %v717, %v964
      %v966 = vpop.f32.mrf.mxu0
      %v967 = vpop.f32.mrf.mxu0
      %v968 = vadd.f32 %v720, %v967
      %v969 = vpop.f32.mrf.mxu0
      %970 = vmatprep.mubr.bf16.mxu0 0
      %971 = vmatmul.mubr.bf16.gmra.mxu0 %v386
      %v972 = vpop.f32.mrf.mxu0
      %v973 = vadd.f32 %v725, %v972
      %v974 = vpop.f32.mrf.mxu0
      %v975 = vpop.f32.mrf.mxu0
      %v976 = vpop.f32.mrf.mxu0
      %977 = vdwg.mxu0
      %v978 = vld [vmem:[%s268 + $0x7] sm:$0xff]
      %v979 = vld [vmem:[%s268 + $0xf] sm:$0xff]
      %v980 = vld [vmem:[%s268 + $0x17] sm:$0xff]
      %v981 = vld [vmem:[%s268 + $0x1f] sm:$0xff]
      %v982 = vld [vmem:[%s268 + $0x27] sm:$0xff]
      %v983 = vld [vmem:[%s268 + $0x2f] sm:$0xff]
      %v984 = vld [vmem:[%s268 + $0x37] sm:$0xff]
      %v985 = vld [vmem:[%s268 + $0x3f] sm:$0xff]
      %v986 = vld [vmem:[%s268 + $0x47] sm:$0xff]
      %v987 = vld [vmem:[%s268 + $0x4f] sm:$0xff]
      %v988 = vld [vmem:[%s268 + $0x57] sm:$0xff]
      %v989 = vld [vmem:[%s268 + $0x5f] sm:$0xff]
      %v990 = vld [vmem:[%s268 + $0x67] sm:$0xff]
      %v991 = vld [vmem:[%s268 + $0x6f] sm:$0xff]
      %v992 = vld [vmem:[%s268 + $0x77] sm:$0xff]
      %v993 = vld [vmem:[%s268 + $0x7f] sm:$0xff]
      %v994 = vld [vmem:[%s268 + $0x87] sm:$0xff]
      %v995 = vld [vmem:[%s268 + $0x8f] sm:$0xff]
      %v996 = vld [vmem:[%s268 + $0x97] sm:$0xff]
      %v997 = vld [vmem:[%s268 + $0x9f] sm:$0xff]
      %v998 = vld [vmem:[%s268 + $0xa7] sm:$0xff]
      %v999 = vld [vmem:[%s268 + $0xaf] sm:$0xff]
      %v1000 = vld [vmem:[%s268 + $0xb7] sm:$0xff]
      %v1001 = vld [vmem:[%s268 + $0xbf] sm:$0xff]
      %v1002 = vld [vmem:[%s268 + $0xc7] sm:$0xff]
      %v1003 = vld [vmem:[%s268 + $0xcf] sm:$0xff]
      %v1004 = vld [vmem:[%s268 + $0xd7] sm:$0xff]
      %v1005 = vld [vmem:[%s268 + $0xdf] sm:$0xff]
      %v1006 = vld [vmem:[%s268 + $0xe7] sm:$0xff]
      %v1007 = vld [vmem:[%s268 + $0xef] sm:$0xff]
      %v1008 = vld [vmem:[%s268 + $0xf7] sm:$0xff]
      %v1009 = vld [vmem:[%s268 + $0xff] sm:$0xff]
      %v1010 = vld [vmem:[%s268 + $0x107] sm:$0xff]
      %v1011 = vld [vmem:[%s268 + $0x10f] sm:$0xff]
      %v1012 = vld [vmem:[%s268 + $0x117] sm:$0xff]
      %v1013 = vld [vmem:[%s268 + $0x11f] sm:$0xff]
      %v1014 = vld [vmem:[%s268 + $0x127] sm:$0xff]
      %v1015 = vld [vmem:[%s268 + $0x12f] sm:$0xff]
      %v1016 = vld [vmem:[%s268 + $0x137] sm:$0xff]
      %v1017 = vld [vmem:[%s268 + $0x13f] sm:$0xff]
      %v1018 = vld [vmem:[%s268 + $0x147] sm:$0xff]
      %v1019 = vpack.c.bf16 %v979, %v978
      %v1020 = vpack.c.bf16 %v981, %v980
      %v1021 = vpack.c.bf16 %v983, %v982
      %v1022 = vpack.c.bf16 %v985, %v984
      %v1023 = vpack.c.bf16 %v987, %v986
      %v1024 = vpack.c.bf16 %v989, %v988
      %v1025 = vpack.c.bf16 %v991, %v990
      %v1026 = vpack.c.bf16 %v993, %v992
      %v1027 = vpack.c.bf16 %v995, %v994
      %v1028 = vpack.c.bf16 %v997, %v996
      %v1029 = vpack.c.bf16 %v999, %v998
      %v1030 = vpack.c.bf16 %v1001, %v1000
      %v1031 = vpack.c.bf16 %v1003, %v1002
      %v1032 = vpack.c.bf16 %v1005, %v1004
      %v1033 = vpack.c.bf16 %v1007, %v1006
      %v1034 = vpack.c.bf16 %v1009, %v1008
      %v1035 = vpack.c.bf16 %v1011, %v1010
      %v1036 = vpack.c.bf16 %v1013, %v1012
      %v1037 = vpack.c.bf16 %v1015, %v1014
      %v1038 = vpack.c.bf16 %v1017, %v1016
      %v1039 = vpack.c.bf16 %v1018, %v1018
      %s1040 = scalar_lea.vmem %s3, 128
      %v1041 = vld [vmem:[%s1040] sm:$0xf]
      %v1042 = vld [vmem:[%s1040 + $0x4] sm:$0xf]
      %v1043 = vld [vmem:[%s1040 + $0x8] sm:$0xf]
      %v1044 = vld [vmem:[%s1040 + $0xc] sm:$0xf]
      %v1045 = vld [vmem:[%s1040 + $0x10] sm:$0xf]
      %v1046 = vld [vmem:[%s1040 + $0x14] sm:$0xf]
      %v1047 = vld [vmem:[%s1040 + $0x18] sm:$0xf]
      %v1048 = vld [vmem:[%s1040 + $0x1c] sm:$0xf]
      %v1049 = vld [vmem:[%s1040 + $0x20] sm:$0xf]
      %v1050 = vld [vmem:[%s1040 + $0x24] sm:$0xf]
      %v1051 = vld [vmem:[%s1040 + $0x28] sm:$0xf]
      %v1052 = vld [vmem:[%s1040 + $0x2c] sm:$0xf]
      %v1053 = vld [vmem:[%s1040 + $0x30] sm:$0xf]
      %v1054 = vld [vmem:[%s1040 + $0x34] sm:$0xf]
      %v1055 = vld [vmem:[%s1040 + $0x38] sm:$0xf]
      %v1056 = vld [vmem:[%s1040 + $0x3c] sm:$0xf]
      %v1073 = vunpack.c.l.b16 %v1041
      %v1074 = vunpack.c.l.b16 %v1042
      %v1075 = vunpack.c.l.b16 %v1043
      %v1076 = vunpack.c.l.b16 %v1044
      %v1077 = vunpack.c.l.b16 %v1045
      %v1078 = vunpack.c.l.b16 %v1046
      %v1079 = vunpack.c.l.b16 %v1047
      %v1080 = vunpack.c.l.b16 %v1048
      %v1081 = vunpack.c.l.b16 %v1049
      %v1082 = vunpack.c.l.b16 %v1050
      %v1083 = vunpack.c.l.b16 %v1051
      %v1084 = vunpack.c.l.b16 %v1052
      %v1085 = vunpack.c.l.b16 %v1053
      %v1086 = vunpack.c.l.b16 %v1054
      %v1087 = vunpack.c.l.b16 %v1055
      %v1088 = vunpack.c.l.b16 %v1056
      %v1089 = vpack.c.b16 %v1074, %v1073
      %v1090 = vpack.c.b16 %v1076, %v1075
      %v1091 = vpack.c.b16 %v1078, %v1077
      %v1092 = vpack.c.b16 %v1080, %v1079
      %v1093 = vpack.c.b16 %v1082, %v1081
      %v1094 = vpack.c.b16 %v1084, %v1083
      %v1095 = vpack.c.b16 %v1086, %v1085
      %v1096 = vpack.c.b16 %v1088, %v1087
      %1105 = vmatprep.subr.bf16.mxu0 0
      %1106 = vmatpush1.bf16.msra.mxu0 %v1096
      %1107 = vmatprep.subr.bf16.mxu0 0
      %1108 = vmatpush1.bf16.msra.mxu0 %v1095
      %1109 = vmatprep.subr.bf16.mxu0 0
      %1110 = vmatpush1.bf16.msra.mxu0 %v1094
      %1111 = vmatprep.subr.bf16.mxu0 0
      %1112 = vmatpush1.bf16.msra.mxu0 %v1093
      %1113 = vmatprep.subr.bf16.mxu0 0
      %1114 = vmatpush1.bf16.msra.mxu0 %v1092
      %1115 = vmatprep.subr.bf16.mxu0 0
      %1116 = vmatpush1.bf16.msra.mxu0 %v1091
      %1117 = vmatprep.subr.bf16.mxu0 0
      %1118 = vmatpush1.bf16.msra.mxu0 %v1090
      %1119 = vmatprep.subr.bf16.mxu0 0
      %1120 = vmatpush1.bf16.msra.mxu0 %v1089
      %1121 = vmatprep.subr.bf16.mxu0 0
      %1122 = vmatpush2.bf16.msra.mxu0 0
      %1123 = vmatprep.subr.bf16.mxu0 0
      %1124 = vmatpush2.bf16.msra.mxu0 0
      %1125 = vmatprep.subr.bf16.mxu0 0
      %1126 = vmatpush2.bf16.msra.mxu0 0
      %1127 = vmatprep.subr.bf16.mxu0 0
      %1128 = vmatpush2.bf16.msra.mxu0 0
      %1129 = vmatprep.subr.bf16.mxu0 0
      %1130 = vmatpush2.bf16.msra.mxu0 0
      %1131 = vmatprep.subr.bf16.mxu0 0
      %1132 = vmatpush2.bf16.msra.mxu0 0
      %1133 = vmatprep.subr.bf16.mxu0 0
      %1134 = vmatpush2.bf16.msra.mxu0 0
      %1135 = vmatprep.subr.bf16.mxu0 0
      %1136 = vmatpush2.bf16.msra.mxu0 0
      %1137 = vmatprep.mubr.bf16.mxu0 0
      %1138 = vmatmul.mubr.bf16.gmra.mxu0 %v1019
      %v1139 = vpop.f32.mrf.mxu0
      %v1140 = vadd.f32 0.0, %v1139
      %v1141 = vpop.f32.mrf.mxu0
      %v1142 = vpop.f32.mrf.mxu0
      %v1143 = vadd.f32 0.0, %v1142
      %v1144 = vpop.f32.mrf.mxu0
      %1145 = vmatprep.mubr.bf16.mxu0 0
      %1146 = vmatmul.mubr.bf16.gmra.mxu0 %v1020
      %v1147 = vpop.f32.mrf.mxu0
      %v1148 = vadd.f32 0.0, %v1147
      %v1149 = vpop.f32.mrf.mxu0
      %v1150 = vpop.f32.mrf.mxu0
      %v1151 = vadd.f32 0.0, %v1150
      %v1152 = vpop.f32.mrf.mxu0
      %1153 = vmatprep.mubr.bf16.mxu0 0
      %1154 = vmatmul.mubr.bf16.gmra.mxu0 %v1021
      %v1155 = vpop.f32.mrf.mxu0
      %v1156 = vadd.f32 0.0, %v1155
      %v1157 = vpop.f32.mrf.mxu0
      %v1158 = vpop.f32.mrf.mxu0
      %v1159 = vadd.f32 0.0, %v1158
      %v1160 = vpop.f32.mrf.mxu0
      %1161 = vmatprep.mubr.bf16.mxu0 0
      %1162 = vmatmul.mubr.bf16.gmra.mxu0 %v1022
      %v1163 = vpop.f32.mrf.mxu0
      %v1164 = vadd.f32 0.0, %v1163
      %v1165 = vpop.f32.mrf.mxu0
      %v1166 = vpop.f32.mrf.mxu0
      %v1167 = vadd.f32 0.0, %v1166
      %v1168 = vpop.f32.mrf.mxu0
      %1169 = vmatprep.mubr.bf16.mxu0 0
      %1170 = vmatmul.mubr.bf16.gmra.mxu0 %v1023
      %v1171 = vpop.f32.mrf.mxu0
      %v1172 = vadd.f32 0.0, %v1171
      %v1173 = vpop.f32.mrf.mxu0
      %v1174 = vpop.f32.mrf.mxu0
      %v1175 = vadd.f32 0.0, %v1174
      %v1176 = vpop.f32.mrf.mxu0
      %1177 = vmatprep.mubr.bf16.mxu0 0
      %1178 = vmatmul.mubr.bf16.gmra.mxu0 %v1024
      %v1179 = vpop.f32.mrf.mxu0
      %v1180 = vadd.f32 0.0, %v1179
      %v1181 = vpop.f32.mrf.mxu0
      %v1182 = vpop.f32.mrf.mxu0
      %v1183 = vadd.f32 0.0, %v1182
      %v1184 = vpop.f32.mrf.mxu0
      %1185 = vmatprep.mubr.bf16.mxu0 0
      %1186 = vmatmul.mubr.bf16.gmra.mxu0 %v1025
      %v1187 = vpop.f32.mrf.mxu0
      %v1188 = vadd.f32 0.0, %v1187
      %v1189 = vpop.f32.mrf.mxu0
      %v1190 = vpop.f32.mrf.mxu0
      %v1191 = vadd.f32 0.0, %v1190
      %v1192 = vpop.f32.mrf.mxu0
      %1193 = vmatprep.mubr.bf16.mxu0 0
      %1194 = vmatmul.mubr.bf16.gmra.mxu0 %v1026
      %v1195 = vpop.f32.mrf.mxu0
      %v1196 = vadd.f32 0.0, %v1195
      %v1197 = vpop.f32.mrf.mxu0
      %v1198 = vpop.f32.mrf.mxu0
      %v1199 = vadd.f32 0.0, %v1198
      %v1200 = vpop.f32.mrf.mxu0
      %1201 = vmatprep.mubr.bf16.mxu0 0
      %1202 = vmatmul.mubr.bf16.gmra.mxu0 %v1027
      %v1203 = vpop.f32.mrf.mxu0
      %v1204 = vadd.f32 0.0, %v1203
      %v1205 = vpop.f32.mrf.mxu0
      %v1206 = vpop.f32.mrf.mxu0
      %v1207 = vadd.f32 0.0, %v1206
      %v1208 = vpop.f32.mrf.mxu0
      %1209 = vmatprep.mubr.bf16.mxu0 0
      %1210 = vmatmul.mubr.bf16.gmra.mxu0 %v1028
      %v1211 = vpop.f32.mrf.mxu0
      %v1212 = vadd.f32 0.0, %v1211
      %v1213 = vpop.f32.mrf.mxu0
      %v1214 = vpop.f32.mrf.mxu0
      %v1215 = vadd.f32 0.0, %v1214
      %v1216 = vpop.f32.mrf.mxu0
      %1217 = vmatprep.mubr.bf16.mxu0 0
      %1218 = vmatmul.mubr.bf16.gmra.mxu0 %v1029
      %v1219 = vpop.f32.mrf.mxu0
      %v1220 = vadd.f32 0.0, %v1219
      %v1221 = vpop.f32.mrf.mxu0
      %v1222 = vpop.f32.mrf.mxu0
      %v1223 = vadd.f32 0.0, %v1222
      %v1224 = vpop.f32.mrf.mxu0
      %1225 = vmatprep.mubr.bf16.mxu0 0
      %1226 = vmatmul.mubr.bf16.gmra.mxu0 %v1030
      %v1227 = vpop.f32.mrf.mxu0
      %v1228 = vadd.f32 0.0, %v1227
      %v1229 = vpop.f32.mrf.mxu0
      %v1230 = vpop.f32.mrf.mxu0
      %v1231 = vadd.f32 0.0, %v1230
      %v1232 = vpop.f32.mrf.mxu0
      %1233 = vmatprep.mubr.bf16.mxu0 0
      %1234 = vmatmul.mubr.bf16.gmra.mxu0 %v1031
      %v1235 = vpop.f32.mrf.mxu0
      %v1236 = vadd.f32 0.0, %v1235
      %v1237 = vpop.f32.mrf.mxu0
      %v1238 = vpop.f32.mrf.mxu0
      %v1239 = vadd.f32 0.0, %v1238
      %v1240 = vpop.f32.mrf.mxu0
      %1241 = vmatprep.mubr.bf16.mxu0 0
      %1242 = vmatmul.mubr.bf16.gmra.mxu0 %v1032
      %v1243 = vpop.f32.mrf.mxu0
      %v1244 = vadd.f32 0.0, %v1243
      %v1245 = vpop.f32.mrf.mxu0
      %v1246 = vpop.f32.mrf.mxu0
      %v1247 = vadd.f32 0.0, %v1246
      %v1248 = vpop.f32.mrf.mxu0
      %1249 = vmatprep.mubr.bf16.mxu0 0
      %1250 = vmatmul.mubr.bf16.gmra.mxu0 %v1033
      %v1251 = vpop.f32.mrf.mxu0
      %v1252 = vadd.f32 0.0, %v1251
      %v1253 = vpop.f32.mrf.mxu0
      %v1254 = vpop.f32.mrf.mxu0
      %v1255 = vadd.f32 0.0, %v1254
      %v1256 = vpop.f32.mrf.mxu0
      %1257 = vmatprep.mubr.bf16.mxu0 0
      %1258 = vmatmul.mubr.bf16.gmra.mxu0 %v1034
      %v1259 = vpop.f32.mrf.mxu0
      %v1260 = vadd.f32 0.0, %v1259
      %v1261 = vpop.f32.mrf.mxu0
      %v1262 = vpop.f32.mrf.mxu0
      %v1263 = vadd.f32 0.0, %v1262
      %v1264 = vpop.f32.mrf.mxu0
      %1265 = vmatprep.mubr.bf16.mxu0 0
      %1266 = vmatmul.mubr.bf16.gmra.mxu0 %v1035
      %v1267 = vpop.f32.mrf.mxu0
      %v1268 = vadd.f32 0.0, %v1267
      %v1269 = vpop.f32.mrf.mxu0
      %v1270 = vpop.f32.mrf.mxu0
      %v1271 = vadd.f32 0.0, %v1270
      %v1272 = vpop.f32.mrf.mxu0
      %1273 = vmatprep.mubr.bf16.mxu0 0
      %1274 = vmatmul.mubr.bf16.gmra.mxu0 %v1036
      %v1275 = vpop.f32.mrf.mxu0
      %v1276 = vadd.f32 0.0, %v1275
      %v1277 = vpop.f32.mrf.mxu0
      %v1278 = vpop.f32.mrf.mxu0
      %v1279 = vadd.f32 0.0, %v1278
      %v1280 = vpop.f32.mrf.mxu0
      %1281 = vmatprep.mubr.bf16.mxu0 0
      %1282 = vmatmul.mubr.bf16.gmra.mxu0 %v1037
      %v1283 = vpop.f32.mrf.mxu0
      %v1284 = vadd.f32 0.0, %v1283
      %v1285 = vpop.f32.mrf.mxu0
      %v1286 = vpop.f32.mrf.mxu0
      %v1287 = vadd.f32 0.0, %v1286
      %v1288 = vpop.f32.mrf.mxu0
      %1289 = vmatprep.mubr.bf16.mxu0 0
      %1290 = vmatmul.mubr.bf16.gmra.mxu0 %v1038
      %v1291 = vpop.f32.mrf.mxu0
      %v1292 = vadd.f32 0.0, %v1291
      %v1293 = vpop.f32.mrf.mxu0
      %v1294 = vpop.f32.mrf.mxu0
      %v1295 = vadd.f32 0.0, %v1294
      %v1296 = vpop.f32.mrf.mxu0
      %1297 = vmatprep.mubr.bf16.mxu0 0
      %1298 = vmatmul.mubr.bf16.gmra.mxu0 %v1039
      %v1299 = vpop.f32.mrf.mxu0
      %v1300 = vadd.f32 0.0, %v1299
      %v1301 = vpop.f32.mrf.mxu0
      %v1302 = vpop.f32.mrf.mxu0
      %v1303 = vpop.f32.mrf.mxu0
      %1304 = vdwg.mxu0
      %v1305 = vadd.f32 %v813, %v1140
      %v1306 = vadd.f32 %v816, %v1143
      %v1307 = vadd.f32 %v821, %v1148
      %v1308 = vadd.f32 %v824, %v1151
      %v1309 = vadd.f32 %v829, %v1156
      %v1310 = vadd.f32 %v832, %v1159
      %v1311 = vadd.f32 %v837, %v1164
      %v1312 = vadd.f32 %v840, %v1167
      %v1313 = vadd.f32 %v845, %v1172
      %v1314 = vadd.f32 %v848, %v1175
      %v1315 = vadd.f32 %v853, %v1180
      %v1316 = vadd.f32 %v856, %v1183
      %v1317 = vadd.f32 %v861, %v1188
      %v1318 = vadd.f32 %v864, %v1191
      %v1319 = vadd.f32 %v869, %v1196
      %v1320 = vadd.f32 %v872, %v1199
      %v1321 = vadd.f32 %v877, %v1204
      %v1322 = vadd.f32 %v880, %v1207
      %v1323 = vadd.f32 %v885, %v1212
      %v1324 = vadd.f32 %v888, %v1215
      %v1325 = vadd.f32 %v893, %v1220
      %v1326 = vadd.f32 %v896, %v1223
      %v1327 = vadd.f32 %v901, %v1228
      %v1328 = vadd.f32 %v904, %v1231
      %v1329 = vadd.f32 %v909, %v1236
      %v1330 = vadd.f32 %v912, %v1239
      %v1331 = vadd.f32 %v917, %v1244
      %v1332 = vadd.f32 %v920, %v1247
      %v1333 = vadd.f32 %v925, %v1252
      %v1334 = vadd.f32 %v928, %v1255
      %v1335 = vadd.f32 %v933, %v1260
      %v1336 = vadd.f32 %v936, %v1263
      %v1337 = vadd.f32 %v941, %v1268
      %v1338 = vadd.f32 %v944, %v1271
      %v1339 = vadd.f32 %v949, %v1276
      %v1340 = vadd.f32 %v952, %v1279
      %v1341 = vadd.f32 %v957, %v1284
      %v1342 = vadd.f32 %v960, %v1287
      %v1343 = vadd.f32 %v965, %v1292
      %v1344 = vadd.f32 %v968, %v1295
      %v1345 = vadd.f32 %v973, %v1300
      %v1346 = vld [vmem:[%s268 + $0x17] sm:$0xff]
      %v1347 = vld [vmem:[%s268 + $0x1f] sm:$0xff]
      %v1348 = vld [vmem:[%s268 + $0x27] sm:$0xff]
      %v1349 = vld [vmem:[%s268 + $0x2f] sm:$0xff]
      %v1350 = vld [vmem:[%s268 + $0x37] sm:$0xff]
      %v1351 = vld [vmem:[%s268 + $0x3f] sm:$0xff]
      %v1352 = vld [vmem:[%s268 + $0x47] sm:$0xff]
      %v1353 = vld [vmem:[%s268 + $0x4f] sm:$0xff]
      %v1354 = vld [vmem:[%s268 + $0x57] sm:$0xff]
      %v1355 = vld [vmem:[%s268 + $0x5f] sm:$0xff]
      %v1356 = vld [vmem:[%s268 + $0x67] sm:$0xff]
      %v1357 = vld [vmem:[%s268 + $0x6f] sm:$0xff]
      %v1358 = vld [vmem:[%s268 + $0x77] sm:$0xff]
      %v1359 = vld [vmem:[%s268 + $0x7f] sm:$0xff]
      %v1360 = vld [vmem:[%s268 + $0x87] sm:$0xff]
      %v1361 = vld [vmem:[%s268 + $0x8f] sm:$0xff]
      %v1362 = vld [vmem:[%s268 + $0x97] sm:$0xff]
      %v1363 = vld [vmem:[%s268 + $0x9f] sm:$0xff]
      %v1364 = vld [vmem:[%s268 + $0xa7] sm:$0xff]
      %v1365 = vld [vmem:[%s268 + $0xaf] sm:$0xff]
      %v1366 = vld [vmem:[%s268 + $0xb7] sm:$0xff]
      %v1367 = vld [vmem:[%s268 + $0xbf] sm:$0xff]
      %v1368 = vld [vmem:[%s268 + $0xc7] sm:$0xff]
      %v1369 = vld [vmem:[%s268 + $0xcf] sm:$0xff]
      %v1370 = vld [vmem:[%s268 + $0xd7] sm:$0xff]
      %v1371 = vld [vmem:[%s268 + $0xdf] sm:$0xff]
      %v1372 = vld [vmem:[%s268 + $0xe7] sm:$0xff]
      %v1373 = vld [vmem:[%s268 + $0xef] sm:$0xff]
      %v1374 = vld [vmem:[%s268 + $0xf7] sm:$0xff]
      %v1375 = vld [vmem:[%s268 + $0xff] sm:$0xff]
      %v1376 = vld [vmem:[%s268 + $0x107] sm:$0xff]
      %v1377 = vld [vmem:[%s268 + $0x10f] sm:$0xff]
      %v1378 = vld [vmem:[%s268 + $0x117] sm:$0xff]
      %v1379 = vld [vmem:[%s268 + $0x11f] sm:$0xff]
      %v1380 = vld [vmem:[%s268 + $0x127] sm:$0xff]
      %v1381 = vld [vmem:[%s268 + $0x12f] sm:$0xff]
      %v1382 = vld [vmem:[%s268 + $0x137] sm:$0xff]
      %v1383 = vld [vmem:[%s268 + $0x13f] sm:$0xff]
      %v1384 = vld [vmem:[%s268 + $0x147] sm:$0xff]
      %v1385 = vld [vmem:[%s268 + $0x14f] sm:$0xff]
      %v1386 = vld [vmem:[%s268 + $0x157] sm:$0xff]
      %v1387 = vpack.c.bf16 %v1347, %v1346
      %v1388 = vpack.c.bf16 %v1349, %v1348
      %v1389 = vpack.c.bf16 %v1351, %v1350
      %v1390 = vpack.c.bf16 %v1353, %v1352
      %v1391 = vpack.c.bf16 %v1355, %v1354
      %v1392 = vpack.c.bf16 %v1357, %v1356
      %v1393 = vpack.c.bf16 %v1359, %v1358
      %v1394 = vpack.c.bf16 %v1361, %v1360
      %v1395 = vpack.c.bf16 %v1363, %v1362
      %v1396 = vpack.c.bf16 %v1365, %v1364
      %v1397 = vpack.c.bf16 %v1367, %v1366
      %v1398 = vpack.c.bf16 %v1369, %v1368
      %v1399 = vpack.c.bf16 %v1371, %v1370
      %v1400 = vpack.c.bf16 %v1373, %v1372
      %v1401 = vpack.c.bf16 %v1375, %v1374
      %v1402 = vpack.c.bf16 %v1377, %v1376
      %v1403 = vpack.c.bf16 %v1379, %v1378
      %v1404 = vpack.c.bf16 %v1381, %v1380
      %v1405 = vpack.c.bf16 %v1383, %v1382
      %v1406 = vpack.c.bf16 %v1385, %v1384
      %v1407 = vpack.c.bf16 %v1386, %v1386
      %s1408 = scalar_lea.vmem %s3, 192
      %v1409 = vld [vmem:[%s1408] sm:$0xf]
      %v1410 = vld [vmem:[%s1408 + $0x4] sm:$0xf]
      %v1411 = vld [vmem:[%s1408 + $0x8] sm:$0xf]
      %v1412 = vld [vmem:[%s1408 + $0xc] sm:$0xf]
      %v1413 = vld [vmem:[%s1408 + $0x10] sm:$0xf]
      %v1414 = vld [vmem:[%s1408 + $0x14] sm:$0xf]
      %v1415 = vld [vmem:[%s1408 + $0x18] sm:$0xf]
      %v1416 = vld [vmem:[%s1408 + $0x1c] sm:$0xf]
      %v1417 = vld [vmem:[%s1408 + $0x20] sm:$0xf]
      %v1418 = vld [vmem:[%s1408 + $0x24] sm:$0xf]
      %v1419 = vld [vmem:[%s1408 + $0x28] sm:$0xf]
      %v1420 = vld [vmem:[%s1408 + $0x2c] sm:$0xf]
      %v1421 = vld [vmem:[%s1408 + $0x30] sm:$0xf]
      %v1422 = vld [vmem:[%s1408 + $0x34] sm:$0xf]
      %v1423 = vld [vmem:[%s1408 + $0x38] sm:$0xf]
      %v1424 = vld [vmem:[%s1408 + $0x3c] sm:$0xf]
      %v1441 = vunpack.c.l.b16 %v1409
      %v1442 = vunpack.c.l.b16 %v1410
      %v1443 = vunpack.c.l.b16 %v1411
      %v1444 = vunpack.c.l.b16 %v1412
      %v1445 = vunpack.c.l.b16 %v1413
      %v1446 = vunpack.c.l.b16 %v1414
      %v1447 = vunpack.c.l.b16 %v1415
      %v1448 = vunpack.c.l.b16 %v1416
      %v1449 = vunpack.c.l.b16 %v1417
      %v1450 = vunpack.c.l.b16 %v1418
      %v1451 = vunpack.c.l.b16 %v1419
      %v1452 = vunpack.c.l.b16 %v1420
      %v1453 = vunpack.c.l.b16 %v1421
      %v1454 = vunpack.c.l.b16 %v1422
      %v1455 = vunpack.c.l.b16 %v1423
      %v1456 = vunpack.c.l.b16 %v1424
      %v1457 = vpack.c.b16 %v1442, %v1441
      %v1458 = vpack.c.b16 %v1444, %v1443
      %v1459 = vpack.c.b16 %v1446, %v1445
      %v1460 = vpack.c.b16 %v1448, %v1447
      %v1461 = vpack.c.b16 %v1450, %v1449
      %v1462 = vpack.c.b16 %v1452, %v1451
      %v1463 = vpack.c.b16 %v1454, %v1453
      %v1464 = vpack.c.b16 %v1456, %v1455
      %1473 = vmatprep.subr.bf16.mxu0 0
      %1474 = vmatpush1.bf16.msra.mxu0 %v1464
      %1475 = vmatprep.subr.bf16.mxu0 0
      %1476 = vmatpush1.bf16.msra.mxu0 %v1463
      %1477 = vmatprep.subr.bf16.mxu0 0
      %1478 = vmatpush1.bf16.msra.mxu0 %v1462
      %1479 = vmatprep.subr.bf16.mxu0 0
      %1480 = vmatpush1.bf16.msra.mxu0 %v1461
      %1481 = vmatprep.subr.bf16.mxu0 0
      %1482 = vmatpush1.bf16.msra.mxu0 %v1460
      %1483 = vmatprep.subr.bf16.mxu0 0
      %1484 = vmatpush1.bf16.msra.mxu0 %v1459
      %1485 = vmatprep.subr.bf16.mxu0 0
      %1486 = vmatpush1.bf16.msra.mxu0 %v1458
      %1487 = vmatprep.subr.bf16.mxu0 0
      %1488 = vmatpush1.bf16.msra.mxu0 %v1457
      %1489 = vmatprep.subr.bf16.mxu0 0
      %1490 = vmatpush2.bf16.msra.mxu0 0
      %1491 = vmatprep.subr.bf16.mxu0 0
      %1492 = vmatpush2.bf16.msra.mxu0 0
      %1493 = vmatprep.subr.bf16.mxu0 0
      %1494 = vmatpush2.bf16.msra.mxu0 0
      %1495 = vmatprep.subr.bf16.mxu0 0
      %1496 = vmatpush2.bf16.msra.mxu0 0
      %1497 = vmatprep.subr.bf16.mxu0 0
      %1498 = vmatpush2.bf16.msra.mxu0 0
      %1499 = vmatprep.subr.bf16.mxu0 0
      %1500 = vmatpush2.bf16.msra.mxu0 0
      %1501 = vmatprep.subr.bf16.mxu0 0
      %1502 = vmatpush2.bf16.msra.mxu0 0
      %1503 = vmatprep.subr.bf16.mxu0 0
      %1504 = vmatpush2.bf16.msra.mxu0 0
      %1505 = vmatprep.mubr.bf16.mxu0 0
      %1506 = vmatmul.mubr.bf16.gmra.mxu0 %v1387
      %v1507 = vpop.f32.mrf.mxu0
      %v1508 = vadd.f32 0.0, %v1507
      %v1509 = vpop.f32.mrf.mxu0
      %v1510 = vpop.f32.mrf.mxu0
      %v1511 = vadd.f32 0.0, %v1510
      %v1512 = vpop.f32.mrf.mxu0
      %1513 = vmatprep.mubr.bf16.mxu0 0
      %1514 = vmatmul.mubr.bf16.gmra.mxu0 %v1388
      %v1515 = vpop.f32.mrf.mxu0
      %v1516 = vadd.f32 0.0, %v1515
      %v1517 = vpop.f32.mrf.mxu0
      %v1518 = vpop.f32.mrf.mxu0
      %v1519 = vadd.f32 0.0, %v1518
      %v1520 = vpop.f32.mrf.mxu0
      %1521 = vmatprep.mubr.bf16.mxu0 0
      %1522 = vmatmul.mubr.bf16.gmra.mxu0 %v1389
      %v1523 = vpop.f32.mrf.mxu0
      %v1524 = vadd.f32 0.0, %v1523
      %v1525 = vpop.f32.mrf.mxu0
      %v1526 = vpop.f32.mrf.mxu0
      %v1527 = vadd.f32 0.0, %v1526
      %v1528 = vpop.f32.mrf.mxu0
      %1529 = vmatprep.mubr.bf16.mxu0 0
      %1530 = vmatmul.mubr.bf16.gmra.mxu0 %v1390
      %v1531 = vpop.f32.mrf.mxu0
      %v1532 = vadd.f32 0.0, %v1531
      %v1533 = vpop.f32.mrf.mxu0
      %v1534 = vpop.f32.mrf.mxu0
      %v1535 = vadd.f32 0.0, %v1534
      %v1536 = vpop.f32.mrf.mxu0
      %1537 = vmatprep.mubr.bf16.mxu0 0
      %1538 = vmatmul.mubr.bf16.gmra.mxu0 %v1391
      %v1539 = vpop.f32.mrf.mxu0
      %v1540 = vadd.f32 0.0, %v1539
      %v1541 = vpop.f32.mrf.mxu0
      %v1542 = vpop.f32.mrf.mxu0
      %v1543 = vadd.f32 0.0, %v1542
      %v1544 = vpop.f32.mrf.mxu0
      %1545 = vmatprep.mubr.bf16.mxu0 0
      %1546 = vmatmul.mubr.bf16.gmra.mxu0 %v1392
      %v1547 = vpop.f32.mrf.mxu0
      %v1548 = vadd.f32 0.0, %v1547
      %v1549 = vpop.f32.mrf.mxu0
      %v1550 = vpop.f32.mrf.mxu0
      %v1551 = vadd.f32 0.0, %v1550
      %v1552 = vpop.f32.mrf.mxu0
      %1553 = vmatprep.mubr.bf16.mxu0 0
      %1554 = vmatmul.mubr.bf16.gmra.mxu0 %v1393
      %v1555 = vpop.f32.mrf.mxu0
      %v1556 = vadd.f32 0.0, %v1555
      %v1557 = vpop.f32.mrf.mxu0
      %v1558 = vpop.f32.mrf.mxu0
      %v1559 = vadd.f32 0.0, %v1558
      %v1560 = vpop.f32.mrf.mxu0
      %1561 = vmatprep.mubr.bf16.mxu0 0
      %1562 = vmatmul.mubr.bf16.gmra.mxu0 %v1394
      %v1563 = vpop.f32.mrf.mxu0
      %v1564 = vadd.f32 0.0, %v1563
      %v1565 = vpop.f32.mrf.mxu0
      %v1566 = vpop.f32.mrf.mxu0
      %v1567 = vadd.f32 0.0, %v1566
      %v1568 = vpop.f32.mrf.mxu0
      %1569 = vmatprep.mubr.bf16.mxu0 0
      %1570 = vmatmul.mubr.bf16.gmra.mxu0 %v1395
      %v1571 = vpop.f32.mrf.mxu0
      %v1572 = vadd.f32 0.0, %v1571
      %v1573 = vpop.f32.mrf.mxu0
      %v1574 = vpop.f32.mrf.mxu0
      %v1575 = vadd.f32 0.0, %v1574
      %v1576 = vpop.f32.mrf.mxu0
      %1577 = vmatprep.mubr.bf16.mxu0 0
      %1578 = vmatmul.mubr.bf16.gmra.mxu0 %v1396
      %v1579 = vpop.f32.mrf.mxu0
      %v1580 = vadd.f32 0.0, %v1579
      %v1581 = vpop.f32.mrf.mxu0
      %v1582 = vpop.f32.mrf.mxu0
      %v1583 = vadd.f32 0.0, %v1582
      %v1584 = vpop.f32.mrf.mxu0
      %1585 = vmatprep.mubr.bf16.mxu0 0
      %1586 = vmatmul.mubr.bf16.gmra.mxu0 %v1397
      %v1587 = vpop.f32.mrf.mxu0
      %v1588 = vadd.f32 0.0, %v1587
      %v1589 = vpop.f32.mrf.mxu0
      %v1590 = vpop.f32.mrf.mxu0
      %v1591 = vadd.f32 0.0, %v1590
      %v1592 = vpop.f32.mrf.mxu0
      %1593 = vmatprep.mubr.bf16.mxu0 0
      %1594 = vmatmul.mubr.bf16.gmra.mxu0 %v1398
      %v1595 = vpop.f32.mrf.mxu0
      %v1596 = vadd.f32 0.0, %v1595
      %v1597 = vpop.f32.mrf.mxu0
      %v1598 = vpop.f32.mrf.mxu0
      %v1599 = vadd.f32 0.0, %v1598
      %v1600 = vpop.f32.mrf.mxu0
      %1601 = vmatprep.mubr.bf16.mxu0 0
      %1602 = vmatmul.mubr.bf16.gmra.mxu0 %v1399
      %v1603 = vpop.f32.mrf.mxu0
      %v1604 = vadd.f32 0.0, %v1603
      %v1605 = vpop.f32.mrf.mxu0
      %v1606 = vpop.f32.mrf.mxu0
      %v1607 = vadd.f32 0.0, %v1606
      %v1608 = vpop.f32.mrf.mxu0
      %1609 = vmatprep.mubr.bf16.mxu0 0
      %1610 = vmatmul.mubr.bf16.gmra.mxu0 %v1400
      %v1611 = vpop.f32.mrf.mxu0
      %v1612 = vadd.f32 0.0, %v1611
      %v1613 = vpop.f32.mrf.mxu0
      %v1614 = vpop.f32.mrf.mxu0
      %v1615 = vadd.f32 0.0, %v1614
      %v1616 = vpop.f32.mrf.mxu0
      %1617 = vmatprep.mubr.bf16.mxu0 0
      %1618 = vmatmul.mubr.bf16.gmra.mxu0 %v1401
      %v1619 = vpop.f32.mrf.mxu0
      %v1620 = vadd.f32 0.0, %v1619
      %v1621 = vpop.f32.mrf.mxu0
      %v1622 = vpop.f32.mrf.mxu0
      %v1623 = vadd.f32 0.0, %v1622
      %v1624 = vpop.f32.mrf.mxu0
      %1625 = vmatprep.mubr.bf16.mxu0 0
      %1626 = vmatmul.mubr.bf16.gmra.mxu0 %v1402
      %v1627 = vpop.f32.mrf.mxu0
      %v1628 = vadd.f32 0.0, %v1627
      %v1629 = vpop.f32.mrf.mxu0
      %v1630 = vpop.f32.mrf.mxu0
      %v1631 = vadd.f32 0.0, %v1630
      %v1632 = vpop.f32.mrf.mxu0
      %1633 = vmatprep.mubr.bf16.mxu0 0
      %1634 = vmatmul.mubr.bf16.gmra.mxu0 %v1403
      %v1635 = vpop.f32.mrf.mxu0
      %v1636 = vadd.f32 0.0, %v1635
      %v1637 = vpop.f32.mrf.mxu0
      %v1638 = vpop.f32.mrf.mxu0
      %v1639 = vadd.f32 0.0, %v1638
      %v1640 = vpop.f32.mrf.mxu0
      %1641 = vmatprep.mubr.bf16.mxu0 0
      %1642 = vmatmul.mubr.bf16.gmra.mxu0 %v1404
      %v1643 = vpop.f32.mrf.mxu0
      %v1644 = vadd.f32 0.0, %v1643
      %v1645 = vpop.f32.mrf.mxu0
      %v1646 = vpop.f32.mrf.mxu0
      %v1647 = vadd.f32 0.0, %v1646
      %v1648 = vpop.f32.mrf.mxu0
      %1649 = vmatprep.mubr.bf16.mxu0 0
      %1650 = vmatmul.mubr.bf16.gmra.mxu0 %v1405
      %v1651 = vpop.f32.mrf.mxu0
      %v1652 = vadd.f32 0.0, %v1651
      %v1653 = vpop.f32.mrf.mxu0
      %v1654 = vpop.f32.mrf.mxu0
      %v1655 = vadd.f32 0.0, %v1654
      %v1656 = vpop.f32.mrf.mxu0
      %1657 = vmatprep.mubr.bf16.mxu0 0
      %1658 = vmatmul.mubr.bf16.gmra.mxu0 %v1406
      %v1659 = vpop.f32.mrf.mxu0
      %v1660 = vadd.f32 0.0, %v1659
      %v1661 = vpop.f32.mrf.mxu0
      %v1662 = vpop.f32.mrf.mxu0
      %v1663 = vadd.f32 0.0, %v1662
      %v1664 = vpop.f32.mrf.mxu0
      %1665 = vmatprep.mubr.bf16.mxu0 0
      %1666 = vmatmul.mubr.bf16.gmra.mxu0 %v1407
      %v1667 = vpop.f32.mrf.mxu0
      %v1668 = vadd.f32 0.0, %v1667
      %v1669 = vpop.f32.mrf.mxu0
      %v1670 = vpop.f32.mrf.mxu0
      %v1671 = vpop.f32.mrf.mxu0
      %1672 = vdwg.mxu0
      %v1673 = vadd.f32 %v1305, %v1508
      %v1674 = vadd.f32 %v1306, %v1511
      %v1675 = vadd.f32 %v1307, %v1516
      %v1676 = vadd.f32 %v1308, %v1519
      %v1677 = vadd.f32 %v1309, %v1524
      %v1678 = vadd.f32 %v1310, %v1527
      %v1679 = vadd.f32 %v1311, %v1532
      %v1680 = vadd.f32 %v1312, %v1535
      %v1681 = vadd.f32 %v1313, %v1540
      %v1682 = vadd.f32 %v1314, %v1543
      %v1683 = vadd.f32 %v1315, %v1548
      %v1684 = vadd.f32 %v1316, %v1551
      %v1685 = vadd.f32 %v1317, %v1556
      %v1686 = vadd.f32 %v1318, %v1559
      %v1687 = vadd.f32 %v1319, %v1564
      %v1688 = vadd.f32 %v1320, %v1567
      %v1689 = vadd.f32 %v1321, %v1572
      %v1690 = vadd.f32 %v1322, %v1575
      %v1691 = vadd.f32 %v1323, %v1580
      %v1692 = vadd.f32 %v1324, %v1583
      %v1693 = vadd.f32 %v1325, %v1588
      %v1694 = vadd.f32 %v1326, %v1591
      %v1695 = vadd.f32 %v1327, %v1596
      %v1696 = vadd.f32 %v1328, %v1599
      %v1697 = vadd.f32 %v1329, %v1604
      %v1698 = vadd.f32 %v1330, %v1607
      %v1699 = vadd.f32 %v1331, %v1612
      %v1700 = vadd.f32 %v1332, %v1615
      %v1701 = vadd.f32 %v1333, %v1620
      %v1702 = vadd.f32 %v1334, %v1623
      %v1703 = vadd.f32 %v1335, %v1628
      %v1704 = vadd.f32 %v1336, %v1631
      %v1705 = vadd.f32 %v1337, %v1636
      %v1706 = vadd.f32 %v1338, %v1639
      %v1707 = vadd.f32 %v1339, %v1644
      %v1708 = vadd.f32 %v1340, %v1647
      %v1709 = vadd.f32 %v1341, %v1652
      %v1710 = vadd.f32 %v1342, %v1655
      %v1711 = vadd.f32 %v1343, %v1660
      %v1712 = vadd.f32 %v1344, %v1663
      %v1713 = vadd.f32 %v1345, %v1668
      %v1714 = vld [vmem:[%s268 + $0x18] sm:$0xff]
      %v1715 = vld [vmem:[%s268 + $0x20] sm:$0xff]
      %v1716 = vld [vmem:[%s268 + $0x28] sm:$0xff]
      %v1717 = vld [vmem:[%s268 + $0x30] sm:$0xff]
      %v1718 = vld [vmem:[%s268 + $0x38] sm:$0xff]
      %v1719 = vld [vmem:[%s268 + $0x40] sm:$0xff]
      %v1720 = vld [vmem:[%s268 + $0x48] sm:$0xff]
      %v1721 = vld [vmem:[%s268 + $0x50] sm:$0xff]
      %v1722 = vld [vmem:[%s268 + $0x58] sm:$0xff]
      %v1723 = vld [vmem:[%s268 + $0x60] sm:$0xff]
      %v1724 = vld [vmem:[%s268 + $0x68] sm:$0xff]
      %v1725 = vld [vmem:[%s268 + $0x70] sm:$0xff]
      %v1726 = vld [vmem:[%s268 + $0x78] sm:$0xff]
      %v1727 = vld [vmem:[%s268 + $0x80] sm:$0xff]
      %v1728 = vld [vmem:[%s268 + $0x88] sm:$0xff]
      %v1729 = vld [vmem:[%s268 + $0x90] sm:$0xff]
      %v1730 = vld [vmem:[%s268 + $0x98] sm:$0xff]
      %v1731 = vld [vmem:[%s268 + $0xa0] sm:$0xff]
      %v1732 = vld [vmem:[%s268 + $0xa8] sm:$0xff]
      %v1733 = vld [vmem:[%s268 + $0xb0] sm:$0xff]
      %v1734 = vld [vmem:[%s268 + $0xb8] sm:$0xff]
      %v1735 = vld [vmem:[%s268 + $0xc0] sm:$0xff]
      %v1736 = vld [vmem:[%s268 + $0xc8] sm:$0xff]
      %v1737 = vld [vmem:[%s268 + $0xd0] sm:$0xff]
      %v1738 = vld [vmem:[%s268 + $0xd8] sm:$0xff]
      %v1739 = vld [vmem:[%s268 + $0xe0] sm:$0xff]
      %v1740 = vld [vmem:[%s268 + $0xe8] sm:$0xff]
      %v1741 = vld [vmem:[%s268 + $0xf0] sm:$0xff]
      %v1742 = vld [vmem:[%s268 + $0xf8] sm:$0xff]
      %v1743 = vld [vmem:[%s268 + $0x100] sm:$0xff]
      %v1744 = vld [vmem:[%s268 + $0x108] sm:$0xff]
      %v1745 = vld [vmem:[%s268 + $0x110] sm:$0xff]
      %v1746 = vld [vmem:[%s268 + $0x118] sm:$0xff]
      %v1747 = vld [vmem:[%s268 + $0x120] sm:$0xff]
      %v1748 = vld [vmem:[%s268 + $0x128] sm:$0xff]
      %v1749 = vld [vmem:[%s268 + $0x130] sm:$0xff]
      %v1750 = vld [vmem:[%s268 + $0x138] sm:$0xff]
      %v1751 = vld [vmem:[%s268 + $0x140] sm:$0xff]
      %v1752 = vld [vmem:[%s268 + $0x148] sm:$0xff]
      %v1753 = vld [vmem:[%s268 + $0x150] sm:$0xff]
      %v1754 = vld [vmem:[%s268 + $0x158] sm:$0xff]
      %v1755 = vpack.c.bf16 %v1715, %v1714
      %v1756 = vpack.c.bf16 %v1717, %v1716
      %v1757 = vpack.c.bf16 %v1719, %v1718
      %v1758 = vpack.c.bf16 %v1721, %v1720
      %v1759 = vpack.c.bf16 %v1723, %v1722
      %v1760 = vpack.c.bf16 %v1725, %v1724
      %v1761 = vpack.c.bf16 %v1727, %v1726
      %v1762 = vpack.c.bf16 %v1729, %v1728
      %v1763 = vpack.c.bf16 %v1731, %v1730
      %v1764 = vpack.c.bf16 %v1733, %v1732
      %v1765 = vpack.c.bf16 %v1735, %v1734
      %v1766 = vpack.c.bf16 %v1737, %v1736
      %v1767 = vpack.c.bf16 %v1739, %v1738
      %v1768 = vpack.c.bf16 %v1741, %v1740
      %v1769 = vpack.c.bf16 %v1743, %v1742
      %v1770 = vpack.c.bf16 %v1745, %v1744
      %v1771 = vpack.c.bf16 %v1747, %v1746
      %v1772 = vpack.c.bf16 %v1749, %v1748
      %v1773 = vpack.c.bf16 %v1751, %v1750
      %v1774 = vpack.c.bf16 %v1753, %v1752
      %v1775 = vpack.c.bf16 %v1754, %v1754
      %s1776 = scalar_lea.vmem %s3, 256
      %v1777 = vld [vmem:[%s1776] sm:$0xf]
      %v1778 = vld [vmem:[%s1776 + $0x4] sm:$0xf]
      %v1779 = vld [vmem:[%s1776 + $0x8] sm:$0xf]
      %v1780 = vld [vmem:[%s1776 + $0xc] sm:$0xf]
      %v1781 = vld [vmem:[%s1776 + $0x10] sm:$0xf]
      %v1782 = vld [vmem:[%s1776 + $0x14] sm:$0xf]
      %v1783 = vld [vmem:[%s1776 + $0x18] sm:$0xf]
      %v1784 = vld [vmem:[%s1776 + $0x1c] sm:$0xf]
      %v1785 = vld [vmem:[%s1776 + $0x20] sm:$0xf]
      %v1786 = vld [vmem:[%s1776 + $0x24] sm:$0xf]
      %v1787 = vld [vmem:[%s1776 + $0x28] sm:$0xf]
      %v1788 = vld [vmem:[%s1776 + $0x2c] sm:$0xf]
      %v1789 = vld [vmem:[%s1776 + $0x30] sm:$0xf]
      %v1790 = vld [vmem:[%s1776 + $0x34] sm:$0xf]
      %v1791 = vld [vmem:[%s1776 + $0x38] sm:$0xf]
      %v1792 = vld [vmem:[%s1776 + $0x3c] sm:$0xf]
      %v1809 = vunpack.c.l.b16 %v1777
      %v1810 = vunpack.c.l.b16 %v1778
      %v1811 = vunpack.c.l.b16 %v1779
      %v1812 = vunpack.c.l.b16 %v1780
      %v1813 = vunpack.c.l.b16 %v1781
      %v1814 = vunpack.c.l.b16 %v1782
      %v1815 = vunpack.c.l.b16 %v1783
      %v1816 = vunpack.c.l.b16 %v1784
      %v1817 = vunpack.c.l.b16 %v1785
      %v1818 = vunpack.c.l.b16 %v1786
      %v1819 = vunpack.c.l.b16 %v1787
      %v1820 = vunpack.c.l.b16 %v1788
      %v1821 = vunpack.c.l.b16 %v1789
      %v1822 = vunpack.c.l.b16 %v1790
      %v1823 = vunpack.c.l.b16 %v1791
      %v1824 = vunpack.c.l.b16 %v1792
      %v1825 = vpack.c.b16 %v1810, %v1809
      %v1826 = vpack.c.b16 %v1812, %v1811
      %v1827 = vpack.c.b16 %v1814, %v1813
      %v1828 = vpack.c.b16 %v1816, %v1815
      %v1829 = vpack.c.b16 %v1818, %v1817
      %v1830 = vpack.c.b16 %v1820, %v1819
      %v1831 = vpack.c.b16 %v1822, %v1821
      %v1832 = vpack.c.b16 %v1824, %v1823
      %1841 = vmatprep.subr.bf16.mxu0 0
      %1842 = vmatpush1.bf16.msra.mxu0 %v1832
      %1843 = vmatprep.subr.bf16.mxu0 0
      %1844 = vmatpush1.bf16.msra.mxu0 %v1831
      %1845 = vmatprep.subr.bf16.mxu0 0
      %1846 = vmatpush1.bf16.msra.mxu0 %v1830
      %1847 = vmatprep.subr.bf16.mxu0 0
      %1848 = vmatpush1.bf16.msra.mxu0 %v1829
      %1849 = vmatprep.subr.bf16.mxu0 0
      %1850 = vmatpush1.bf16.msra.mxu0 %v1828
      %1851 = vmatprep.subr.bf16.mxu0 0
      %1852 = vmatpush1.bf16.msra.mxu0 %v1827
      %1853 = vmatprep.subr.bf16.mxu0 0
      %1854 = vmatpush1.bf16.msra.mxu0 %v1826
      %1855 = vmatprep.subr.bf16.mxu0 0
      %1856 = vmatpush1.bf16.msra.mxu0 %v1825
      %1857 = vmatprep.subr.bf16.mxu0 0
      %1858 = vmatpush2.bf16.msra.mxu0 0
      %1859 = vmatprep.subr.bf16.mxu0 0
      %1860 = vmatpush2.bf16.msra.mxu0 0
      %1861 = vmatprep.subr.bf16.mxu0 0
      %1862 = vmatpush2.bf16.msra.mxu0 0
      %1863 = vmatprep.subr.bf16.mxu0 0
      %1864 = vmatpush2.bf16.msra.mxu0 0
      %1865 = vmatprep.subr.bf16.mxu0 0
      %1866 = vmatpush2.bf16.msra.mxu0 0
      %1867 = vmatprep.subr.bf16.mxu0 0
      %1868 = vmatpush2.bf16.msra.mxu0 0
      %1869 = vmatprep.subr.bf16.mxu0 0
      %1870 = vmatpush2.bf16.msra.mxu0 0
      %1871 = vmatprep.subr.bf16.mxu0 0
      %1872 = vmatpush2.bf16.msra.mxu0 0
      %1873 = vmatprep.mubr.bf16.mxu0 0
      %1874 = vmatmul.mubr.bf16.gmra.mxu0 %v1755
      %v1875 = vpop.f32.mrf.mxu0
      %v1876 = vadd.f32 0.0, %v1875
      %v1877 = vpop.f32.mrf.mxu0
      %v1878 = vpop.f32.mrf.mxu0
      %v1879 = vadd.f32 0.0, %v1878
      %v1880 = vpop.f32.mrf.mxu0
      %1881 = vmatprep.mubr.bf16.mxu0 0
      %1882 = vmatmul.mubr.bf16.gmra.mxu0 %v1756
      %v1883 = vpop.f32.mrf.mxu0
      %v1884 = vadd.f32 0.0, %v1883
      %v1885 = vpop.f32.mrf.mxu0
      %v1886 = vpop.f32.mrf.mxu0
      %v1887 = vadd.f32 0.0, %v1886
      %v1888 = vpop.f32.mrf.mxu0
      %1889 = vmatprep.mubr.bf16.mxu0 0
      %1890 = vmatmul.mubr.bf16.gmra.mxu0 %v1757
      %v1891 = vpop.f32.mrf.mxu0
      %v1892 = vadd.f32 0.0, %v1891
      %v1893 = vpop.f32.mrf.mxu0
      %v1894 = vpop.f32.mrf.mxu0
      %v1895 = vadd.f32 0.0, %v1894
      %v1896 = vpop.f32.mrf.mxu0
      %1897 = vmatprep.mubr.bf16.mxu0 0
      %1898 = vmatmul.mubr.bf16.gmra.mxu0 %v1758
      %v1899 = vpop.f32.mrf.mxu0
      %v1900 = vadd.f32 0.0, %v1899
      %v1901 = vpop.f32.mrf.mxu0
      %v1902 = vpop.f32.mrf.mxu0
      %v1903 = vadd.f32 0.0, %v1902
      %v1904 = vpop.f32.mrf.mxu0
      %1905 = vmatprep.mubr.bf16.mxu0 0
      %1906 = vmatmul.mubr.bf16.gmra.mxu0 %v1759
      %v1907 = vpop.f32.mrf.mxu0
      %v1908 = vadd.f32 0.0, %v1907
      %v1909 = vpop.f32.mrf.mxu0
      %v1910 = vpop.f32.mrf.mxu0
      %v1911 = vadd.f32 0.0, %v1910
      %v1912 = vpop.f32.mrf.mxu0
      %1913 = vmatprep.mubr.bf16.mxu0 0
      %1914 = vmatmul.mubr.bf16.gmra.mxu0 %v1760
      %v1915 = vpop.f32.mrf.mxu0
      %v1916 = vadd.f32 0.0, %v1915
      %v1917 = vpop.f32.mrf.mxu0
      %v1918 = vpop.f32.mrf.mxu0
      %v1919 = vadd.f32 0.0, %v1918
      %v1920 = vpop.f32.mrf.mxu0
      %1921 = vmatprep.mubr.bf16.mxu0 0
      %1922 = vmatmul.mubr.bf16.gmra.mxu0 %v1761
      %v1923 = vpop.f32.mrf.mxu0
      %v1924 = vadd.f32 0.0, %v1923
      %v1925 = vpop.f32.mrf.mxu0
      %v1926 = vpop.f32.mrf.mxu0
      %v1927 = vadd.f32 0.0, %v1926
      %v1928 = vpop.f32.mrf.mxu0
      %1929 = vmatprep.mubr.bf16.mxu0 0
      %1930 = vmatmul.mubr.bf16.gmra.mxu0 %v1762
      %v1931 = vpop.f32.mrf.mxu0
      %v1932 = vadd.f32 0.0, %v1931
      %v1933 = vpop.f32.mrf.mxu0
      %v1934 = vpop.f32.mrf.mxu0
      %v1935 = vadd.f32 0.0, %v1934
      %v1936 = vpop.f32.mrf.mxu0
      %1937 = vmatprep.mubr.bf16.mxu0 0
      %1938 = vmatmul.mubr.bf16.gmra.mxu0 %v1763
      %v1939 = vpop.f32.mrf.mxu0
      %v1940 = vadd.f32 0.0, %v1939
      %v1941 = vpop.f32.mrf.mxu0
      %v1942 = vpop.f32.mrf.mxu0
      %v1943 = vadd.f32 0.0, %v1942
      %v1944 = vpop.f32.mrf.mxu0
      %1945 = vmatprep.mubr.bf16.mxu0 0
      %1946 = vmatmul.mubr.bf16.gmra.mxu0 %v1764
      %v1947 = vpop.f32.mrf.mxu0
      %v1948 = vadd.f32 0.0, %v1947
      %v1949 = vpop.f32.mrf.mxu0
      %v1950 = vpop.f32.mrf.mxu0
      %v1951 = vadd.f32 0.0, %v1950
      %v1952 = vpop.f32.mrf.mxu0
      %1953 = vmatprep.mubr.bf16.mxu0 0
      %1954 = vmatmul.mubr.bf16.gmra.mxu0 %v1765
      %v1955 = vpop.f32.mrf.mxu0
      %v1956 = vadd.f32 0.0, %v1955
      %v1957 = vpop.f32.mrf.mxu0
      %v1958 = vpop.f32.mrf.mxu0
      %v1959 = vadd.f32 0.0, %v1958
      %v1960 = vpop.f32.mrf.mxu0
      %1961 = vmatprep.mubr.bf16.mxu0 0
      %1962 = vmatmul.mubr.bf16.gmra.mxu0 %v1766
      %v1963 = vpop.f32.mrf.mxu0
      %v1964 = vadd.f32 0.0, %v1963
      %v1965 = vpop.f32.mrf.mxu0
      %v1966 = vpop.f32.mrf.mxu0
      %v1967 = vadd.f32 0.0, %v1966
      %v1968 = vpop.f32.mrf.mxu0
      %1969 = vmatprep.mubr.bf16.mxu0 0
      %1970 = vmatmul.mubr.bf16.gmra.mxu0 %v1767
      %v1971 = vpop.f32.mrf.mxu0
      %v1972 = vadd.f32 0.0, %v1971
      %v1973 = vpop.f32.mrf.mxu0
      %v1974 = vpop.f32.mrf.mxu0
      %v1975 = vadd.f32 0.0, %v1974
      %v1976 = vpop.f32.mrf.mxu0
      %1977 = vmatprep.mubr.bf16.mxu0 0
      %1978 = vmatmul.mubr.bf16.gmra.mxu0 %v1768
      %v1979 = vpop.f32.mrf.mxu0
      %v1980 = vadd.f32 0.0, %v1979
      %v1981 = vpop.f32.mrf.mxu0
      %v1982 = vpop.f32.mrf.mxu0
      %v1983 = vadd.f32 0.0, %v1982
      %v1984 = vpop.f32.mrf.mxu0
      %1985 = vmatprep.mubr.bf16.mxu0 0
      %1986 = vmatmul.mubr.bf16.gmra.mxu0 %v1769
      %v1987 = vpop.f32.mrf.mxu0
      %v1988 = vadd.f32 0.0, %v1987
      %v1989 = vpop.f32.mrf.mxu0
      %v1990 = vpop.f32.mrf.mxu0
      %v1991 = vadd.f32 0.0, %v1990
      %v1992 = vpop.f32.mrf.mxu0
      %1993 = vmatprep.mubr.bf16.mxu0 0
      %1994 = vmatmul.mubr.bf16.gmra.mxu0 %v1770
      %v1995 = vpop.f32.mrf.mxu0
      %v1996 = vadd.f32 0.0, %v1995
      %v1997 = vpop.f32.mrf.mxu0
      %v1998 = vpop.f32.mrf.mxu0
      %v1999 = vadd.f32 0.0, %v1998
      %v2000 = vpop.f32.mrf.mxu0
      %2001 = vmatprep.mubr.bf16.mxu0 0
      %2002 = vmatmul.mubr.bf16.gmra.mxu0 %v1771
      %v2003 = vpop.f32.mrf.mxu0
      %v2004 = vadd.f32 0.0, %v2003
      %v2005 = vpop.f32.mrf.mxu0
      %v2006 = vpop.f32.mrf.mxu0
      %v2007 = vadd.f32 0.0, %v2006
      %v2008 = vpop.f32.mrf.mxu0
      %2009 = vmatprep.mubr.bf16.mxu0 0
      %2010 = vmatmul.mubr.bf16.gmra.mxu0 %v1772
      %v2011 = vpop.f32.mrf.mxu0
      %v2012 = vadd.f32 0.0, %v2011
      %v2013 = vpop.f32.mrf.mxu0
      %v2014 = vpop.f32.mrf.mxu0
      %v2015 = vadd.f32 0.0, %v2014
      %v2016 = vpop.f32.mrf.mxu0
      %2017 = vmatprep.mubr.bf16.mxu0 0
      %2018 = vmatmul.mubr.bf16.gmra.mxu0 %v1773
      %v2019 = vpop.f32.mrf.mxu0
      %v2020 = vadd.f32 0.0, %v2019
      %v2021 = vpop.f32.mrf.mxu0
      %v2022 = vpop.f32.mrf.mxu0
      %v2023 = vadd.f32 0.0, %v2022
      %v2024 = vpop.f32.mrf.mxu0
      %2025 = vmatprep.mubr.bf16.mxu0 0
      %2026 = vmatmul.mubr.bf16.gmra.mxu0 %v1774
      %v2027 = vpop.f32.mrf.mxu0
      %v2028 = vadd.f32 0.0, %v2027
      %v2029 = vpop.f32.mrf.mxu0
      %v2030 = vpop.f32.mrf.mxu0
      %v2031 = vadd.f32 0.0, %v2030
      %v2032 = vpop.f32.mrf.mxu0
      %2033 = vmatprep.mubr.bf16.mxu0 0
      %2034 = vmatmul.mubr.bf16.gmra.mxu0 %v1775
      %v2035 = vpop.f32.mrf.mxu0
      %v2036 = vadd.f32 0.0, %v2035
      %v2037 = vpop.f32.mrf.mxu0
      %v2038 = vpop.f32.mrf.mxu0
      %v2039 = vpop.f32.mrf.mxu0
      %2040 = vdwg.mxu0
      %v2041 = vadd.f32 %v1673, %v1876
      %v2042 = vadd.f32 %v1674, %v1879
      %v2043 = vadd.f32 %v1675, %v1884
      %v2044 = vadd.f32 %v1676, %v1887
      %v2045 = vadd.f32 %v1677, %v1892
      %v2046 = vadd.f32 %v1678, %v1895
      %v2047 = vadd.f32 %v1679, %v1900
      %v2048 = vadd.f32 %v1680, %v1903
      %v2049 = vadd.f32 %v1681, %v1908
      %v2050 = vadd.f32 %v1682, %v1911
      %v2051 = vadd.f32 %v1683, %v1916
      %v2052 = vadd.f32 %v1684, %v1919
      %v2053 = vadd.f32 %v1685, %v1924
      %v2054 = vadd.f32 %v1686, %v1927
      %v2055 = vadd.f32 %v1687, %v1932
      %v2056 = vadd.f32 %v1688, %v1935
      %v2057 = vadd.f32 %v1689, %v1940
      %v2058 = vadd.f32 %v1690, %v1943
      %v2059 = vadd.f32 %v1691, %v1948
      %v2060 = vadd.f32 %v1692, %v1951
      %v2061 = vadd.f32 %v1693, %v1956
      %v2062 = vadd.f32 %v1694, %v1959
      %v2063 = vadd.f32 %v1695, %v1964
      %v2064 = vadd.f32 %v1696, %v1967
      %v2065 = vadd.f32 %v1697, %v1972
      %v2066 = vadd.f32 %v1698, %v1975
      %v2067 = vadd.f32 %v1699, %v1980
      %v2068 = vadd.f32 %v1700, %v1983
      %v2069 = vadd.f32 %v1701, %v1988
      %v2070 = vadd.f32 %v1702, %v1991
      %v2071 = vadd.f32 %v1703, %v1996
      %v2072 = vadd.f32 %v1704, %v1999
      %v2073 = vadd.f32 %v1705, %v2004
      %v2074 = vadd.f32 %v1706, %v2007
      %v2075 = vadd.f32 %v1707, %v2012
      %v2076 = vadd.f32 %v1708, %v2015
      %v2077 = vadd.f32 %v1709, %v2020
      %v2078 = vadd.f32 %v1710, %v2023
      %v2079 = vadd.f32 %v1711, %v2028
      %v2080 = vadd.f32 %v1712, %v2031
      %v2081 = vadd.f32 %v1713, %v2036
      %v2082 = vld [vmem:[%s268 + $0x19] sm:$0xff]
      %v2083 = vld [vmem:[%s268 + $0x21] sm:$0xff]
      %v2084 = vld [vmem:[%s268 + $0x29] sm:$0xff]
      %v2085 = vld [vmem:[%s268 + $0x31] sm:$0xff]
      %v2086 = vld [vmem:[%s268 + $0x39] sm:$0xff]
      %v2087 = vld [vmem:[%s268 + $0x41] sm:$0xff]
      %v2088 = vld [vmem:[%s268 + $0x49] sm:$0xff]
      %v2089 = vld [vmem:[%s268 + $0x51] sm:$0xff]
      %v2090 = vld [vmem:[%s268 + $0x59] sm:$0xff]
      %v2091 = vld [vmem:[%s268 + $0x61] sm:$0xff]
      %v2092 = vld [vmem:[%s268 + $0x69] sm:$0xff]
      %v2093 = vld [vmem:[%s268 + $0x71] sm:$0xff]
      %v2094 = vld [vmem:[%s268 + $0x79] sm:$0xff]
      %v2095 = vld [vmem:[%s268 + $0x81] sm:$0xff]
      %v2096 = vld [vmem:[%s268 + $0x89] sm:$0xff]
      %v2097 = vld [vmem:[%s268 + $0x91] sm:$0xff]
      %v2098 = vld [vmem:[%s268 + $0x99] sm:$0xff]
      %v2099 = vld [vmem:[%s268 + $0xa1] sm:$0xff]
      %v2100 = vld [vmem:[%s268 + $0xa9] sm:$0xff]
      %v2101 = vld [vmem:[%s268 + $0xb1] sm:$0xff]
      %v2102 = vld [vmem:[%s268 + $0xb9] sm:$0xff]
      %v2103 = vld [vmem:[%s268 + $0xc1] sm:$0xff]
      %v2104 = vld [vmem:[%s268 + $0xc9] sm:$0xff]
      %v2105 = vld [vmem:[%s268 + $0xd1] sm:$0xff]
      %v2106 = vld [vmem:[%s268 + $0xd9] sm:$0xff]
      %v2107 = vld [vmem:[%s268 + $0xe1] sm:$0xff]
      %v2108 = vld [vmem:[%s268 + $0xe9] sm:$0xff]
      %v2109 = vld [vmem:[%s268 + $0xf1] sm:$0xff]
      %v2110 = vld [vmem:[%s268 + $0xf9] sm:$0xff]
      %v2111 = vld [vmem:[%s268 + $0x101] sm:$0xff]
      %v2112 = vld [vmem:[%s268 + $0x109] sm:$0xff]
      %v2113 = vld [vmem:[%s268 + $0x111] sm:$0xff]
      %v2114 = vld [vmem:[%s268 + $0x119] sm:$0xff]
      %v2115 = vld [vmem:[%s268 + $0x121] sm:$0xff]
      %v2116 = vld [vmem:[%s268 + $0x129] sm:$0xff]
      %v2117 = vld [vmem:[%s268 + $0x131] sm:$0xff]
      %v2118 = vld [vmem:[%s268 + $0x139] sm:$0xff]
      %v2119 = vld [vmem:[%s268 + $0x141] sm:$0xff]
      %v2120 = vld [vmem:[%s268 + $0x149] sm:$0xff]
      %v2121 = vld [vmem:[%s268 + $0x151] sm:$0xff]
      %v2122 = vld [vmem:[%s268 + $0x159] sm:$0xff]
      %v2123 = vpack.c.bf16 %v2083, %v2082
      %v2124 = vpack.c.bf16 %v2085, %v2084
      %v2125 = vpack.c.bf16 %v2087, %v2086
      %v2126 = vpack.c.bf16 %v2089, %v2088
      %v2127 = vpack.c.bf16 %v2091, %v2090
      %v2128 = vpack.c.bf16 %v2093, %v2092
      %v2129 = vpack.c.bf16 %v2095, %v2094
      %v2130 = vpack.c.bf16 %v2097, %v2096
      %v2131 = vpack.c.bf16 %v2099, %v2098
      %v2132 = vpack.c.bf16 %v2101, %v2100
      %v2133 = vpack.c.bf16 %v2103, %v2102
      %v2134 = vpack.c.bf16 %v2105, %v2104
      %v2135 = vpack.c.bf16 %v2107, %v2106
      %v2136 = vpack.c.bf16 %v2109, %v2108
      %v2137 = vpack.c.bf16 %v2111, %v2110
      %v2138 = vpack.c.bf16 %v2113, %v2112
      %v2139 = vpack.c.bf16 %v2115, %v2114
      %v2140 = vpack.c.bf16 %v2117, %v2116
      %v2141 = vpack.c.bf16 %v2119, %v2118
      %v2142 = vpack.c.bf16 %v2121, %v2120
      %v2143 = vpack.c.bf16 %v2122, %v2122
      %s2144 = scalar_lea.vmem %s3, 320
      %v2145 = vld [vmem:[%s2144] sm:$0xf]
      %v2146 = vld [vmem:[%s2144 + $0x4] sm:$0xf]
      %v2147 = vld [vmem:[%s2144 + $0x8] sm:$0xf]
      %v2148 = vld [vmem:[%s2144 + $0xc] sm:$0xf]
      %v2149 = vld [vmem:[%s2144 + $0x10] sm:$0xf]
      %v2150 = vld [vmem:[%s2144 + $0x14] sm:$0xf]
      %v2151 = vld [vmem:[%s2144 + $0x18] sm:$0xf]
      %v2152 = vld [vmem:[%s2144 + $0x1c] sm:$0xf]
      %v2153 = vld [vmem:[%s2144 + $0x20] sm:$0xf]
      %v2154 = vld [vmem:[%s2144 + $0x24] sm:$0xf]
      %v2155 = vld [vmem:[%s2144 + $0x28] sm:$0xf]
      %v2156 = vld [vmem:[%s2144 + $0x2c] sm:$0xf]
      %v2157 = vld [vmem:[%s2144 + $0x30] sm:$0xf]
      %v2158 = vld [vmem:[%s2144 + $0x34] sm:$0xf]
      %v2159 = vld [vmem:[%s2144 + $0x38] sm:$0xf]
      %v2160 = vld [vmem:[%s2144 + $0x3c] sm:$0xf]
      %v2177 = vunpack.c.l.b16 %v2145
      %v2178 = vunpack.c.l.b16 %v2146
      %v2179 = vunpack.c.l.b16 %v2147
      %v2180 = vunpack.c.l.b16 %v2148
      %v2181 = vunpack.c.l.b16 %v2149
      %v2182 = vunpack.c.l.b16 %v2150
      %v2183 = vunpack.c.l.b16 %v2151
      %v2184 = vunpack.c.l.b16 %v2152
      %v2185 = vunpack.c.l.b16 %v2153
      %v2186 = vunpack.c.l.b16 %v2154
      %v2187 = vunpack.c.l.b16 %v2155
      %v2188 = vunpack.c.l.b16 %v2156
      %v2189 = vunpack.c.l.b16 %v2157
      %v2190 = vunpack.c.l.b16 %v2158
      %v2191 = vunpack.c.l.b16 %v2159
      %v2192 = vunpack.c.l.b16 %v2160
      %v2193 = vpack.c.b16 %v2178, %v2177
      %v2194 = vpack.c.b16 %v2180, %v2179
      %v2195 = vpack.c.b16 %v2182, %v2181
      %v2196 = vpack.c.b16 %v2184, %v2183
      %v2197 = vpack.c.b16 %v2186, %v2185
      %v2198 = vpack.c.b16 %v2188, %v2187
      %v2199 = vpack.c.b16 %v2190, %v2189
      %v2200 = vpack.c.b16 %v2192, %v2191
      %2209 = vmatprep.subr.bf16.mxu0 0
      %2210 = vmatpush1.bf16.msra.mxu0 %v2200
      %2211 = vmatprep.subr.bf16.mxu0 0
      %2212 = vmatpush1.bf16.msra.mxu0 %v2199
      %2213 = vmatprep.subr.bf16.mxu0 0
      %2214 = vmatpush1.bf16.msra.mxu0 %v2198
      %2215 = vmatprep.subr.bf16.mxu0 0
      %2216 = vmatpush1.bf16.msra.mxu0 %v2197
      %2217 = vmatprep.subr.bf16.mxu0 0
      %2218 = vmatpush1.bf16.msra.mxu0 %v2196
      %2219 = vmatprep.subr.bf16.mxu0 0
      %2220 = vmatpush1.bf16.msra.mxu0 %v2195
      %2221 = vmatprep.subr.bf16.mxu0 0
      %2222 = vmatpush1.bf16.msra.mxu0 %v2194
      %2223 = vmatprep.subr.bf16.mxu0 0
      %2224 = vmatpush1.bf16.msra.mxu0 %v2193
      %2225 = vmatprep.subr.bf16.mxu0 0
      %2226 = vmatpush2.bf16.msra.mxu0 0
      %2227 = vmatprep.subr.bf16.mxu0 0
      %2228 = vmatpush2.bf16.msra.mxu0 0
      %2229 = vmatprep.subr.bf16.mxu0 0
      %2230 = vmatpush2.bf16.msra.mxu0 0
      %2231 = vmatprep.subr.bf16.mxu0 0
      %2232 = vmatpush2.bf16.msra.mxu0 0
      %2233 = vmatprep.subr.bf16.mxu0 0
      %2234 = vmatpush2.bf16.msra.mxu0 0
      %2235 = vmatprep.subr.bf16.mxu0 0
      %2236 = vmatpush2.bf16.msra.mxu0 0
      %2237 = vmatprep.subr.bf16.mxu0 0
      %2238 = vmatpush2.bf16.msra.mxu0 0
      %2239 = vmatprep.subr.bf16.mxu0 0
      %2240 = vmatpush2.bf16.msra.mxu0 0
      %2241 = vmatprep.mubr.bf16.mxu0 0
      %2242 = vmatmul.mubr.bf16.gmra.mxu0 %v2123
      %v2243 = vpop.f32.mrf.mxu0
      %v2244 = vadd.f32 0.0, %v2243
      %v2245 = vpop.f32.mrf.mxu0
      %v2246 = vpop.f32.mrf.mxu0
      %v2247 = vadd.f32 0.0, %v2246
      %v2248 = vpop.f32.mrf.mxu0
      %2249 = vmatprep.mubr.bf16.mxu0 0
      %2250 = vmatmul.mubr.bf16.gmra.mxu0 %v2124
      %v2251 = vpop.f32.mrf.mxu0
      %v2252 = vadd.f32 0.0, %v2251
      %v2253 = vpop.f32.mrf.mxu0
      %v2254 = vpop.f32.mrf.mxu0
      %v2255 = vadd.f32 0.0, %v2254
      %v2256 = vpop.f32.mrf.mxu0
      %2257 = vmatprep.mubr.bf16.mxu0 0
      %2258 = vmatmul.mubr.bf16.gmra.mxu0 %v2125
      %v2259 = vpop.f32.mrf.mxu0
      %v2260 = vadd.f32 0.0, %v2259
      %v2261 = vpop.f32.mrf.mxu0
      %v2262 = vpop.f32.mrf.mxu0
      %v2263 = vadd.f32 0.0, %v2262
      %v2264 = vpop.f32.mrf.mxu0
      %2265 = vmatprep.mubr.bf16.mxu0 0
      %2266 = vmatmul.mubr.bf16.gmra.mxu0 %v2126
      %v2267 = vpop.f32.mrf.mxu0
      %v2268 = vadd.f32 0.0, %v2267
      %v2269 = vpop.f32.mrf.mxu0
      %v2270 = vpop.f32.mrf.mxu0
      %v2271 = vadd.f32 0.0, %v2270
      %v2272 = vpop.f32.mrf.mxu0
      %2273 = vmatprep.mubr.bf16.mxu0 0
      %2274 = vmatmul.mubr.bf16.gmra.mxu0 %v2127
      %v2275 = vpop.f32.mrf.mxu0
      %v2276 = vadd.f32 0.0, %v2275
      %v2277 = vpop.f32.mrf.mxu0
      %v2278 = vpop.f32.mrf.mxu0
      %v2279 = vadd.f32 0.0, %v2278
      %v2280 = vpop.f32.mrf.mxu0
      %2281 = vmatprep.mubr.bf16.mxu0 0
      %2282 = vmatmul.mubr.bf16.gmra.mxu0 %v2128
      %v2283 = vpop.f32.mrf.mxu0
      %v2284 = vadd.f32 0.0, %v2283
      %v2285 = vpop.f32.mrf.mxu0
      %v2286 = vpop.f32.mrf.mxu0
      %v2287 = vadd.f32 0.0, %v2286
      %v2288 = vpop.f32.mrf.mxu0
      %2289 = vmatprep.mubr.bf16.mxu0 0
      %2290 = vmatmul.mubr.bf16.gmra.mxu0 %v2129
      %v2291 = vpop.f32.mrf.mxu0
      %v2292 = vadd.f32 0.0, %v2291
      %v2293 = vpop.f32.mrf.mxu0
      %v2294 = vpop.f32.mrf.mxu0
      %v2295 = vadd.f32 0.0, %v2294
      %v2296 = vpop.f32.mrf.mxu0
      %2297 = vmatprep.mubr.bf16.mxu0 0
      %2298 = vmatmul.mubr.bf16.gmra.mxu0 %v2130
      %v2299 = vpop.f32.mrf.mxu0
      %v2300 = vadd.f32 0.0, %v2299
      %v2301 = vpop.f32.mrf.mxu0
      %v2302 = vpop.f32.mrf.mxu0
      %v2303 = vadd.f32 0.0, %v2302
      %v2304 = vpop.f32.mrf.mxu0
      %2305 = vmatprep.mubr.bf16.mxu0 0
      %2306 = vmatmul.mubr.bf16.gmra.mxu0 %v2131
      %v2307 = vpop.f32.mrf.mxu0
      %v2308 = vadd.f32 0.0, %v2307
      %v2309 = vpop.f32.mrf.mxu0
      %v2310 = vpop.f32.mrf.mxu0
      %v2311 = vadd.f32 0.0, %v2310
      %v2312 = vpop.f32.mrf.mxu0
      %2313 = vmatprep.mubr.bf16.mxu0 0
      %2314 = vmatmul.mubr.bf16.gmra.mxu0 %v2132
      %v2315 = vpop.f32.mrf.mxu0
      %v2316 = vadd.f32 0.0, %v2315
      %v2317 = vpop.f32.mrf.mxu0
      %v2318 = vpop.f32.mrf.mxu0
      %v2319 = vadd.f32 0.0, %v2318
      %v2320 = vpop.f32.mrf.mxu0
      %2321 = vmatprep.mubr.bf16.mxu0 0
      %2322 = vmatmul.mubr.bf16.gmra.mxu0 %v2133
      %v2323 = vpop.f32.mrf.mxu0
      %v2324 = vadd.f32 0.0, %v2323
      %v2325 = vpop.f32.mrf.mxu0
      %v2326 = vpop.f32.mrf.mxu0
      %v2327 = vadd.f32 0.0, %v2326
      %v2328 = vpop.f32.mrf.mxu0
      %2329 = vmatprep.mubr.bf16.mxu0 0
      %2330 = vmatmul.mubr.bf16.gmra.mxu0 %v2134
      %v2331 = vpop.f32.mrf.mxu0
      %v2332 = vadd.f32 0.0, %v2331
      %v2333 = vpop.f32.mrf.mxu0
      %v2334 = vpop.f32.mrf.mxu0
      %v2335 = vadd.f32 0.0, %v2334
      %v2336 = vpop.f32.mrf.mxu0
      %2337 = vmatprep.mubr.bf16.mxu0 0
      %2338 = vmatmul.mubr.bf16.gmra.mxu0 %v2135
      %v2339 = vpop.f32.mrf.mxu0
      %v2340 = vadd.f32 0.0, %v2339
      %v2341 = vpop.f32.mrf.mxu0
      %v2342 = vpop.f32.mrf.mxu0
      %v2343 = vadd.f32 0.0, %v2342
      %v2344 = vpop.f32.mrf.mxu0
      %2345 = vmatprep.mubr.bf16.mxu0 0
      %2346 = vmatmul.mubr.bf16.gmra.mxu0 %v2136
      %v2347 = vpop.f32.mrf.mxu0
      %v2348 = vadd.f32 0.0, %v2347
      %v2349 = vpop.f32.mrf.mxu0
      %v2350 = vpop.f32.mrf.mxu0
      %v2351 = vadd.f32 0.0, %v2350
      %v2352 = vpop.f32.mrf.mxu0
      %2353 = vmatprep.mubr.bf16.mxu0 0
      %2354 = vmatmul.mubr.bf16.gmra.mxu0 %v2137
      %v2355 = vpop.f32.mrf.mxu0
      %v2356 = vadd.f32 0.0, %v2355
      %v2357 = vpop.f32.mrf.mxu0
      %v2358 = vpop.f32.mrf.mxu0
      %v2359 = vadd.f32 0.0, %v2358
      %v2360 = vpop.f32.mrf.mxu0
      %2361 = vmatprep.mubr.bf16.mxu0 0
      %2362 = vmatmul.mubr.bf16.gmra.mxu0 %v2138
      %v2363 = vpop.f32.mrf.mxu0
      %v2364 = vadd.f32 0.0, %v2363
      %v2365 = vpop.f32.mrf.mxu0
      %v2366 = vpop.f32.mrf.mxu0
      %v2367 = vadd.f32 0.0, %v2366
      %v2368 = vpop.f32.mrf.mxu0
      %2369 = vmatprep.mubr.bf16.mxu0 0
      %2370 = vmatmul.mubr.bf16.gmra.mxu0 %v2139
      %v2371 = vpop.f32.mrf.mxu0
      %v2372 = vadd.f32 0.0, %v2371
      %v2373 = vpop.f32.mrf.mxu0
      %v2374 = vpop.f32.mrf.mxu0
      %v2375 = vadd.f32 0.0, %v2374
      %v2376 = vpop.f32.mrf.mxu0
      %2377 = vmatprep.mubr.bf16.mxu0 0
      %2378 = vmatmul.mubr.bf16.gmra.mxu0 %v2140
      %v2379 = vpop.f32.mrf.mxu0
      %v2380 = vadd.f32 0.0, %v2379
      %v2381 = vpop.f32.mrf.mxu0
      %v2382 = vpop.f32.mrf.mxu0
      %v2383 = vadd.f32 0.0, %v2382
      %v2384 = vpop.f32.mrf.mxu0
      %2385 = vmatprep.mubr.bf16.mxu0 0
      %2386 = vmatmul.mubr.bf16.gmra.mxu0 %v2141
      %v2387 = vpop.f32.mrf.mxu0
      %v2388 = vadd.f32 0.0, %v2387
      %v2389 = vpop.f32.mrf.mxu0
      %v2390 = vpop.f32.mrf.mxu0
      %v2391 = vadd.f32 0.0, %v2390
      %v2392 = vpop.f32.mrf.mxu0
      %2393 = vmatprep.mubr.bf16.mxu0 0
      %2394 = vmatmul.mubr.bf16.gmra.mxu0 %v2142
      %v2395 = vpop.f32.mrf.mxu0
      %v2396 = vadd.f32 0.0, %v2395
      %v2397 = vpop.f32.mrf.mxu0
      %v2398 = vpop.f32.mrf.mxu0
      %v2399 = vadd.f32 0.0, %v2398
      %v2400 = vpop.f32.mrf.mxu0
      %2401 = vmatprep.mubr.bf16.mxu0 0
      %2402 = vmatmul.mubr.bf16.gmra.mxu0 %v2143
      %v2403 = vpop.f32.mrf.mxu0
      %v2404 = vadd.f32 0.0, %v2403
      %v2405 = vpop.f32.mrf.mxu0
      %v2406 = vpop.f32.mrf.mxu0
      %v2407 = vpop.f32.mrf.mxu0
      %2408 = vdwg.mxu0
      %v2409 = vadd.f32 %v2041, %v2244
      %v2410 = vadd.f32 %v2042, %v2247
      %v2411 = vadd.f32 %v2043, %v2252
      %v2412 = vadd.f32 %v2044, %v2255
      %v2413 = vadd.f32 %v2045, %v2260
      %v2414 = vadd.f32 %v2046, %v2263
      %v2415 = vadd.f32 %v2047, %v2268
      %v2416 = vadd.f32 %v2048, %v2271
      %v2417 = vadd.f32 %v2049, %v2276
      %v2418 = vadd.f32 %v2050, %v2279
      %v2419 = vadd.f32 %v2051, %v2284
      %v2420 = vadd.f32 %v2052, %v2287
      %v2421 = vadd.f32 %v2053, %v2292
      %v2422 = vadd.f32 %v2054, %v2295
      %v2423 = vadd.f32 %v2055, %v2300
      %v2424 = vadd.f32 %v2056, %v2303
      %v2425 = vadd.f32 %v2057, %v2308
      %v2426 = vadd.f32 %v2058, %v2311
      %v2427 = vadd.f32 %v2059, %v2316
      %v2428 = vadd.f32 %v2060, %v2319
      %v2429 = vadd.f32 %v2061, %v2324
      %v2430 = vadd.f32 %v2062, %v2327
      %v2431 = vadd.f32 %v2063, %v2332
      %v2432 = vadd.f32 %v2064, %v2335
      %v2433 = vadd.f32 %v2065, %v2340
      %v2434 = vadd.f32 %v2066, %v2343
      %v2435 = vadd.f32 %v2067, %v2348
      %v2436 = vadd.f32 %v2068, %v2351
      %v2437 = vadd.f32 %v2069, %v2356
      %v2438 = vadd.f32 %v2070, %v2359
      %v2439 = vadd.f32 %v2071, %v2364
      %v2440 = vadd.f32 %v2072, %v2367
      %v2441 = vadd.f32 %v2073, %v2372
      %v2442 = vadd.f32 %v2074, %v2375
      %v2443 = vadd.f32 %v2075, %v2380
      %v2444 = vadd.f32 %v2076, %v2383
      %v2445 = vadd.f32 %v2077, %v2388
      %v2446 = vadd.f32 %v2078, %v2391
      %v2447 = vadd.f32 %v2079, %v2396
      %v2448 = vadd.f32 %v2080, %v2399
      %v2449 = vadd.f32 %v2081, %v2404
      %v2450 = vld [vmem:[%s268 + $0x29] sm:$0xff]
      %v2451 = vld [vmem:[%s268 + $0x31] sm:$0xff]
      %v2452 = vld [vmem:[%s268 + $0x39] sm:$0xff]
      %v2453 = vld [vmem:[%s268 + $0x41] sm:$0xff]
      %v2454 = vld [vmem:[%s268 + $0x49] sm:$0xff]
      %v2455 = vld [vmem:[%s268 + $0x51] sm:$0xff]
      %v2456 = vld [vmem:[%s268 + $0x59] sm:$0xff]
      %v2457 = vld [vmem:[%s268 + $0x61] sm:$0xff]
      %v2458 = vld [vmem:[%s268 + $0x69] sm:$0xff]
      %v2459 = vld [vmem:[%s268 + $0x71] sm:$0xff]
      %v2460 = vld [vmem:[%s268 + $0x79] sm:$0xff]
      %v2461 = vld [vmem:[%s268 + $0x81] sm:$0xff]
      %v2462 = vld [vmem:[%s268 + $0x89] sm:$0xff]
      %v2463 = vld [vmem:[%s268 + $0x91] sm:$0xff]
      %v2464 = vld [vmem:[%s268 + $0x99] sm:$0xff]
      %v2465 = vld [vmem:[%s268 + $0xa1] sm:$0xff]
      %v2466 = vld [vmem:[%s268 + $0xa9] sm:$0xff]
      %v2467 = vld [vmem:[%s268 + $0xb1] sm:$0xff]
      %v2468 = vld [vmem:[%s268 + $0xb9] sm:$0xff]
      %v2469 = vld [vmem:[%s268 + $0xc1] sm:$0xff]
      %v2470 = vld [vmem:[%s268 + $0xc9] sm:$0xff]
      %v2471 = vld [vmem:[%s268 + $0xd1] sm:$0xff]
      %v2472 = vld [vmem:[%s268 + $0xd9] sm:$0xff]
      %v2473 = vld [vmem:[%s268 + $0xe1] sm:$0xff]
      %v2474 = vld [vmem:[%s268 + $0xe9] sm:$0xff]
      %v2475 = vld [vmem:[%s268 + $0xf1] sm:$0xff]
      %v2476 = vld [vmem:[%s268 + $0xf9] sm:$0xff]
      %v2477 = vld [vmem:[%s268 + $0x101] sm:$0xff]
      %v2478 = vld [vmem:[%s268 + $0x109] sm:$0xff]
      %v2479 = vld [vmem:[%s268 + $0x111] sm:$0xff]
      %v2480 = vld [vmem:[%s268 + $0x119] sm:$0xff]
      %v2481 = vld [vmem:[%s268 + $0x121] sm:$0xff]
      %v2482 = vld [vmem:[%s268 + $0x129] sm:$0xff]
      %v2483 = vld [vmem:[%s268 + $0x131] sm:$0xff]
      %v2484 = vld [vmem:[%s268 + $0x139] sm:$0xff]
      %v2485 = vld [vmem:[%s268 + $0x141] sm:$0xff]
      %v2486 = vld [vmem:[%s268 + $0x149] sm:$0xff]
      %v2487 = vld [vmem:[%s268 + $0x151] sm:$0xff]
      %v2488 = vld [vmem:[%s268 + $0x159] sm:$0xff]
      %v2489 = vld [vmem:[%s268 + $0x161] sm:$0xff]
      %v2490 = vld [vmem:[%s268 + $0x169] sm:$0xff]
      %v2491 = vpack.c.bf16 %v2451, %v2450
      %v2492 = vpack.c.bf16 %v2453, %v2452
      %v2493 = vpack.c.bf16 %v2455, %v2454
      %v2494 = vpack.c.bf16 %v2457, %v2456
      %v2495 = vpack.c.bf16 %v2459, %v2458
      %v2496 = vpack.c.bf16 %v2461, %v2460
      %v2497 = vpack.c.bf16 %v2463, %v2462
      %v2498 = vpack.c.bf16 %v2465, %v2464
      %v2499 = vpack.c.bf16 %v2467, %v2466
      %v2500 = vpack.c.bf16 %v2469, %v2468
      %v2501 = vpack.c.bf16 %v2471, %v2470
      %v2502 = vpack.c.bf16 %v2473, %v2472
      %v2503 = vpack.c.bf16 %v2475, %v2474
      %v2504 = vpack.c.bf16 %v2477, %v2476
      %v2505 = vpack.c.bf16 %v2479, %v2478
      %v2506 = vpack.c.bf16 %v2481, %v2480
      %v2507 = vpack.c.bf16 %v2483, %v2482
      %v2508 = vpack.c.bf16 %v2485, %v2484
      %v2509 = vpack.c.bf16 %v2487, %v2486
      %v2510 = vpack.c.bf16 %v2489, %v2488
      %v2511 = vpack.c.bf16 %v2490, %v2490
      %s2512 = scalar_lea.vmem %s3, 384
      %v2513 = vld [vmem:[%s2512] sm:$0xf]
      %v2514 = vld [vmem:[%s2512 + $0x4] sm:$0xf]
      %v2515 = vld [vmem:[%s2512 + $0x8] sm:$0xf]
      %v2516 = vld [vmem:[%s2512 + $0xc] sm:$0xf]
      %v2517 = vld [vmem:[%s2512 + $0x10] sm:$0xf]
      %v2518 = vld [vmem:[%s2512 + $0x14] sm:$0xf]
      %v2519 = vld [vmem:[%s2512 + $0x18] sm:$0xf]
      %v2520 = vld [vmem:[%s2512 + $0x1c] sm:$0xf]
      %v2521 = vld [vmem:[%s2512 + $0x20] sm:$0xf]
      %v2522 = vld [vmem:[%s2512 + $0x24] sm:$0xf]
      %v2523 = vld [vmem:[%s2512 + $0x28] sm:$0xf]
      %v2524 = vld [vmem:[%s2512 + $0x2c] sm:$0xf]
      %v2525 = vld [vmem:[%s2512 + $0x30] sm:$0xf]
      %v2526 = vld [vmem:[%s2512 + $0x34] sm:$0xf]
      %v2527 = vld [vmem:[%s2512 + $0x38] sm:$0xf]
      %v2528 = vld [vmem:[%s2512 + $0x3c] sm:$0xf]
      %v2545 = vunpack.c.l.b16 %v2513
      %v2546 = vunpack.c.l.b16 %v2514
      %v2547 = vunpack.c.l.b16 %v2515
      %v2548 = vunpack.c.l.b16 %v2516
      %v2549 = vunpack.c.l.b16 %v2517
      %v2550 = vunpack.c.l.b16 %v2518
      %v2551 = vunpack.c.l.b16 %v2519
      %v2552 = vunpack.c.l.b16 %v2520
      %v2553 = vunpack.c.l.b16 %v2521
      %v2554 = vunpack.c.l.b16 %v2522
      %v2555 = vunpack.c.l.b16 %v2523
      %v2556 = vunpack.c.l.b16 %v2524
      %v2557 = vunpack.c.l.b16 %v2525
      %v2558 = vunpack.c.l.b16 %v2526
      %v2559 = vunpack.c.l.b16 %v2527
      %v2560 = vunpack.c.l.b16 %v2528
      %v2561 = vpack.c.b16 %v2546, %v2545
      %v2562 = vpack.c.b16 %v2548, %v2547
      %v2563 = vpack.c.b16 %v2550, %v2549
      %v2564 = vpack.c.b16 %v2552, %v2551
      %v2565 = vpack.c.b16 %v2554, %v2553
      %v2566 = vpack.c.b16 %v2556, %v2555
      %v2567 = vpack.c.b16 %v2558, %v2557
      %v2568 = vpack.c.b16 %v2560, %v2559
      %2577 = vmatprep.subr.bf16.mxu0 0
      %2578 = vmatpush1.bf16.msra.mxu0 %v2568
      %2579 = vmatprep.subr.bf16.mxu0 0
      %2580 = vmatpush1.bf16.msra.mxu0 %v2567
      %2581 = vmatprep.subr.bf16.mxu0 0
      %2582 = vmatpush1.bf16.msra.mxu0 %v2566
      %2583 = vmatprep.subr.bf16.mxu0 0
      %2584 = vmatpush1.bf16.msra.mxu0 %v2565
      %2585 = vmatprep.subr.bf16.mxu0 0
      %2586 = vmatpush1.bf16.msra.mxu0 %v2564
      %2587 = vmatprep.subr.bf16.mxu0 0
      %2588 = vmatpush1.bf16.msra.mxu0 %v2563
      %2589 = vmatprep.subr.bf16.mxu0 0
      %2590 = vmatpush1.bf16.msra.mxu0 %v2562
      %2591 = vmatprep.subr.bf16.mxu0 0
      %2592 = vmatpush1.bf16.msra.mxu0 %v2561
      %2593 = vmatprep.subr.bf16.mxu0 0
      %2594 = vmatpush2.bf16.msra.mxu0 0
      %2595 = vmatprep.subr.bf16.mxu0 0
      %2596 = vmatpush2.bf16.msra.mxu0 0
      %2597 = vmatprep.subr.bf16.mxu0 0
      %2598 = vmatpush2.bf16.msra.mxu0 0
      %2599 = vmatprep.subr.bf16.mxu0 0
      %2600 = vmatpush2.bf16.msra.mxu0 0
      %2601 = vmatprep.subr.bf16.mxu0 0
      %2602 = vmatpush2.bf16.msra.mxu0 0
      %2603 = vmatprep.subr.bf16.mxu0 0
      %2604 = vmatpush2.bf16.msra.mxu0 0
      %2605 = vmatprep.subr.bf16.mxu0 0
      %2606 = vmatpush2.bf16.msra.mxu0 0
      %2607 = vmatprep.subr.bf16.mxu0 0
      %2608 = vmatpush2.bf16.msra.mxu0 0
      %2609 = vmatprep.mubr.bf16.mxu0 0
      %2610 = vmatmul.mubr.bf16.gmra.mxu0 %v2491
      %v2611 = vpop.f32.mrf.mxu0
      %v2612 = vadd.f32 0.0, %v2611
      %v2613 = vpop.f32.mrf.mxu0
      %v2614 = vpop.f32.mrf.mxu0
      %v2615 = vadd.f32 0.0, %v2614
      %v2616 = vpop.f32.mrf.mxu0
      %2617 = vmatprep.mubr.bf16.mxu0 0
      %2618 = vmatmul.mubr.bf16.gmra.mxu0 %v2492
      %v2619 = vpop.f32.mrf.mxu0
      %v2620 = vadd.f32 0.0, %v2619
      %v2621 = vpop.f32.mrf.mxu0
      %v2622 = vpop.f32.mrf.mxu0
      %v2623 = vadd.f32 0.0, %v2622
      %v2624 = vpop.f32.mrf.mxu0
      %2625 = vmatprep.mubr.bf16.mxu0 0
      %2626 = vmatmul.mubr.bf16.gmra.mxu0 %v2493
      %v2627 = vpop.f32.mrf.mxu0
      %v2628 = vadd.f32 0.0, %v2627
      %v2629 = vpop.f32.mrf.mxu0
      %v2630 = vpop.f32.mrf.mxu0
      %v2631 = vadd.f32 0.0, %v2630
      %v2632 = vpop.f32.mrf.mxu0
      %2633 = vmatprep.mubr.bf16.mxu0 0
      %2634 = vmatmul.mubr.bf16.gmra.mxu0 %v2494
      %v2635 = vpop.f32.mrf.mxu0
      %v2636 = vadd.f32 0.0, %v2635
      %v2637 = vpop.f32.mrf.mxu0
      %v2638 = vpop.f32.mrf.mxu0
      %v2639 = vadd.f32 0.0, %v2638
      %v2640 = vpop.f32.mrf.mxu0
      %2641 = vmatprep.mubr.bf16.mxu0 0
      %2642 = vmatmul.mubr.bf16.gmra.mxu0 %v2495
      %v2643 = vpop.f32.mrf.mxu0
      %v2644 = vadd.f32 0.0, %v2643
      %v2645 = vpop.f32.mrf.mxu0
      %v2646 = vpop.f32.mrf.mxu0
      %v2647 = vadd.f32 0.0, %v2646
      %v2648 = vpop.f32.mrf.mxu0
      %2649 = vmatprep.mubr.bf16.mxu0 0
      %2650 = vmatmul.mubr.bf16.gmra.mxu0 %v2496
      %v2651 = vpop.f32.mrf.mxu0
      %v2652 = vadd.f32 0.0, %v2651
      %v2653 = vpop.f32.mrf.mxu0
      %v2654 = vpop.f32.mrf.mxu0
      %v2655 = vadd.f32 0.0, %v2654
      %v2656 = vpop.f32.mrf.mxu0
      %2657 = vmatprep.mubr.bf16.mxu0 0
      %2658 = vmatmul.mubr.bf16.gmra.mxu0 %v2497
      %v2659 = vpop.f32.mrf.mxu0
      %v2660 = vadd.f32 0.0, %v2659
      %v2661 = vpop.f32.mrf.mxu0
      %v2662 = vpop.f32.mrf.mxu0
      %v2663 = vadd.f32 0.0, %v2662
      %v2664 = vpop.f32.mrf.mxu0
      %2665 = vmatprep.mubr.bf16.mxu0 0
      %2666 = vmatmul.mubr.bf16.gmra.mxu0 %v2498
      %v2667 = vpop.f32.mrf.mxu0
      %v2668 = vadd.f32 0.0, %v2667
      %v2669 = vpop.f32.mrf.mxu0
      %v2670 = vpop.f32.mrf.mxu0
      %v2671 = vadd.f32 0.0, %v2670
      %v2672 = vpop.f32.mrf.mxu0
      %2673 = vmatprep.mubr.bf16.mxu0 0
      %2674 = vmatmul.mubr.bf16.gmra.mxu0 %v2499
      %v2675 = vpop.f32.mrf.mxu0
      %v2676 = vadd.f32 0.0, %v2675
      %v2677 = vpop.f32.mrf.mxu0
      %v2678 = vpop.f32.mrf.mxu0
      %v2679 = vadd.f32 0.0, %v2678
      %v2680 = vpop.f32.mrf.mxu0
      %2681 = vmatprep.mubr.bf16.mxu0 0
      %2682 = vmatmul.mubr.bf16.gmra.mxu0 %v2500
      %v2683 = vpop.f32.mrf.mxu0
      %v2684 = vadd.f32 0.0, %v2683
      %v2685 = vpop.f32.mrf.mxu0
      %v2686 = vpop.f32.mrf.mxu0
      %v2687 = vadd.f32 0.0, %v2686
      %v2688 = vpop.f32.mrf.mxu0
      %2689 = vmatprep.mubr.bf16.mxu0 0
      %2690 = vmatmul.mubr.bf16.gmra.mxu0 %v2501
      %v2691 = vpop.f32.mrf.mxu0
      %v2692 = vadd.f32 0.0, %v2691
      %v2693 = vpop.f32.mrf.mxu0
      %v2694 = vpop.f32.mrf.mxu0
      %v2695 = vadd.f32 0.0, %v2694
      %v2696 = vpop.f32.mrf.mxu0
      %2697 = vmatprep.mubr.bf16.mxu0 0
      %2698 = vmatmul.mubr.bf16.gmra.mxu0 %v2502
      %v2699 = vpop.f32.mrf.mxu0
      %v2700 = vadd.f32 0.0, %v2699
      %v2701 = vpop.f32.mrf.mxu0
      %v2702 = vpop.f32.mrf.mxu0
      %v2703 = vadd.f32 0.0, %v2702
      %v2704 = vpop.f32.mrf.mxu0
      %2705 = vmatprep.mubr.bf16.mxu0 0
      %2706 = vmatmul.mubr.bf16.gmra.mxu0 %v2503
      %v2707 = vpop.f32.mrf.mxu0
      %v2708 = vadd.f32 0.0, %v2707
      %v2709 = vpop.f32.mrf.mxu0
      %v2710 = vpop.f32.mrf.mxu0
      %v2711 = vadd.f32 0.0, %v2710
      %v2712 = vpop.f32.mrf.mxu0
      %2713 = vmatprep.mubr.bf16.mxu0 0
      %2714 = vmatmul.mubr.bf16.gmra.mxu0 %v2504
      %v2715 = vpop.f32.mrf.mxu0
      %v2716 = vadd.f32 0.0, %v2715
      %v2717 = vpop.f32.mrf.mxu0
      %v2718 = vpop.f32.mrf.mxu0
      %v2719 = vadd.f32 0.0, %v2718
      %v2720 = vpop.f32.mrf.mxu0
      %2721 = vmatprep.mubr.bf16.mxu0 0
      %2722 = vmatmul.mubr.bf16.gmra.mxu0 %v2505
      %v2723 = vpop.f32.mrf.mxu0
      %v2724 = vadd.f32 0.0, %v2723
      %v2725 = vpop.f32.mrf.mxu0
      %v2726 = vpop.f32.mrf.mxu0
      %v2727 = vadd.f32 0.0, %v2726
      %v2728 = vpop.f32.mrf.mxu0
      %2729 = vmatprep.mubr.bf16.mxu0 0
      %2730 = vmatmul.mubr.bf16.gmra.mxu0 %v2506
      %v2731 = vpop.f32.mrf.mxu0
      %v2732 = vadd.f32 0.0, %v2731
      %v2733 = vpop.f32.mrf.mxu0
      %v2734 = vpop.f32.mrf.mxu0
      %v2735 = vadd.f32 0.0, %v2734
      %v2736 = vpop.f32.mrf.mxu0
      %2737 = vmatprep.mubr.bf16.mxu0 0
      %2738 = vmatmul.mubr.bf16.gmra.mxu0 %v2507
      %v2739 = vpop.f32.mrf.mxu0
      %v2740 = vadd.f32 0.0, %v2739
      %v2741 = vpop.f32.mrf.mxu0
      %v2742 = vpop.f32.mrf.mxu0
      %v2743 = vadd.f32 0.0, %v2742
      %v2744 = vpop.f32.mrf.mxu0
      %2745 = vmatprep.mubr.bf16.mxu0 0
      %2746 = vmatmul.mubr.bf16.gmra.mxu0 %v2508
      %v2747 = vpop.f32.mrf.mxu0
      %v2748 = vadd.f32 0.0, %v2747
      %v2749 = vpop.f32.mrf.mxu0
      %v2750 = vpop.f32.mrf.mxu0
      %v2751 = vadd.f32 0.0, %v2750
      %v2752 = vpop.f32.mrf.mxu0
      %2753 = vmatprep.mubr.bf16.mxu0 0
      %2754 = vmatmul.mubr.bf16.gmra.mxu0 %v2509
      %v2755 = vpop.f32.mrf.mxu0
      %v2756 = vadd.f32 0.0, %v2755
      %v2757 = vpop.f32.mrf.mxu0
      %v2758 = vpop.f32.mrf.mxu0
      %v2759 = vadd.f32 0.0, %v2758
      %v2760 = vpop.f32.mrf.mxu0
      %2761 = vmatprep.mubr.bf16.mxu0 0
      %2762 = vmatmul.mubr.bf16.gmra.mxu0 %v2510
      %v2763 = vpop.f32.mrf.mxu0
      %v2764 = vadd.f32 0.0, %v2763
      %v2765 = vpop.f32.mrf.mxu0
      %v2766 = vpop.f32.mrf.mxu0
      %v2767 = vadd.f32 0.0, %v2766
      %v2768 = vpop.f32.mrf.mxu0
      %2769 = vmatprep.mubr.bf16.mxu0 0
      %2770 = vmatmul.mubr.bf16.gmra.mxu0 %v2511
      %v2771 = vpop.f32.mrf.mxu0
      %v2772 = vadd.f32 0.0, %v2771
      %v2773 = vpop.f32.mrf.mxu0
      %v2774 = vpop.f32.mrf.mxu0
      %v2775 = vpop.f32.mrf.mxu0
      %2776 = vdwg.mxu0
      %v2777 = vadd.f32 %v2409, %v2612
      %v2778 = vadd.f32 %v2410, %v2615
      %v2779 = vadd.f32 %v2411, %v2620
      %v2780 = vadd.f32 %v2412, %v2623
      %v2781 = vadd.f32 %v2413, %v2628
      %v2782 = vadd.f32 %v2414, %v2631
      %v2783 = vadd.f32 %v2415, %v2636
      %v2784 = vadd.f32 %v2416, %v2639
      %v2785 = vadd.f32 %v2417, %v2644
      %v2786 = vadd.f32 %v2418, %v2647
      %v2787 = vadd.f32 %v2419, %v2652
      %v2788 = vadd.f32 %v2420, %v2655
      %v2789 = vadd.f32 %v2421, %v2660
      %v2790 = vadd.f32 %v2422, %v2663
      %v2791 = vadd.f32 %v2423, %v2668
      %v2792 = vadd.f32 %v2424, %v2671
      %v2793 = vadd.f32 %v2425, %v2676
      %v2794 = vadd.f32 %v2426, %v2679
      %v2795 = vadd.f32 %v2427, %v2684
      %v2796 = vadd.f32 %v2428, %v2687
      %v2797 = vadd.f32 %v2429, %v2692
      %v2798 = vadd.f32 %v2430, %v2695
      %v2799 = vadd.f32 %v2431, %v2700
      %v2800 = vadd.f32 %v2432, %v2703
      %v2801 = vadd.f32 %v2433, %v2708
      %v2802 = vadd.f32 %v2434, %v2711
      %v2803 = vadd.f32 %v2435, %v2716
      %v2804 = vadd.f32 %v2436, %v2719
      %v2805 = vadd.f32 %v2437, %v2724
      %v2806 = vadd.f32 %v2438, %v2727
      %v2807 = vadd.f32 %v2439, %v2732
      %v2808 = vadd.f32 %v2440, %v2735
      %v2809 = vadd.f32 %v2441, %v2740
      %v2810 = vadd.f32 %v2442, %v2743
      %v2811 = vadd.f32 %v2443, %v2748
      %v2812 = vadd.f32 %v2444, %v2751
      %v2813 = vadd.f32 %v2445, %v2756
      %v2814 = vadd.f32 %v2446, %v2759
      %v2815 = vadd.f32 %v2447, %v2764
      %v2816 = vadd.f32 %v2448, %v2767
      %v2817 = vadd.f32 %v2449, %v2772
      %v2818 = vld [vmem:[%s268 + $0x2a] sm:$0xff]
      %v2819 = vld [vmem:[%s268 + $0x32] sm:$0xff]
      %v2820 = vld [vmem:[%s268 + $0x3a] sm:$0xff]
      %v2821 = vld [vmem:[%s268 + $0x42] sm:$0xff]
      %v2822 = vld [vmem:[%s268 + $0x4a] sm:$0xff]
      %v2823 = vld [vmem:[%s268 + $0x52] sm:$0xff]
      %v2824 = vld [vmem:[%s268 + $0x5a] sm:$0xff]
      %v2825 = vld [vmem:[%s268 + $0x62] sm:$0xff]
      %v2826 = vld [vmem:[%s268 + $0x6a] sm:$0xff]
      %v2827 = vld [vmem:[%s268 + $0x72] sm:$0xff]
      %v2828 = vld [vmem:[%s268 + $0x7a] sm:$0xff]
      %v2829 = vld [vmem:[%s268 + $0x82] sm:$0xff]
      %v2830 = vld [vmem:[%s268 + $0x8a] sm:$0xff]
      %v2831 = vld [vmem:[%s268 + $0x92] sm:$0xff]
      %v2832 = vld [vmem:[%s268 + $0x9a] sm:$0xff]
      %v2833 = vld [vmem:[%s268 + $0xa2] sm:$0xff]
      %v2834 = vld [vmem:[%s268 + $0xaa] sm:$0xff]
      %v2835 = vld [vmem:[%s268 + $0xb2] sm:$0xff]
      %v2836 = vld [vmem:[%s268 + $0xba] sm:$0xff]
      %v2837 = vld [vmem:[%s268 + $0xc2] sm:$0xff]
      %v2838 = vld [vmem:[%s268 + $0xca] sm:$0xff]
      %v2839 = vld [vmem:[%s268 + $0xd2] sm:$0xff]
      %v2840 = vld [vmem:[%s268 + $0xda] sm:$0xff]
      %v2841 = vld [vmem:[%s268 + $0xe2] sm:$0xff]
      %v2842 = vld [vmem:[%s268 + $0xea] sm:$0xff]
      %v2843 = vld [vmem:[%s268 + $0xf2] sm:$0xff]
      %v2844 = vld [vmem:[%s268 + $0xfa] sm:$0xff]
      %v2845 = vld [vmem:[%s268 + $0x102] sm:$0xff]
      %v2846 = vld [vmem:[%s268 + $0x10a] sm:$0xff]
      %v2847 = vld [vmem:[%s268 + $0x112] sm:$0xff]
      %v2848 = vld [vmem:[%s268 + $0x11a] sm:$0xff]
      %v2849 = vld [vmem:[%s268 + $0x122] sm:$0xff]
      %v2850 = vld [vmem:[%s268 + $0x12a] sm:$0xff]
      %v2851 = vld [vmem:[%s268 + $0x132] sm:$0xff]
      %v2852 = vld [vmem:[%s268 + $0x13a] sm:$0xff]
      %v2853 = vld [vmem:[%s268 + $0x142] sm:$0xff]
      %v2854 = vld [vmem:[%s268 + $0x14a] sm:$0xff]
      %v2855 = vld [vmem:[%s268 + $0x152] sm:$0xff]
      %v2856 = vld [vmem:[%s268 + $0x15a] sm:$0xff]
      %v2857 = vld [vmem:[%s268 + $0x162] sm:$0xff]
      %v2858 = vld [vmem:[%s268 + $0x16a] sm:$0xff]
      %v2859 = vpack.c.bf16 %v2819, %v2818
      %v2860 = vpack.c.bf16 %v2821, %v2820
      %v2861 = vpack.c.bf16 %v2823, %v2822
      %v2862 = vpack.c.bf16 %v2825, %v2824
      %v2863 = vpack.c.bf16 %v2827, %v2826
      %v2864 = vpack.c.bf16 %v2829, %v2828
      %v2865 = vpack.c.bf16 %v2831, %v2830
      %v2866 = vpack.c.bf16 %v2833, %v2832
      %v2867 = vpack.c.bf16 %v2835, %v2834
      %v2868 = vpack.c.bf16 %v2837, %v2836
      %v2869 = vpack.c.bf16 %v2839, %v2838
      %v2870 = vpack.c.bf16 %v2841, %v2840
      %v2871 = vpack.c.bf16 %v2843, %v2842
      %v2872 = vpack.c.bf16 %v2845, %v2844
      %v2873 = vpack.c.bf16 %v2847, %v2846
      %v2874 = vpack.c.bf16 %v2849, %v2848
      %v2875 = vpack.c.bf16 %v2851, %v2850
      %v2876 = vpack.c.bf16 %v2853, %v2852
      %v2877 = vpack.c.bf16 %v2855, %v2854
      %v2878 = vpack.c.bf16 %v2857, %v2856
      %v2879 = vpack.c.bf16 %v2858, %v2858
      %s2880 = scalar_lea.vmem %s3, 448
      %v2881 = vld [vmem:[%s2880] sm:$0xf]
      %v2882 = vld [vmem:[%s2880 + $0x4] sm:$0xf]
      %v2883 = vld [vmem:[%s2880 + $0x8] sm:$0xf]
      %v2884 = vld [vmem:[%s2880 + $0xc] sm:$0xf]
      %v2885 = vld [vmem:[%s2880 + $0x10] sm:$0xf]
      %v2886 = vld [vmem:[%s2880 + $0x14] sm:$0xf]
      %v2887 = vld [vmem:[%s2880 + $0x18] sm:$0xf]
      %v2888 = vld [vmem:[%s2880 + $0x1c] sm:$0xf]
      %v2889 = vld [vmem:[%s2880 + $0x20] sm:$0xf]
      %v2890 = vld [vmem:[%s2880 + $0x24] sm:$0xf]
      %v2891 = vld [vmem:[%s2880 + $0x28] sm:$0xf]
      %v2892 = vld [vmem:[%s2880 + $0x2c] sm:$0xf]
      %v2893 = vld [vmem:[%s2880 + $0x30] sm:$0xf]
      %v2894 = vld [vmem:[%s2880 + $0x34] sm:$0xf]
      %v2895 = vld [vmem:[%s2880 + $0x38] sm:$0xf]
      %v2896 = vld [vmem:[%s2880 + $0x3c] sm:$0xf]
      %v2913 = vunpack.c.l.b16 %v2881
      %v2914 = vunpack.c.l.b16 %v2882
      %v2915 = vunpack.c.l.b16 %v2883
      %v2916 = vunpack.c.l.b16 %v2884
      %v2917 = vunpack.c.l.b16 %v2885
      %v2918 = vunpack.c.l.b16 %v2886
      %v2919 = vunpack.c.l.b16 %v2887
      %v2920 = vunpack.c.l.b16 %v2888
      %v2921 = vunpack.c.l.b16 %v2889
      %v2922 = vunpack.c.l.b16 %v2890
      %v2923 = vunpack.c.l.b16 %v2891
      %v2924 = vunpack.c.l.b16 %v2892
      %v2925 = vunpack.c.l.b16 %v2893
      %v2926 = vunpack.c.l.b16 %v2894
      %v2927 = vunpack.c.l.b16 %v2895
      %v2928 = vunpack.c.l.b16 %v2896
      %v2929 = vpack.c.b16 %v2914, %v2913
      %v2930 = vpack.c.b16 %v2916, %v2915
      %v2931 = vpack.c.b16 %v2918, %v2917
      %v2932 = vpack.c.b16 %v2920, %v2919
      %v2933 = vpack.c.b16 %v2922, %v2921
      %v2934 = vpack.c.b16 %v2924, %v2923
      %v2935 = vpack.c.b16 %v2926, %v2925
      %v2936 = vpack.c.b16 %v2928, %v2927
      %2945 = vmatprep.subr.bf16.mxu0 0
      %2946 = vmatpush1.bf16.msra.mxu0 %v2936
      %2947 = vmatprep.subr.bf16.mxu0 0
      %2948 = vmatpush1.bf16.msra.mxu0 %v2935
      %2949 = vmatprep.subr.bf16.mxu0 0
      %2950 = vmatpush1.bf16.msra.mxu0 %v2934
      %2951 = vmatprep.subr.bf16.mxu0 0
      %2952 = vmatpush1.bf16.msra.mxu0 %v2933
      %2953 = vmatprep.subr.bf16.mxu0 0
      %2954 = vmatpush1.bf16.msra.mxu0 %v2932
      %2955 = vmatprep.subr.bf16.mxu0 0
      %2956 = vmatpush1.bf16.msra.mxu0 %v2931
      %2957 = vmatprep.subr.bf16.mxu0 0
      %2958 = vmatpush1.bf16.msra.mxu0 %v2930
      %2959 = vmatprep.subr.bf16.mxu0 0
      %2960 = vmatpush1.bf16.msra.mxu0 %v2929
      %2961 = vmatprep.subr.bf16.mxu0 0
      %2962 = vmatpush2.bf16.msra.mxu0 0
      %2963 = vmatprep.subr.bf16.mxu0 0
      %2964 = vmatpush2.bf16.msra.mxu0 0
      %2965 = vmatprep.subr.bf16.mxu0 0
      %2966 = vmatpush2.bf16.msra.mxu0 0
      %2967 = vmatprep.subr.bf16.mxu0 0
      %2968 = vmatpush2.bf16.msra.mxu0 0
      %2969 = vmatprep.subr.bf16.mxu0 0
      %2970 = vmatpush2.bf16.msra.mxu0 0
      %2971 = vmatprep.subr.bf16.mxu0 0
      %2972 = vmatpush2.bf16.msra.mxu0 0
      %2973 = vmatprep.subr.bf16.mxu0 0
      %2974 = vmatpush2.bf16.msra.mxu0 0
      %2975 = vmatprep.subr.bf16.mxu0 0
      %2976 = vmatpush2.bf16.msra.mxu0 0
      %2977 = vmatprep.mubr.bf16.mxu0 0
      %2978 = vmatmul.mubr.bf16.gmra.mxu0 %v2859
      %v2979 = vpop.f32.mrf.mxu0
      %v2980 = vadd.f32 0.0, %v2979
      %v2981 = vpop.f32.mrf.mxu0
      %v2982 = vpop.f32.mrf.mxu0
      %v2983 = vadd.f32 0.0, %v2982
      %v2984 = vpop.f32.mrf.mxu0
      %2985 = vmatprep.mubr.bf16.mxu0 0
      %2986 = vmatmul.mubr.bf16.gmra.mxu0 %v2860
      %v2987 = vpop.f32.mrf.mxu0
      %v2988 = vadd.f32 0.0, %v2987
      %v2989 = vpop.f32.mrf.mxu0
      %v2990 = vpop.f32.mrf.mxu0
      %v2991 = vadd.f32 0.0, %v2990
      %v2992 = vpop.f32.mrf.mxu0
      %2993 = vmatprep.mubr.bf16.mxu0 0
      %2994 = vmatmul.mubr.bf16.gmra.mxu0 %v2861
      %v2995 = vpop.f32.mrf.mxu0
      %v2996 = vadd.f32 0.0, %v2995
      %v2997 = vpop.f32.mrf.mxu0
      %v2998 = vpop.f32.mrf.mxu0
      %v2999 = vadd.f32 0.0, %v2998
      %v3000 = vpop.f32.mrf.mxu0
      %3001 = vmatprep.mubr.bf16.mxu0 0
      %3002 = vmatmul.mubr.bf16.gmra.mxu0 %v2862
      %v3003 = vpop.f32.mrf.mxu0
      %v3004 = vadd.f32 0.0, %v3003
      %v3005 = vpop.f32.mrf.mxu0
      %v3006 = vpop.f32.mrf.mxu0
      %v3007 = vadd.f32 0.0, %v3006
      %v3008 = vpop.f32.mrf.mxu0
      %3009 = vmatprep.mubr.bf16.mxu0 0
      %3010 = vmatmul.mubr.bf16.gmra.mxu0 %v2863
      %v3011 = vpop.f32.mrf.mxu0
      %v3012 = vadd.f32 0.0, %v3011
      %v3013 = vpop.f32.mrf.mxu0
      %v3014 = vpop.f32.mrf.mxu0
      %v3015 = vadd.f32 0.0, %v3014
      %v3016 = vpop.f32.mrf.mxu0
      %3017 = vmatprep.mubr.bf16.mxu0 0
      %3018 = vmatmul.mubr.bf16.gmra.mxu0 %v2864
      %v3019 = vpop.f32.mrf.mxu0
      %v3020 = vadd.f32 0.0, %v3019
      %v3021 = vpop.f32.mrf.mxu0
      %v3022 = vpop.f32.mrf.mxu0
      %v3023 = vadd.f32 0.0, %v3022
      %v3024 = vpop.f32.mrf.mxu0
      %3025 = vmatprep.mubr.bf16.mxu0 0
      %3026 = vmatmul.mubr.bf16.gmra.mxu0 %v2865
      %v3027 = vpop.f32.mrf.mxu0
      %v3028 = vadd.f32 0.0, %v3027
      %v3029 = vpop.f32.mrf.mxu0
      %v3030 = vpop.f32.mrf.mxu0
      %v3031 = vadd.f32 0.0, %v3030
      %v3032 = vpop.f32.mrf.mxu0
      %3033 = vmatprep.mubr.bf16.mxu0 0
      %3034 = vmatmul.mubr.bf16.gmra.mxu0 %v2866
      %v3035 = vpop.f32.mrf.mxu0
      %v3036 = vadd.f32 0.0, %v3035
      %v3037 = vpop.f32.mrf.mxu0
      %v3038 = vpop.f32.mrf.mxu0
      %v3039 = vadd.f32 0.0, %v3038
      %v3040 = vpop.f32.mrf.mxu0
      %3041 = vmatprep.mubr.bf16.mxu0 0
      %3042 = vmatmul.mubr.bf16.gmra.mxu0 %v2867
      %v3043 = vpop.f32.mrf.mxu0
      %v3044 = vadd.f32 0.0, %v3043
      %v3045 = vpop.f32.mrf.mxu0
      %v3046 = vpop.f32.mrf.mxu0
      %v3047 = vadd.f32 0.0, %v3046
      %v3048 = vpop.f32.mrf.mxu0
      %3049 = vmatprep.mubr.bf16.mxu0 0
      %3050 = vmatmul.mubr.bf16.gmra.mxu0 %v2868
      %v3051 = vpop.f32.mrf.mxu0
      %v3052 = vadd.f32 0.0, %v3051
      %v3053 = vpop.f32.mrf.mxu0
      %v3054 = vpop.f32.mrf.mxu0
      %v3055 = vadd.f32 0.0, %v3054
      %v3056 = vpop.f32.mrf.mxu0
      %3057 = vmatprep.mubr.bf16.mxu0 0
      %3058 = vmatmul.mubr.bf16.gmra.mxu0 %v2869
      %v3059 = vpop.f32.mrf.mxu0
      %v3060 = vadd.f32 0.0, %v3059
      %v3061 = vpop.f32.mrf.mxu0
      %v3062 = vpop.f32.mrf.mxu0
      %v3063 = vadd.f32 0.0, %v3062
      %v3064 = vpop.f32.mrf.mxu0
      %3065 = vmatprep.mubr.bf16.mxu0 0
      %3066 = vmatmul.mubr.bf16.gmra.mxu0 %v2870
      %v3067 = vpop.f32.mrf.mxu0
      %v3068 = vadd.f32 0.0, %v3067
      %v3069 = vpop.f32.mrf.mxu0
      %v3070 = vpop.f32.mrf.mxu0
      %v3071 = vadd.f32 0.0, %v3070
      %v3072 = vpop.f32.mrf.mxu0
      %3073 = vmatprep.mubr.bf16.mxu0 0
      %3074 = vmatmul.mubr.bf16.gmra.mxu0 %v2871
      %v3075 = vpop.f32.mrf.mxu0
      %v3076 = vadd.f32 0.0, %v3075
      %v3077 = vpop.f32.mrf.mxu0
      %v3078 = vpop.f32.mrf.mxu0
      %v3079 = vadd.f32 0.0, %v3078
      %v3080 = vpop.f32.mrf.mxu0
      %3081 = vmatprep.mubr.bf16.mxu0 0
      %3082 = vmatmul.mubr.bf16.gmra.mxu0 %v2872
      %v3083 = vpop.f32.mrf.mxu0
      %v3084 = vadd.f32 0.0, %v3083
      %v3085 = vpop.f32.mrf.mxu0
      %v3086 = vpop.f32.mrf.mxu0
      %v3087 = vadd.f32 0.0, %v3086
      %v3088 = vpop.f32.mrf.mxu0
      %3089 = vmatprep.mubr.bf16.mxu0 0
      %3090 = vmatmul.mubr.bf16.gmra.mxu0 %v2873
      %v3091 = vpop.f32.mrf.mxu0
      %v3092 = vadd.f32 0.0, %v3091
      %v3093 = vpop.f32.mrf.mxu0
      %v3094 = vpop.f32.mrf.mxu0
      %v3095 = vadd.f32 0.0, %v3094
      %v3096 = vpop.f32.mrf.mxu0
      %3097 = vmatprep.mubr.bf16.mxu0 0
      %3098 = vmatmul.mubr.bf16.gmra.mxu0 %v2874
      %v3099 = vpop.f32.mrf.mxu0
      %v3100 = vadd.f32 0.0, %v3099
      %v3101 = vpop.f32.mrf.mxu0
      %v3102 = vpop.f32.mrf.mxu0
      %v3103 = vadd.f32 0.0, %v3102
      %v3104 = vpop.f32.mrf.mxu0
      %3105 = vmatprep.mubr.bf16.mxu0 0
      %3106 = vmatmul.mubr.bf16.gmra.mxu0 %v2875
      %v3107 = vpop.f32.mrf.mxu0
      %v3108 = vadd.f32 0.0, %v3107
      %v3109 = vpop.f32.mrf.mxu0
      %v3110 = vpop.f32.mrf.mxu0
      %v3111 = vadd.f32 0.0, %v3110
      %v3112 = vpop.f32.mrf.mxu0
      %3113 = vmatprep.mubr.bf16.mxu0 0
      %3114 = vmatmul.mubr.bf16.gmra.mxu0 %v2876
      %v3115 = vpop.f32.mrf.mxu0
      %v3116 = vadd.f32 0.0, %v3115
      %v3117 = vpop.f32.mrf.mxu0
      %v3118 = vpop.f32.mrf.mxu0
      %v3119 = vadd.f32 0.0, %v3118
      %v3120 = vpop.f32.mrf.mxu0
      %3121 = vmatprep.mubr.bf16.mxu0 0
      %3122 = vmatmul.mubr.bf16.gmra.mxu0 %v2877
      %v3123 = vpop.f32.mrf.mxu0
      %v3124 = vadd.f32 0.0, %v3123
      %v3125 = vpop.f32.mrf.mxu0
      %v3126 = vpop.f32.mrf.mxu0
      %v3127 = vadd.f32 0.0, %v3126
      %v3128 = vpop.f32.mrf.mxu0
      %3129 = vmatprep.mubr.bf16.mxu0 0
      %3130 = vmatmul.mubr.bf16.gmra.mxu0 %v2878
      %v3131 = vpop.f32.mrf.mxu0
      %v3132 = vadd.f32 0.0, %v3131
      %v3133 = vpop.f32.mrf.mxu0
      %v3134 = vpop.f32.mrf.mxu0
      %v3135 = vadd.f32 0.0, %v3134
      %v3136 = vpop.f32.mrf.mxu0
      %3137 = vmatprep.mubr.bf16.mxu0 0
      %3138 = vmatmul.mubr.bf16.gmra.mxu0 %v2879
      %v3139 = vpop.f32.mrf.mxu0
      %v3140 = vadd.f32 0.0, %v3139
      %v3141 = vpop.f32.mrf.mxu0
      %v3142 = vpop.f32.mrf.mxu0
      %v3143 = vpop.f32.mrf.mxu0
      %3144 = vdwg.mxu0
      %v3145 = vadd.f32 %v2777, %v2980
      %v3146 = vadd.f32 %v2778, %v2983
      %v3147 = vadd.f32 %v2779, %v2988
      %v3148 = vadd.f32 %v2780, %v2991
      %v3149 = vadd.f32 %v2781, %v2996
      %v3150 = vadd.f32 %v2782, %v2999
      %v3151 = vadd.f32 %v2783, %v3004
      %v3152 = vadd.f32 %v2784, %v3007
      %v3153 = vadd.f32 %v2785, %v3012
      %v3154 = vadd.f32 %v2786, %v3015
      %v3155 = vadd.f32 %v2787, %v3020
      %v3156 = vadd.f32 %v2788, %v3023
      %v3157 = vadd.f32 %v2789, %v3028
      %v3158 = vadd.f32 %v2790, %v3031
      %v3159 = vadd.f32 %v2791, %v3036
      %v3160 = vadd.f32 %v2792, %v3039
      %v3161 = vadd.f32 %v2793, %v3044
      %v3162 = vadd.f32 %v2794, %v3047
      %v3163 = vadd.f32 %v2795, %v3052
      %v3164 = vadd.f32 %v2796, %v3055
      %v3165 = vadd.f32 %v2797, %v3060
      %v3166 = vadd.f32 %v2798, %v3063
      %v3167 = vadd.f32 %v2799, %v3068
      %v3168 = vadd.f32 %v2800, %v3071
      %v3169 = vadd.f32 %v2801, %v3076
      %v3170 = vadd.f32 %v2802, %v3079
      %v3171 = vadd.f32 %v2803, %v3084
      %v3172 = vadd.f32 %v2804, %v3087
      %v3173 = vadd.f32 %v2805, %v3092
      %v3174 = vadd.f32 %v2806, %v3095
      %v3175 = vadd.f32 %v2807, %v3100
      %v3176 = vadd.f32 %v2808, %v3103
      %v3177 = vadd.f32 %v2809, %v3108
      %v3178 = vadd.f32 %v2810, %v3111
      %v3179 = vadd.f32 %v2811, %v3116
      %v3180 = vadd.f32 %v2812, %v3119
      %v3181 = vadd.f32 %v2813, %v3124
      %v3182 = vadd.f32 %v2814, %v3127
      %v3183 = vadd.f32 %v2815, %v3132
      %v3184 = vadd.f32 %v2816, %v3135
      %v3185 = vadd.f32 %v2817, %v3140
      %v3186 = vld [vmem:[%s268 + $0x2b] sm:$0xff]
      %v3187 = vld [vmem:[%s268 + $0x33] sm:$0xff]
      %v3188 = vld [vmem:[%s268 + $0x3b] sm:$0xff]
      %v3189 = vld [vmem:[%s268 + $0x43] sm:$0xff]
      %v3190 = vld [vmem:[%s268 + $0x4b] sm:$0xff]
      %v3191 = vld [vmem:[%s268 + $0x53] sm:$0xff]
      %v3192 = vld [vmem:[%s268 + $0x5b] sm:$0xff]
      %v3193 = vld [vmem:[%s268 + $0x63] sm:$0xff]
      %v3194 = vld [vmem:[%s268 + $0x6b] sm:$0xff]
      %v3195 = vld [vmem:[%s268 + $0x73] sm:$0xff]
      %v3196 = vld [vmem:[%s268 + $0x7b] sm:$0xff]
      %v3197 = vld [vmem:[%s268 + $0x83] sm:$0xff]
      %v3198 = vld [vmem:[%s268 + $0x8b] sm:$0xff]
      %v3199 = vld [vmem:[%s268 + $0x93] sm:$0xff]
      %v3200 = vld [vmem:[%s268 + $0x9b] sm:$0xff]
      %v3201 = vld [vmem:[%s268 + $0xa3] sm:$0xff]
      %v3202 = vld [vmem:[%s268 + $0xab] sm:$0xff]
      %v3203 = vld [vmem:[%s268 + $0xb3] sm:$0xff]
      %v3204 = vld [vmem:[%s268 + $0xbb] sm:$0xff]
      %v3205 = vld [vmem:[%s268 + $0xc3] sm:$0xff]
      %v3206 = vld [vmem:[%s268 + $0xcb] sm:$0xff]
      %v3207 = vld [vmem:[%s268 + $0xd3] sm:$0xff]
      %v3208 = vld [vmem:[%s268 + $0xdb] sm:$0xff]
      %v3209 = vld [vmem:[%s268 + $0xe3] sm:$0xff]
      %v3210 = vld [vmem:[%s268 + $0xeb] sm:$0xff]
      %v3211 = vld [vmem:[%s268 + $0xf3] sm:$0xff]
      %v3212 = vld [vmem:[%s268 + $0xfb] sm:$0xff]
      %v3213 = vld [vmem:[%s268 + $0x103] sm:$0xff]
      %v3214 = vld [vmem:[%s268 + $0x10b] sm:$0xff]
      %v3215 = vld [vmem:[%s268 + $0x113] sm:$0xff]
      %v3216 = vld [vmem:[%s268 + $0x11b] sm:$0xff]
      %v3217 = vld [vmem:[%s268 + $0x123] sm:$0xff]
      %v3218 = vld [vmem:[%s268 + $0x12b] sm:$0xff]
      %v3219 = vld [vmem:[%s268 + $0x133] sm:$0xff]
      %v3220 = vld [vmem:[%s268 + $0x13b] sm:$0xff]
      %v3221 = vld [vmem:[%s268 + $0x143] sm:$0xff]
      %v3222 = vld [vmem:[%s268 + $0x14b] sm:$0xff]
      %v3223 = vld [vmem:[%s268 + $0x153] sm:$0xff]
      %v3224 = vld [vmem:[%s268 + $0x15b] sm:$0xff]
      %v3225 = vld [vmem:[%s268 + $0x163] sm:$0xff]
      %v3226 = vld [vmem:[%s268 + $0x16b] sm:$0xff]
      %v3227 = vpack.c.bf16 %v3187, %v3186
      %v3228 = vpack.c.bf16 %v3189, %v3188
      %v3229 = vpack.c.bf16 %v3191, %v3190
      %v3230 = vpack.c.bf16 %v3193, %v3192
      %v3231 = vpack.c.bf16 %v3195, %v3194
      %v3232 = vpack.c.bf16 %v3197, %v3196
      %v3233 = vpack.c.bf16 %v3199, %v3198
      %v3234 = vpack.c.bf16 %v3201, %v3200
      %v3235 = vpack.c.bf16 %v3203, %v3202
      %v3236 = vpack.c.bf16 %v3205, %v3204
      %v3237 = vpack.c.bf16 %v3207, %v3206
      %v3238 = vpack.c.bf16 %v3209, %v3208
      %v3239 = vpack.c.bf16 %v3211, %v3210
      %v3240 = vpack.c.bf16 %v3213, %v3212
      %v3241 = vpack.c.bf16 %v3215, %v3214
      %v3242 = vpack.c.bf16 %v3217, %v3216
      %v3243 = vpack.c.bf16 %v3219, %v3218
      %v3244 = vpack.c.bf16 %v3221, %v3220
      %v3245 = vpack.c.bf16 %v3223, %v3222
      %v3246 = vpack.c.bf16 %v3225, %v3224
      %v3247 = vpack.c.bf16 %v3226, %v3226
      %s3248 = scalar_lea.vmem %s3, 512
      %v3249 = vld [vmem:[%s3248] sm:$0xf]
      %v3250 = vld [vmem:[%s3248 + $0x4] sm:$0xf]
      %v3251 = vld [vmem:[%s3248 + $0x8] sm:$0xf]
      %v3252 = vld [vmem:[%s3248 + $0xc] sm:$0xf]
      %v3253 = vld [vmem:[%s3248 + $0x10] sm:$0xf]
      %v3254 = vld [vmem:[%s3248 + $0x14] sm:$0xf]
      %v3255 = vld [vmem:[%s3248 + $0x18] sm:$0xf]
      %v3256 = vld [vmem:[%s3248 + $0x1c] sm:$0xf]
      %v3257 = vld [vmem:[%s3248 + $0x20] sm:$0xf]
      %v3258 = vld [vmem:[%s3248 + $0x24] sm:$0xf]
      %v3259 = vld [vmem:[%s3248 + $0x28] sm:$0xf]
      %v3260 = vld [vmem:[%s3248 + $0x2c] sm:$0xf]
      %v3261 = vld [vmem:[%s3248 + $0x30] sm:$0xf]
      %v3262 = vld [vmem:[%s3248 + $0x34] sm:$0xf]
      %v3263 = vld [vmem:[%s3248 + $0x38] sm:$0xf]
      %v3264 = vld [vmem:[%s3248 + $0x3c] sm:$0xf]
      %v3281 = vunpack.c.l.b16 %v3249
      %v3282 = vunpack.c.l.b16 %v3250
      %v3283 = vunpack.c.l.b16 %v3251
      %v3284 = vunpack.c.l.b16 %v3252
      %v3285 = vunpack.c.l.b16 %v3253
      %v3286 = vunpack.c.l.b16 %v3254
      %v3287 = vunpack.c.l.b16 %v3255
      %v3288 = vunpack.c.l.b16 %v3256
      %v3289 = vunpack.c.l.b16 %v3257
      %v3290 = vunpack.c.l.b16 %v3258
      %v3291 = vunpack.c.l.b16 %v3259
      %v3292 = vunpack.c.l.b16 %v3260
      %v3293 = vunpack.c.l.b16 %v3261
      %v3294 = vunpack.c.l.b16 %v3262
      %v3295 = vunpack.c.l.b16 %v3263
      %v3296 = vunpack.c.l.b16 %v3264
      %v3297 = vpack.c.b16 %v3282, %v3281
      %v3298 = vpack.c.b16 %v3284, %v3283
      %v3299 = vpack.c.b16 %v3286, %v3285
      %v3300 = vpack.c.b16 %v3288, %v3287
      %v3301 = vpack.c.b16 %v3290, %v3289
      %v3302 = vpack.c.b16 %v3292, %v3291
      %v3303 = vpack.c.b16 %v3294, %v3293
      %v3304 = vpack.c.b16 %v3296, %v3295
      %3313 = vmatprep.subr.bf16.mxu0 0
      %3314 = vmatpush1.bf16.msra.mxu0 %v3304
      %3315 = vmatprep.subr.bf16.mxu0 0
      %3316 = vmatpush1.bf16.msra.mxu0 %v3303
      %3317 = vmatprep.subr.bf16.mxu0 0
      %3318 = vmatpush1.bf16.msra.mxu0 %v3302
      %3319 = vmatprep.subr.bf16.mxu0 0
      %3320 = vmatpush1.bf16.msra.mxu0 %v3301
      %3321 = vmatprep.subr.bf16.mxu0 0
      %3322 = vmatpush1.bf16.msra.mxu0 %v3300
      %3323 = vmatprep.subr.bf16.mxu0 0
      %3324 = vmatpush1.bf16.msra.mxu0 %v3299
      %3325 = vmatprep.subr.bf16.mxu0 0
      %3326 = vmatpush1.bf16.msra.mxu0 %v3298
      %3327 = vmatprep.subr.bf16.mxu0 0
      %3328 = vmatpush1.bf16.msra.mxu0 %v3297
      %3329 = vmatprep.subr.bf16.mxu0 0
      %3330 = vmatpush2.bf16.msra.mxu0 0
      %3331 = vmatprep.subr.bf16.mxu0 0
      %3332 = vmatpush2.bf16.msra.mxu0 0
      %3333 = vmatprep.subr.bf16.mxu0 0
      %3334 = vmatpush2.bf16.msra.mxu0 0
      %3335 = vmatprep.subr.bf16.mxu0 0
      %3336 = vmatpush2.bf16.msra.mxu0 0
      %3337 = vmatprep.subr.bf16.mxu0 0
      %3338 = vmatpush2.bf16.msra.mxu0 0
      %3339 = vmatprep.subr.bf16.mxu0 0
      %3340 = vmatpush2.bf16.msra.mxu0 0
      %3341 = vmatprep.subr.bf16.mxu0 0
      %3342 = vmatpush2.bf16.msra.mxu0 0
      %3343 = vmatprep.subr.bf16.mxu0 0
      %3344 = vmatpush2.bf16.msra.mxu0 0
      %3345 = vmatprep.mubr.bf16.mxu0 0
      %3346 = vmatmul.mubr.bf16.gmra.mxu0 %v3227
      %v3347 = vpop.f32.mrf.mxu0
      %v3348 = vadd.f32 0.0, %v3347
      %v3349 = vpop.f32.mrf.mxu0
      %v3350 = vpop.f32.mrf.mxu0
      %v3351 = vadd.f32 0.0, %v3350
      %v3352 = vpop.f32.mrf.mxu0
      %3353 = vmatprep.mubr.bf16.mxu0 0
      %3354 = vmatmul.mubr.bf16.gmra.mxu0 %v3228
      %v3355 = vpop.f32.mrf.mxu0
      %v3356 = vadd.f32 0.0, %v3355
      %v3357 = vpop.f32.mrf.mxu0
      %v3358 = vpop.f32.mrf.mxu0
      %v3359 = vadd.f32 0.0, %v3358
      %v3360 = vpop.f32.mrf.mxu0
      %3361 = vmatprep.mubr.bf16.mxu0 0
      %3362 = vmatmul.mubr.bf16.gmra.mxu0 %v3229
      %v3363 = vpop.f32.mrf.mxu0
      %v3364 = vadd.f32 0.0, %v3363
      %v3365 = vpop.f32.mrf.mxu0
      %v3366 = vpop.f32.mrf.mxu0
      %v3367 = vadd.f32 0.0, %v3366
      %v3368 = vpop.f32.mrf.mxu0
      %3369 = vmatprep.mubr.bf16.mxu0 0
      %3370 = vmatmul.mubr.bf16.gmra.mxu0 %v3230
      %v3371 = vpop.f32.mrf.mxu0
      %v3372 = vadd.f32 0.0, %v3371
      %v3373 = vpop.f32.mrf.mxu0
      %v3374 = vpop.f32.mrf.mxu0
      %v3375 = vadd.f32 0.0, %v3374
      %v3376 = vpop.f32.mrf.mxu0
      %3377 = vmatprep.mubr.bf16.mxu0 0
      %3378 = vmatmul.mubr.bf16.gmra.mxu0 %v3231
      %v3379 = vpop.f32.mrf.mxu0
      %v3380 = vadd.f32 0.0, %v3379
      %v3381 = vpop.f32.mrf.mxu0
      %v3382 = vpop.f32.mrf.mxu0
      %v3383 = vadd.f32 0.0, %v3382
      %v3384 = vpop.f32.mrf.mxu0
      %3385 = vmatprep.mubr.bf16.mxu0 0
      %3386 = vmatmul.mubr.bf16.gmra.mxu0 %v3232
      %v3387 = vpop.f32.mrf.mxu0
      %v3388 = vadd.f32 0.0, %v3387
      %v3389 = vpop.f32.mrf.mxu0
      %v3390 = vpop.f32.mrf.mxu0
      %v3391 = vadd.f32 0.0, %v3390
      %v3392 = vpop.f32.mrf.mxu0
      %3393 = vmatprep.mubr.bf16.mxu0 0
      %3394 = vmatmul.mubr.bf16.gmra.mxu0 %v3233
      %v3395 = vpop.f32.mrf.mxu0
      %v3396 = vadd.f32 0.0, %v3395
      %v3397 = vpop.f32.mrf.mxu0
      %v3398 = vpop.f32.mrf.mxu0
      %v3399 = vadd.f32 0.0, %v3398
      %v3400 = vpop.f32.mrf.mxu0
      %3401 = vmatprep.mubr.bf16.mxu0 0
      %3402 = vmatmul.mubr.bf16.gmra.mxu0 %v3234
      %v3403 = vpop.f32.mrf.mxu0
      %v3404 = vadd.f32 0.0, %v3403
      %v3405 = vpop.f32.mrf.mxu0
      %v3406 = vpop.f32.mrf.mxu0
      %v3407 = vadd.f32 0.0, %v3406
      %v3408 = vpop.f32.mrf.mxu0
      %3409 = vmatprep.mubr.bf16.mxu0 0
      %3410 = vmatmul.mubr.bf16.gmra.mxu0 %v3235
      %v3411 = vpop.f32.mrf.mxu0
      %v3412 = vadd.f32 0.0, %v3411
      %v3413 = vpop.f32.mrf.mxu0
      %v3414 = vpop.f32.mrf.mxu0
      %v3415 = vadd.f32 0.0, %v3414
      %v3416 = vpop.f32.mrf.mxu0
      %3417 = vmatprep.mubr.bf16.mxu0 0
      %3418 = vmatmul.mubr.bf16.gmra.mxu0 %v3236
      %v3419 = vpop.f32.mrf.mxu0
      %v3420 = vadd.f32 0.0, %v3419
      %v3421 = vpop.f32.mrf.mxu0
      %v3422 = vpop.f32.mrf.mxu0
      %v3423 = vadd.f32 0.0, %v3422
      %v3424 = vpop.f32.mrf.mxu0
      %3425 = vmatprep.mubr.bf16.mxu0 0
      %3426 = vmatmul.mubr.bf16.gmra.mxu0 %v3237
      %v3427 = vpop.f32.mrf.mxu0
      %v3428 = vadd.f32 0.0, %v3427
      %v3429 = vpop.f32.mrf.mxu0
      %v3430 = vpop.f32.mrf.mxu0
      %v3431 = vadd.f32 0.0, %v3430
      %v3432 = vpop.f32.mrf.mxu0
      %3433 = vmatprep.mubr.bf16.mxu0 0
      %3434 = vmatmul.mubr.bf16.gmra.mxu0 %v3238
      %v3435 = vpop.f32.mrf.mxu0
      %v3436 = vadd.f32 0.0, %v3435
      %v3437 = vpop.f32.mrf.mxu0
      %v3438 = vpop.f32.mrf.mxu0
      %v3439 = vadd.f32 0.0, %v3438
      %v3440 = vpop.f32.mrf.mxu0
      %3441 = vmatprep.mubr.bf16.mxu0 0
      %3442 = vmatmul.mubr.bf16.gmra.mxu0 %v3239
      %v3443 = vpop.f32.mrf.mxu0
      %v3444 = vadd.f32 0.0, %v3443
      %v3445 = vpop.f32.mrf.mxu0
      %v3446 = vpop.f32.mrf.mxu0
      %v3447 = vadd.f32 0.0, %v3446
      %v3448 = vpop.f32.mrf.mxu0
      %3449 = vmatprep.mubr.bf16.mxu0 0
      %3450 = vmatmul.mubr.bf16.gmra.mxu0 %v3240
      %v3451 = vpop.f32.mrf.mxu0
      %v3452 = vadd.f32 0.0, %v3451
      %v3453 = vpop.f32.mrf.mxu0
      %v3454 = vpop.f32.mrf.mxu0
      %v3455 = vadd.f32 0.0, %v3454
      %v3456 = vpop.f32.mrf.mxu0
      %3457 = vmatprep.mubr.bf16.mxu0 0
      %3458 = vmatmul.mubr.bf16.gmra.mxu0 %v3241
      %v3459 = vpop.f32.mrf.mxu0
      %v3460 = vadd.f32 0.0, %v3459
      %v3461 = vpop.f32.mrf.mxu0
      %v3462 = vpop.f32.mrf.mxu0
      %v3463 = vadd.f32 0.0, %v3462
      %v3464 = vpop.f32.mrf.mxu0
      %3465 = vmatprep.mubr.bf16.mxu0 0
      %3466 = vmatmul.mubr.bf16.gmra.mxu0 %v3242
      %v3467 = vpop.f32.mrf.mxu0
      %v3468 = vadd.f32 0.0, %v3467
      %v3469 = vpop.f32.mrf.mxu0
      %v3470 = vpop.f32.mrf.mxu0
      %v3471 = vadd.f32 0.0, %v3470
      %v3472 = vpop.f32.mrf.mxu0
      %3473 = vmatprep.mubr.bf16.mxu0 0
      %3474 = vmatmul.mubr.bf16.gmra.mxu0 %v3243
      %v3475 = vpop.f32.mrf.mxu0
      %v3476 = vadd.f32 0.0, %v3475
      %v3477 = vpop.f32.mrf.mxu0
      %v3478 = vpop.f32.mrf.mxu0
      %v3479 = vadd.f32 0.0, %v3478
      %v3480 = vpop.f32.mrf.mxu0
      %3481 = vmatprep.mubr.bf16.mxu0 0
      %3482 = vmatmul.mubr.bf16.gmra.mxu0 %v3244
      %v3483 = vpop.f32.mrf.mxu0
      %v3484 = vadd.f32 0.0, %v3483
      %v3485 = vpop.f32.mrf.mxu0
      %v3486 = vpop.f32.mrf.mxu0
      %v3487 = vadd.f32 0.0, %v3486
      %v3488 = vpop.f32.mrf.mxu0
      %3489 = vmatprep.mubr.bf16.mxu0 0
      %3490 = vmatmul.mubr.bf16.gmra.mxu0 %v3245
      %v3491 = vpop.f32.mrf.mxu0
      %v3492 = vadd.f32 0.0, %v3491
      %v3493 = vpop.f32.mrf.mxu0
      %v3494 = vpop.f32.mrf.mxu0
      %v3495 = vadd.f32 0.0, %v3494
      %v3496 = vpop.f32.mrf.mxu0
      %3497 = vmatprep.mubr.bf16.mxu0 0
      %3498 = vmatmul.mubr.bf16.gmra.mxu0 %v3246
      %v3499 = vpop.f32.mrf.mxu0
      %v3500 = vadd.f32 0.0, %v3499
      %v3501 = vpop.f32.mrf.mxu0
      %v3502 = vpop.f32.mrf.mxu0
      %v3503 = vadd.f32 0.0, %v3502
      %v3504 = vpop.f32.mrf.mxu0
      %3505 = vmatprep.mubr.bf16.mxu0 0
      %3506 = vmatmul.mubr.bf16.gmra.mxu0 %v3247
      %v3507 = vpop.f32.mrf.mxu0
      %v3508 = vadd.f32 0.0, %v3507
      %v3509 = vpop.f32.mrf.mxu0
      %v3510 = vpop.f32.mrf.mxu0
      %v3511 = vpop.f32.mrf.mxu0
      %3512 = vdwg.mxu0
      %v3513 = vadd.f32 %v3145, %v3348
      %v3514 = vadd.f32 %v3146, %v3351
      %v3515 = vadd.f32 %v3147, %v3356
      %v3516 = vadd.f32 %v3148, %v3359
      %v3517 = vadd.f32 %v3149, %v3364
      %v3518 = vadd.f32 %v3150, %v3367
      %v3519 = vadd.f32 %v3151, %v3372
      %v3520 = vadd.f32 %v3152, %v3375
      %v3521 = vadd.f32 %v3153, %v3380
      %v3522 = vadd.f32 %v3154, %v3383
      %v3523 = vadd.f32 %v3155, %v3388
      %v3524 = vadd.f32 %v3156, %v3391
      %v3525 = vadd.f32 %v3157, %v3396
      %v3526 = vadd.f32 %v3158, %v3399
      %v3527 = vadd.f32 %v3159, %v3404
      %v3528 = vadd.f32 %v3160, %v3407
      %v3529 = vadd.f32 %v3161, %v3412
      %v3530 = vadd.f32 %v3162, %v3415
      %v3531 = vadd.f32 %v3163, %v3420
      %v3532 = vadd.f32 %v3164, %v3423
      %v3533 = vadd.f32 %v3165, %v3428
      %v3534 = vadd.f32 %v3166, %v3431
      %v3535 = vadd.f32 %v3167, %v3436
      %v3536 = vadd.f32 %v3168, %v3439
      %v3537 = vadd.f32 %v3169, %v3444
      %v3538 = vadd.f32 %v3170, %v3447
      %v3539 = vadd.f32 %v3171, %v3452
      %v3540 = vadd.f32 %v3172, %v3455
      %v3541 = vadd.f32 %v3173, %v3460
      %v3542 = vadd.f32 %v3174, %v3463
      %v3543 = vadd.f32 %v3175, %v3468
      %v3544 = vadd.f32 %v3176, %v3471
      %v3545 = vadd.f32 %v3177, %v3476
      %v3546 = vadd.f32 %v3178, %v3479
      %v3547 = vadd.f32 %v3179, %v3484
      %v3548 = vadd.f32 %v3180, %v3487
      %v3549 = vadd.f32 %v3181, %v3492
      %v3550 = vadd.f32 %v3182, %v3495
      %v3551 = vadd.f32 %v3183, %v3500
      %v3552 = vadd.f32 %v3184, %v3503
      %v3553 = vadd.f32 %v3185, %v3508
      %v3554 = vld [vmem:[%s4] sm:$0x1]
      %v3556 = vlaneseq
      %v3557 = vshrl.u32 %v3556, 7
      %v3558 = vsub.s32 0, %v3557
      %v3559 = vrot.slane %v3554, %v3558
      %v3561 = vadd.f32 %v3513, %v3559
      %v3562 = vadd.f32 %v3514, %v3559
      %v3563 = vadd.f32 %v3515, %v3559
      %v3564 = vadd.f32 %v3516, %v3559
      %v3565 = vadd.f32 %v3517, %v3559
      %v3566 = vadd.f32 %v3518, %v3559
      %v3567 = vadd.f32 %v3519, %v3559
      %v3568 = vadd.f32 %v3520, %v3559
      %v3569 = vadd.f32 %v3521, %v3559
      %v3570 = vadd.f32 %v3522, %v3559
      %v3571 = vadd.f32 %v3523, %v3559
      %v3572 = vadd.f32 %v3524, %v3559
      %v3573 = vadd.f32 %v3525, %v3559
      %v3574 = vadd.f32 %v3526, %v3559
      %v3575 = vadd.f32 %v3527, %v3559
      %v3576 = vadd.f32 %v3528, %v3559
      %v3577 = vadd.f32 %v3529, %v3559
      %v3578 = vadd.f32 %v3530, %v3559
      %v3579 = vadd.f32 %v3531, %v3559
      %v3580 = vadd.f32 %v3532, %v3559
      %v3581 = vadd.f32 %v3533, %v3559
      %v3582 = vadd.f32 %v3534, %v3559
      %v3583 = vadd.f32 %v3535, %v3559
      %v3584 = vadd.f32 %v3536, %v3559
      %v3585 = vadd.f32 %v3537, %v3559
      %v3586 = vadd.f32 %v3538, %v3559
      %v3587 = vadd.f32 %v3539, %v3559
      %v3588 = vadd.f32 %v3540, %v3559
      %v3589 = vadd.f32 %v3541, %v3559
      %v3590 = vadd.f32 %v3542, %v3559
      %v3591 = vadd.f32 %v3543, %v3559
      %v3592 = vadd.f32 %v3544, %v3559
      %v3593 = vadd.f32 %v3545, %v3559
      %v3594 = vadd.f32 %v3546, %v3559
      %v3595 = vadd.f32 %v3547, %v3559
      %v3596 = vadd.f32 %v3548, %v3559
      %v3597 = vadd.f32 %v3549, %v3559
      %v3598 = vadd.f32 %v3550, %v3559
      %v3599 = vadd.f32 %v3551, %v3559
      %v3600 = vadd.f32 %v3552, %v3559
      %v3601 = vadd.f32 %v3553, %v3559
      %v3602 = vmax.f32 %v3561, 0.0
      %v3603 = vmax.f32 %v3562, 0.0
      %v3604 = vmax.f32 %v3563, 0.0
      %v3605 = vmax.f32 %v3564, 0.0
      %v3606 = vmax.f32 %v3565, 0.0
      %v3607 = vmax.f32 %v3566, 0.0
      %v3608 = vmax.f32 %v3567, 0.0
      %v3609 = vmax.f32 %v3568, 0.0
      %v3610 = vmax.f32 %v3569, 0.0
      %v3611 = vmax.f32 %v3570, 0.0
      %v3612 = vmax.f32 %v3571, 0.0
      %v3613 = vmax.f32 %v3572, 0.0
      %v3614 = vmax.f32 %v3573, 0.0
      %v3615 = vmax.f32 %v3574, 0.0
      %v3616 = vmax.f32 %v3575, 0.0
      %v3617 = vmax.f32 %v3576, 0.0
      %v3618 = vmax.f32 %v3577, 0.0
      %v3619 = vmax.f32 %v3578, 0.0
      %v3620 = vmax.f32 %v3579, 0.0
      %v3621 = vmax.f32 %v3580, 0.0
      %v3622 = vmax.f32 %v3581, 0.0
      %v3623 = vmax.f32 %v3582, 0.0
      %v3624 = vmax.f32 %v3583, 0.0
      %v3625 = vmax.f32 %v3584, 0.0
      %v3626 = vmax.f32 %v3585, 0.0
      %v3627 = vmax.f32 %v3586, 0.0
      %v3628 = vmax.f32 %v3587, 0.0
      %v3629 = vmax.f32 %v3588, 0.0
      %v3630 = vmax.f32 %v3589, 0.0
      %v3631 = vmax.f32 %v3590, 0.0
      %v3632 = vmax.f32 %v3591, 0.0
      %v3633 = vmax.f32 %v3592, 0.0
      %v3634 = vmax.f32 %v3593, 0.0
      %v3635 = vmax.f32 %v3594, 0.0
      %v3636 = vmax.f32 %v3595, 0.0
      %v3637 = vmax.f32 %v3596, 0.0
      %v3638 = vmax.f32 %v3597, 0.0
      %v3639 = vmax.f32 %v3598, 0.0
      %v3640 = vmax.f32 %v3599, 0.0
      %v3641 = vmax.f32 %v3600, 0.0
      %v3642 = vmax.f32 %v3601, 0.0
      %v3643 = vmul.f32 %v3602, %v284
      %v3644 = vmul.f32 %v3603, %v285
      %v3645 = vmul.f32 %v3604, %v286
      %v3646 = vmul.f32 %v3605, %v287
      %v3647 = vmul.f32 %v3606, %v288
      %v3648 = vmul.f32 %v3607, %v289
      %v3649 = vmul.f32 %v3608, %v290
      %v3650 = vmul.f32 %v3609, %v291
      %v3651 = vmul.f32 %v3610, %v292
      %v3652 = vmul.f32 %v3611, %v293
      %v3653 = vmul.f32 %v3612, %v294
      %v3654 = vmul.f32 %v3613, %v295
      %v3655 = vmul.f32 %v3614, %v296
      %v3656 = vmul.f32 %v3615, %v297
      %v3657 = vmul.f32 %v3616, %v298
      %v3658 = vmul.f32 %v3617, %v299
      %v3659 = vmul.f32 %v3618, %v300
      %v3660 = vmul.f32 %v3619, %v301
      %v3661 = vmul.f32 %v3620, %v302
      %v3662 = vmul.f32 %v3621, %v303
      %v3663 = vmul.f32 %v3622, %v304
      %v3664 = vmul.f32 %v3623, %v305
      %v3665 = vmul.f32 %v3624, %v306
      %v3666 = vmul.f32 %v3625, %v307
      %v3667 = vmul.f32 %v3626, %v308
      %v3668 = vmul.f32 %v3627, %v309
      %v3669 = vmul.f32 %v3628, %v310
      %v3670 = vmul.f32 %v3629, %v311
      %v3671 = vmul.f32 %v3630, %v312
      %v3672 = vmul.f32 %v3631, %v313
      %v3673 = vmul.f32 %v3632, %v314
      %v3674 = vmul.f32 %v3633, %v315
      %v3675 = vmul.f32 %v3634, %v316
      %v3676 = vmul.f32 %v3635, %v317
      %v3677 = vmul.f32 %v3636, %v318
      %v3678 = vmul.f32 %v3637, %v319
      %v3679 = vmul.f32 %v3638, %v320
      %v3680 = vmul.f32 %v3639, %v321
      %v3681 = vmul.f32 %v3640, %v322
      %v3682 = vmul.f32 %v3641, %v323
      %v3683 = vmul.f32 %v3642, %v324
      %v3684 = vld [vmem:[%s273 + $0x18] sm:$0xff]
      %v3685 = vld [vmem:[%s273 + $0x20] sm:$0xff]
      %v3686 = vld [vmem:[%s273 + $0x28] sm:$0xff]
      %v3687 = vld [vmem:[%s273 + $0x30] sm:$0xff]
      %v3688 = vld [vmem:[%s273 + $0x38] sm:$0xff]
      %v3689 = vld [vmem:[%s273 + $0x40] sm:$0xff]
      %v3690 = vld [vmem:[%s273 + $0x48] sm:$0xff]
      %v3691 = vld [vmem:[%s273 + $0x50] sm:$0xff]
      %v3692 = vld [vmem:[%s273 + $0x58] sm:$0xff]
      %v3693 = vld [vmem:[%s273 + $0x60] sm:$0xff]
      %v3694 = vld [vmem:[%s273 + $0x68] sm:$0xff]
      %v3695 = vld [vmem:[%s273 + $0x70] sm:$0xff]
      %v3696 = vld [vmem:[%s273 + $0x78] sm:$0xff]
      %v3697 = vld [vmem:[%s273 + $0x80] sm:$0xff]
      %v3698 = vld [vmem:[%s273 + $0x88] sm:$0xff]
      %v3699 = vld [vmem:[%s273 + $0x90] sm:$0xff]
      %v3700 = vld [vmem:[%s273 + $0x98] sm:$0xff]
      %v3701 = vld [vmem:[%s273 + $0xa0] sm:$0xff]
      %v3702 = vld [vmem:[%s273 + $0xa8] sm:$0xff]
      %v3703 = vld [vmem:[%s273 + $0xb0] sm:$0xff]
      %v3704 = vld [vmem:[%s273 + $0xb8] sm:$0xff]
      %v3705 = vld [vmem:[%s273 + $0xc0] sm:$0xff]
      %v3706 = vld [vmem:[%s273 + $0xc8] sm:$0xff]
      %v3707 = vld [vmem:[%s273 + $0xd0] sm:$0xff]
      %v3708 = vld [vmem:[%s273 + $0xd8] sm:$0xff]
      %v3709 = vld [vmem:[%s273 + $0xe0] sm:$0xff]
      %v3710 = vld [vmem:[%s273 + $0xe8] sm:$0xff]
      %v3711 = vld [vmem:[%s273 + $0xf0] sm:$0xff]
      %v3712 = vld [vmem:[%s273 + $0xf8] sm:$0xff]
      %v3713 = vld [vmem:[%s273 + $0x100] sm:$0xff]
      %v3714 = vld [vmem:[%s273 + $0x108] sm:$0xff]
      %v3715 = vld [vmem:[%s273 + $0x110] sm:$0xff]
      %v3716 = vld [vmem:[%s273 + $0x118] sm:$0xff]
      %v3717 = vld [vmem:[%s273 + $0x120] sm:$0xff]
      %v3718 = vld [vmem:[%s273 + $0x128] sm:$0xff]
      %v3719 = vld [vmem:[%s273 + $0x130] sm:$0xff]
      %v3720 = vld [vmem:[%s273 + $0x138] sm:$0xff]
      %v3721 = vld [vmem:[%s273 + $0x140] sm:$0xff]
      %v3722 = vld [vmem:[%s273 + $0x148] sm:$0xff]
      %v3723 = vld [vmem:[%s273 + $0x150] sm:$0xff]
      %v3724 = vld [vmem:[%s273 + $0x158] sm:$0xff]
      %v3725 = vadd.f32 %v3643, %v3644
      %v3726 = vadd.f32 %v3725, %v3645
      %v3727 = vadd.f32 %v3726, %v3646
      %v3728 = vadd.f32 %v3727, %v3647
      %v3729 = vadd.f32 %v3728, %v3648
      %v3730 = vadd.f32 %v3729, %v3649
      %v3731 = vadd.f32 %v3730, %v3650
      %v3732 = vadd.f32 %v3731, %v3651
      %v3733 = vadd.f32 %v3732, %v3652
      %v3734 = vadd.f32 %v3733, %v3653
      %v3735 = vadd.f32 %v3734, %v3654
      %v3736 = vadd.f32 %v3735, %v3655
      %v3737 = vadd.f32 %v3736, %v3656
      %v3738 = vadd.f32 %v3737, %v3657
      %v3739 = vadd.f32 %v3738, %v3658
      %v3740 = vadd.f32 %v3739, %v3659
      %v3741 = vadd.f32 %v3740, %v3660
      %v3742 = vadd.f32 %v3741, %v3661
      %v3743 = vadd.f32 %v3742, %v3662
      %v3744 = vadd.f32 %v3743, %v3663
      %v3745 = vadd.f32 %v3744, %v3664
      %v3746 = vadd.f32 %v3745, %v3665
      %v3747 = vadd.f32 %v3746, %v3666
      %v3748 = vadd.f32 %v3747, %v3667
      %v3749 = vadd.f32 %v3748, %v3668
      %v3750 = vadd.f32 %v3749, %v3669
      %v3751 = vadd.f32 %v3750, %v3670
      %v3752 = vadd.f32 %v3751, %v3671
      %v3753 = vadd.f32 %v3752, %v3672
      %v3754 = vadd.f32 %v3753, %v3673
      %v3755 = vadd.f32 %v3754, %v3674
      %v3756 = vadd.f32 %v3755, %v3675
      %v3757 = vadd.f32 %v3756, %v3676
      %v3758 = vadd.f32 %v3757, %v3677
      %v3759 = vadd.f32 %v3758, %v3678
      %v3760 = vadd.f32 %v3759, %v3679
      %v3761 = vadd.f32 %v3760, %v3680
      %v3762 = vadd.f32 %v3761, %v3681
      %v3763 = vadd.f32 %v3762, %v3682
      %v3764 = vadd.f32 %v3763, %v3683
      %v3765 = vrot.slane %v3764, 4
      %v3766 = vadd.f32 %v3764, %v3765
      %v3767 = vrot.slane %v3766, 2
      %v3768 = vadd.f32 %v3766, %v3767
      %v3769 = vrot.slane %v3768, 1
      %v3770 = vadd.f32 %v3768, %v3769
      %3771 = vst [vmem:[%s282] sm:$0x1] %v3770
      %v3772 = vmul.f32 %v3643, %v3643
      %v3773 = vmul.f32 %v3644, %v3644
      %v3774 = vmul.f32 %v3645, %v3645
      %v3775 = vmul.f32 %v3646, %v3646
      %v3776 = vmul.f32 %v3647, %v3647
      %v3777 = vmul.f32 %v3648, %v3648
      %v3778 = vmul.f32 %v3649, %v3649
      %v3779 = vmul.f32 %v3650, %v3650
      %v3780 = vmul.f32 %v3651, %v3651
      %v3781 = vmul.f32 %v3652, %v3652
      %v3782 = vmul.f32 %v3653, %v3653
      %v3783 = vmul.f32 %v3654, %v3654
      %v3784 = vmul.f32 %v3655, %v3655
      %v3785 = vmul.f32 %v3656, %v3656
      %v3786 = vmul.f32 %v3657, %v3657
      %v3787 = vmul.f32 %v3658, %v3658
      %v3788 = vmul.f32 %v3659, %v3659
      %v3789 = vmul.f32 %v3660, %v3660
      %v3790 = vmul.f32 %v3661, %v3661
      %v3791 = vmul.f32 %v3662, %v3662
      %v3792 = vmul.f32 %v3663, %v3663
      %v3793 = vmul.f32 %v3664, %v3664
      %v3794 = vmul.f32 %v3665, %v3665
      %v3795 = vmul.f32 %v3666, %v3666
      %v3796 = vmul.f32 %v3667, %v3667
      %v3797 = vmul.f32 %v3668, %v3668
      %v3798 = vmul.f32 %v3669, %v3669
      %v3799 = vmul.f32 %v3670, %v3670
      %v3800 = vmul.f32 %v3671, %v3671
      %v3801 = vmul.f32 %v3672, %v3672
      %v3802 = vmul.f32 %v3673, %v3673
      %v3803 = vmul.f32 %v3674, %v3674
      %v3804 = vmul.f32 %v3675, %v3675
      %v3805 = vmul.f32 %v3676, %v3676
      %v3806 = vmul.f32 %v3677, %v3677
      %v3807 = vmul.f32 %v3678, %v3678
      %v3808 = vmul.f32 %v3679, %v3679
      %v3809 = vmul.f32 %v3680, %v3680
      %v3810 = vmul.f32 %v3681, %v3681
      %v3811 = vmul.f32 %v3682, %v3682
      %v3812 = vmul.f32 %v3683, %v3683
      %v3813 = vadd.f32 %v3772, %v3773
      %v3814 = vadd.f32 %v3813, %v3774
      %v3815 = vadd.f32 %v3814, %v3775
      %v3816 = vadd.f32 %v3815, %v3776
      %v3817 = vadd.f32 %v3816, %v3777
      %v3818 = vadd.f32 %v3817, %v3778
      %v3819 = vadd.f32 %v3818, %v3779
      %v3820 = vadd.f32 %v3819, %v3780
      %v3821 = vadd.f32 %v3820, %v3781
      %v3822 = vadd.f32 %v3821, %v3782
      %v3823 = vadd.f32 %v3822, %v3783
      %v3824 = vadd.f32 %v3823, %v3784
      %v3825 = vadd.f32 %v3824, %v3785
      %v3826 = vadd.f32 %v3825, %v3786
      %v3827 = vadd.f32 %v3826, %v3787
      %v3828 = vadd.f32 %v3827, %v3788
      %v3829 = vadd.f32 %v3828, %v3789
      %v3830 = vadd.f32 %v3829, %v3790
      %v3831 = vadd.f32 %v3830, %v3791
      %v3832 = vadd.f32 %v3831, %v3792
      %v3833 = vadd.f32 %v3832, %v3793
      %v3834 = vadd.f32 %v3833, %v3794
      %v3835 = vadd.f32 %v3834, %v3795
      %v3836 = vadd.f32 %v3835, %v3796
      %v3837 = vadd.f32 %v3836, %v3797
      %v3838 = vadd.f32 %v3837, %v3798
      %v3839 = vadd.f32 %v3838, %v3799
      %v3840 = vadd.f32 %v3839, %v3800
      %v3841 = vadd.f32 %v3840, %v3801
      %v3842 = vadd.f32 %v3841, %v3802
      %v3843 = vadd.f32 %v3842, %v3803
      %v3844 = vadd.f32 %v3843, %v3804
      %v3845 = vadd.f32 %v3844, %v3805
      %v3846 = vadd.f32 %v3845, %v3806
      %v3847 = vadd.f32 %v3846, %v3807
      %v3848 = vadd.f32 %v3847, %v3808
      %v3849 = vadd.f32 %v3848, %v3809
      %v3850 = vadd.f32 %v3849, %v3810
      %v3851 = vadd.f32 %v3850, %v3811
      %v3852 = vadd.f32 %v3851, %v3812
      %v3853 = vrot.slane %v3852, 4
      %v3854 = vadd.f32 %v3852, %v3853
      %v3855 = vrot.slane %v3854, 2
      %v3856 = vadd.f32 %v3854, %v3855
      %v3857 = vrot.slane %v3856, 1
      %v3858 = vadd.f32 %v3856, %v3857
      %3859 = vst [vmem:[%s282 + $0x1] sm:$0x1] %v3858
      %v3860 = vadd.f32 %v3684, %v3685
      %v3861 = vadd.f32 %v3860, %v3686
      %v3862 = vadd.f32 %v3861, %v3687
      %v3863 = vadd.f32 %v3862, %v3688
      %v3864 = vadd.f32 %v3863, %v3689
      %v3865 = vadd.f32 %v3864, %v3690
      %v3866 = vadd.f32 %v3865, %v3691
      %v3867 = vadd.f32 %v3866, %v3692
      %v3868 = vadd.f32 %v3867, %v3693
      %v3869 = vadd.f32 %v3868, %v3694
      %v3870 = vadd.f32 %v3869, %v3695
      %v3871 = vadd.f32 %v3870, %v3696
      %v3872 = vadd.f32 %v3871, %v3697
      %v3873 = vadd.f32 %v3872, %v3698
      %v3874 = vadd.f32 %v3873, %v3699
      %v3875 = vadd.f32 %v3874, %v3700
      %v3876 = vadd.f32 %v3875, %v3701
      %v3877 = vadd.f32 %v3876, %v3702
      %v3878 = vadd.f32 %v3877, %v3703
      %v3879 = vadd.f32 %v3878, %v3704
      %v3880 = vadd.f32 %v3879, %v3705
      %v3881 = vadd.f32 %v3880, %v3706
      %v3882 = vadd.f32 %v3881, %v3707
      %v3883 = vadd.f32 %v3882, %v3708
      %v3884 = vadd.f32 %v3883, %v3709
      %v3885 = vadd.f32 %v3884, %v3710
      %v3886 = vadd.f32 %v3885, %v3711
      %v3887 = vadd.f32 %v3886, %v3712
      %v3888 = vadd.f32 %v3887, %v3713
      %v3889 = vadd.f32 %v3888, %v3714
      %v3890 = vadd.f32 %v3889, %v3715
      %v3891 = vadd.f32 %v3890, %v3716
      %v3892 = vadd.f32 %v3891, %v3717
      %v3893 = vadd.f32 %v3892, %v3718
      %v3894 = vadd.f32 %v3893, %v3719
      %v3895 = vadd.f32 %v3894, %v3720
      %v3896 = vadd.f32 %v3895, %v3721
      %v3897 = vadd.f32 %v3896, %v3722
      %v3898 = vadd.f32 %v3897, %v3723
      %v3899 = vadd.f32 %v3898, %v3724
      %v3900 = vrot.slane %v3899, 4
      %v3901 = vadd.f32 %v3899, %v3900
      %v3902 = vrot.slane %v3901, 2
      %v3903 = vadd.f32 %v3901, %v3902
      %v3904 = vrot.slane %v3903, 1
      %v3905 = vadd.f32 %v3903, %v3904
      %3906 = vst [vmem:[%s282 + $0x2] sm:$0x1] %v3905
      %v3907 = vmul.f32 %v3684, %v3684
      %v3908 = vmul.f32 %v3685, %v3685
      %v3909 = vmul.f32 %v3686, %v3686
      %v3910 = vmul.f32 %v3687, %v3687
      %v3911 = vmul.f32 %v3688, %v3688
      %v3912 = vmul.f32 %v3689, %v3689
      %v3913 = vmul.f32 %v3690, %v3690
      %v3914 = vmul.f32 %v3691, %v3691
      %v3915 = vmul.f32 %v3692, %v3692
      %v3916 = vmul.f32 %v3693, %v3693
      %v3917 = vmul.f32 %v3694, %v3694
      %v3918 = vmul.f32 %v3695, %v3695
      %v3919 = vmul.f32 %v3696, %v3696
      %v3920 = vmul.f32 %v3697, %v3697
      %v3921 = vmul.f32 %v3698, %v3698
      %v3922 = vmul.f32 %v3699, %v3699
      %v3923 = vmul.f32 %v3700, %v3700
      %v3924 = vmul.f32 %v3701, %v3701
      %v3925 = vmul.f32 %v3702, %v3702
      %v3926 = vmul.f32 %v3703, %v3703
      %v3927 = vmul.f32 %v3704, %v3704
      %v3928 = vmul.f32 %v3705, %v3705
      %v3929 = vmul.f32 %v3706, %v3706
      %v3930 = vmul.f32 %v3707, %v3707
      %v3931 = vmul.f32 %v3708, %v3708
      %v3932 = vmul.f32 %v3709, %v3709
      %v3933 = vmul.f32 %v3710, %v3710
      %v3934 = vmul.f32 %v3711, %v3711
      %v3935 = vmul.f32 %v3712, %v3712
      %v3936 = vmul.f32 %v3713, %v3713
      %v3937 = vmul.f32 %v3714, %v3714
      %v3938 = vmul.f32 %v3715, %v3715
      %v3939 = vmul.f32 %v3716, %v3716
      %v3940 = vmul.f32 %v3717, %v3717
      %v3941 = vmul.f32 %v3718, %v3718
      %v3942 = vmul.f32 %v3719, %v3719
      %v3943 = vmul.f32 %v3720, %v3720
      %v3944 = vmul.f32 %v3721, %v3721
      %v3945 = vmul.f32 %v3722, %v3722
      %v3946 = vmul.f32 %v3723, %v3723
      %v3947 = vmul.f32 %v3724, %v3724
      %v3948 = vadd.f32 %v3907, %v3908
      %v3949 = vadd.f32 %v3948, %v3909
      %v3950 = vadd.f32 %v3949, %v3910
      %v3951 = vadd.f32 %v3950, %v3911
      %v3952 = vadd.f32 %v3951, %v3912
      %v3953 = vadd.f32 %v3952, %v3913
      %v3954 = vadd.f32 %v3953, %v3914
      %v3955 = vadd.f32 %v3954, %v3915
      %v3956 = vadd.f32 %v3955, %v3916
      %v3957 = vadd.f32 %v3956, %v3917
      %v3958 = vadd.f32 %v3957, %v3918
      %v3959 = vadd.f32 %v3958, %v3919
      %v3960 = vadd.f32 %v3959, %v3920
      %v3961 = vadd.f32 %v3960, %v3921
      %v3962 = vadd.f32 %v3961, %v3922
      %v3963 = vadd.f32 %v3962, %v3923
      %v3964 = vadd.f32 %v3963, %v3924
      %v3965 = vadd.f32 %v3964, %v3925
      %v3966 = vadd.f32 %v3965, %v3926
      %v3967 = vadd.f32 %v3966, %v3927
      %v3968 = vadd.f32 %v3967, %v3928
      %v3969 = vadd.f32 %v3968, %v3929
      %v3970 = vadd.f32 %v3969, %v3930
      %v3971 = vadd.f32 %v3970, %v3931
      %v3972 = vadd.f32 %v3971, %v3932
      %v3973 = vadd.f32 %v3972, %v3933
      %v3974 = vadd.f32 %v3973, %v3934
      %v3975 = vadd.f32 %v3974, %v3935
      %v3976 = vadd.f32 %v3975, %v3936
      %v3977 = vadd.f32 %v3976, %v3937
      %v3978 = vadd.f32 %v3977, %v3938
      %v3979 = vadd.f32 %v3978, %v3939
      %v3980 = vadd.f32 %v3979, %v3940
      %v3981 = vadd.f32 %v3980, %v3941
      %v3982 = vadd.f32 %v3981, %v3942
      %v3983 = vadd.f32 %v3982, %v3943
      %v3984 = vadd.f32 %v3983, %v3944
      %v3985 = vadd.f32 %v3984, %v3945
      %v3986 = vadd.f32 %v3985, %v3946
      %v3987 = vadd.f32 %v3986, %v3947
      %v3988 = vrot.slane %v3987, 4
      %v3989 = vadd.f32 %v3987, %v3988
      %v3990 = vrot.slane %v3989, 2
      %v3991 = vadd.f32 %v3989, %v3990
      %v3992 = vrot.slane %v3991, 1
      %v3993 = vadd.f32 %v3991, %v3992
      %3994 = vst [vmem:[%s282 + $0x3] sm:$0x1] %v3993
      %v3995 = vmul.f32 %v3643, %v3684
      %v3996 = vmul.f32 %v3644, %v3685
      %v3997 = vmul.f32 %v3645, %v3686
      %v3998 = vmul.f32 %v3646, %v3687
      %v3999 = vmul.f32 %v3647, %v3688
      %v4000 = vmul.f32 %v3648, %v3689
      %v4001 = vmul.f32 %v3649, %v3690
      %v4002 = vmul.f32 %v3650, %v3691
      %v4003 = vmul.f32 %v3651, %v3692
      %v4004 = vmul.f32 %v3652, %v3693
      %v4005 = vmul.f32 %v3653, %v3694
      %v4006 = vmul.f32 %v3654, %v3695
      %v4007 = vmul.f32 %v3655, %v3696
      %v4008 = vmul.f32 %v3656, %v3697
      %v4009 = vmul.f32 %v3657, %v3698
      %v4010 = vmul.f32 %v3658, %v3699
      %v4011 = vmul.f32 %v3659, %v3700
      %v4012 = vmul.f32 %v3660, %v3701
      %v4013 = vmul.f32 %v3661, %v3702
      %v4014 = vmul.f32 %v3662, %v3703
      %v4015 = vmul.f32 %v3663, %v3704
      %v4016 = vmul.f32 %v3664, %v3705
      %v4017 = vmul.f32 %v3665, %v3706
      %v4018 = vmul.f32 %v3666, %v3707
      %v4019 = vmul.f32 %v3667, %v3708
      %v4020 = vmul.f32 %v3668, %v3709
      %v4021 = vmul.f32 %v3669, %v3710
      %v4022 = vmul.f32 %v3670, %v3711
      %v4023 = vmul.f32 %v3671, %v3712
      %v4024 = vmul.f32 %v3672, %v3713
      %v4025 = vmul.f32 %v3673, %v3714
      %v4026 = vmul.f32 %v3674, %v3715
      %v4027 = vmul.f32 %v3675, %v3716
      %v4028 = vmul.f32 %v3676, %v3717
      %v4029 = vmul.f32 %v3677, %v3718
      %v4030 = vmul.f32 %v3678, %v3719
      %v4031 = vmul.f32 %v3679, %v3720
      %v4032 = vmul.f32 %v3680, %v3721
      %v4033 = vmul.f32 %v3681, %v3722
      %v4034 = vmul.f32 %v3682, %v3723
      %v4035 = vmul.f32 %v3683, %v3724
      %v4036 = vadd.f32 %v3995, %v3996
      %v4037 = vadd.f32 %v4036, %v3997
      %v4038 = vadd.f32 %v4037, %v3998
      %v4039 = vadd.f32 %v4038, %v3999
      %v4040 = vadd.f32 %v4039, %v4000
      %v4041 = vadd.f32 %v4040, %v4001
      %v4042 = vadd.f32 %v4041, %v4002
      %v4043 = vadd.f32 %v4042, %v4003
      %v4044 = vadd.f32 %v4043, %v4004
      %v4045 = vadd.f32 %v4044, %v4005
      %v4046 = vadd.f32 %v4045, %v4006
      %v4047 = vadd.f32 %v4046, %v4007
      %v4048 = vadd.f32 %v4047, %v4008
      %v4049 = vadd.f32 %v4048, %v4009
      %v4050 = vadd.f32 %v4049, %v4010
      %v4051 = vadd.f32 %v4050, %v4011
      %v4052 = vadd.f32 %v4051, %v4012
      %v4053 = vadd.f32 %v4052, %v4013
      %v4054 = vadd.f32 %v4053, %v4014
      %v4055 = vadd.f32 %v4054, %v4015
      %v4056 = vadd.f32 %v4055, %v4016
      %v4057 = vadd.f32 %v4056, %v4017
      %v4058 = vadd.f32 %v4057, %v4018
      %v4059 = vadd.f32 %v4058, %v4019
      %v4060 = vadd.f32 %v4059, %v4020
      %v4061 = vadd.f32 %v4060, %v4021
      %v4062 = vadd.f32 %v4061, %v4022
      %v4063 = vadd.f32 %v4062, %v4023
      %v4064 = vadd.f32 %v4063, %v4024
      %v4065 = vadd.f32 %v4064, %v4025
      %v4066 = vadd.f32 %v4065, %v4026
      %v4067 = vadd.f32 %v4066, %v4027
      %v4068 = vadd.f32 %v4067, %v4028
      %v4069 = vadd.f32 %v4068, %v4029
      %v4070 = vadd.f32 %v4069, %v4030
      %v4071 = vadd.f32 %v4070, %v4031
      %v4072 = vadd.f32 %v4071, %v4032
      %v4073 = vadd.f32 %v4072, %v4033
      %v4074 = vadd.f32 %v4073, %v4034
      %v4075 = vadd.f32 %v4074, %v4035
      %v4076 = vrot.slane %v4075, 4
      %v4077 = vadd.f32 %v4075, %v4076
      %v4078 = vrot.slane %v4077, 2
      %v4079 = vadd.f32 %v4077, %v4078
      %v4080 = vrot.slane %v4079, 1
      %v4081 = vadd.f32 %v4079, %v4080
      %4082 = vst [vmem:[%s282 + $0x4] sm:$0x1] %v4081
      %4083 = vst [vmem:[%s282 + $0x5] sm:$0x7] 0.0
      %4084 = vst [vmem:[%s278] sm:$0xff] 0.0
      %4085 = vst [vmem:[%s278 + $0x8] sm:$0xff] 0.0
      %4086 = vst [vmem:[%s278 + $0x10] sm:$0xff] 0.0
      %4087 = vst [vmem:[%s278 + $0x18] sm:$0xff] %v3643
      %4088 = vst [vmem:[%s278 + $0x20] sm:$0xff] %v3644
      %4089 = vst [vmem:[%s278 + $0x28] sm:$0xff] %v3645
      %4090 = vst [vmem:[%s278 + $0x30] sm:$0xff] %v3646
      %4091 = vst [vmem:[%s278 + $0x38] sm:$0xff] %v3647
      %4092 = vst [vmem:[%s278 + $0x40] sm:$0xff] %v3648
      %4093 = vst [vmem:[%s278 + $0x48] sm:$0xff] %v3649
      %4094 = vst [vmem:[%s278 + $0x50] sm:$0xff] %v3650
      %4095 = vst [vmem:[%s278 + $0x58] sm:$0xff] %v3651
      %4096 = vst [vmem:[%s278 + $0x60] sm:$0xff] %v3652
      %4097 = vst [vmem:[%s278 + $0x68] sm:$0xff] %v3653
      %4098 = vst [vmem:[%s278 + $0x70] sm:$0xff] %v3654
      %4099 = vst [vmem:[%s278 + $0x78] sm:$0xff] %v3655
      %4100 = vst [vmem:[%s278 + $0x80] sm:$0xff] %v3656
      %4101 = vst [vmem:[%s278 + $0x88] sm:$0xff] %v3657
      %4102 = vst [vmem:[%s278 + $0x90] sm:$0xff] %v3658
      %4103 = vst [vmem:[%s278 + $0x98] sm:$0xff] %v3659
      %4104 = vst [vmem:[%s278 + $0xa0] sm:$0xff] %v3660
      %4105 = vst [vmem:[%s278 + $0xa8] sm:$0xff] %v3661
      %4106 = vst [vmem:[%s278 + $0xb0] sm:$0xff] %v3662
      %4107 = vst [vmem:[%s278 + $0xb8] sm:$0xff] %v3663
      %4108 = vst [vmem:[%s278 + $0xc0] sm:$0xff] %v3664
      %4109 = vst [vmem:[%s278 + $0xc8] sm:$0xff] %v3665
      %4110 = vst [vmem:[%s278 + $0xd0] sm:$0xff] %v3666
      %4111 = vst [vmem:[%s278 + $0xd8] sm:$0xff] %v3667
      %4112 = vst [vmem:[%s278 + $0xe0] sm:$0xff] %v3668
      %4113 = vst [vmem:[%s278 + $0xe8] sm:$0xff] %v3669
      %4114 = vst [vmem:[%s278 + $0xf0] sm:$0xff] %v3670
      %4115 = vst [vmem:[%s278 + $0xf8] sm:$0xff] %v3671
      %4116 = vst [vmem:[%s278 + $0x100] sm:$0xff] %v3672
      %4117 = vst [vmem:[%s278 + $0x108] sm:$0xff] %v3673
      %4118 = vst [vmem:[%s278 + $0x110] sm:$0xff] %v3674
      %4119 = vst [vmem:[%s278 + $0x118] sm:$0xff] %v3675
      %4120 = vst [vmem:[%s278 + $0x120] sm:$0xff] %v3676
      %4121 = vst [vmem:[%s278 + $0x128] sm:$0xff] %v3677
      %4122 = vst [vmem:[%s278 + $0x130] sm:$0xff] %v3678
      %4123 = vst [vmem:[%s278 + $0x138] sm:$0xff] %v3679
      %4124 = vst [vmem:[%s278 + $0x140] sm:$0xff] %v3680
      %4125 = vst [vmem:[%s278 + $0x148] sm:$0xff] %v3681
      %4126 = vst [vmem:[%s278 + $0x150] sm:$0xff] %v3682
      %4127 = vst [vmem:[%s278 + $0x158] sm:$0xff] %v3683
      %4128 = vst [vmem:[%s278 + $0x160] sm:$0xff] 0.0
      %4129 = vst [vmem:[%s278 + $0x168] sm:$0xff] 0.0
      %4130 = vst [vmem:[%s278 + $0x170] sm:$0xff] 0.0
      %p4131 = scmp.lt.s32.totalorder %s18, 1
      %s4132 = scalar_select %p4131, %s18, 1
      %s4133 = smul.addr %s4132, 47
      %s4134 = smul.addr %s4133, 8
      %s4135 = scalar_lea.vmem %s5, %s4134
      %p4136 = scmp.lt.s32.totalorder %s18, 1
      %s4137 = scalar_select %p4136, %s18, 1
      %s4138 = smul.addr %s4137, 8
      %s4139 = scalar_lea.vmem %s6, %s4138
      // Predicated region
      $region41: #{residual_block_forward.4} parent=39 // pred_check
        %p4140 = pneg %p151
      $region42: #{residual_block_forward.4} parent=39 // pred_check_branch
        %4142 = sbr.rel (%p4140) target = $region44
      $region43: #{residual_block_forward.4} parent=39 // pred_region
        _
      $region44: #{residual_block_forward.4} parent=39 // pred_fallthru
        _
      // Predicated region
      $region45: #{residual_block_forward.4} parent=39 // pred_check
        %p4143 = pneg %p177
      $region46: #{residual_block_forward.4} parent=39 // pred_check_branch
        %4145 = sbr.rel (%p4143) target = $region48
      $region47: #{residual_block_forward.4} parent=39 // pred_region
        _
      $region48: #{residual_block_forward.4} parent=39 // pred_fallthru
        _
    $region40: #{residual_block_forward.4} parent=5 // pred_fallthru
      _
    %p4146 = scmp.le.s32.totalorder 2, %s13
    // Predicated region
    $region49: #{residual_block_forward.4} parent=5 // pred_check
      %p4147 = pneg %p4146
    $region50: #{residual_block_forward.4} parent=5 // pred_check_branch
      %4149 = sbr.rel (%p4147) target = $region52
    $region51: #{residual_block_forward.4} parent=5 // pred_region
      %s4150 = ssub.s32 %s13, 2
      // Predicated region
      $region53: #{residual_block_forward.4} parent=51 // pred_check
        %p4151 = pneg %p157
      $region54: #{residual_block_forward.4} parent=51 // pred_check_branch
        %4153 = sbr.rel (%p4151) target = $region56
      $region55: #{residual_block_forward.4} parent=51 // pred_region
        %p4154 = scmp.lt.s32.totalorder %s19, 1
        %s4155 = scalar_select %p4154, %s19, 1
        %s4156 = smul.addr %s4155, 47
        %s4157 = smul.addr %s4156, 8
        %s4158 = scalar_lea.vmem %s5, %s4157
      $region56: #{residual_block_forward.4} parent=51 // pred_fallthru
        _
      // Predicated region
      $region57: #{residual_block_forward.4} parent=51 // pred_check
        %p4159 = pneg %p183
      $region58: #{residual_block_forward.4} parent=51 // pred_check_branch
        %4161 = sbr.rel (%p4159) target = $region60
      $region59: #{residual_block_forward.4} parent=51 // pred_region
        %p4162 = scmp.lt.s32.totalorder %s19, 1
        %s4163 = scalar_select %p4162, %s19, 1
        %s4164 = smul.addr %s4163, 8
        %s4165 = scalar_lea.vmem %s6, %s4164
      $region60: #{residual_block_forward.4} parent=51 // pred_fallthru
        _
    $region52: #{residual_block_forward.4} parent=5 // pred_fallthru
      _
  $region6: #{residual_block_forward.4} parent=0 // loop_footer
    %s17 = sadd.s32 1, %s13
  $region7: #{residual_block_forward.4} parent=0 // loop_footer_branch
    %12 = sbr.rel target = $region3
  $region8: #{residual_block_forward.4} parent=0 // loop_exit
    _

// kernel: residual_block_forward.3
$region0: #{residual_block_forward.3}
  #allocation0 [shape = 'u32[]', space=smem, size = 0x4, offset = 0x4, fixed_abs, tag = 'smem constant byte address 0x4 - core index']
  #allocation1 [shape = 'u32[144,128]{1,0:T(1,128)}', space=vmem, size = 0x12000, scoped, tag = 'internal scratch']
  %s0 = inlined_call_operand.vmem [shape: f32[2,376,128], index: 0, kind: input, shape index: {}]
  %s1 = inlined_call_operand.vmem [shape: f32[328,128], index: 1, kind: input, shape index: {}]
  %s2 = inlined_call_operand.vmem [shape: bf16[128,128], index: 2, kind: input, shape index: {}]
  %s3 = inlined_call_operand.vmem [shape: f32[1,128], index: 3, kind: input, shape index: {}]
  %s4 = inlined_call_operand.vmem [shape: bf16[9,128,128], index: 4, kind: input, shape index: {}]
  %s5 = inlined_call_operand.vmem [shape: f32[1,128], index: 5, kind: input, shape index: {}]
  %s6 = inlined_call_operand.vmem [shape: f32[2,376,128], index: 6, kind: output, shape index: {0}]
  %s7 = inlined_call_operand.vmem [shape: f32[2,376,128], index: 7, kind: output, shape index: {1}]
  %s8 = inlined_call_operand.vmem [shape: f32[2,8,128], index: 8, kind: output, shape index: {2}]
  %9 = xla_tuple %s6, %s7, %s8
  %s10 = sld [smem:[#allocation0]]
  $region73: #{residual_block_forward.3} parent=0
    _
  %s12 = ssub.s32 1, %s10
  %s13 = scalar_select 0, %s12, %s10
  loop: start=0, step=1, limit=4
  $region2: #{residual_block_forward.3} parent=0 // loop_pre_header
    _
  $region3: #{residual_block_forward.3} parent=0 // loop_header
    %s15 = sphi 0, %s19
    %p16 = scmp.ge.s32.totalorder %s15, 4
    %s25 = sphi 0, %s27
    %s28 = sphi 0, %s25
    %s29 = sphi 0, %s28
    %s45 = sphi 0, %s29
    %s49 = sphi 0, %s49
    %s51 = sphi 0, %s49
    %s52 = sphi 0, %s51
    %s66 = sphi 0, %s52
    %s70 = sphi 0, %s70
    %s72 = sphi 0, %s70
    %s73 = sphi 0, %s72
    %s87 = sphi 0, %s73
    %s91 = sphi 0, %s91
    %s93 = sphi 0, %s91
    %s94 = sphi 0, %s93
    %s108 = sphi 0, %s94
    %s112 = sphi 0, %s112
    %s114 = sphi 0, %s112
    %s115 = sphi 0, %s114
    %s129 = sphi 0, %s115
    %s133 = sphi 0, %s133
    %s135 = sphi 0, %s133
    %s136 = sphi 0, %s135
    %s150 = sphi 0, %s136
    %s156 = sphi 0, %s158
    %s159 = sphi 0, %s156
    %s160 = sphi 0, %s159
    %s176 = sphi 0, %s160
    %s182 = sphi 0, %s184
    %s185 = sphi 0, %s182
    %s186 = sphi 0, %s185
    %s202 = sphi 0, %s186
    %s208 = sphi 0, %s210
    %s211 = sphi 0, %s208
    %s212 = sphi 0, %s211
    %s228 = sphi 0, %s212
  $region4: #{residual_block_forward.3} parent=0 // loop_header_branch
    %18 = sbr.rel (%p16) target = $region8
  $region5: #{residual_block_forward.3} parent=0 // loop_body
    %s20 = ssub.s32 %s15, 1
    %s21 = ssub.s32 %s15, 2
    %s22 = sadd.s32 %s15, 1
    %s23 = ssub.s32 %s15, %s22
    %p24 = scmp.eq.s32.totalorder %s23, 0
    %s26 = sadd.s32 %s25, 1
    %s27 = scalar_select %p24, %s25, %s26
    %p30 = pneg %p24
    %p31 = scmp.eq.s32.totalorder %s15, 1
    %p32 = por %p30, %p31
    %p33 = scmp.ne.s32.totalorder %s25, %s28
    %p34 = scmp.eq.s32.totalorder %s15, 0
    %p35 = por %p33, %p34
    %p36 = scmp.ne.s32.totalorder %s25, %s28
    %p37 = scmp.eq.s32.totalorder %s20, 1
    %p38 = por %p36, %p37
    %p39 = scmp.ne.s32.totalorder %s28, %s29
    %p40 = scmp.eq.s32.totalorder %s20, 0
    %p41 = por %p39, %p40
    %p42 = scmp.ne.s32.totalorder %s28, %s29
    %p43 = scmp.eq.s32.totalorder %s21, 1
    %p44 = por %p42, %p43
    %p46 = scmp.ne.s32.totalorder %s29, %s45
    %p47 = scmp.eq.s32.totalorder %s21, 0
    %p48 = por %p46, %p47
    %s50 = sadd.s32 %s49, 1
    %p53 = scmp.eq.s32.totalorder %s15, 1
    %p54 = scmp.ne.s32.totalorder %s49, %s51
    %p55 = scmp.eq.s32.totalorder %s15, 0
    %p56 = por %p54, %p55
    %p57 = scmp.ne.s32.totalorder %s49, %s51
    %p58 = scmp.eq.s32.totalorder %s20, 1
    %p59 = por %p57, %p58
    %p60 = scmp.ne.s32.totalorder %s51, %s52
    %p61 = scmp.eq.s32.totalorder %s20, 0
    %p62 = por %p60, %p61
    %p63 = scmp.ne.s32.totalorder %s51, %s52
    %p64 = scmp.eq.s32.totalorder %s21, 1
    %p65 = por %p63, %p64
    %p67 = scmp.ne.s32.totalorder %s52, %s66
    %p68 = scmp.eq.s32.totalorder %s21, 0
    %p69 = por %p67, %p68
    %s71 = sadd.s32 %s70, 1
    %p74 = scmp.eq.s32.totalorder %s15, 1
    %p75 = scmp.ne.s32.totalorder %s70, %s72
    %p76 = scmp.eq.s32.totalorder %s15, 0
    %p77 = por %p75, %p76
    %p78 = scmp.ne.s32.totalorder %s70, %s72
    %p79 = scmp.eq.s32.totalorder %s20, 1
    %p80 = por %p78, %p79
    %p81 = scmp.ne.s32.totalorder %s72, %s73
    %p82 = scmp.eq.s32.totalorder %s20, 0
    %p83 = por %p81, %p82
    %p84 = scmp.ne.s32.totalorder %s72, %s73
    %p85 = scmp.eq.s32.totalorder %s21, 1
    %p86 = por %p84, %p85
    %p88 = scmp.ne.s32.totalorder %s73, %s87
    %p89 = scmp.eq.s32.totalorder %s21, 0
    %p90 = por %p88, %p89
    %s92 = sadd.s32 %s91, 1
    %p95 = scmp.eq.s32.totalorder %s15, 1
    %p96 = scmp.ne.s32.totalorder %s91, %s93
    %p97 = scmp.eq.s32.totalorder %s15, 0
    %p98 = por %p96, %p97
    %p99 = scmp.ne.s32.totalorder %s91, %s93
    %p100 = scmp.eq.s32.totalorder %s20, 1
    %p101 = por %p99, %p100
    %p102 = scmp.ne.s32.totalorder %s93, %s94
    %p103 = scmp.eq.s32.totalorder %s20, 0
    %p104 = por %p102, %p103
    %p105 = scmp.ne.s32.totalorder %s93, %s94
    %p106 = scmp.eq.s32.totalorder %s21, 1
    %p107 = por %p105, %p106
    %p109 = scmp.ne.s32.totalorder %s94, %s108
    %p110 = scmp.eq.s32.totalorder %s21, 0
    %p111 = por %p109, %p110
    %s113 = sadd.s32 %s112, 1
    %p116 = scmp.eq.s32.totalorder %s15, 1
    %p117 = scmp.ne.s32.totalorder %s112, %s114
    %p118 = scmp.eq.s32.totalorder %s15, 0
    %p119 = por %p117, %p118
    %p120 = scmp.ne.s32.totalorder %s112, %s114
    %p121 = scmp.eq.s32.totalorder %s20, 1
    %p122 = por %p120, %p121
    %p123 = scmp.ne.s32.totalorder %s114, %s115
    %p124 = scmp.eq.s32.totalorder %s20, 0
    %p125 = por %p123, %p124
    %p126 = scmp.ne.s32.totalorder %s114, %s115
    %p127 = scmp.eq.s32.totalorder %s21, 1
    %p128 = por %p126, %p127
    %p130 = scmp.ne.s32.totalorder %s115, %s129
    %p131 = scmp.eq.s32.totalorder %s21, 0
    %p132 = por %p130, %p131
    %s134 = sadd.s32 %s133, 1
    %p137 = scmp.eq.s32.totalorder %s15, 1
    %p138 = scmp.ne.s32.totalorder %s133, %s135
    %p139 = scmp.eq.s32.totalorder %s15, 0
    %p140 = por %p138, %p139
    %p141 = scmp.ne.s32.totalorder %s133, %s135
    %p142 = scmp.eq.s32.totalorder %s20, 1
    %p143 = por %p141, %p142
    %p144 = scmp.ne.s32.totalorder %s135, %s136
    %p145 = scmp.eq.s32.totalorder %s20, 0
    %p146 = por %p144, %p145
    %p147 = scmp.ne.s32.totalorder %s135, %s136
    %p148 = scmp.eq.s32.totalorder %s21, 1
    %p149 = por %p147, %p148
    %p151 = scmp.ne.s32.totalorder %s136, %s150
    %p152 = scmp.eq.s32.totalorder %s21, 0
    %p153 = por %p151, %p152
    %s154 = ssub.s32 %s15, %s22
    %p155 = scmp.eq.s32.totalorder %s154, 0
    %s157 = sadd.s32 %s156, 1
    %s158 = scalar_select %p155, %s156, %s157
    %p161 = pneg %p155
    %p162 = scmp.eq.s32.totalorder %s15, 1
    %p163 = por %p161, %p162
    %p164 = scmp.ne.s32.totalorder %s156, %s159
    %p165 = scmp.eq.s32.totalorder %s15, 0
    %p166 = por %p164, %p165
    %p167 = scmp.ne.s32.totalorder %s156, %s159
    %p168 = scmp.eq.s32.totalorder %s20, 1
    %p169 = por %p167, %p168
    %p170 = scmp.ne.s32.totalorder %s159, %s160
    %p171 = scmp.eq.s32.totalorder %s20, 0
    %p172 = por %p170, %p171
    %p173 = scmp.ne.s32.totalorder %s159, %s160
    %p174 = scmp.eq.s32.totalorder %s21, 1
    %p175 = por %p173, %p174
    %p177 = scmp.ne.s32.totalorder %s160, %s176
    %p178 = scmp.eq.s32.totalorder %s21, 0
    %p179 = por %p177, %p178
    %s180 = ssub.s32 %s15, %s22
    %p181 = scmp.eq.s32.totalorder %s180, 0
    %s183 = sadd.s32 %s182, 1
    %s184 = scalar_select %p181, %s182, %s183
    %p187 = pneg %p181
    %p188 = scmp.eq.s32.totalorder %s15, 1
    %p189 = por %p187, %p188
    %p190 = scmp.ne.s32.totalorder %s182, %s185
    %p191 = scmp.eq.s32.totalorder %s15, 0
    %p192 = por %p190, %p191
    %p193 = scmp.ne.s32.totalorder %s182, %s185
    %p194 = scmp.eq.s32.totalorder %s20, 1
    %p195 = por %p193, %p194
    %p196 = scmp.ne.s32.totalorder %s185, %s186
    %p197 = scmp.eq.s32.totalorder %s20, 0
    %p198 = por %p196, %p197
    %p199 = scmp.ne.s32.totalorder %s185, %s186
    %p200 = scmp.eq.s32.totalorder %s21, 1
    %p201 = por %p199, %p200
    %p203 = scmp.ne.s32.totalorder %s186, %s202
    %p204 = scmp.eq.s32.totalorder %s21, 0
    %p205 = por %p203, %p204
    %s206 = ssub.s32 %s15, %s22
    %p207 = scmp.eq.s32.totalorder %s206, 0
    %s209 = sadd.s32 %s208, 1
    %s210 = scalar_select %p207, %s208, %s209
    %p213 = pneg %p207
    %p214 = scmp.eq.s32.totalorder %s15, 1
    %p215 = por %p213, %p214
    %p216 = scmp.ne.s32.totalorder %s208, %s211
    %p217 = scmp.eq.s32.totalorder %s15, 0
    %p218 = por %p216, %p217
    %p219 = scmp.ne.s32.totalorder %s208, %s211
    %p220 = scmp.eq.s32.totalorder %s20, 1
    %p221 = por %p219, %p220
    %p222 = scmp.ne.s32.totalorder %s211, %s212
    %p223 = scmp.eq.s32.totalorder %s20, 0
    %p224 = por %p222, %p223
    %p225 = scmp.ne.s32.totalorder %s211, %s212
    %p226 = scmp.eq.s32.totalorder %s21, 1
    %p227 = por %p225, %p226
    %p229 = scmp.ne.s32.totalorder %s212, %s228
    %p230 = scmp.eq.s32.totalorder %s21, 0
    %p231 = por %p229, %p230
    %p232 = scmp.le.s32.totalorder 1, %s15
    %p233 = scmp.lt.s32.totalorder %s15, 3
    %p234 = pnand %p232, %p233
    %p235 = pneg %p234
    // Predicated region
    $region9: #{residual_block_forward.3} parent=5 // pred_check
      _
    $region10: #{residual_block_forward.3} parent=5 // pred_check_branch
      %237 = sbr.rel (%p234) target = $region12
    $region11: #{residual_block_forward.3} parent=5 // pred_region
      %s238 = ssub.s32 %s15, 1
      // Predicated region
      $region13: #{residual_block_forward.3} parent=11 // pred_check
        %p239 = pneg %p62
      $region14: #{residual_block_forward.3} parent=11 // pred_check_branch
        %241 = sbr.rel (%p239) target = $region16
      $region15: #{residual_block_forward.3} parent=11 // pred_region
        _
      $region16: #{residual_block_forward.3} parent=11 // pred_fallthru
        _
      // Predicated region
      $region17: #{residual_block_forward.3} parent=11 // pred_check
        %p242 = pneg %p83
      $region18: #{residual_block_forward.3} parent=11 // pred_check_branch
        %244 = sbr.rel (%p242) target = $region20
      $region19: #{residual_block_forward.3} parent=11 // pred_region
        _
      $region20: #{residual_block_forward.3} parent=11 // pred_fallthru
        _
      // Predicated region
      $region21: #{residual_block_forward.3} parent=11 // pred_check
        %p245 = pneg %p104
      $region22: #{residual_block_forward.3} parent=11 // pred_check_branch
        %247 = sbr.rel (%p245) target = $region24
      $region23: #{residual_block_forward.3} parent=11 // pred_region
        _
      $region24: #{residual_block_forward.3} parent=11 // pred_fallthru
        _
      // Predicated region
      $region25: #{residual_block_forward.3} parent=11 // pred_check
        %p248 = pneg %p125
      $region26: #{residual_block_forward.3} parent=11 // pred_check_branch
        %250 = sbr.rel (%p248) target = $region28
      $region27: #{residual_block_forward.3} parent=11 // pred_region
        _
      $region28: #{residual_block_forward.3} parent=11 // pred_fallthru
        _
      // Predicated region
      $region29: #{residual_block_forward.3} parent=11 // pred_check
        %p251 = pneg %p146
      $region30: #{residual_block_forward.3} parent=11 // pred_check_branch
        %253 = sbr.rel (%p251) target = $region32
      $region31: #{residual_block_forward.3} parent=11 // pred_region
        _
      $region32: #{residual_block_forward.3} parent=11 // pred_fallthru
        _
    $region12: #{residual_block_forward.3} parent=5 // pred_fallthru
      _
    %p254 = scmp.lt.s32.totalorder %s15, 2
    // Predicated region
    $region33: #{residual_block_forward.3} parent=5 // pred_check
      %p255 = pneg %p254
    $region34: #{residual_block_forward.3} parent=5 // pred_check_branch
      %257 = sbr.rel (%p255) target = $region36
    $region35: #{residual_block_forward.3} parent=5 // pred_region
      // Predicated region
      $region37: #{residual_block_forward.3} parent=35 // pred_check
        %p258 = pneg %p35
      $region38: #{residual_block_forward.3} parent=35 // pred_check_branch
        %260 = sbr.rel (%p258) target = $region40
      $region39: #{residual_block_forward.3} parent=35 // pred_region
        %p261 = scmp.lt.s32.totalorder %s15, 1
        %s262 = scalar_select %p261, %s15, 1
        %s263 = smul.addr %s262, 47
        %s264 = smul.addr %s263, 8
        %s265 = scalar_lea.vmem %s0, %s264
      $region40: #{residual_block_forward.3} parent=35 // pred_fallthru
        _
    $region36: #{residual_block_forward.3} parent=5 // pred_fallthru
      _
    %p266 = scmp.le.s32.totalorder 1, %s15
    %p267 = scmp.lt.s32.totalorder %s15, 3
    %p268 = pnand %p266, %p267
    %p269 = pneg %p268
    // Predicated region
    $region41: #{residual_block_forward.3} parent=5 // pred_check
      _
    $region42: #{residual_block_forward.3} parent=5 // pred_check_branch
      %271 = sbr.rel (%p268) target = $region44
    $region43: #{residual_block_forward.3} parent=5 // pred_region
      %s272 = ssub.s32 %s15, 1
      %p273 = scmp.lt.s32.totalorder %s20, 1
      %s274 = scalar_select %p273, %s20, 1
      %s275 = smul.addr %s274, 47
      %s276 = smul.addr %s275, 8
      %s277 = scalar_lea.vmem %s0, %s276
      %p278 = pneg %p41
      %p279 = pneg %p38
      %p280 = pneg %p62
      %p281 = pneg %p59
      %p282 = pneg %p83
      %p283 = pneg %p80
      %p284 = pneg %p104
      %p285 = pneg %p101
      %p286 = pneg %p125
      %p287 = pneg %p122
      %p288 = pneg %p146
      %p289 = pneg %p143
      %p290 = pneg %p172
      %p291 = pneg %p169
      %p292 = scmp.lt.s32.totalorder %s20, 1
      %s293 = scalar_select %p292, %s20, 1
      %s294 = smul.addr %s293, 47
      %s295 = smul.addr %s294, 8
      %s296 = scalar_lea.vmem %s6, %s295
      %p297 = pneg %p198
      %p298 = pneg %p195
      %p299 = scmp.lt.s32.totalorder %s20, 1
      %s300 = scalar_select %p299, %s20, 1
      %s301 = smul.addr %s300, 47
      %s302 = smul.addr %s301, 8
      %s303 = scalar_lea.vmem %s7, %s302
      %p304 = pneg %p224
      %p305 = pneg %p221
      %p306 = scmp.lt.s32.totalorder %s20, 1
      %s307 = scalar_select %p306, %s20, 1
      %s308 = smul.addr %s307, 8
      %s309 = scalar_lea.vmem %s8, %s308
      %p310 = scmp.lt.s32.totalorder %s20, 1
      %s311 = scalar_select %p310, %s20, 1
      %s312 = smul.addr %s311, 47
      %s313 = smul.addr %s312, 8
      %s314 = scalar_lea.vmem %s0, %s313
      %p315 = scmp.lt.s32.totalorder %s20, 1
      %s316 = scalar_select %p315, %s20, 1
      %s317 = smul.addr %s316, 47
      %s318 = smul.addr %s317, 8
      %s319 = scalar_lea.vmem %s6, %s318
      %p320 = scmp.lt.s32.totalorder %s20, 1
      %s321 = scalar_select %p320, %s20, 1
      %s322 = smul.addr %s321, 47
      %s323 = smul.addr %s322, 8
      %s324 = scalar_lea.vmem %s7, %s323
      %p325 = scmp.lt.s32.totalorder %s20, 1
      %s326 = scalar_select %p325, %s20, 1
      %s327 = smul.addr %s326, 8
      %s328 = scalar_lea.vmem %s8, %s327
      %v330 = vld [vmem:[%s1] sm:$0xff]
      %v331 = vld [vmem:[%s1 + $0x8] sm:$0xff]
      %v332 = vld [vmem:[%s1 + $0x10] sm:$0xff]
      %v333 = vld [vmem:[%s1 + $0x18] sm:$0xff]
      %v334 = vld [vmem:[%s1 + $0x20] sm:$0xff]
      %v335 = vld [vmem:[%s1 + $0x28] sm:$0xff]
      %v336 = vld [vmem:[%s1 + $0x30] sm:$0xff]
      %v337 = vld [vmem:[%s1 + $0x38] sm:$0xff]
      %v338 = vld [vmem:[%s1 + $0x40] sm:$0xff]
      %v339 = vld [vmem:[%s1 + $0x48] sm:$0xff]
      %v340 = vld [vmem:[%s1 + $0x50] sm:$0xff]
      %v341 = vld [vmem:[%s1 + $0x58] sm:$0xff]
      %v342 = vld [vmem:[%s1 + $0x60] sm:$0xff]
      %v343 = vld [vmem:[%s1 + $0x68] sm:$0xff]
      %v344 = vld [vmem:[%s1 + $0x70] sm:$0xff]
      %v345 = vld [vmem:[%s1 + $0x78] sm:$0xff]
      %v346 = vld [vmem:[%s1 + $0x80] sm:$0xff]
      %v347 = vld [vmem:[%s1 + $0x88] sm:$0xff]
      %v348 = vld [vmem:[%s1 + $0x90] sm:$0xff]
      %v349 = vld [vmem:[%s1 + $0x98] sm:$0xff]
      %v350 = vld [vmem:[%s1 + $0xa0] sm:$0xff]
      %v351 = vld [vmem:[%s1 + $0xa8] sm:$0xff]
      %v352 = vld [vmem:[%s1 + $0xb0] sm:$0xff]
      %v353 = vld [vmem:[%s1 + $0xb8] sm:$0xff]
      %v354 = vld [vmem:[%s1 + $0xc0] sm:$0xff]
      %v355 = vld [vmem:[%s1 + $0xc8] sm:$0xff]
      %v356 = vld [vmem:[%s1 + $0xd0] sm:$0xff]
      %v357 = vld [vmem:[%s1 + $0xd8] sm:$0xff]
      %v358 = vld [vmem:[%s1 + $0xe0] sm:$0xff]
      %v359 = vld [vmem:[%s1 + $0xe8] sm:$0xff]
      %v360 = vld [vmem:[%s1 + $0xf0] sm:$0xff]
      %v361 = vld [vmem:[%s1 + $0xf8] sm:$0xff]
      %v362 = vld [vmem:[%s1 + $0x100] sm:$0xff]
      %v363 = vld [vmem:[%s1 + $0x108] sm:$0xff]
      %v364 = vld [vmem:[%s1 + $0x110] sm:$0xff]
      %v365 = vld [vmem:[%s1 + $0x118] sm:$0xff]
      %v366 = vld [vmem:[%s1 + $0x120] sm:$0xff]
      %v367 = vld [vmem:[%s1 + $0x128] sm:$0xff]
      %v368 = vld [vmem:[%s1 + $0x130] sm:$0xff]
      %v369 = vld [vmem:[%s1 + $0x138] sm:$0xff]
      %v370 = vld [vmem:[%s1 + $0x140] sm:$0xff]
      %v371 = vld [vmem:[%s314 + $0x18] sm:$0xff]
      %v372 = vld [vmem:[%s314 + $0x20] sm:$0xff]
      %v373 = vld [vmem:[%s314 + $0x28] sm:$0xff]
      %v374 = vld [vmem:[%s314 + $0x30] sm:$0xff]
      %v375 = vld [vmem:[%s314 + $0x38] sm:$0xff]
      %v376 = vld [vmem:[%s314 + $0x40] sm:$0xff]
      %v377 = vld [vmem:[%s314 + $0x48] sm:$0xff]
      %v378 = vld [vmem:[%s314 + $0x50] sm:$0xff]
      %v379 = vld [vmem:[%s314 + $0x58] sm:$0xff]
      %v380 = vld [vmem:[%s314 + $0x60] sm:$0xff]
      %v381 = vld [vmem:[%s314 + $0x68] sm:$0xff]
      %v382 = vld [vmem:[%s314 + $0x70] sm:$0xff]
      %v383 = vld [vmem:[%s314 + $0x78] sm:$0xff]
      %v384 = vld [vmem:[%s314 + $0x80] sm:$0xff]
      %v385 = vld [vmem:[%s314 + $0x88] sm:$0xff]
      %v386 = vld [vmem:[%s314 + $0x90] sm:$0xff]
      %v387 = vld [vmem:[%s314 + $0x98] sm:$0xff]
      %v388 = vld [vmem:[%s314 + $0xa0] sm:$0xff]
      %v389 = vld [vmem:[%s314 + $0xa8] sm:$0xff]
      %v390 = vld [vmem:[%s314 + $0xb0] sm:$0xff]
      %v391 = vld [vmem:[%s314 + $0xb8] sm:$0xff]
      %v392 = vld [vmem:[%s314 + $0xc0] sm:$0xff]
      %v393 = vld [vmem:[%s314 + $0xc8] sm:$0xff]
      %v394 = vld [vmem:[%s314 + $0xd0] sm:$0xff]
      %v395 = vld [vmem:[%s314 + $0xd8] sm:$0xff]
      %v396 = vld [vmem:[%s314 + $0xe0] sm:$0xff]
      %v397 = vld [vmem:[%s314 + $0xe8] sm:$0xff]
      %v398 = vld [vmem:[%s314 + $0xf0] sm:$0xff]
      %v399 = vld [vmem:[%s314 + $0xf8] sm:$0xff]
      %v400 = vld [vmem:[%s314 + $0x100] sm:$0xff]
      %v401 = vld [vmem:[%s314 + $0x108] sm:$0xff]
      %v402 = vld [vmem:[%s314 + $0x110] sm:$0xff]
      %v403 = vld [vmem:[%s314 + $0x118] sm:$0xff]
      %v404 = vld [vmem:[%s314 + $0x120] sm:$0xff]
      %v405 = vld [vmem:[%s314 + $0x128] sm:$0xff]
      %v406 = vld [vmem:[%s314 + $0x130] sm:$0xff]
      %v407 = vld [vmem:[%s314 + $0x138] sm:$0xff]
      %v408 = vld [vmem:[%s314 + $0x140] sm:$0xff]
      %v409 = vld [vmem:[%s314 + $0x148] sm:$0xff]
      %v410 = vld [vmem:[%s314 + $0x150] sm:$0xff]
      %v411 = vld [vmem:[%s314 + $0x158] sm:$0xff]
      %v412 = vpack.c.bf16 %v372, %v371
      %v413 = vpack.c.bf16 %v374, %v373
      %v414 = vpack.c.bf16 %v376, %v375
      %v415 = vpack.c.bf16 %v378, %v377
      %v416 = vpack.c.bf16 %v380, %v379
      %v417 = vpack.c.bf16 %v382, %v381
      %v418 = vpack.c.bf16 %v384, %v383
      %v419 = vpack.c.bf16 %v386, %v385
      %v420 = vpack.c.bf16 %v388, %v387
      %v421 = vpack.c.bf16 %v390, %v389
      %v422 = vpack.c.bf16 %v392, %v391
      %v423 = vpack.c.bf16 %v394, %v393
      %v424 = vpack.c.bf16 %v396, %v395
      %v425 = vpack.c.bf16 %v398, %v397
      %v426 = vpack.c.bf16 %v400, %v399
      %v427 = vpack.c.bf16 %v402, %v401
      %v428 = vpack.c.bf16 %v404, %v403
      %v429 = vpack.c.bf16 %v406, %v405
      %v430 = vpack.c.bf16 %v408, %v407
      %v431 = vpack.c.bf16 %v410, %v409
      %v432 = vpack.c.bf16 %v411, %v411
      %v433 = vld [vmem:[%s2] sm:$0xf]
      %v434 = vld [vmem:[%s2 + $0x4] sm:$0xf]
      %v435 = vld [vmem:[%s2 + $0x8] sm:$0xf]
      %v436 = vld [vmem:[%s2 + $0xc] sm:$0xf]
      %v437 = vld [vmem:[%s2 + $0x10] sm:$0xf]
      %v438 = vld [vmem:[%s2 + $0x14] sm:$0xf]
      %v439 = vld [vmem:[%s2 + $0x18] sm:$0xf]
      %v440 = vld [vmem:[%s2 + $0x1c] sm:$0xf]
      %v441 = vld [vmem:[%s2 + $0x20] sm:$0xf]
      %v442 = vld [vmem:[%s2 + $0x24] sm:$0xf]
      %v443 = vld [vmem:[%s2 + $0x28] sm:$0xf]
      %v444 = vld [vmem:[%s2 + $0x2c] sm:$0xf]
      %v445 = vld [vmem:[%s2 + $0x30] sm:$0xf]
      %v446 = vld [vmem:[%s2 + $0x34] sm:$0xf]
      %v447 = vld [vmem:[%s2 + $0x38] sm:$0xf]
      %v448 = vld [vmem:[%s2 + $0x3c] sm:$0xf]
      %v449 = vld [vmem:[%s3] sm:$0x1]
      %v451 = vlaneseq
      %v452 = vshrl.u32 %v451, 7
      %v453 = vsub.s32 0, %v452
      %v454 = vrot.slane %v449, %v453
      %v472 = vunpack.c.l.b16 %v433
      %v473 = vunpack.c.l.b16 %v434
      %v474 = vunpack.c.l.b16 %v435
      %v475 = vunpack.c.l.b16 %v436
      %v476 = vunpack.c.l.b16 %v437
      %v477 = vunpack.c.l.b16 %v438
      %v478 = vunpack.c.l.b16 %v439
      %v479 = vunpack.c.l.b16 %v440
      %v480 = vunpack.c.l.b16 %v441
      %v481 = vunpack.c.l.b16 %v442
      %v482 = vunpack.c.l.b16 %v443
      %v483 = vunpack.c.l.b16 %v444
      %v484 = vunpack.c.l.b16 %v445
      %v485 = vunpack.c.l.b16 %v446
      %v486 = vunpack.c.l.b16 %v447
      %v487 = vunpack.c.l.b16 %v448
      %v488 = vpack.c.b16 %v473, %v472
      %v489 = vpack.c.b16 %v475, %v474
      %v490 = vpack.c.b16 %v477, %v476
      %v491 = vpack.c.b16 %v479, %v478
      %v492 = vpack.c.b16 %v481, %v480
      %v493 = vpack.c.b16 %v483, %v482
      %v494 = vpack.c.b16 %v485, %v484
      %v495 = vpack.c.b16 %v487, %v486
      %504 = vmatprep.subr.bf16.mxu0 0
      %505 = vmatpush1.bf16.msra.mxu0 %v495
      %506 = vmatprep.subr.bf16.mxu0 0
      %507 = vmatpush1.bf16.msra.mxu0 %v494
      %508 = vmatprep.subr.bf16.mxu0 0
      %509 = vmatpush1.bf16.msra.mxu0 %v493
      %510 = vmatprep.subr.bf16.mxu0 0
      %511 = vmatpush1.bf16.msra.mxu0 %v492
      %512 = vmatprep.subr.bf16.mxu0 0
      %513 = vmatpush1.bf16.msra.mxu0 %v491
      %514 = vmatprep.subr.bf16.mxu0 0
      %515 = vmatpush1.bf16.msra.mxu0 %v490
      %516 = vmatprep.subr.bf16.mxu0 0
      %517 = vmatpush1.bf16.msra.mxu0 %v489
      %518 = vmatprep.subr.bf16.mxu0 0
      %519 = vmatpush1.bf16.msra.mxu0 %v488
      %520 = vmatprep.subr.bf16.mxu0 0
      %521 = vmatpush2.bf16.msra.mxu0 0
      %522 = vmatprep.subr.bf16.mxu0 0
      %523 = vmatpush2.bf16.msra.mxu0 0
      %524 = vmatprep.subr.bf16.mxu0 0
      %525 = vmatpush2.bf16.msra.mxu0 0
      %526 = vmatprep.subr.bf16.mxu0 0
      %527 = vmatpush2.bf16.msra.mxu0 0
      %528 = vmatprep.subr.bf16.mxu0 0
      %529 = vmatpush2.bf16.msra.mxu0 0
      %530 = vmatprep.subr.bf16.mxu0 0
      %531 = vmatpush2.bf16.msra.mxu0 0
      %532 = vmatprep.subr.bf16.mxu0 0
      %533 = vmatpush2.bf16.msra.mxu0 0
      %534 = vmatprep.subr.bf16.mxu0 0
      %535 = vmatpush2.bf16.msra.mxu0 0
      %536 = vmatprep.mubr.bf16.mxu0 0
      %537 = vmatmul.mubr.bf16.gmra.mxu0 %v412
      %v538 = vpop.f32.mrf.mxu0
      %v539 = vadd.f32 %v454, %v538
      %v540 = vpop.f32.mrf.mxu0
      %v541 = vpop.f32.mrf.mxu0
      %v542 = vadd.f32 %v454, %v541
      %v543 = vpop.f32.mrf.mxu0
      %544 = vmatprep.mubr.bf16.mxu0 0
      %545 = vmatmul.mubr.bf16.gmra.mxu0 %v413
      %v546 = vpop.f32.mrf.mxu0
      %v547 = vadd.f32 %v454, %v546
      %v548 = vpop.f32.mrf.mxu0
      %v549 = vpop.f32.mrf.mxu0
      %v550 = vadd.f32 %v454, %v549
      %v551 = vpop.f32.mrf.mxu0
      %552 = vmatprep.mubr.bf16.mxu0 0
      %553 = vmatmul.mubr.bf16.gmra.mxu0 %v414
      %v554 = vpop.f32.mrf.mxu0
      %v555 = vadd.f32 %v454, %v554
      %v556 = vpop.f32.mrf.mxu0
      %v557 = vpop.f32.mrf.mxu0
      %v558 = vadd.f32 %v454, %v557
      %v559 = vpop.f32.mrf.mxu0
      %560 = vmatprep.mubr.bf16.mxu0 0
      %561 = vmatmul.mubr.bf16.gmra.mxu0 %v415
      %v562 = vpop.f32.mrf.mxu0
      %v563 = vadd.f32 %v454, %v562
      %v564 = vpop.f32.mrf.mxu0
      %v565 = vpop.f32.mrf.mxu0
      %v566 = vadd.f32 %v454, %v565
      %v567 = vpop.f32.mrf.mxu0
      %568 = vmatprep.mubr.bf16.mxu0 0
      %569 = vmatmul.mubr.bf16.gmra.mxu0 %v416
      %v570 = vpop.f32.mrf.mxu0
      %v571 = vadd.f32 %v454, %v570
      %v572 = vpop.f32.mrf.mxu0
      %v573 = vpop.f32.mrf.mxu0
      %v574 = vadd.f32 %v454, %v573
      %v575 = vpop.f32.mrf.mxu0
      %576 = vmatprep.mubr.bf16.mxu0 0
      %577 = vmatmul.mubr.bf16.gmra.mxu0 %v417
      %v578 = vpop.f32.mrf.mxu0
      %v579 = vadd.f32 %v454, %v578
      %v580 = vpop.f32.mrf.mxu0
      %v581 = vpop.f32.mrf.mxu0
      %v582 = vadd.f32 %v454, %v581
      %v583 = vpop.f32.mrf.mxu0
      %584 = vmatprep.mubr.bf16.mxu0 0
      %585 = vmatmul.mubr.bf16.gmra.mxu0 %v418
      %v586 = vpop.f32.mrf.mxu0
      %v587 = vadd.f32 %v454, %v586
      %v588 = vpop.f32.mrf.mxu0
      %v589 = vpop.f32.mrf.mxu0
      %v590 = vadd.f32 %v454, %v589
      %v591 = vpop.f32.mrf.mxu0
      %592 = vmatprep.mubr.bf16.mxu0 0
      %593 = vmatmul.mubr.bf16.gmra.mxu0 %v419
      %v594 = vpop.f32.mrf.mxu0
      %v595 = vadd.f32 %v454, %v594
      %v596 = vpop.f32.mrf.mxu0
      %v597 = vpop.f32.mrf.mxu0
      %v598 = vadd.f32 %v454, %v597
      %v599 = vpop.f32.mrf.mxu0
      %600 = vmatprep.mubr.bf16.mxu0 0
      %601 = vmatmul.mubr.bf16.gmra.mxu0 %v420
      %v602 = vpop.f32.mrf.mxu0
      %v603 = vadd.f32 %v454, %v602
      %v604 = vpop.f32.mrf.mxu0
      %v605 = vpop.f32.mrf.mxu0
      %v606 = vadd.f32 %v454, %v605
      %v607 = vpop.f32.mrf.mxu0
      %608 = vmatprep.mubr.bf16.mxu0 0
      %609 = vmatmul.mubr.bf16.gmra.mxu0 %v421
      %v610 = vpop.f32.mrf.mxu0
      %v611 = vadd.f32 %v454, %v610
      %v612 = vpop.f32.mrf.mxu0
      %v613 = vpop.f32.mrf.mxu0
      %v614 = vadd.f32 %v454, %v613
      %v615 = vpop.f32.mrf.mxu0
      %616 = vmatprep.mubr.bf16.mxu0 0
      %617 = vmatmul.mubr.bf16.gmra.mxu0 %v422
      %v618 = vpop.f32.mrf.mxu0
      %v619 = vadd.f32 %v454, %v618
      %v620 = vpop.f32.mrf.mxu0
      %v621 = vpop.f32.mrf.mxu0
      %v622 = vadd.f32 %v454, %v621
      %v623 = vpop.f32.mrf.mxu0
      %624 = vmatprep.mubr.bf16.mxu0 0
      %625 = vmatmul.mubr.bf16.gmra.mxu0 %v423
      %v626 = vpop.f32.mrf.mxu0
      %v627 = vadd.f32 %v454, %v626
      %v628 = vpop.f32.mrf.mxu0
      %v629 = vpop.f32.mrf.mxu0
      %v630 = vadd.f32 %v454, %v629
      %v631 = vpop.f32.mrf.mxu0
      %632 = vmatprep.mubr.bf16.mxu0 0
      %633 = vmatmul.mubr.bf16.gmra.mxu0 %v424
      %v634 = vpop.f32.mrf.mxu0
      %v635 = vadd.f32 %v454, %v634
      %v636 = vpop.f32.mrf.mxu0
      %v637 = vpop.f32.mrf.mxu0
      %v638 = vadd.f32 %v454, %v637
      %v639 = vpop.f32.mrf.mxu0
      %640 = vmatprep.mubr.bf16.mxu0 0
      %641 = vmatmul.mubr.bf16.gmra.mxu0 %v425
      %v642 = vpop.f32.mrf.mxu0
      %v643 = vadd.f32 %v454, %v642
      %v644 = vpop.f32.mrf.mxu0
      %v645 = vpop.f32.mrf.mxu0
      %v646 = vadd.f32 %v454, %v645
      %v647 = vpop.f32.mrf.mxu0
      %648 = vmatprep.mubr.bf16.mxu0 0
      %649 = vmatmul.mubr.bf16.gmra.mxu0 %v426
      %v650 = vpop.f32.mrf.mxu0
      %v651 = vadd.f32 %v454, %v650
      %v652 = vpop.f32.mrf.mxu0
      %v653 = vpop.f32.mrf.mxu0
      %v654 = vadd.f32 %v454, %v653
      %v655 = vpop.f32.mrf.mxu0
      %656 = vmatprep.mubr.bf16.mxu0 0
      %657 = vmatmul.mubr.bf16.gmra.mxu0 %v427
      %v658 = vpop.f32.mrf.mxu0
      %v659 = vadd.f32 %v454, %v658
      %v660 = vpop.f32.mrf.mxu0
      %v661 = vpop.f32.mrf.mxu0
      %v662 = vadd.f32 %v454, %v661
      %v663 = vpop.f32.mrf.mxu0
      %664 = vmatprep.mubr.bf16.mxu0 0
      %665 = vmatmul.mubr.bf16.gmra.mxu0 %v428
      %v666 = vpop.f32.mrf.mxu0
      %v667 = vadd.f32 %v454, %v666
      %v668 = vpop.f32.mrf.mxu0
      %v669 = vpop.f32.mrf.mxu0
      %v670 = vadd.f32 %v454, %v669
      %v671 = vpop.f32.mrf.mxu0
      %672 = vmatprep.mubr.bf16.mxu0 0
      %673 = vmatmul.mubr.bf16.gmra.mxu0 %v429
      %v674 = vpop.f32.mrf.mxu0
      %v675 = vadd.f32 %v454, %v674
      %v676 = vpop.f32.mrf.mxu0
      %v677 = vpop.f32.mrf.mxu0
      %v678 = vadd.f32 %v454, %v677
      %v679 = vpop.f32.mrf.mxu0
      %680 = vmatprep.mubr.bf16.mxu0 0
      %681 = vmatmul.mubr.bf16.gmra.mxu0 %v430
      %v682 = vpop.f32.mrf.mxu0
      %v683 = vadd.f32 %v454, %v682
      %v684 = vpop.f32.mrf.mxu0
      %v685 = vpop.f32.mrf.mxu0
      %v686 = vadd.f32 %v454, %v685
      %v687 = vpop.f32.mrf.mxu0
      %688 = vmatprep.mubr.bf16.mxu0 0
      %689 = vmatmul.mubr.bf16.gmra.mxu0 %v431
      %v690 = vpop.f32.mrf.mxu0
      %v691 = vadd.f32 %v454, %v690
      %v692 = vpop.f32.mrf.mxu0
      %v693 = vpop.f32.mrf.mxu0
      %v694 = vadd.f32 %v454, %v693
      %v695 = vpop.f32.mrf.mxu0
      %696 = vmatprep.mubr.bf16.mxu0 0
      %697 = vmatmul.mubr.bf16.gmra.mxu0 %v432
      %v698 = vpop.f32.mrf.mxu0
      %v699 = vadd.f32 %v454, %v698
      %v700 = vpop.f32.mrf.mxu0
      %v701 = vpop.f32.mrf.mxu0
      %v702 = vpop.f32.mrf.mxu0
      %703 = vdwg.mxu0
      %v704 = vmax.f32 %v539, 0.0
      %v705 = vmax.f32 %v542, 0.0
      %v706 = vmax.f32 %v547, 0.0
      %v707 = vmax.f32 %v550, 0.0
      %v708 = vmax.f32 %v555, 0.0
      %v709 = vmax.f32 %v558, 0.0
      %v710 = vmax.f32 %v563, 0.0
      %v711 = vmax.f32 %v566, 0.0
      %v712 = vmax.f32 %v571, 0.0
      %v713 = vmax.f32 %v574, 0.0
      %v714 = vmax.f32 %v579, 0.0
      %v715 = vmax.f32 %v582, 0.0
      %v716 = vmax.f32 %v587, 0.0
      %v717 = vmax.f32 %v590, 0.0
      %v718 = vmax.f32 %v595, 0.0
      %v719 = vmax.f32 %v598, 0.0
      %v720 = vmax.f32 %v603, 0.0
      %v721 = vmax.f32 %v606, 0.0
      %v722 = vmax.f32 %v611, 0.0
      %v723 = vmax.f32 %v614, 0.0
      %v724 = vmax.f32 %v619, 0.0
      %v725 = vmax.f32 %v622, 0.0
      %v726 = vmax.f32 %v627, 0.0
      %v727 = vmax.f32 %v630, 0.0
      %v728 = vmax.f32 %v635, 0.0
      %v729 = vmax.f32 %v638, 0.0
      %v730 = vmax.f32 %v643, 0.0
      %v731 = vmax.f32 %v646, 0.0
      %v732 = vmax.f32 %v651, 0.0
      %v733 = vmax.f32 %v654, 0.0
      %v734 = vmax.f32 %v659, 0.0
      %v735 = vmax.f32 %v662, 0.0
      %v736 = vmax.f32 %v667, 0.0
      %v737 = vmax.f32 %v670, 0.0
      %v738 = vmax.f32 %v675, 0.0
      %v739 = vmax.f32 %v678, 0.0
      %v740 = vmax.f32 %v683, 0.0
      %v741 = vmax.f32 %v686, 0.0
      %v742 = vmax.f32 %v691, 0.0
      %v743 = vmax.f32 %v694, 0.0
      %v744 = vmax.f32 %v699, 0.0
      %v745 = vmul.f32 %v704, %v330
      %v746 = vmul.f32 %v705, %v331
      %v747 = vmul.f32 %v706, %v332
      %v748 = vmul.f32 %v707, %v333
      %v749 = vmul.f32 %v708, %v334
      %v750 = vmul.f32 %v709, %v335
      %v751 = vmul.f32 %v710, %v336
      %v752 = vmul.f32 %v711, %v337
      %v753 = vmul.f32 %v712, %v338
      %v754 = vmul.f32 %v713, %v339
      %v755 = vmul.f32 %v714, %v340
      %v756 = vmul.f32 %v715, %v341
      %v757 = vmul.f32 %v716, %v342
      %v758 = vmul.f32 %v717, %v343
      %v759 = vmul.f32 %v718, %v344
      %v760 = vmul.f32 %v719, %v345
      %v761 = vmul.f32 %v720, %v346
      %v762 = vmul.f32 %v721, %v347
      %v763 = vmul.f32 %v722, %v348
      %v764 = vmul.f32 %v723, %v349
      %v765 = vmul.f32 %v724, %v350
      %v766 = vmul.f32 %v725, %v351
      %v767 = vmul.f32 %v726, %v352
      %v768 = vmul.f32 %v727, %v353
      %v769 = vmul.f32 %v728, %v354
      %v770 = vmul.f32 %v729, %v355
      %v771 = vmul.f32 %v730, %v356
      %v772 = vmul.f32 %v731, %v357
      %v773 = vmul.f32 %v732, %v358
      %v774 = vmul.f32 %v733, %v359
      %v775 = vmul.f32 %v734, %v360
      %v776 = vmul.f32 %v735, %v361
      %v777 = vmul.f32 %v736, %v362
      %v778 = vmul.f32 %v737, %v363
      %v779 = vmul.f32 %v738, %v364
      %v780 = vmul.f32 %v739, %v365
      %v781 = vmul.f32 %v740, %v366
      %v782 = vmul.f32 %v741, %v367
      %v783 = vmul.f32 %v742, %v368
      %v784 = vmul.f32 %v743, %v369
      %v785 = vmul.f32 %v744, %v370
      %v786 = vld [vmem:[%s314 + $0x5] sm:$0xff]
      %v787 = vld [vmem:[%s314 + $0xd] sm:$0xff]
      %v788 = vld [vmem:[%s314 + $0x15] sm:$0xff]
      %v789 = vld [vmem:[%s314 + $0x1d] sm:$0xff]
      %v790 = vld [vmem:[%s314 + $0x25] sm:$0xff]
      %v791 = vld [vmem:[%s314 + $0x2d] sm:$0xff]
      %v792 = vld [vmem:[%s314 + $0x35] sm:$0xff]
      %v793 = vld [vmem:[%s314 + $0x3d] sm:$0xff]
      %v794 = vld [vmem:[%s314 + $0x45] sm:$0xff]
      %v795 = vld [vmem:[%s314 + $0x4d] sm:$0xff]
      %v796 = vld [vmem:[%s314 + $0x55] sm:$0xff]
      %v797 = vld [vmem:[%s314 + $0x5d] sm:$0xff]
      %v798 = vld [vmem:[%s314 + $0x65] sm:$0xff]
      %v799 = vld [vmem:[%s314 + $0x6d] sm:$0xff]
      %v800 = vld [vmem:[%s314 + $0x75] sm:$0xff]
      %v801 = vld [vmem:[%s314 + $0x7d] sm:$0xff]
      %v802 = vld [vmem:[%s314 + $0x85] sm:$0xff]
      %v803 = vld [vmem:[%s314 + $0x8d] sm:$0xff]
      %v804 = vld [vmem:[%s314 + $0x95] sm:$0xff]
      %v805 = vld [vmem:[%s314 + $0x9d] sm:$0xff]
      %v806 = vld [vmem:[%s314 + $0xa5] sm:$0xff]
      %v807 = vld [vmem:[%s314 + $0xad] sm:$0xff]
      %v808 = vld [vmem:[%s314 + $0xb5] sm:$0xff]
      %v809 = vld [vmem:[%s314 + $0xbd] sm:$0xff]
      %v810 = vld [vmem:[%s314 + $0xc5] sm:$0xff]
      %v811 = vld [vmem:[%s314 + $0xcd] sm:$0xff]
      %v812 = vld [vmem:[%s314 + $0xd5] sm:$0xff]
      %v813 = vld [vmem:[%s314 + $0xdd] sm:$0xff]
      %v814 = vld [vmem:[%s314 + $0xe5] sm:$0xff]
      %v815 = vld [vmem:[%s314 + $0xed] sm:$0xff]
      %v816 = vld [vmem:[%s314 + $0xf5] sm:$0xff]
      %v817 = vld [vmem:[%s314 + $0xfd] sm:$0xff]
      %v818 = vld [vmem:[%s314 + $0x105] sm:$0xff]
      %v819 = vld [vmem:[%s314 + $0x10d] sm:$0xff]
      %v820 = vld [vmem:[%s314 + $0x115] sm:$0xff]
      %v821 = vld [vmem:[%s314 + $0x11d] sm:$0xff]
      %v822 = vld [vmem:[%s314 + $0x125] sm:$0xff]
      %v823 = vld [vmem:[%s314 + $0x12d] sm:$0xff]
      %v824 = vld [vmem:[%s314 + $0x135] sm:$0xff]
      %v825 = vld [vmem:[%s314 + $0x13d] sm:$0xff]
      %v826 = vld [vmem:[%s314 + $0x145] sm:$0xff]
      %v827 = vpack.c.bf16 %v787, %v786
      %v828 = vpack.c.bf16 %v789, %v788
      %v829 = vpack.c.bf16 %v791, %v790
      %v830 = vpack.c.bf16 %v793, %v792
      %v831 = vpack.c.bf16 %v795, %v794
      %v832 = vpack.c.bf16 %v797, %v796
      %v833 = vpack.c.bf16 %v799, %v798
      %v834 = vpack.c.bf16 %v801, %v800
      %v835 = vpack.c.bf16 %v803, %v802
      %v836 = vpack.c.bf16 %v805, %v804
      %v837 = vpack.c.bf16 %v807, %v806
      %v838 = vpack.c.bf16 %v809, %v808
      %v839 = vpack.c.bf16 %v811, %v810
      %v840 = vpack.c.bf16 %v813, %v812
      %v841 = vpack.c.bf16 %v815, %v814
      %v842 = vpack.c.bf16 %v817, %v816
      %v843 = vpack.c.bf16 %v819, %v818
      %v844 = vpack.c.bf16 %v821, %v820
      %v845 = vpack.c.bf16 %v823, %v822
      %v846 = vpack.c.bf16 %v825, %v824
      %v847 = vpack.c.bf16 %v826, %v826
      %v848 = vld [vmem:[%s4] sm:$0xf]
      %v849 = vld [vmem:[%s4 + $0x4] sm:$0xf]
      %v850 = vld [vmem:[%s4 + $0x8] sm:$0xf]
      %v851 = vld [vmem:[%s4 + $0xc] sm:$0xf]
      %v852 = vld [vmem:[%s4 + $0x10] sm:$0xf]
      %v853 = vld [vmem:[%s4 + $0x14] sm:$0xf]
      %v854 = vld [vmem:[%s4 + $0x18] sm:$0xf]
      %v855 = vld [vmem:[%s4 + $0x1c] sm:$0xf]
      %v856 = vld [vmem:[%s4 + $0x20] sm:$0xf]
      %v857 = vld [vmem:[%s4 + $0x24] sm:$0xf]
      %v858 = vld [vmem:[%s4 + $0x28] sm:$0xf]
      %v859 = vld [vmem:[%s4 + $0x2c] sm:$0xf]
      %v860 = vld [vmem:[%s4 + $0x30] sm:$0xf]
      %v861 = vld [vmem:[%s4 + $0x34] sm:$0xf]
      %v862 = vld [vmem:[%s4 + $0x38] sm:$0xf]
      %v863 = vld [vmem:[%s4 + $0x3c] sm:$0xf]
      %v864 = vld [vmem:[%s314 + $0x6] sm:$0xff]
      %v865 = vld [vmem:[%s314 + $0xe] sm:$0xff]
      %v866 = vld [vmem:[%s314 + $0x16] sm:$0xff]
      %v867 = vld [vmem:[%s314 + $0x1e] sm:$0xff]
      %v868 = vld [vmem:[%s314 + $0x26] sm:$0xff]
      %v869 = vld [vmem:[%s314 + $0x2e] sm:$0xff]
      %v870 = vld [vmem:[%s314 + $0x36] sm:$0xff]
      %v871 = vld [vmem:[%s314 + $0x3e] sm:$0xff]
      %v872 = vld [vmem:[%s314 + $0x46] sm:$0xff]
      %v873 = vld [vmem:[%s314 + $0x4e] sm:$0xff]
      %v874 = vld [vmem:[%s314 + $0x56] sm:$0xff]
      %v875 = vld [vmem:[%s314 + $0x5e] sm:$0xff]
      %v876 = vld [vmem:[%s314 + $0x66] sm:$0xff]
      %v877 = vld [vmem:[%s314 + $0x6e] sm:$0xff]
      %v878 = vld [vmem:[%s314 + $0x76] sm:$0xff]
      %v879 = vld [vmem:[%s314 + $0x7e] sm:$0xff]
      %v880 = vld [vmem:[%s314 + $0x86] sm:$0xff]
      %v881 = vld [vmem:[%s314 + $0x8e] sm:$0xff]
      %v882 = vld [vmem:[%s314 + $0x96] sm:$0xff]
      %v883 = vld [vmem:[%s314 + $0x9e] sm:$0xff]
      %v884 = vld [vmem:[%s314 + $0xa6] sm:$0xff]
      %v885 = vld [vmem:[%s314 + $0xae] sm:$0xff]
      %v886 = vld [vmem:[%s314 + $0xb6] sm:$0xff]
      %v887 = vld [vmem:[%s314 + $0xbe] sm:$0xff]
      %v888 = vld [vmem:[%s314 + $0xc6] sm:$0xff]
      %v889 = vld [vmem:[%s314 + $0xce] sm:$0xff]
      %v890 = vld [vmem:[%s314 + $0xd6] sm:$0xff]
      %v891 = vld [vmem:[%s314 + $0xde] sm:$0xff]
      %v892 = vld [vmem:[%s314 + $0xe6] sm:$0xff]
      %v893 = vld [vmem:[%s314 + $0xee] sm:$0xff]
      %v894 = vld [vmem:[%s314 + $0xf6] sm:$0xff]
      %v895 = vld [vmem:[%s314 + $0xfe] sm:$0xff]
      %v896 = vld [vmem:[%s314 + $0x106] sm:$0xff]
      %v897 = vld [vmem:[%s314 + $0x10e] sm:$0xff]
      %v898 = vld [vmem:[%s314 + $0x116] sm:$0xff]
      %v899 = vld [vmem:[%s314 + $0x11e] sm:$0xff]
      %v900 = vld [vmem:[%s314 + $0x126] sm:$0xff]
      %v901 = vld [vmem:[%s314 + $0x12e] sm:$0xff]
      %v902 = vld [vmem:[%s314 + $0x136] sm:$0xff]
      %v903 = vld [vmem:[%s314 + $0x13e] sm:$0xff]
      %v904 = vld [vmem:[%s314 + $0x146] sm:$0xff]
      %v905 = vpack.c.bf16 %v865, %v864
      %v906 = vpack.c.bf16 %v867, %v866
      %v907 = vpack.c.bf16 %v869, %v868
      %v908 = vpack.c.bf16 %v871, %v870
      %v909 = vpack.c.bf16 %v873, %v872
      %v910 = vpack.c.bf16 %v875, %v874
      %v911 = vpack.c.bf16 %v877, %v876
      %v912 = vpack.c.bf16 %v879, %v878
      %v913 = vpack.c.bf16 %v881, %v880
      %v914 = vpack.c.bf16 %v883, %v882
      %v915 = vpack.c.bf16 %v885, %v884
      %v916 = vpack.c.bf16 %v887, %v886
      %v917 = vpack.c.bf16 %v889, %v888
      %v918 = vpack.c.bf16 %v891, %v890
      %v919 = vpack.c.bf16 %v893, %v892
      %v920 = vpack.c.bf16 %v895, %v894
      %v921 = vpack.c.bf16 %v897, %v896
      %v922 = vpack.c.bf16 %v899, %v898
      %v923 = vpack.c.bf16 %v901, %v900
      %v924 = vpack.c.bf16 %v903, %v902
      %v925 = vpack.c.bf16 %v904, %v904
      %s926 = scalar_lea.vmem %s4, 64
      %v927 = vld [vmem:[%s926] sm:$0xf]
      %v928 = vld [vmem:[%s926 + $0x4] sm:$0xf]
      %v929 = vld [vmem:[%s926 + $0x8] sm:$0xf]
      %v930 = vld [vmem:[%s926 + $0xc] sm:$0xf]
      %v931 = vld [vmem:[%s926 + $0x10] sm:$0xf]
      %v932 = vld [vmem:[%s926 + $0x14] sm:$0xf]
      %v933 = vld [vmem:[%s926 + $0x18] sm:$0xf]
      %v934 = vld [vmem:[%s926 + $0x1c] sm:$0xf]
      %v935 = vld [vmem:[%s926 + $0x20] sm:$0xf]
      %v936 = vld [vmem:[%s926 + $0x24] sm:$0xf]
      %v937 = vld [vmem:[%s926 + $0x28] sm:$0xf]
      %v938 = vld [vmem:[%s926 + $0x2c] sm:$0xf]
      %v939 = vld [vmem:[%s926 + $0x30] sm:$0xf]
      %v940 = vld [vmem:[%s926 + $0x34] sm:$0xf]
      %v941 = vld [vmem:[%s926 + $0x38] sm:$0xf]
      %v942 = vld [vmem:[%s926 + $0x3c] sm:$0xf]
      %v959 = vunpack.c.l.b16 %v927
      %v960 = vunpack.c.l.b16 %v928
      %v961 = vunpack.c.l.b16 %v929
      %v962 = vunpack.c.l.b16 %v930
      %v963 = vunpack.c.l.b16 %v931
      %v964 = vunpack.c.l.b16 %v932
      %v965 = vunpack.c.l.b16 %v933
      %v966 = vunpack.c.l.b16 %v934
      %v967 = vunpack.c.l.b16 %v935
      %v968 = vunpack.c.l.b16 %v936
      %v969 = vunpack.c.l.b16 %v937
      %v970 = vunpack.c.l.b16 %v938
      %v971 = vunpack.c.l.b16 %v939
      %v972 = vunpack.c.l.b16 %v940
      %v973 = vunpack.c.l.b16 %v941
      %v974 = vunpack.c.l.b16 %v942
      %v975 = vpack.c.b16 %v960, %v959
      %v976 = vpack.c.b16 %v962, %v961
      %v977 = vpack.c.b16 %v964, %v963
      %v978 = vpack.c.b16 %v966, %v965
      %v979 = vpack.c.b16 %v968, %v967
      %v980 = vpack.c.b16 %v970, %v969
      %v981 = vpack.c.b16 %v972, %v971
      %v982 = vpack.c.b16 %v974, %v973
      %991 = vmatprep.subr.bf16.mxu0 0
      %992 = vmatpush1.bf16.msra.mxu0 %v982
      %993 = vmatprep.subr.bf16.mxu0 0
      %994 = vmatpush1.bf16.msra.mxu0 %v981
      %995 = vmatprep.subr.bf16.mxu0 0
      %996 = vmatpush1.bf16.msra.mxu0 %v980
      %997 = vmatprep.subr.bf16.mxu0 0
      %998 = vmatpush1.bf16.msra.mxu0 %v979
      %999 = vmatprep.subr.bf16.mxu0 0
      %1000 = vmatpush1.bf16.msra.mxu0 %v978
      %1001 = vmatprep.subr.bf16.mxu0 0
      %1002 = vmatpush1.bf16.msra.mxu0 %v977
      %1003 = vmatprep.subr.bf16.mxu0 0
      %1004 = vmatpush1.bf16.msra.mxu0 %v976
      %1005 = vmatprep.subr.bf16.mxu0 0
      %1006 = vmatpush1.bf16.msra.mxu0 %v975
      %1007 = vmatprep.subr.bf16.mxu0 0
      %1008 = vmatpush2.bf16.msra.mxu0 0
      %1009 = vmatprep.subr.bf16.mxu0 0
      %1010 = vmatpush2.bf16.msra.mxu0 0
      %1011 = vmatprep.subr.bf16.mxu0 0
      %1012 = vmatpush2.bf16.msra.mxu0 0
      %1013 = vmatprep.subr.bf16.mxu0 0
      %1014 = vmatpush2.bf16.msra.mxu0 0
      %1015 = vmatprep.subr.bf16.mxu0 0
      %1016 = vmatpush2.bf16.msra.mxu0 0
      %1017 = vmatprep.subr.bf16.mxu0 0
      %1018 = vmatpush2.bf16.msra.mxu0 0
      %1019 = vmatprep.subr.bf16.mxu0 0
      %1020 = vmatpush2.bf16.msra.mxu0 0
      %1021 = vmatprep.subr.bf16.mxu0 0
      %1022 = vmatpush2.bf16.msra.mxu0 0
      %1023 = vmatprep.mubr.bf16.mxu0 0
      %1024 = vmatmul.mubr.bf16.gmra.mxu0 %v905
      %v1025 = vpop.f32.mrf.mxu0
      %v1026 = vadd.f32 0.0, %v1025
      %v1027 = vpop.f32.mrf.mxu0
      %v1028 = vpop.f32.mrf.mxu0
      %v1029 = vadd.f32 0.0, %v1028
      %v1030 = vpop.f32.mrf.mxu0
      %1031 = vmatprep.mubr.bf16.mxu0 0
      %1032 = vmatmul.mubr.bf16.gmra.mxu0 %v906
      %v1033 = vpop.f32.mrf.mxu0
      %v1034 = vadd.f32 0.0, %v1033
      %v1035 = vpop.f32.mrf.mxu0
      %v1036 = vpop.f32.mrf.mxu0
      %v1037 = vadd.f32 0.0, %v1036
      %v1038 = vpop.f32.mrf.mxu0
      %1039 = vmatprep.mubr.bf16.mxu0 0
      %1040 = vmatmul.mubr.bf16.gmra.mxu0 %v907
      %v1041 = vpop.f32.mrf.mxu0
      %v1042 = vadd.f32 0.0, %v1041
      %v1043 = vpop.f32.mrf.mxu0
      %v1044 = vpop.f32.mrf.mxu0
      %v1045 = vadd.f32 0.0, %v1044
      %v1046 = vpop.f32.mrf.mxu0
      %1047 = vmatprep.mubr.bf16.mxu0 0
      %1048 = vmatmul.mubr.bf16.gmra.mxu0 %v908
      %v1049 = vpop.f32.mrf.mxu0
      %v1050 = vadd.f32 0.0, %v1049
      %v1051 = vpop.f32.mrf.mxu0
      %v1052 = vpop.f32.mrf.mxu0
      %v1053 = vadd.f32 0.0, %v1052
      %v1054 = vpop.f32.mrf.mxu0
      %1055 = vmatprep.mubr.bf16.mxu0 0
      %1056 = vmatmul.mubr.bf16.gmra.mxu0 %v909
      %v1057 = vpop.f32.mrf.mxu0
      %v1058 = vadd.f32 0.0, %v1057
      %v1059 = vpop.f32.mrf.mxu0
      %v1060 = vpop.f32.mrf.mxu0
      %v1061 = vadd.f32 0.0, %v1060
      %v1062 = vpop.f32.mrf.mxu0
      %1063 = vmatprep.mubr.bf16.mxu0 0
      %1064 = vmatmul.mubr.bf16.gmra.mxu0 %v910
      %v1065 = vpop.f32.mrf.mxu0
      %v1066 = vadd.f32 0.0, %v1065
      %v1067 = vpop.f32.mrf.mxu0
      %v1068 = vpop.f32.mrf.mxu0
      %v1069 = vadd.f32 0.0, %v1068
      %v1070 = vpop.f32.mrf.mxu0
      %1071 = vmatprep.mubr.bf16.mxu0 0
      %1072 = vmatmul.mubr.bf16.gmra.mxu0 %v911
      %v1073 = vpop.f32.mrf.mxu0
      %v1074 = vadd.f32 0.0, %v1073
      %v1075 = vpop.f32.mrf.mxu0
      %v1076 = vpop.f32.mrf.mxu0
      %v1077 = vadd.f32 0.0, %v1076
      %v1078 = vpop.f32.mrf.mxu0
      %1079 = vmatprep.mubr.bf16.mxu0 0
      %1080 = vmatmul.mubr.bf16.gmra.mxu0 %v912
      %v1081 = vpop.f32.mrf.mxu0
      %v1082 = vadd.f32 0.0, %v1081
      %v1083 = vpop.f32.mrf.mxu0
      %v1084 = vpop.f32.mrf.mxu0
      %v1085 = vadd.f32 0.0, %v1084
      %v1086 = vpop.f32.mrf.mxu0
      %1087 = vmatprep.mubr.bf16.mxu0 0
      %1088 = vmatmul.mubr.bf16.gmra.mxu0 %v913
      %v1089 = vpop.f32.mrf.mxu0
      %v1090 = vadd.f32 0.0, %v1089
      %v1091 = vpop.f32.mrf.mxu0
      %v1092 = vpop.f32.mrf.mxu0
      %v1093 = vadd.f32 0.0, %v1092
      %v1094 = vpop.f32.mrf.mxu0
      %1095 = vmatprep.mubr.bf16.mxu0 0
      %1096 = vmatmul.mubr.bf16.gmra.mxu0 %v914
      %v1097 = vpop.f32.mrf.mxu0
      %v1098 = vadd.f32 0.0, %v1097
      %v1099 = vpop.f32.mrf.mxu0
      %v1100 = vpop.f32.mrf.mxu0
      %v1101 = vadd.f32 0.0, %v1100
      %v1102 = vpop.f32.mrf.mxu0
      %1103 = vmatprep.mubr.bf16.mxu0 0
      %1104 = vmatmul.mubr.bf16.gmra.mxu0 %v915
      %v1105 = vpop.f32.mrf.mxu0
      %v1106 = vadd.f32 0.0, %v1105
      %v1107 = vpop.f32.mrf.mxu0
      %v1108 = vpop.f32.mrf.mxu0
      %v1109 = vadd.f32 0.0, %v1108
      %v1110 = vpop.f32.mrf.mxu0
      %1111 = vmatprep.mubr.bf16.mxu0 0
      %1112 = vmatmul.mubr.bf16.gmra.mxu0 %v916
      %v1113 = vpop.f32.mrf.mxu0
      %v1114 = vadd.f32 0.0, %v1113
      %v1115 = vpop.f32.mrf.mxu0
      %v1116 = vpop.f32.mrf.mxu0
      %v1117 = vadd.f32 0.0, %v1116
      %v1118 = vpop.f32.mrf.mxu0
      %1119 = vmatprep.mubr.bf16.mxu0 0
      %1120 = vmatmul.mubr.bf16.gmra.mxu0 %v917
      %v1121 = vpop.f32.mrf.mxu0
      %v1122 = vadd.f32 0.0, %v1121
      %v1123 = vpop.f32.mrf.mxu0
      %v1124 = vpop.f32.mrf.mxu0
      %v1125 = vadd.f32 0.0, %v1124
      %v1126 = vpop.f32.mrf.mxu0
      %1127 = vmatprep.mubr.bf16.mxu0 0
      %1128 = vmatmul.mubr.bf16.gmra.mxu0 %v918
      %v1129 = vpop.f32.mrf.mxu0
      %v1130 = vadd.f32 0.0, %v1129
      %v1131 = vpop.f32.mrf.mxu0
      %v1132 = vpop.f32.mrf.mxu0
      %v1133 = vadd.f32 0.0, %v1132
      %v1134 = vpop.f32.mrf.mxu0
      %1135 = vmatprep.mubr.bf16.mxu0 0
      %1136 = vmatmul.mubr.bf16.gmra.mxu0 %v919
      %v1137 = vpop.f32.mrf.mxu0
      %v1138 = vadd.f32 0.0, %v1137
      %v1139 = vpop.f32.mrf.mxu0
      %v1140 = vpop.f32.mrf.mxu0
      %v1141 = vadd.f32 0.0, %v1140
      %v1142 = vpop.f32.mrf.mxu0
      %1143 = vmatprep.mubr.bf16.mxu0 0
      %1144 = vmatmul.mubr.bf16.gmra.mxu0 %v920
      %v1145 = vpop.f32.mrf.mxu0
      %v1146 = vadd.f32 0.0, %v1145
      %v1147 = vpop.f32.mrf.mxu0
      %v1148 = vpop.f32.mrf.mxu0
      %v1149 = vadd.f32 0.0, %v1148
      %v1150 = vpop.f32.mrf.mxu0
      %1151 = vmatprep.mubr.bf16.mxu0 0
      %1152 = vmatmul.mubr.bf16.gmra.mxu0 %v921
      %v1153 = vpop.f32.mrf.mxu0
      %v1154 = vadd.f32 0.0, %v1153
      %v1155 = vpop.f32.mrf.mxu0
      %v1156 = vpop.f32.mrf.mxu0
      %v1157 = vadd.f32 0.0, %v1156
      %v1158 = vpop.f32.mrf.mxu0
      %1159 = vmatprep.mubr.bf16.mxu0 0
      %1160 = vmatmul.mubr.bf16.gmra.mxu0 %v922
      %v1161 = vpop.f32.mrf.mxu0
      %v1162 = vadd.f32 0.0, %v1161
      %v1163 = vpop.f32.mrf.mxu0
      %v1164 = vpop.f32.mrf.mxu0
      %v1165 = vadd.f32 0.0, %v1164
      %v1166 = vpop.f32.mrf.mxu0
      %1167 = vmatprep.mubr.bf16.mxu0 0
      %1168 = vmatmul.mubr.bf16.gmra.mxu0 %v923
      %v1169 = vpop.f32.mrf.mxu0
      %v1170 = vadd.f32 0.0, %v1169
      %v1171 = vpop.f32.mrf.mxu0
      %v1172 = vpop.f32.mrf.mxu0
      %v1173 = vadd.f32 0.0, %v1172
      %v1174 = vpop.f32.mrf.mxu0
      %1175 = vmatprep.mubr.bf16.mxu0 0
      %1176 = vmatmul.mubr.bf16.gmra.mxu0 %v924
      %v1177 = vpop.f32.mrf.mxu0
      %v1178 = vadd.f32 0.0, %v1177
      %v1179 = vpop.f32.mrf.mxu0
      %v1180 = vpop.f32.mrf.mxu0
      %v1181 = vadd.f32 0.0, %v1180
      %v1182 = vpop.f32.mrf.mxu0
      %1183 = vmatprep.mubr.bf16.mxu0 0
      %1184 = vmatmul.mubr.bf16.gmra.mxu0 %v925
      %v1185 = vpop.f32.mrf.mxu0
      %v1186 = vadd.f32 0.0, %v1185
      %v1187 = vpop.f32.mrf.mxu0
      %v1188 = vpop.f32.mrf.mxu0
      %v1189 = vpop.f32.mrf.mxu0
      %1190 = vdwg.mxu0
      %v1207 = vunpack.c.l.b16 %v848
      %v1208 = vunpack.c.l.b16 %v849
      %v1209 = vunpack.c.l.b16 %v850
      %v1210 = vunpack.c.l.b16 %v851
      %v1211 = vunpack.c.l.b16 %v852
      %v1212 = vunpack.c.l.b16 %v853
      %v1213 = vunpack.c.l.b16 %v854
      %v1214 = vunpack.c.l.b16 %v855
      %v1215 = vunpack.c.l.b16 %v856
      %v1216 = vunpack.c.l.b16 %v857
      %v1217 = vunpack.c.l.b16 %v858
      %v1218 = vunpack.c.l.b16 %v859
      %v1219 = vunpack.c.l.b16 %v860
      %v1220 = vunpack.c.l.b16 %v861
      %v1221 = vunpack.c.l.b16 %v862
      %v1222 = vunpack.c.l.b16 %v863
      %v1223 = vpack.c.b16 %v1208, %v1207
      %v1224 = vpack.c.b16 %v1210, %v1209
      %v1225 = vpack.c.b16 %v1212, %v1211
      %v1226 = vpack.c.b16 %v1214, %v1213
      %v1227 = vpack.c.b16 %v1216, %v1215
      %v1228 = vpack.c.b16 %v1218, %v1217
      %v1229 = vpack.c.b16 %v1220, %v1219
      %v1230 = vpack.c.b16 %v1222, %v1221
      %1239 = vmatprep.subr.bf16.mxu0 0
      %1240 = vmatpush1.bf16.msra.mxu0 %v1230
      %1241 = vmatprep.subr.bf16.mxu0 0
      %1242 = vmatpush1.bf16.msra.mxu0 %v1229
      %1243 = vmatprep.subr.bf16.mxu0 0
      %1244 = vmatpush1.bf16.msra.mxu0 %v1228
      %1245 = vmatprep.subr.bf16.mxu0 0
      %1246 = vmatpush1.bf16.msra.mxu0 %v1227
      %1247 = vmatprep.subr.bf16.mxu0 0
      %1248 = vmatpush1.bf16.msra.mxu0 %v1226
      %1249 = vmatprep.subr.bf16.mxu0 0
      %1250 = vmatpush1.bf16.msra.mxu0 %v1225
      %1251 = vmatprep.subr.bf16.mxu0 0
      %1252 = vmatpush1.bf16.msra.mxu0 %v1224
      %1253 = vmatprep.subr.bf16.mxu0 0
      %1254 = vmatpush1.bf16.msra.mxu0 %v1223
      %1255 = vmatprep.subr.bf16.mxu0 0
      %1256 = vmatpush2.bf16.msra.mxu0 0
      %1257 = vmatprep.subr.bf16.mxu0 0
      %1258 = vmatpush2.bf16.msra.mxu0 0
      %1259 = vmatprep.subr.bf16.mxu0 0
      %1260 = vmatpush2.bf16.msra.mxu0 0
      %1261 = vmatprep.subr.bf16.mxu0 0
      %1262 = vmatpush2.bf16.msra.mxu0 0
      %1263 = vmatprep.subr.bf16.mxu0 0
      %1264 = vmatpush2.bf16.msra.mxu0 0
      %1265 = vmatprep.subr.bf16.mxu0 0
      %1266 = vmatpush2.bf16.msra.mxu0 0
      %1267 = vmatprep.subr.bf16.mxu0 0
      %1268 = vmatpush2.bf16.msra.mxu0 0
      %1269 = vmatprep.subr.bf16.mxu0 0
      %1270 = vmatpush2.bf16.msra.mxu0 0
      %1271 = vmatprep.mubr.bf16.mxu0 0
      %1272 = vmatmul.mubr.bf16.gmra.mxu0 %v827
      %v1273 = vpop.f32.mrf.mxu0
      %v1274 = vadd.f32 %v1026, %v1273
      %v1275 = vpop.f32.mrf.mxu0
      %v1276 = vpop.f32.mrf.mxu0
      %v1277 = vadd.f32 %v1029, %v1276
      %v1278 = vpop.f32.mrf.mxu0
      %1279 = vmatprep.mubr.bf16.mxu0 0
      %1280 = vmatmul.mubr.bf16.gmra.mxu0 %v828
      %v1281 = vpop.f32.mrf.mxu0
      %v1282 = vadd.f32 %v1034, %v1281
      %v1283 = vpop.f32.mrf.mxu0
      %v1284 = vpop.f32.mrf.mxu0
      %v1285 = vadd.f32 %v1037, %v1284
      %v1286 = vpop.f32.mrf.mxu0
      %1287 = vmatprep.mubr.bf16.mxu0 0
      %1288 = vmatmul.mubr.bf16.gmra.mxu0 %v829
      %v1289 = vpop.f32.mrf.mxu0
      %v1290 = vadd.f32 %v1042, %v1289
      %v1291 = vpop.f32.mrf.mxu0
      %v1292 = vpop.f32.mrf.mxu0
      %v1293 = vadd.f32 %v1045, %v1292
      %v1294 = vpop.f32.mrf.mxu0
      %1295 = vmatprep.mubr.bf16.mxu0 0
      %1296 = vmatmul.mubr.bf16.gmra.mxu0 %v830
      %v1297 = vpop.f32.mrf.mxu0
      %v1298 = vadd.f32 %v1050, %v1297
      %v1299 = vpop.f32.mrf.mxu0
      %v1300 = vpop.f32.mrf.mxu0
      %v1301 = vadd.f32 %v1053, %v1300
      %v1302 = vpop.f32.mrf.mxu0
      %1303 = vmatprep.mubr.bf16.mxu0 0
      %1304 = vmatmul.mubr.bf16.gmra.mxu0 %v831
      %v1305 = vpop.f32.mrf.mxu0
      %v1306 = vadd.f32 %v1058, %v1305
      %v1307 = vpop.f32.mrf.mxu0
      %v1308 = vpop.f32.mrf.mxu0
      %v1309 = vadd.f32 %v1061, %v1308
      %v1310 = vpop.f32.mrf.mxu0
      %1311 = vmatprep.mubr.bf16.mxu0 0
      %1312 = vmatmul.mubr.bf16.gmra.mxu0 %v832
      %v1313 = vpop.f32.mrf.mxu0
      %v1314 = vadd.f32 %v1066, %v1313
      %v1315 = vpop.f32.mrf.mxu0
      %v1316 = vpop.f32.mrf.mxu0
      %v1317 = vadd.f32 %v1069, %v1316
      %v1318 = vpop.f32.mrf.mxu0
      %1319 = vmatprep.mubr.bf16.mxu0 0
      %1320 = vmatmul.mubr.bf16.gmra.mxu0 %v833
      %v1321 = vpop.f32.mrf.mxu0
      %v1322 = vadd.f32 %v1074, %v1321
      %v1323 = vpop.f32.mrf.mxu0
      %v1324 = vpop.f32.mrf.mxu0
      %v1325 = vadd.f32 %v1077, %v1324
      %v1326 = vpop.f32.mrf.mxu0
      %1327 = vmatprep.mubr.bf16.mxu0 0
      %1328 = vmatmul.mubr.bf16.gmra.mxu0 %v834
      %v1329 = vpop.f32.mrf.mxu0
      %v1330 = vadd.f32 %v1082, %v1329
      %v1331 = vpop.f32.mrf.mxu0
      %v1332 = vpop.f32.mrf.mxu0
      %v1333 = vadd.f32 %v1085, %v1332
      %v1334 = vpop.f32.mrf.mxu0
      %1335 = vmatprep.mubr.bf16.mxu0 0
      %1336 = vmatmul.mubr.bf16.gmra.mxu0 %v835
      %v1337 = vpop.f32.mrf.mxu0
      %v1338 = vadd.f32 %v1090, %v1337
      %v1339 = vpop.f32.mrf.mxu0
      %v1340 = vpop.f32.mrf.mxu0
      %v1341 = vadd.f32 %v1093, %v1340
      %v1342 = vpop.f32.mrf.mxu0
      %1343 = vmatprep.mubr.bf16.mxu0 0
      %1344 = vmatmul.mubr.bf16.gmra.mxu0 %v836
      %v1345 = vpop.f32.mrf.mxu0
      %v1346 = vadd.f32 %v1098, %v1345
      %v1347 = vpop.f32.mrf.mxu0
      %v1348 = vpop.f32.mrf.mxu0
      %v1349 = vadd.f32 %v1101, %v1348
      %v1350 = vpop.f32.mrf.mxu0
      %1351 = vmatprep.mubr.bf16.mxu0 0
      %1352 = vmatmul.mubr.bf16.gmra.mxu0 %v837
      %v1353 = vpop.f32.mrf.mxu0
      %v1354 = vadd.f32 %v1106, %v1353
      %v1355 = vpop.f32.mrf.mxu0
      %v1356 = vpop.f32.mrf.mxu0
      %v1357 = vadd.f32 %v1109, %v1356
      %v1358 = vpop.f32.mrf.mxu0
      %1359 = vmatprep.mubr.bf16.mxu0 0
      %1360 = vmatmul.mubr.bf16.gmra.mxu0 %v838
      %v1361 = vpop.f32.mrf.mxu0
      %v1362 = vadd.f32 %v1114, %v1361
      %v1363 = vpop.f32.mrf.mxu0
      %v1364 = vpop.f32.mrf.mxu0
      %v1365 = vadd.f32 %v1117, %v1364
      %v1366 = vpop.f32.mrf.mxu0
      %1367 = vmatprep.mubr.bf16.mxu0 0
      %1368 = vmatmul.mubr.bf16.gmra.mxu0 %v839
      %v1369 = vpop.f32.mrf.mxu0
      %v1370 = vadd.f32 %v1122, %v1369
      %v1371 = vpop.f32.mrf.mxu0
      %v1372 = vpop.f32.mrf.mxu0
      %v1373 = vadd.f32 %v1125, %v1372
      %v1374 = vpop.f32.mrf.mxu0
      %1375 = vmatprep.mubr.bf16.mxu0 0
      %1376 = vmatmul.mubr.bf16.gmra.mxu0 %v840
      %v1377 = vpop.f32.mrf.mxu0
      %v1378 = vadd.f32 %v1130, %v1377
      %v1379 = vpop.f32.mrf.mxu0
      %v1380 = vpop.f32.mrf.mxu0
      %v1381 = vadd.f32 %v1133, %v1380
      %v1382 = vpop.f32.mrf.mxu0
      %1383 = vmatprep.mubr.bf16.mxu0 0
      %1384 = vmatmul.mubr.bf16.gmra.mxu0 %v841
      %v1385 = vpop.f32.mrf.mxu0
      %v1386 = vadd.f32 %v1138, %v1385
      %v1387 = vpop.f32.mrf.mxu0
      %v1388 = vpop.f32.mrf.mxu0
      %v1389 = vadd.f32 %v1141, %v1388
      %v1390 = vpop.f32.mrf.mxu0
      %1391 = vmatprep.mubr.bf16.mxu0 0
      %1392 = vmatmul.mubr.bf16.gmra.mxu0 %v842
      %v1393 = vpop.f32.mrf.mxu0
      %v1394 = vadd.f32 %v1146, %v1393
      %v1395 = vpop.f32.mrf.mxu0
      %v1396 = vpop.f32.mrf.mxu0
      %v1397 = vadd.f32 %v1149, %v1396
      %v1398 = vpop.f32.mrf.mxu0
      %1399 = vmatprep.mubr.bf16.mxu0 0
      %1400 = vmatmul.mubr.bf16.gmra.mxu0 %v843
      %v1401 = vpop.f32.mrf.mxu0
      %v1402 = vadd.f32 %v1154, %v1401
      %v1403 = vpop.f32.mrf.mxu0
      %v1404 = vpop.f32.mrf.mxu0
      %v1405 = vadd.f32 %v1157, %v1404
      %v1406 = vpop.f32.mrf.mxu0
      %1407 = vmatprep.mubr.bf16.mxu0 0
      %1408 = vmatmul.mubr.bf16.gmra.mxu0 %v844
      %v1409 = vpop.f32.mrf.mxu0
      %v1410 = vadd.f32 %v1162, %v1409
      %v1411 = vpop.f32.mrf.mxu0
      %v1412 = vpop.f32.mrf.mxu0
      %v1413 = vadd.f32 %v1165, %v1412
      %v1414 = vpop.f32.mrf.mxu0
      %1415 = vmatprep.mubr.bf16.mxu0 0
      %1416 = vmatmul.mubr.bf16.gmra.mxu0 %v845
      %v1417 = vpop.f32.mrf.mxu0
      %v1418 = vadd.f32 %v1170, %v1417
      %v1419 = vpop.f32.mrf.mxu0
      %v1420 = vpop.f32.mrf.mxu0
      %v1421 = vadd.f32 %v1173, %v1420
      %v1422 = vpop.f32.mrf.mxu0
      %1423 = vmatprep.mubr.bf16.mxu0 0
      %1424 = vmatmul.mubr.bf16.gmra.mxu0 %v846
      %v1425 = vpop.f32.mrf.mxu0
      %v1426 = vadd.f32 %v1178, %v1425
      %v1427 = vpop.f32.mrf.mxu0
      %v1428 = vpop.f32.mrf.mxu0
      %v1429 = vadd.f32 %v1181, %v1428
      %v1430 = vpop.f32.mrf.mxu0
      %1431 = vmatprep.mubr.bf16.mxu0 0
      %1432 = vmatmul.mubr.bf16.gmra.mxu0 %v847
      %v1433 = vpop.f32.mrf.mxu0
      %v1434 = vadd.f32 %v1186, %v1433
      %v1435 = vpop.f32.mrf.mxu0
      %v1436 = vpop.f32.mrf.mxu0
      %v1437 = vpop.f32.mrf.mxu0
      %1438 = vdwg.mxu0
      %v1439 = vld [vmem:[%s314 + $0x7] sm:$0xff]
      %v1440 = vld [vmem:[%s314 + $0xf] sm:$0xff]
      %v1441 = vld [vmem:[%s314 + $0x17] sm:$0xff]
      %v1442 = vld [vmem:[%s314 + $0x1f] sm:$0xff]
      %v1443 = vld [vmem:[%s314 + $0x27] sm:$0xff]
      %v1444 = vld [vmem:[%s314 + $0x2f] sm:$0xff]
      %v1445 = vld [vmem:[%s314 + $0x37] sm:$0xff]
      %v1446 = vld [vmem:[%s314 + $0x3f] sm:$0xff]
      %v1447 = vld [vmem:[%s314 + $0x47] sm:$0xff]
      %v1448 = vld [vmem:[%s314 + $0x4f] sm:$0xff]
      %v1449 = vld [vmem:[%s314 + $0x57] sm:$0xff]
      %v1450 = vld [vmem:[%s314 + $0x5f] sm:$0xff]
      %v1451 = vld [vmem:[%s314 + $0x67] sm:$0xff]
      %v1452 = vld [vmem:[%s314 + $0x6f] sm:$0xff]
      %v1453 = vld [vmem:[%s314 + $0x77] sm:$0xff]
      %v1454 = vld [vmem:[%s314 + $0x7f] sm:$0xff]
      %v1455 = vld [vmem:[%s314 + $0x87] sm:$0xff]
      %v1456 = vld [vmem:[%s314 + $0x8f] sm:$0xff]
      %v1457 = vld [vmem:[%s314 + $0x97] sm:$0xff]
      %v1458 = vld [vmem:[%s314 + $0x9f] sm:$0xff]
      %v1459 = vld [vmem:[%s314 + $0xa7] sm:$0xff]
      %v1460 = vld [vmem:[%s314 + $0xaf] sm:$0xff]
      %v1461 = vld [vmem:[%s314 + $0xb7] sm:$0xff]
      %v1462 = vld [vmem:[%s314 + $0xbf] sm:$0xff]
      %v1463 = vld [vmem:[%s314 + $0xc7] sm:$0xff]
      %v1464 = vld [vmem:[%s314 + $0xcf] sm:$0xff]
      %v1465 = vld [vmem:[%s314 + $0xd7] sm:$0xff]
      %v1466 = vld [vmem:[%s314 + $0xdf] sm:$0xff]
      %v1467 = vld [vmem:[%s314 + $0xe7] sm:$0xff]
      %v1468 = vld [vmem:[%s314 + $0xef] sm:$0xff]
      %v1469 = vld [vmem:[%s314 + $0xf7] sm:$0xff]
      %v1470 = vld [vmem:[%s314 + $0xff] sm:$0xff]
      %v1471 = vld [vmem:[%s314 + $0x107] sm:$0xff]
      %v1472 = vld [vmem:[%s314 + $0x10f] sm:$0xff]
      %v1473 = vld [vmem:[%s314 + $0x117] sm:$0xff]
      %v1474 = vld [vmem:[%s314 + $0x11f] sm:$0xff]
      %v1475 = vld [vmem:[%s314 + $0x127] sm:$0xff]
      %v1476 = vld [vmem:[%s314 + $0x12f] sm:$0xff]
      %v1477 = vld [vmem:[%s314 + $0x137] sm:$0xff]
      %v1478 = vld [vmem:[%s314 + $0x13f] sm:$0xff]
      %v1479 = vld [vmem:[%s314 + $0x147] sm:$0xff]
      %v1480 = vpack.c.bf16 %v1440, %v1439
      %v1481 = vpack.c.bf16 %v1442, %v1441
      %v1482 = vpack.c.bf16 %v1444, %v1443
      %v1483 = vpack.c.bf16 %v1446, %v1445
      %v1484 = vpack.c.bf16 %v1448, %v1447
      %v1485 = vpack.c.bf16 %v1450, %v1449
      %v1486 = vpack.c.bf16 %v1452, %v1451
      %v1487 = vpack.c.bf16 %v1454, %v1453
      %v1488 = vpack.c.bf16 %v1456, %v1455
      %v1489 = vpack.c.bf16 %v1458, %v1457
      %v1490 = vpack.c.bf16 %v1460, %v1459
      %v1491 = vpack.c.bf16 %v1462, %v1461
      %v1492 = vpack.c.bf16 %v1464, %v1463
      %v1493 = vpack.c.bf16 %v1466, %v1465
      %v1494 = vpack.c.bf16 %v1468, %v1467
      %v1495 = vpack.c.bf16 %v1470, %v1469
      %v1496 = vpack.c.bf16 %v1472, %v1471
      %v1497 = vpack.c.bf16 %v1474, %v1473
      %v1498 = vpack.c.bf16 %v1476, %v1475
      %v1499 = vpack.c.bf16 %v1478, %v1477
      %v1500 = vpack.c.bf16 %v1479, %v1479
      %s1501 = scalar_lea.vmem %s4, 128
      %v1502 = vld [vmem:[%s1501] sm:$0xf]
      %v1503 = vld [vmem:[%s1501 + $0x4] sm:$0xf]
      %v1504 = vld [vmem:[%s1501 + $0x8] sm:$0xf]
      %v1505 = vld [vmem:[%s1501 + $0xc] sm:$0xf]
      %v1506 = vld [vmem:[%s1501 + $0x10] sm:$0xf]
      %v1507 = vld [vmem:[%s1501 + $0x14] sm:$0xf]
      %v1508 = vld [vmem:[%s1501 + $0x18] sm:$0xf]
      %v1509 = vld [vmem:[%s1501 + $0x1c] sm:$0xf]
      %v1510 = vld [vmem:[%s1501 + $0x20] sm:$0xf]
      %v1511 = vld [vmem:[%s1501 + $0x24] sm:$0xf]
      %v1512 = vld [vmem:[%s1501 + $0x28] sm:$0xf]
      %v1513 = vld [vmem:[%s1501 + $0x2c] sm:$0xf]
      %v1514 = vld [vmem:[%s1501 + $0x30] sm:$0xf]
      %v1515 = vld [vmem:[%s1501 + $0x34] sm:$0xf]
      %v1516 = vld [vmem:[%s1501 + $0x38] sm:$0xf]
      %v1517 = vld [vmem:[%s1501 + $0x3c] sm:$0xf]
      %v1534 = vunpack.c.l.b16 %v1502
      %v1535 = vunpack.c.l.b16 %v1503
      %v1536 = vunpack.c.l.b16 %v1504
      %v1537 = vunpack.c.l.b16 %v1505
      %v1538 = vunpack.c.l.b16 %v1506
      %v1539 = vunpack.c.l.b16 %v1507
      %v1540 = vunpack.c.l.b16 %v1508
      %v1541 = vunpack.c.l.b16 %v1509
      %v1542 = vunpack.c.l.b16 %v1510
      %v1543 = vunpack.c.l.b16 %v1511
      %v1544 = vunpack.c.l.b16 %v1512
      %v1545 = vunpack.c.l.b16 %v1513
      %v1546 = vunpack.c.l.b16 %v1514
      %v1547 = vunpack.c.l.b16 %v1515
      %v1548 = vunpack.c.l.b16 %v1516
      %v1549 = vunpack.c.l.b16 %v1517
      %v1550 = vpack.c.b16 %v1535, %v1534
      %v1551 = vpack.c.b16 %v1537, %v1536
      %v1552 = vpack.c.b16 %v1539, %v1538
      %v1553 = vpack.c.b16 %v1541, %v1540
      %v1554 = vpack.c.b16 %v1543, %v1542
      %v1555 = vpack.c.b16 %v1545, %v1544
      %v1556 = vpack.c.b16 %v1547, %v1546
      %v1557 = vpack.c.b16 %v1549, %v1548
      %1566 = vmatprep.subr.bf16.mxu0 0
      %1567 = vmatpush1.bf16.msra.mxu0 %v1557
      %1568 = vmatprep.subr.bf16.mxu0 0
      %1569 = vmatpush1.bf16.msra.mxu0 %v1556
      %1570 = vmatprep.subr.bf16.mxu0 0
      %1571 = vmatpush1.bf16.msra.mxu0 %v1555
      %1572 = vmatprep.subr.bf16.mxu0 0
      %1573 = vmatpush1.bf16.msra.mxu0 %v1554
      %1574 = vmatprep.subr.bf16.mxu0 0
      %1575 = vmatpush1.bf16.msra.mxu0 %v1553
      %1576 = vmatprep.subr.bf16.mxu0 0
      %1577 = vmatpush1.bf16.msra.mxu0 %v1552
      %1578 = vmatprep.subr.bf16.mxu0 0
      %1579 = vmatpush1.bf16.msra.mxu0 %v1551
      %1580 = vmatprep.subr.bf16.mxu0 0
      %1581 = vmatpush1.bf16.msra.mxu0 %v1550
      %1582 = vmatprep.subr.bf16.mxu0 0
      %1583 = vmatpush2.bf16.msra.mxu0 0
      %1584 = vmatprep.subr.bf16.mxu0 0
      %1585 = vmatpush2.bf16.msra.mxu0 0
      %1586 = vmatprep.subr.bf16.mxu0 0
      %1587 = vmatpush2.bf16.msra.mxu0 0
      %1588 = vmatprep.subr.bf16.mxu0 0
      %1589 = vmatpush2.bf16.msra.mxu0 0
      %1590 = vmatprep.subr.bf16.mxu0 0
      %1591 = vmatpush2.bf16.msra.mxu0 0
      %1592 = vmatprep.subr.bf16.mxu0 0
      %1593 = vmatpush2.bf16.msra.mxu0 0
      %1594 = vmatprep.subr.bf16.mxu0 0
      %1595 = vmatpush2.bf16.msra.mxu0 0
      %1596 = vmatprep.subr.bf16.mxu0 0
      %1597 = vmatpush2.bf16.msra.mxu0 0
      %1598 = vmatprep.mubr.bf16.mxu0 0
      %1599 = vmatmul.mubr.bf16.gmra.mxu0 %v1480
      %v1600 = vpop.f32.mrf.mxu0
      %v1601 = vadd.f32 0.0, %v1600
      %v1602 = vpop.f32.mrf.mxu0
      %v1603 = vpop.f32.mrf.mxu0
      %v1604 = vadd.f32 0.0, %v1603
      %v1605 = vpop.f32.mrf.mxu0
      %1606 = vmatprep.mubr.bf16.mxu0 0
      %1607 = vmatmul.mubr.bf16.gmra.mxu0 %v1481
      %v1608 = vpop.f32.mrf.mxu0
      %v1609 = vadd.f32 0.0, %v1608
      %v1610 = vpop.f32.mrf.mxu0
      %v1611 = vpop.f32.mrf.mxu0
      %v1612 = vadd.f32 0.0, %v1611
      %v1613 = vpop.f32.mrf.mxu0
      %1614 = vmatprep.mubr.bf16.mxu0 0
      %1615 = vmatmul.mubr.bf16.gmra.mxu0 %v1482
      %v1616 = vpop.f32.mrf.mxu0
      %v1617 = vadd.f32 0.0, %v1616
      %v1618 = vpop.f32.mrf.mxu0
      %v1619 = vpop.f32.mrf.mxu0
      %v1620 = vadd.f32 0.0, %v1619
      %v1621 = vpop.f32.mrf.mxu0
      %1622 = vmatprep.mubr.bf16.mxu0 0
      %1623 = vmatmul.mubr.bf16.gmra.mxu0 %v1483
      %v1624 = vpop.f32.mrf.mxu0
      %v1625 = vadd.f32 0.0, %v1624
      %v1626 = vpop.f32.mrf.mxu0
      %v1627 = vpop.f32.mrf.mxu0
      %v1628 = vadd.f32 0.0, %v1627
      %v1629 = vpop.f32.mrf.mxu0
      %1630 = vmatprep.mubr.bf16.mxu0 0
      %1631 = vmatmul.mubr.bf16.gmra.mxu0 %v1484
      %v1632 = vpop.f32.mrf.mxu0
      %v1633 = vadd.f32 0.0, %v1632
      %v1634 = vpop.f32.mrf.mxu0
      %v1635 = vpop.f32.mrf.mxu0
      %v1636 = vadd.f32 0.0, %v1635
      %v1637 = vpop.f32.mrf.mxu0
      %1638 = vmatprep.mubr.bf16.mxu0 0
      %1639 = vmatmul.mubr.bf16.gmra.mxu0 %v1485
      %v1640 = vpop.f32.mrf.mxu0
      %v1641 = vadd.f32 0.0, %v1640
      %v1642 = vpop.f32.mrf.mxu0
      %v1643 = vpop.f32.mrf.mxu0
      %v1644 = vadd.f32 0.0, %v1643
      %v1645 = vpop.f32.mrf.mxu0
      %1646 = vmatprep.mubr.bf16.mxu0 0
      %1647 = vmatmul.mubr.bf16.gmra.mxu0 %v1486
      %v1648 = vpop.f32.mrf.mxu0
      %v1649 = vadd.f32 0.0, %v1648
      %v1650 = vpop.f32.mrf.mxu0
      %v1651 = vpop.f32.mrf.mxu0
      %v1652 = vadd.f32 0.0, %v1651
      %v1653 = vpop.f32.mrf.mxu0
      %1654 = vmatprep.mubr.bf16.mxu0 0
      %1655 = vmatmul.mubr.bf16.gmra.mxu0 %v1487
      %v1656 = vpop.f32.mrf.mxu0
      %v1657 = vadd.f32 0.0, %v1656
      %v1658 = vpop.f32.mrf.mxu0
      %v1659 = vpop.f32.mrf.mxu0
      %v1660 = vadd.f32 0.0, %v1659
      %v1661 = vpop.f32.mrf.mxu0
      %1662 = vmatprep.mubr.bf16.mxu0 0
      %1663 = vmatmul.mubr.bf16.gmra.mxu0 %v1488
      %v1664 = vpop.f32.mrf.mxu0
      %v1665 = vadd.f32 0.0, %v1664
      %v1666 = vpop.f32.mrf.mxu0
      %v1667 = vpop.f32.mrf.mxu0
      %v1668 = vadd.f32 0.0, %v1667
      %v1669 = vpop.f32.mrf.mxu0
      %1670 = vmatprep.mubr.bf16.mxu0 0
      %1671 = vmatmul.mubr.bf16.gmra.mxu0 %v1489
      %v1672 = vpop.f32.mrf.mxu0
      %v1673 = vadd.f32 0.0, %v1672
      %v1674 = vpop.f32.mrf.mxu0
      %v1675 = vpop.f32.mrf.mxu0
      %v1676 = vadd.f32 0.0, %v1675
      %v1677 = vpop.f32.mrf.mxu0
      %1678 = vmatprep.mubr.bf16.mxu0 0
      %1679 = vmatmul.mubr.bf16.gmra.mxu0 %v1490
      %v1680 = vpop.f32.mrf.mxu0
      %v1681 = vadd.f32 0.0, %v1680
      %v1682 = vpop.f32.mrf.mxu0
      %v1683 = vpop.f32.mrf.mxu0
      %v1684 = vadd.f32 0.0, %v1683
      %v1685 = vpop.f32.mrf.mxu0
      %1686 = vmatprep.mubr.bf16.mxu0 0
      %1687 = vmatmul.mubr.bf16.gmra.mxu0 %v1491
      %v1688 = vpop.f32.mrf.mxu0
      %v1689 = vadd.f32 0.0, %v1688
      %v1690 = vpop.f32.mrf.mxu0
      %v1691 = vpop.f32.mrf.mxu0
      %v1692 = vadd.f32 0.0, %v1691
      %v1693 = vpop.f32.mrf.mxu0
      %1694 = vmatprep.mubr.bf16.mxu0 0
      %1695 = vmatmul.mubr.bf16.gmra.mxu0 %v1492
      %v1696 = vpop.f32.mrf.mxu0
      %v1697 = vadd.f32 0.0, %v1696
      %v1698 = vpop.f32.mrf.mxu0
      %v1699 = vpop.f32.mrf.mxu0
      %v1700 = vadd.f32 0.0, %v1699
      %v1701 = vpop.f32.mrf.mxu0
      %1702 = vmatprep.mubr.bf16.mxu0 0
      %1703 = vmatmul.mubr.bf16.gmra.mxu0 %v1493
      %v1704 = vpop.f32.mrf.mxu0
      %v1705 = vadd.f32 0.0, %v1704
      %v1706 = vpop.f32.mrf.mxu0
      %v1707 = vpop.f32.mrf.mxu0
      %v1708 = vadd.f32 0.0, %v1707
      %v1709 = vpop.f32.mrf.mxu0
      %1710 = vmatprep.mubr.bf16.mxu0 0
      %1711 = vmatmul.mubr.bf16.gmra.mxu0 %v1494
      %v1712 = vpop.f32.mrf.mxu0
      %v1713 = vadd.f32 0.0, %v1712
      %v1714 = vpop.f32.mrf.mxu0
      %v1715 = vpop.f32.mrf.mxu0
      %v1716 = vadd.f32 0.0, %v1715
      %v1717 = vpop.f32.mrf.mxu0
      %1718 = vmatprep.mubr.bf16.mxu0 0
      %1719 = vmatmul.mubr.bf16.gmra.mxu0 %v1495
      %v1720 = vpop.f32.mrf.mxu0
      %v1721 = vadd.f32 0.0, %v1720
      %v1722 = vpop.f32.mrf.mxu0
      %v1723 = vpop.f32.mrf.mxu0
      %v1724 = vadd.f32 0.0, %v1723
      %v1725 = vpop.f32.mrf.mxu0
      %1726 = vmatprep.mubr.bf16.mxu0 0
      %1727 = vmatmul.mubr.bf16.gmra.mxu0 %v1496
      %v1728 = vpop.f32.mrf.mxu0
      %v1729 = vadd.f32 0.0, %v1728
      %v1730 = vpop.f32.mrf.mxu0
      %v1731 = vpop.f32.mrf.mxu0
      %v1732 = vadd.f32 0.0, %v1731
      %v1733 = vpop.f32.mrf.mxu0
      %1734 = vmatprep.mubr.bf16.mxu0 0
      %1735 = vmatmul.mubr.bf16.gmra.mxu0 %v1497
      %v1736 = vpop.f32.mrf.mxu0
      %v1737 = vadd.f32 0.0, %v1736
      %v1738 = vpop.f32.mrf.mxu0
      %v1739 = vpop.f32.mrf.mxu0
      %v1740 = vadd.f32 0.0, %v1739
      %v1741 = vpop.f32.mrf.mxu0
      %1742 = vmatprep.mubr.bf16.mxu0 0
      %1743 = vmatmul.mubr.bf16.gmra.mxu0 %v1498
      %v1744 = vpop.f32.mrf.mxu0
      %v1745 = vadd.f32 0.0, %v1744
      %v1746 = vpop.f32.mrf.mxu0
      %v1747 = vpop.f32.mrf.mxu0
      %v1748 = vadd.f32 0.0, %v1747
      %v1749 = vpop.f32.mrf.mxu0
      %1750 = vmatprep.mubr.bf16.mxu0 0
      %1751 = vmatmul.mubr.bf16.gmra.mxu0 %v1499
      %v1752 = vpop.f32.mrf.mxu0
      %v1753 = vadd.f32 0.0, %v1752
      %v1754 = vpop.f32.mrf.mxu0
      %v1755 = vpop.f32.mrf.mxu0
      %v1756 = vadd.f32 0.0, %v1755
      %v1757 = vpop.f32.mrf.mxu0
      %1758 = vmatprep.mubr.bf16.mxu0 0
      %1759 = vmatmul.mubr.bf16.gmra.mxu0 %v1500
      %v1760 = vpop.f32.mrf.mxu0
      %v1761 = vadd.f32 0.0, %v1760
      %v1762 = vpop.f32.mrf.mxu0
      %v1763 = vpop.f32.mrf.mxu0
      %v1764 = vpop.f32.mrf.mxu0
      %1765 = vdwg.mxu0
      %v1766 = vadd.f32 %v1274, %v1601
      %v1767 = vadd.f32 %v1277, %v1604
      %v1768 = vadd.f32 %v1282, %v1609
      %v1769 = vadd.f32 %v1285, %v1612
      %v1770 = vadd.f32 %v1290, %v1617
      %v1771 = vadd.f32 %v1293, %v1620
      %v1772 = vadd.f32 %v1298, %v1625
      %v1773 = vadd.f32 %v1301, %v1628
      %v1774 = vadd.f32 %v1306, %v1633
      %v1775 = vadd.f32 %v1309, %v1636
      %v1776 = vadd.f32 %v1314, %v1641
      %v1777 = vadd.f32 %v1317, %v1644
      %v1778 = vadd.f32 %v1322, %v1649
      %v1779 = vadd.f32 %v1325, %v1652
      %v1780 = vadd.f32 %v1330, %v1657
      %v1781 = vadd.f32 %v1333, %v1660
      %v1782 = vadd.f32 %v1338, %v1665
      %v1783 = vadd.f32 %v1341, %v1668
      %v1784 = vadd.f32 %v1346, %v1673
      %v1785 = vadd.f32 %v1349, %v1676
      %v1786 = vadd.f32 %v1354, %v1681
      %v1787 = vadd.f32 %v1357, %v1684
      %v1788 = vadd.f32 %v1362, %v1689
      %v1789 = vadd.f32 %v1365, %v1692
      %v1790 = vadd.f32 %v1370, %v1697
      %v1791 = vadd.f32 %v1373, %v1700
      %v1792 = vadd.f32 %v1378, %v1705
      %v1793 = vadd.f32 %v1381, %v1708
      %v1794 = vadd.f32 %v1386, %v1713
      %v1795 = vadd.f32 %v1389, %v1716
      %v1796 = vadd.f32 %v1394, %v1721
      %v1797 = vadd.f32 %v1397, %v1724
      %v1798 = vadd.f32 %v1402, %v1729
      %v1799 = vadd.f32 %v1405, %v1732
      %v1800 = vadd.f32 %v1410, %v1737
      %v1801 = vadd.f32 %v1413, %v1740
      %v1802 = vadd.f32 %v1418, %v1745
      %v1803 = vadd.f32 %v1421, %v1748
      %v1804 = vadd.f32 %v1426, %v1753
      %v1805 = vadd.f32 %v1429, %v1756
      %v1806 = vadd.f32 %v1434, %v1761
      %v1807 = vld [vmem:[%s314 + $0x17] sm:$0xff]
      %v1808 = vld [vmem:[%s314 + $0x1f] sm:$0xff]
      %v1809 = vld [vmem:[%s314 + $0x27] sm:$0xff]
      %v1810 = vld [vmem:[%s314 + $0x2f] sm:$0xff]
      %v1811 = vld [vmem:[%s314 + $0x37] sm:$0xff]
      %v1812 = vld [vmem:[%s314 + $0x3f] sm:$0xff]
      %v1813 = vld [vmem:[%s314 + $0x47] sm:$0xff]
      %v1814 = vld [vmem:[%s314 + $0x4f] sm:$0xff]
      %v1815 = vld [vmem:[%s314 + $0x57] sm:$0xff]
      %v1816 = vld [vmem:[%s314 + $0x5f] sm:$0xff]
      %v1817 = vld [vmem:[%s314 + $0x67] sm:$0xff]
      %v1818 = vld [vmem:[%s314 + $0x6f] sm:$0xff]
      %v1819 = vld [vmem:[%s314 + $0x77] sm:$0xff]
      %v1820 = vld [vmem:[%s314 + $0x7f] sm:$0xff]
      %v1821 = vld [vmem:[%s314 + $0x87] sm:$0xff]
      %v1822 = vld [vmem:[%s314 + $0x8f] sm:$0xff]
      %v1823 = vld [vmem:[%s314 + $0x97] sm:$0xff]
      %v1824 = vld [vmem:[%s314 + $0x9f] sm:$0xff]
      %v1825 = vld [vmem:[%s314 + $0xa7] sm:$0xff]
      %v1826 = vld [vmem:[%s314 + $0xaf] sm:$0xff]
      %v1827 = vld [vmem:[%s314 + $0xb7] sm:$0xff]
      %v1828 = vld [vmem:[%s314 + $0xbf] sm:$0xff]
      %v1829 = vld [vmem:[%s314 + $0xc7] sm:$0xff]
      %v1830 = vld [vmem:[%s314 + $0xcf] sm:$0xff]
      %v1831 = vld [vmem:[%s314 + $0xd7] sm:$0xff]
      %v1832 = vld [vmem:[%s314 + $0xdf] sm:$0xff]
      %v1833 = vld [vmem:[%s314 + $0xe7] sm:$0xff]
      %v1834 = vld [vmem:[%s314 + $0xef] sm:$0xff]
      %v1835 = vld [vmem:[%s314 + $0xf7] sm:$0xff]
      %v1836 = vld [vmem:[%s314 + $0xff] sm:$0xff]
      %v1837 = vld [vmem:[%s314 + $0x107] sm:$0xff]
      %v1838 = vld [vmem:[%s314 + $0x10f] sm:$0xff]
      %v1839 = vld [vmem:[%s314 + $0x117] sm:$0xff]
      %v1840 = vld [vmem:[%s314 + $0x11f] sm:$0xff]
      %v1841 = vld [vmem:[%s314 + $0x127] sm:$0xff]
      %v1842 = vld [vmem:[%s314 + $0x12f] sm:$0xff]
      %v1843 = vld [vmem:[%s314 + $0x137] sm:$0xff]
      %v1844 = vld [vmem:[%s314 + $0x13f] sm:$0xff]
      %v1845 = vld [vmem:[%s314 + $0x147] sm:$0xff]
      %v1846 = vld [vmem:[%s314 + $0x14f] sm:$0xff]
      %v1847 = vld [vmem:[%s314 + $0x157] sm:$0xff]
      %v1848 = vpack.c.bf16 %v1808, %v1807
      %v1849 = vpack.c.bf16 %v1810, %v1809
      %v1850 = vpack.c.bf16 %v1812, %v1811
      %v1851 = vpack.c.bf16 %v1814, %v1813
      %v1852 = vpack.c.bf16 %v1816, %v1815
      %v1853 = vpack.c.bf16 %v1818, %v1817
      %v1854 = vpack.c.bf16 %v1820, %v1819
      %v1855 = vpack.c.bf16 %v1822, %v1821
      %v1856 = vpack.c.bf16 %v1824, %v1823
      %v1857 = vpack.c.bf16 %v1826, %v1825
      %v1858 = vpack.c.bf16 %v1828, %v1827
      %v1859 = vpack.c.bf16 %v1830, %v1829
      %v1860 = vpack.c.bf16 %v1832, %v1831
      %v1861 = vpack.c.bf16 %v1834, %v1833
      %v1862 = vpack.c.bf16 %v1836, %v1835
      %v1863 = vpack.c.bf16 %v1838, %v1837
      %v1864 = vpack.c.bf16 %v1840, %v1839
      %v1865 = vpack.c.bf16 %v1842, %v1841
      %v1866 = vpack.c.bf16 %v1844, %v1843
      %v1867 = vpack.c.bf16 %v1846, %v1845
      %v1868 = vpack.c.bf16 %v1847, %v1847
      %s1869 = scalar_lea.vmem %s4, 192
      %v1870 = vld [vmem:[%s1869] sm:$0xf]
      %v1871 = vld [vmem:[%s1869 + $0x4] sm:$0xf]
      %v1872 = vld [vmem:[%s1869 + $0x8] sm:$0xf]
      %v1873 = vld [vmem:[%s1869 + $0xc] sm:$0xf]
      %v1874 = vld [vmem:[%s1869 + $0x10] sm:$0xf]
      %v1875 = vld [vmem:[%s1869 + $0x14] sm:$0xf]
      %v1876 = vld [vmem:[%s1869 + $0x18] sm:$0xf]
      %v1877 = vld [vmem:[%s1869 + $0x1c] sm:$0xf]
      %v1878 = vld [vmem:[%s1869 + $0x20] sm:$0xf]
      %v1879 = vld [vmem:[%s1869 + $0x24] sm:$0xf]
      %v1880 = vld [vmem:[%s1869 + $0x28] sm:$0xf]
      %v1881 = vld [vmem:[%s1869 + $0x2c] sm:$0xf]
      %v1882 = vld [vmem:[%s1869 + $0x30] sm:$0xf]
      %v1883 = vld [vmem:[%s1869 + $0x34] sm:$0xf]
      %v1884 = vld [vmem:[%s1869 + $0x38] sm:$0xf]
      %v1885 = vld [vmem:[%s1869 + $0x3c] sm:$0xf]
      %v1902 = vunpack.c.l.b16 %v1870
      %v1903 = vunpack.c.l.b16 %v1871
      %v1904 = vunpack.c.l.b16 %v1872
      %v1905 = vunpack.c.l.b16 %v1873
      %v1906 = vunpack.c.l.b16 %v1874
      %v1907 = vunpack.c.l.b16 %v1875
      %v1908 = vunpack.c.l.b16 %v1876
      %v1909 = vunpack.c.l.b16 %v1877
      %v1910 = vunpack.c.l.b16 %v1878
      %v1911 = vunpack.c.l.b16 %v1879
      %v1912 = vunpack.c.l.b16 %v1880
      %v1913 = vunpack.c.l.b16 %v1881
      %v1914 = vunpack.c.l.b16 %v1882
      %v1915 = vunpack.c.l.b16 %v1883
      %v1916 = vunpack.c.l.b16 %v1884
      %v1917 = vunpack.c.l.b16 %v1885
      %v1918 = vpack.c.b16 %v1903, %v1902
      %v1919 = vpack.c.b16 %v1905, %v1904
      %v1920 = vpack.c.b16 %v1907, %v1906
      %v1921 = vpack.c.b16 %v1909, %v1908
      %v1922 = vpack.c.b16 %v1911, %v1910
      %v1923 = vpack.c.b16 %v1913, %v1912
      %v1924 = vpack.c.b16 %v1915, %v1914
      %v1925 = vpack.c.b16 %v1917, %v1916
      %1934 = vmatprep.subr.bf16.mxu0 0
      %1935 = vmatpush1.bf16.msra.mxu0 %v1925
      %1936 = vmatprep.subr.bf16.mxu0 0
      %1937 = vmatpush1.bf16.msra.mxu0 %v1924
      %1938 = vmatprep.subr.bf16.mxu0 0
      %1939 = vmatpush1.bf16.msra.mxu0 %v1923
      %1940 = vmatprep.subr.bf16.mxu0 0
      %1941 = vmatpush1.bf16.msra.mxu0 %v1922
      %1942 = vmatprep.subr.bf16.mxu0 0
      %1943 = vmatpush1.bf16.msra.mxu0 %v1921
      %1944 = vmatprep.subr.bf16.mxu0 0
      %1945 = vmatpush1.bf16.msra.mxu0 %v1920
      %1946 = vmatprep.subr.bf16.mxu0 0
      %1947 = vmatpush1.bf16.msra.mxu0 %v1919
      %1948 = vmatprep.subr.bf16.mxu0 0
      %1949 = vmatpush1.bf16.msra.mxu0 %v1918
      %1950 = vmatprep.subr.bf16.mxu0 0
      %1951 = vmatpush2.bf16.msra.mxu0 0
      %1952 = vmatprep.subr.bf16.mxu0 0
      %1953 = vmatpush2.bf16.msra.mxu0 0
      %1954 = vmatprep.subr.bf16.mxu0 0
      %1955 = vmatpush2.bf16.msra.mxu0 0
      %1956 = vmatprep.subr.bf16.mxu0 0
      %1957 = vmatpush2.bf16.msra.mxu0 0
      %1958 = vmatprep.subr.bf16.mxu0 0
      %1959 = vmatpush2.bf16.msra.mxu0 0
      %1960 = vmatprep.subr.bf16.mxu0 0
      %1961 = vmatpush2.bf16.msra.mxu0 0
      %1962 = vmatprep.subr.bf16.mxu0 0
      %1963 = vmatpush2.bf16.msra.mxu0 0
      %1964 = vmatprep.subr.bf16.mxu0 0
      %1965 = vmatpush2.bf16.msra.mxu0 0
      %1966 = vmatprep.mubr.bf16.mxu0 0
      %1967 = vmatmul.mubr.bf16.gmra.mxu0 %v1848
      %v1968 = vpop.f32.mrf.mxu0
      %v1969 = vadd.f32 0.0, %v1968
      %v1970 = vpop.f32.mrf.mxu0
      %v1971 = vpop.f32.mrf.mxu0
      %v1972 = vadd.f32 0.0, %v1971
      %v1973 = vpop.f32.mrf.mxu0
      %1974 = vmatprep.mubr.bf16.mxu0 0
      %1975 = vmatmul.mubr.bf16.gmra.mxu0 %v1849
      %v1976 = vpop.f32.mrf.mxu0
      %v1977 = vadd.f32 0.0, %v1976
      %v1978 = vpop.f32.mrf.mxu0
      %v1979 = vpop.f32.mrf.mxu0
      %v1980 = vadd.f32 0.0, %v1979
      %v1981 = vpop.f32.mrf.mxu0
      %1982 = vmatprep.mubr.bf16.mxu0 0
      %1983 = vmatmul.mubr.bf16.gmra.mxu0 %v1850
      %v1984 = vpop.f32.mrf.mxu0
      %v1985 = vadd.f32 0.0, %v1984
      %v1986 = vpop.f32.mrf.mxu0
      %v1987 = vpop.f32.mrf.mxu0
      %v1988 = vadd.f32 0.0, %v1987
      %v1989 = vpop.f32.mrf.mxu0
      %1990 = vmatprep.mubr.bf16.mxu0 0
      %1991 = vmatmul.mubr.bf16.gmra.mxu0 %v1851
      %v1992 = vpop.f32.mrf.mxu0
      %v1993 = vadd.f32 0.0, %v1992
      %v1994 = vpop.f32.mrf.mxu0
      %v1995 = vpop.f32.mrf.mxu0
      %v1996 = vadd.f32 0.0, %v1995
      %v1997 = vpop.f32.mrf.mxu0
      %1998 = vmatprep.mubr.bf16.mxu0 0
      %1999 = vmatmul.mubr.bf16.gmra.mxu0 %v1852
      %v2000 = vpop.f32.mrf.mxu0
      %v2001 = vadd.f32 0.0, %v2000
      %v2002 = vpop.f32.mrf.mxu0
      %v2003 = vpop.f32.mrf.mxu0
      %v2004 = vadd.f32 0.0, %v2003
      %v2005 = vpop.f32.mrf.mxu0
      %2006 = vmatprep.mubr.bf16.mxu0 0
      %2007 = vmatmul.mubr.bf16.gmra.mxu0 %v1853
      %v2008 = vpop.f32.mrf.mxu0
      %v2009 = vadd.f32 0.0, %v2008
      %v2010 = vpop.f32.mrf.mxu0
      %v2011 = vpop.f32.mrf.mxu0
      %v2012 = vadd.f32 0.0, %v2011
      %v2013 = vpop.f32.mrf.mxu0
      %2014 = vmatprep.mubr.bf16.mxu0 0
      %2015 = vmatmul.mubr.bf16.gmra.mxu0 %v1854
      %v2016 = vpop.f32.mrf.mxu0
      %v2017 = vadd.f32 0.0, %v2016
      %v2018 = vpop.f32.mrf.mxu0
      %v2019 = vpop.f32.mrf.mxu0
      %v2020 = vadd.f32 0.0, %v2019
      %v2021 = vpop.f32.mrf.mxu0
      %2022 = vmatprep.mubr.bf16.mxu0 0
      %2023 = vmatmul.mubr.bf16.gmra.mxu0 %v1855
      %v2024 = vpop.f32.mrf.mxu0
      %v2025 = vadd.f32 0.0, %v2024
      %v2026 = vpop.f32.mrf.mxu0
      %v2027 = vpop.f32.mrf.mxu0
      %v2028 = vadd.f32 0.0, %v2027
      %v2029 = vpop.f32.mrf.mxu0
      %2030 = vmatprep.mubr.bf16.mxu0 0
      %2031 = vmatmul.mubr.bf16.gmra.mxu0 %v1856
      %v2032 = vpop.f32.mrf.mxu0
      %v2033 = vadd.f32 0.0, %v2032
      %v2034 = vpop.f32.mrf.mxu0
      %v2035 = vpop.f32.mrf.mxu0
      %v2036 = vadd.f32 0.0, %v2035
      %v2037 = vpop.f32.mrf.mxu0
      %2038 = vmatprep.mubr.bf16.mxu0 0
      %2039 = vmatmul.mubr.bf16.gmra.mxu0 %v1857
      %v2040 = vpop.f32.mrf.mxu0
      %v2041 = vadd.f32 0.0, %v2040
      %v2042 = vpop.f32.mrf.mxu0
      %v2043 = vpop.f32.mrf.mxu0
      %v2044 = vadd.f32 0.0, %v2043
      %v2045 = vpop.f32.mrf.mxu0
      %2046 = vmatprep.mubr.bf16.mxu0 0
      %2047 = vmatmul.mubr.bf16.gmra.mxu0 %v1858
      %v2048 = vpop.f32.mrf.mxu0
      %v2049 = vadd.f32 0.0, %v2048
      %v2050 = vpop.f32.mrf.mxu0
      %v2051 = vpop.f32.mrf.mxu0
      %v2052 = vadd.f32 0.0, %v2051
      %v2053 = vpop.f32.mrf.mxu0
      %2054 = vmatprep.mubr.bf16.mxu0 0
      %2055 = vmatmul.mubr.bf16.gmra.mxu0 %v1859
      %v2056 = vpop.f32.mrf.mxu0
      %v2057 = vadd.f32 0.0, %v2056
      %v2058 = vpop.f32.mrf.mxu0
      %v2059 = vpop.f32.mrf.mxu0
      %v2060 = vadd.f32 0.0, %v2059
      %v2061 = vpop.f32.mrf.mxu0
      %2062 = vmatprep.mubr.bf16.mxu0 0
      %2063 = vmatmul.mubr.bf16.gmra.mxu0 %v1860
      %v2064 = vpop.f32.mrf.mxu0
      %v2065 = vadd.f32 0.0, %v2064
      %v2066 = vpop.f32.mrf.mxu0
      %v2067 = vpop.f32.mrf.mxu0
      %v2068 = vadd.f32 0.0, %v2067
      %v2069 = vpop.f32.mrf.mxu0
      %2070 = vmatprep.mubr.bf16.mxu0 0
      %2071 = vmatmul.mubr.bf16.gmra.mxu0 %v1861
      %v2072 = vpop.f32.mrf.mxu0
      %v2073 = vadd.f32 0.0, %v2072
      %v2074 = vpop.f32.mrf.mxu0
      %v2075 = vpop.f32.mrf.mxu0
      %v2076 = vadd.f32 0.0, %v2075
      %v2077 = vpop.f32.mrf.mxu0
      %2078 = vmatprep.mubr.bf16.mxu0 0
      %2079 = vmatmul.mubr.bf16.gmra.mxu0 %v1862
      %v2080 = vpop.f32.mrf.mxu0
      %v2081 = vadd.f32 0.0, %v2080
      %v2082 = vpop.f32.mrf.mxu0
      %v2083 = vpop.f32.mrf.mxu0
      %v2084 = vadd.f32 0.0, %v2083
      %v2085 = vpop.f32.mrf.mxu0
      %2086 = vmatprep.mubr.bf16.mxu0 0
      %2087 = vmatmul.mubr.bf16.gmra.mxu0 %v1863
      %v2088 = vpop.f32.mrf.mxu0
      %v2089 = vadd.f32 0.0, %v2088
      %v2090 = vpop.f32.mrf.mxu0
      %v2091 = vpop.f32.mrf.mxu0
      %v2092 = vadd.f32 0.0, %v2091
      %v2093 = vpop.f32.mrf.mxu0
      %2094 = vmatprep.mubr.bf16.mxu0 0
      %2095 = vmatmul.mubr.bf16.gmra.mxu0 %v1864
      %v2096 = vpop.f32.mrf.mxu0
      %v2097 = vadd.f32 0.0, %v2096
      %v2098 = vpop.f32.mrf.mxu0
      %v2099 = vpop.f32.mrf.mxu0
      %v2100 = vadd.f32 0.0, %v2099
      %v2101 = vpop.f32.mrf.mxu0
      %2102 = vmatprep.mubr.bf16.mxu0 0
      %2103 = vmatmul.mubr.bf16.gmra.mxu0 %v1865
      %v2104 = vpop.f32.mrf.mxu0
      %v2105 = vadd.f32 0.0, %v2104
      %v2106 = vpop.f32.mrf.mxu0
      %v2107 = vpop.f32.mrf.mxu0
      %v2108 = vadd.f32 0.0, %v2107
      %v2109 = vpop.f32.mrf.mxu0
      %2110 = vmatprep.mubr.bf16.mxu0 0
      %2111 = vmatmul.mubr.bf16.gmra.mxu0 %v1866
      %v2112 = vpop.f32.mrf.mxu0
      %v2113 = vadd.f32 0.0, %v2112
      %v2114 = vpop.f32.mrf.mxu0
      %v2115 = vpop.f32.mrf.mxu0
      %v2116 = vadd.f32 0.0, %v2115
      %v2117 = vpop.f32.mrf.mxu0
      %2118 = vmatprep.mubr.bf16.mxu0 0
      %2119 = vmatmul.mubr.bf16.gmra.mxu0 %v1867
      %v2120 = vpop.f32.mrf.mxu0
      %v2121 = vadd.f32 0.0, %v2120
      %v2122 = vpop.f32.mrf.mxu0
      %v2123 = vpop.f32.mrf.mxu0
      %v2124 = vadd.f32 0.0, %v2123
      %v2125 = vpop.f32.mrf.mxu0
      %2126 = vmatprep.mubr.bf16.mxu0 0
      %2127 = vmatmul.mubr.bf16.gmra.mxu0 %v1868
      %v2128 = vpop.f32.mrf.mxu0
      %v2129 = vadd.f32 0.0, %v2128
      %v2130 = vpop.f32.mrf.mxu0
      %v2131 = vpop.f32.mrf.mxu0
      %v2132 = vpop.f32.mrf.mxu0
      %2133 = vdwg.mxu0
      %v2134 = vadd.f32 %v1766, %v1969
      %v2135 = vadd.f32 %v1767, %v1972
      %v2136 = vadd.f32 %v1768, %v1977
      %v2137 = vadd.f32 %v1769, %v1980
      %v2138 = vadd.f32 %v1770, %v1985
      %v2139 = vadd.f32 %v1771, %v1988
      %v2140 = vadd.f32 %v1772, %v1993
      %v2141 = vadd.f32 %v1773, %v1996
      %v2142 = vadd.f32 %v1774, %v2001
      %v2143 = vadd.f32 %v1775, %v2004
      %v2144 = vadd.f32 %v1776, %v2009
      %v2145 = vadd.f32 %v1777, %v2012
      %v2146 = vadd.f32 %v1778, %v2017
      %v2147 = vadd.f32 %v1779, %v2020
      %v2148 = vadd.f32 %v1780, %v2025
      %v2149 = vadd.f32 %v1781, %v2028
      %v2150 = vadd.f32 %v1782, %v2033
      %v2151 = vadd.f32 %v1783, %v2036
      %v2152 = vadd.f32 %v1784, %v2041
      %v2153 = vadd.f32 %v1785, %v2044
      %v2154 = vadd.f32 %v1786, %v2049
      %v2155 = vadd.f32 %v1787, %v2052
      %v2156 = vadd.f32 %v1788, %v2057
      %v2157 = vadd.f32 %v1789, %v2060
      %v2158 = vadd.f32 %v1790, %v2065
      %v2159 = vadd.f32 %v1791, %v2068
      %v2160 = vadd.f32 %v1792, %v2073
      %v2161 = vadd.f32 %v1793, %v2076
      %v2162 = vadd.f32 %v1794, %v2081
      %v2163 = vadd.f32 %v1795, %v2084
      %v2164 = vadd.f32 %v1796, %v2089
      %v2165 = vadd.f32 %v1797, %v2092
      %v2166 = vadd.f32 %v1798, %v2097
      %v2167 = vadd.f32 %v1799, %v2100
      %v2168 = vadd.f32 %v1800, %v2105
      %v2169 = vadd.f32 %v1801, %v2108
      %v2170 = vadd.f32 %v1802, %v2113
      %v2171 = vadd.f32 %v1803, %v2116
      %v2172 = vadd.f32 %v1804, %v2121
      %v2173 = vadd.f32 %v1805, %v2124
      %v2174 = vadd.f32 %v1806, %v2129
      %s2175 = scalar_lea.vmem %s4, 256
      %v2176 = vld [vmem:[%s2175] sm:$0xf]
      %v2177 = vld [vmem:[%s2175 + $0x4] sm:$0xf]
      %v2178 = vld [vmem:[%s2175 + $0x8] sm:$0xf]
      %v2179 = vld [vmem:[%s2175 + $0xc] sm:$0xf]
      %v2180 = vld [vmem:[%s2175 + $0x10] sm:$0xf]
      %v2181 = vld [vmem:[%s2175 + $0x14] sm:$0xf]
      %v2182 = vld [vmem:[%s2175 + $0x18] sm:$0xf]
      %v2183 = vld [vmem:[%s2175 + $0x1c] sm:$0xf]
      %v2184 = vld [vmem:[%s2175 + $0x20] sm:$0xf]
      %v2185 = vld [vmem:[%s2175 + $0x24] sm:$0xf]
      %v2186 = vld [vmem:[%s2175 + $0x28] sm:$0xf]
      %v2187 = vld [vmem:[%s2175 + $0x2c] sm:$0xf]
      %v2188 = vld [vmem:[%s2175 + $0x30] sm:$0xf]
      %v2189 = vld [vmem:[%s2175 + $0x34] sm:$0xf]
      %v2190 = vld [vmem:[%s2175 + $0x38] sm:$0xf]
      %v2191 = vld [vmem:[%s2175 + $0x3c] sm:$0xf]
      %v2208 = vunpack.c.l.b16 %v2176
      %v2209 = vunpack.c.l.b16 %v2177
      %v2210 = vunpack.c.l.b16 %v2178
      %v2211 = vunpack.c.l.b16 %v2179
      %v2212 = vunpack.c.l.b16 %v2180
      %v2213 = vunpack.c.l.b16 %v2181
      %v2214 = vunpack.c.l.b16 %v2182
      %v2215 = vunpack.c.l.b16 %v2183
      %v2216 = vunpack.c.l.b16 %v2184
      %v2217 = vunpack.c.l.b16 %v2185
      %v2218 = vunpack.c.l.b16 %v2186
      %v2219 = vunpack.c.l.b16 %v2187
      %v2220 = vunpack.c.l.b16 %v2188
      %v2221 = vunpack.c.l.b16 %v2189
      %v2222 = vunpack.c.l.b16 %v2190
      %v2223 = vunpack.c.l.b16 %v2191
      %v2224 = vpack.c.b16 %v2209, %v2208
      %v2225 = vpack.c.b16 %v2211, %v2210
      %v2226 = vpack.c.b16 %v2213, %v2212
      %v2227 = vpack.c.b16 %v2215, %v2214
      %v2228 = vpack.c.b16 %v2217, %v2216
      %v2229 = vpack.c.b16 %v2219, %v2218
      %v2230 = vpack.c.b16 %v2221, %v2220
      %v2231 = vpack.c.b16 %v2223, %v2222
      %2240 = vmatprep.subr.bf16.mxu0 0
      %2241 = vmatpush1.bf16.msra.mxu0 %v2231
      %2242 = vmatprep.subr.bf16.mxu0 0
      %2243 = vmatpush1.bf16.msra.mxu0 %v2230
      %2244 = vmatprep.subr.bf16.mxu0 0
      %2245 = vmatpush1.bf16.msra.mxu0 %v2229
      %2246 = vmatprep.subr.bf16.mxu0 0
      %2247 = vmatpush1.bf16.msra.mxu0 %v2228
      %2248 = vmatprep.subr.bf16.mxu0 0
      %2249 = vmatpush1.bf16.msra.mxu0 %v2227
      %2250 = vmatprep.subr.bf16.mxu0 0
      %2251 = vmatpush1.bf16.msra.mxu0 %v2226
      %2252 = vmatprep.subr.bf16.mxu0 0
      %2253 = vmatpush1.bf16.msra.mxu0 %v2225
      %2254 = vmatprep.subr.bf16.mxu0 0
      %2255 = vmatpush1.bf16.msra.mxu0 %v2224
      %2256 = vmatprep.subr.bf16.mxu0 0
      %2257 = vmatpush2.bf16.msra.mxu0 0
      %2258 = vmatprep.subr.bf16.mxu0 0
      %2259 = vmatpush2.bf16.msra.mxu0 0
      %2260 = vmatprep.subr.bf16.mxu0 0
      %2261 = vmatpush2.bf16.msra.mxu0 0
      %2262 = vmatprep.subr.bf16.mxu0 0
      %2263 = vmatpush2.bf16.msra.mxu0 0
      %2264 = vmatprep.subr.bf16.mxu0 0
      %2265 = vmatpush2.bf16.msra.mxu0 0
      %2266 = vmatprep.subr.bf16.mxu0 0
      %2267 = vmatpush2.bf16.msra.mxu0 0
      %2268 = vmatprep.subr.bf16.mxu0 0
      %2269 = vmatpush2.bf16.msra.mxu0 0
      %2270 = vmatprep.subr.bf16.mxu0 0
      %2271 = vmatpush2.bf16.msra.mxu0 0
      %2272 = vmatprep.mubr.bf16.mxu0 0
      %2273 = vmatmul.mubr.bf16.gmra.mxu0 %v412
      %v2274 = vpop.f32.mrf.mxu0
      %v2275 = vadd.f32 0.0, %v2274
      %v2276 = vpop.f32.mrf.mxu0
      %v2277 = vpop.f32.mrf.mxu0
      %v2278 = vadd.f32 0.0, %v2277
      %v2279 = vpop.f32.mrf.mxu0
      %2280 = vmatprep.mubr.bf16.mxu0 0
      %2281 = vmatmul.mubr.bf16.gmra.mxu0 %v413
      %v2282 = vpop.f32.mrf.mxu0
      %v2283 = vadd.f32 0.0, %v2282
      %v2284 = vpop.f32.mrf.mxu0
      %v2285 = vpop.f32.mrf.mxu0
      %v2286 = vadd.f32 0.0, %v2285
      %v2287 = vpop.f32.mrf.mxu0
      %2288 = vmatprep.mubr.bf16.mxu0 0
      %2289 = vmatmul.mubr.bf16.gmra.mxu0 %v414
      %v2290 = vpop.f32.mrf.mxu0
      %v2291 = vadd.f32 0.0, %v2290
      %v2292 = vpop.f32.mrf.mxu0
      %v2293 = vpop.f32.mrf.mxu0
      %v2294 = vadd.f32 0.0, %v2293
      %v2295 = vpop.f32.mrf.mxu0
      %2296 = vmatprep.mubr.bf16.mxu0 0
      %2297 = vmatmul.mubr.bf16.gmra.mxu0 %v415
      %v2298 = vpop.f32.mrf.mxu0
      %v2299 = vadd.f32 0.0, %v2298
      %v2300 = vpop.f32.mrf.mxu0
      %v2301 = vpop.f32.mrf.mxu0
      %v2302 = vadd.f32 0.0, %v2301
      %v2303 = vpop.f32.mrf.mxu0
      %2304 = vmatprep.mubr.bf16.mxu0 0
      %2305 = vmatmul.mubr.bf16.gmra.mxu0 %v416
      %v2306 = vpop.f32.mrf.mxu0
      %v2307 = vadd.f32 0.0, %v2306
      %v2308 = vpop.f32.mrf.mxu0
      %v2309 = vpop.f32.mrf.mxu0
      %v2310 = vadd.f32 0.0, %v2309
      %v2311 = vpop.f32.mrf.mxu0
      %2312 = vmatprep.mubr.bf16.mxu0 0
      %2313 = vmatmul.mubr.bf16.gmra.mxu0 %v417
      %v2314 = vpop.f32.mrf.mxu0
      %v2315 = vadd.f32 0.0, %v2314
      %v2316 = vpop.f32.mrf.mxu0
      %v2317 = vpop.f32.mrf.mxu0
      %v2318 = vadd.f32 0.0, %v2317
      %v2319 = vpop.f32.mrf.mxu0
      %2320 = vmatprep.mubr.bf16.mxu0 0
      %2321 = vmatmul.mubr.bf16.gmra.mxu0 %v418
      %v2322 = vpop.f32.mrf.mxu0
      %v2323 = vadd.f32 0.0, %v2322
      %v2324 = vpop.f32.mrf.mxu0
      %v2325 = vpop.f32.mrf.mxu0
      %v2326 = vadd.f32 0.0, %v2325
      %v2327 = vpop.f32.mrf.mxu0
      %2328 = vmatprep.mubr.bf16.mxu0 0
      %2329 = vmatmul.mubr.bf16.gmra.mxu0 %v419
      %v2330 = vpop.f32.mrf.mxu0
      %v2331 = vadd.f32 0.0, %v2330
      %v2332 = vpop.f32.mrf.mxu0
      %v2333 = vpop.f32.mrf.mxu0
      %v2334 = vadd.f32 0.0, %v2333
      %v2335 = vpop.f32.mrf.mxu0
      %2336 = vmatprep.mubr.bf16.mxu0 0
      %2337 = vmatmul.mubr.bf16.gmra.mxu0 %v420
      %v2338 = vpop.f32.mrf.mxu0
      %v2339 = vadd.f32 0.0, %v2338
      %v2340 = vpop.f32.mrf.mxu0
      %v2341 = vpop.f32.mrf.mxu0
      %v2342 = vadd.f32 0.0, %v2341
      %v2343 = vpop.f32.mrf.mxu0
      %2344 = vmatprep.mubr.bf16.mxu0 0
      %2345 = vmatmul.mubr.bf16.gmra.mxu0 %v421
      %v2346 = vpop.f32.mrf.mxu0
      %v2347 = vadd.f32 0.0, %v2346
      %v2348 = vpop.f32.mrf.mxu0
      %v2349 = vpop.f32.mrf.mxu0
      %v2350 = vadd.f32 0.0, %v2349
      %v2351 = vpop.f32.mrf.mxu0
      %2352 = vmatprep.mubr.bf16.mxu0 0
      %2353 = vmatmul.mubr.bf16.gmra.mxu0 %v422
      %v2354 = vpop.f32.mrf.mxu0
      %v2355 = vadd.f32 0.0, %v2354
      %v2356 = vpop.f32.mrf.mxu0
      %v2357 = vpop.f32.mrf.mxu0
      %v2358 = vadd.f32 0.0, %v2357
      %v2359 = vpop.f32.mrf.mxu0
      %2360 = vmatprep.mubr.bf16.mxu0 0
      %2361 = vmatmul.mubr.bf16.gmra.mxu0 %v423
      %v2362 = vpop.f32.mrf.mxu0
      %v2363 = vadd.f32 0.0, %v2362
      %v2364 = vpop.f32.mrf.mxu0
      %v2365 = vpop.f32.mrf.mxu0
      %v2366 = vadd.f32 0.0, %v2365
      %v2367 = vpop.f32.mrf.mxu0
      %2368 = vmatprep.mubr.bf16.mxu0 0
      %2369 = vmatmul.mubr.bf16.gmra.mxu0 %v424
      %v2370 = vpop.f32.mrf.mxu0
      %v2371 = vadd.f32 0.0, %v2370
      %v2372 = vpop.f32.mrf.mxu0
      %v2373 = vpop.f32.mrf.mxu0
      %v2374 = vadd.f32 0.0, %v2373
      %v2375 = vpop.f32.mrf.mxu0
      %2376 = vmatprep.mubr.bf16.mxu0 0
      %2377 = vmatmul.mubr.bf16.gmra.mxu0 %v425
      %v2378 = vpop.f32.mrf.mxu0
      %v2379 = vadd.f32 0.0, %v2378
      %v2380 = vpop.f32.mrf.mxu0
      %v2381 = vpop.f32.mrf.mxu0
      %v2382 = vadd.f32 0.0, %v2381
      %v2383 = vpop.f32.mrf.mxu0
      %2384 = vmatprep.mubr.bf16.mxu0 0
      %2385 = vmatmul.mubr.bf16.gmra.mxu0 %v426
      %v2386 = vpop.f32.mrf.mxu0
      %v2387 = vadd.f32 0.0, %v2386
      %v2388 = vpop.f32.mrf.mxu0
      %v2389 = vpop.f32.mrf.mxu0
      %v2390 = vadd.f32 0.0, %v2389
      %v2391 = vpop.f32.mrf.mxu0
      %2392 = vmatprep.mubr.bf16.mxu0 0
      %2393 = vmatmul.mubr.bf16.gmra.mxu0 %v427
      %v2394 = vpop.f32.mrf.mxu0
      %v2395 = vadd.f32 0.0, %v2394
      %v2396 = vpop.f32.mrf.mxu0
      %v2397 = vpop.f32.mrf.mxu0
      %v2398 = vadd.f32 0.0, %v2397
      %v2399 = vpop.f32.mrf.mxu0
      %2400 = vmatprep.mubr.bf16.mxu0 0
      %2401 = vmatmul.mubr.bf16.gmra.mxu0 %v428
      %v2402 = vpop.f32.mrf.mxu0
      %v2403 = vadd.f32 0.0, %v2402
      %v2404 = vpop.f32.mrf.mxu0
      %v2405 = vpop.f32.mrf.mxu0
      %v2406 = vadd.f32 0.0, %v2405
      %v2407 = vpop.f32.mrf.mxu0
      %2408 = vmatprep.mubr.bf16.mxu0 0
      %2409 = vmatmul.mubr.bf16.gmra.mxu0 %v429
      %v2410 = vpop.f32.mrf.mxu0
      %v2411 = vadd.f32 0.0, %v2410
      %v2412 = vpop.f32.mrf.mxu0
      %v2413 = vpop.f32.mrf.mxu0
      %v2414 = vadd.f32 0.0, %v2413
      %v2415 = vpop.f32.mrf.mxu0
      %2416 = vmatprep.mubr.bf16.mxu0 0
      %2417 = vmatmul.mubr.bf16.gmra.mxu0 %v430
      %v2418 = vpop.f32.mrf.mxu0
      %v2419 = vadd.f32 0.0, %v2418
      %v2420 = vpop.f32.mrf.mxu0
      %v2421 = vpop.f32.mrf.mxu0
      %v2422 = vadd.f32 0.0, %v2421
      %v2423 = vpop.f32.mrf.mxu0
      %2424 = vmatprep.mubr.bf16.mxu0 0
      %2425 = vmatmul.mubr.bf16.gmra.mxu0 %v431
      %v2426 = vpop.f32.mrf.mxu0
      %v2427 = vadd.f32 0.0, %v2426
      %v2428 = vpop.f32.mrf.mxu0
      %v2429 = vpop.f32.mrf.mxu0
      %v2430 = vadd.f32 0.0, %v2429
      %v2431 = vpop.f32.mrf.mxu0
      %2432 = vmatprep.mubr.bf16.mxu0 0
      %2433 = vmatmul.mubr.bf16.gmra.mxu0 %v432
      %v2434 = vpop.f32.mrf.mxu0
      %v2435 = vadd.f32 0.0, %v2434
      %v2436 = vpop.f32.mrf.mxu0
      %v2437 = vpop.f32.mrf.mxu0
      %v2438 = vpop.f32.mrf.mxu0
      %2439 = vdwg.mxu0
      %v2440 = vadd.f32 %v2134, %v2275
      %v2441 = vadd.f32 %v2135, %v2278
      %v2442 = vadd.f32 %v2136, %v2283
      %v2443 = vadd.f32 %v2137, %v2286
      %v2444 = vadd.f32 %v2138, %v2291
      %v2445 = vadd.f32 %v2139, %v2294
      %v2446 = vadd.f32 %v2140, %v2299
      %v2447 = vadd.f32 %v2141, %v2302
      %v2448 = vadd.f32 %v2142, %v2307
      %v2449 = vadd.f32 %v2143, %v2310
      %v2450 = vadd.f32 %v2144, %v2315
      %v2451 = vadd.f32 %v2145, %v2318
      %v2452 = vadd.f32 %v2146, %v2323
      %v2453 = vadd.f32 %v2147, %v2326
      %v2454 = vadd.f32 %v2148, %v2331
      %v2455 = vadd.f32 %v2149, %v2334
      %v2456 = vadd.f32 %v2150, %v2339
      %v2457 = vadd.f32 %v2151, %v2342
      %v2458 = vadd.f32 %v2152, %v2347
      %v2459 = vadd.f32 %v2153, %v2350
      %v2460 = vadd.f32 %v2154, %v2355
      %v2461 = vadd.f32 %v2155, %v2358
      %v2462 = vadd.f32 %v2156, %v2363
      %v2463 = vadd.f32 %v2157, %v2366
      %v2464 = vadd.f32 %v2158, %v2371
      %v2465 = vadd.f32 %v2159, %v2374
      %v2466 = vadd.f32 %v2160, %v2379
      %v2467 = vadd.f32 %v2161, %v2382
      %v2468 = vadd.f32 %v2162, %v2387
      %v2469 = vadd.f32 %v2163, %v2390
      %v2470 = vadd.f32 %v2164, %v2395
      %v2471 = vadd.f32 %v2165, %v2398
      %v2472 = vadd.f32 %v2166, %v2403
      %v2473 = vadd.f32 %v2167, %v2406
      %v2474 = vadd.f32 %v2168, %v2411
      %v2475 = vadd.f32 %v2169, %v2414
      %v2476 = vadd.f32 %v2170, %v2419
      %v2477 = vadd.f32 %v2171, %v2422
      %v2478 = vadd.f32 %v2172, %v2427
      %v2479 = vadd.f32 %v2173, %v2430
      %v2480 = vadd.f32 %v2174, %v2435
      %v2481 = vld [vmem:[%s314 + $0x19] sm:$0xff]
      %v2482 = vld [vmem:[%s314 + $0x21] sm:$0xff]
      %v2483 = vld [vmem:[%s314 + $0x29] sm:$0xff]
      %v2484 = vld [vmem:[%s314 + $0x31] sm:$0xff]
      %v2485 = vld [vmem:[%s314 + $0x39] sm:$0xff]
      %v2486 = vld [vmem:[%s314 + $0x41] sm:$0xff]
      %v2487 = vld [vmem:[%s314 + $0x49] sm:$0xff]
      %v2488 = vld [vmem:[%s314 + $0x51] sm:$0xff]
      %v2489 = vld [vmem:[%s314 + $0x59] sm:$0xff]
      %v2490 = vld [vmem:[%s314 + $0x61] sm:$0xff]
      %v2491 = vld [vmem:[%s314 + $0x69] sm:$0xff]
      %v2492 = vld [vmem:[%s314 + $0x71] sm:$0xff]
      %v2493 = vld [vmem:[%s314 + $0x79] sm:$0xff]
      %v2494 = vld [vmem:[%s314 + $0x81] sm:$0xff]
      %v2495 = vld [vmem:[%s314 + $0x89] sm:$0xff]
      %v2496 = vld [vmem:[%s314 + $0x91] sm:$0xff]
      %v2497 = vld [vmem:[%s314 + $0x99] sm:$0xff]
      %v2498 = vld [vmem:[%s314 + $0xa1] sm:$0xff]
      %v2499 = vld [vmem:[%s314 + $0xa9] sm:$0xff]
      %v2500 = vld [vmem:[%s314 + $0xb1] sm:$0xff]
      %v2501 = vld [vmem:[%s314 + $0xb9] sm:$0xff]
      %v2502 = vld [vmem:[%s314 + $0xc1] sm:$0xff]
      %v2503 = vld [vmem:[%s314 + $0xc9] sm:$0xff]
      %v2504 = vld [vmem:[%s314 + $0xd1] sm:$0xff]
      %v2505 = vld [vmem:[%s314 + $0xd9] sm:$0xff]
      %v2506 = vld [vmem:[%s314 + $0xe1] sm:$0xff]
      %v2507 = vld [vmem:[%s314 + $0xe9] sm:$0xff]
      %v2508 = vld [vmem:[%s314 + $0xf1] sm:$0xff]
      %v2509 = vld [vmem:[%s314 + $0xf9] sm:$0xff]
      %v2510 = vld [vmem:[%s314 + $0x101] sm:$0xff]
      %v2511 = vld [vmem:[%s314 + $0x109] sm:$0xff]
      %v2512 = vld [vmem:[%s314 + $0x111] sm:$0xff]
      %v2513 = vld [vmem:[%s314 + $0x119] sm:$0xff]
      %v2514 = vld [vmem:[%s314 + $0x121] sm:$0xff]
      %v2515 = vld [vmem:[%s314 + $0x129] sm:$0xff]
      %v2516 = vld [vmem:[%s314 + $0x131] sm:$0xff]
      %v2517 = vld [vmem:[%s314 + $0x139] sm:$0xff]
      %v2518 = vld [vmem:[%s314 + $0x141] sm:$0xff]
      %v2519 = vld [vmem:[%s314 + $0x149] sm:$0xff]
      %v2520 = vld [vmem:[%s314 + $0x151] sm:$0xff]
      %v2521 = vld [vmem:[%s314 + $0x159] sm:$0xff]
      %v2522 = vpack.c.bf16 %v2482, %v2481
      %v2523 = vpack.c.bf16 %v2484, %v2483
      %v2524 = vpack.c.bf16 %v2486, %v2485
      %v2525 = vpack.c.bf16 %v2488, %v2487
      %v2526 = vpack.c.bf16 %v2490, %v2489
      %v2527 = vpack.c.bf16 %v2492, %v2491
      %v2528 = vpack.c.bf16 %v2494, %v2493
      %v2529 = vpack.c.bf16 %v2496, %v2495
      %v2530 = vpack.c.bf16 %v2498, %v2497
      %v2531 = vpack.c.bf16 %v2500, %v2499
      %v2532 = vpack.c.bf16 %v2502, %v2501
      %v2533 = vpack.c.bf16 %v2504, %v2503
      %v2534 = vpack.c.bf16 %v2506, %v2505
      %v2535 = vpack.c.bf16 %v2508, %v2507
      %v2536 = vpack.c.bf16 %v2510, %v2509
      %v2537 = vpack.c.bf16 %v2512, %v2511
      %v2538 = vpack.c.bf16 %v2514, %v2513
      %v2539 = vpack.c.bf16 %v2516, %v2515
      %v2540 = vpack.c.bf16 %v2518, %v2517
      %v2541 = vpack.c.bf16 %v2520, %v2519
      %v2542 = vpack.c.bf16 %v2521, %v2521
      %s2543 = scalar_lea.vmem %s4, 320
      %v2544 = vld [vmem:[%s2543] sm:$0xf]
      %v2545 = vld [vmem:[%s2543 + $0x4] sm:$0xf]
      %v2546 = vld [vmem:[%s2543 + $0x8] sm:$0xf]
      %v2547 = vld [vmem:[%s2543 + $0xc] sm:$0xf]
      %v2548 = vld [vmem:[%s2543 + $0x10] sm:$0xf]
      %v2549 = vld [vmem:[%s2543 + $0x14] sm:$0xf]
      %v2550 = vld [vmem:[%s2543 + $0x18] sm:$0xf]
      %v2551 = vld [vmem:[%s2543 + $0x1c] sm:$0xf]
      %v2552 = vld [vmem:[%s2543 + $0x20] sm:$0xf]
      %v2553 = vld [vmem:[%s2543 + $0x24] sm:$0xf]
      %v2554 = vld [vmem:[%s2543 + $0x28] sm:$0xf]
      %v2555 = vld [vmem:[%s2543 + $0x2c] sm:$0xf]
      %v2556 = vld [vmem:[%s2543 + $0x30] sm:$0xf]
      %v2557 = vld [vmem:[%s2543 + $0x34] sm:$0xf]
      %v2558 = vld [vmem:[%s2543 + $0x38] sm:$0xf]
      %v2559 = vld [vmem:[%s2543 + $0x3c] sm:$0xf]
      %v2576 = vunpack.c.l.b16 %v2544
      %v2577 = vunpack.c.l.b16 %v2545
      %v2578 = vunpack.c.l.b16 %v2546
      %v2579 = vunpack.c.l.b16 %v2547
      %v2580 = vunpack.c.l.b16 %v2548
      %v2581 = vunpack.c.l.b16 %v2549
      %v2582 = vunpack.c.l.b16 %v2550
      %v2583 = vunpack.c.l.b16 %v2551
      %v2584 = vunpack.c.l.b16 %v2552
      %v2585 = vunpack.c.l.b16 %v2553
      %v2586 = vunpack.c.l.b16 %v2554
      %v2587 = vunpack.c.l.b16 %v2555
      %v2588 = vunpack.c.l.b16 %v2556
      %v2589 = vunpack.c.l.b16 %v2557
      %v2590 = vunpack.c.l.b16 %v2558
      %v2591 = vunpack.c.l.b16 %v2559
      %v2592 = vpack.c.b16 %v2577, %v2576
      %v2593 = vpack.c.b16 %v2579, %v2578
      %v2594 = vpack.c.b16 %v2581, %v2580
      %v2595 = vpack.c.b16 %v2583, %v2582
      %v2596 = vpack.c.b16 %v2585, %v2584
      %v2597 = vpack.c.b16 %v2587, %v2586
      %v2598 = vpack.c.b16 %v2589, %v2588
      %v2599 = vpack.c.b16 %v2591, %v2590
      %2608 = vmatprep.subr.bf16.mxu0 0
      %2609 = vmatpush1.bf16.msra.mxu0 %v2599
      %2610 = vmatprep.subr.bf16.mxu0 0
      %2611 = vmatpush1.bf16.msra.mxu0 %v2598
      %2612 = vmatprep.subr.bf16.mxu0 0
      %2613 = vmatpush1.bf16.msra.mxu0 %v2597
      %2614 = vmatprep.subr.bf16.mxu0 0
      %2615 = vmatpush1.bf16.msra.mxu0 %v2596
      %2616 = vmatprep.subr.bf16.mxu0 0
      %2617 = vmatpush1.bf16.msra.mxu0 %v2595
      %2618 = vmatprep.subr.bf16.mxu0 0
      %2619 = vmatpush1.bf16.msra.mxu0 %v2594
      %2620 = vmatprep.subr.bf16.mxu0 0
      %2621 = vmatpush1.bf16.msra.mxu0 %v2593
      %2622 = vmatprep.subr.bf16.mxu0 0
      %2623 = vmatpush1.bf16.msra.mxu0 %v2592
      %2624 = vmatprep.subr.bf16.mxu0 0
      %2625 = vmatpush2.bf16.msra.mxu0 0
      %2626 = vmatprep.subr.bf16.mxu0 0
      %2627 = vmatpush2.bf16.msra.mxu0 0
      %2628 = vmatprep.subr.bf16.mxu0 0
      %2629 = vmatpush2.bf16.msra.mxu0 0
      %2630 = vmatprep.subr.bf16.mxu0 0
      %2631 = vmatpush2.bf16.msra.mxu0 0
      %2632 = vmatprep.subr.bf16.mxu0 0
      %2633 = vmatpush2.bf16.msra.mxu0 0
      %2634 = vmatprep.subr.bf16.mxu0 0
      %2635 = vmatpush2.bf16.msra.mxu0 0
      %2636 = vmatprep.subr.bf16.mxu0 0
      %2637 = vmatpush2.bf16.msra.mxu0 0
      %2638 = vmatprep.subr.bf16.mxu0 0
      %2639 = vmatpush2.bf16.msra.mxu0 0
      %2640 = vmatprep.mubr.bf16.mxu0 0
      %2641 = vmatmul.mubr.bf16.gmra.mxu0 %v2522
      %v2642 = vpop.f32.mrf.mxu0
      %v2643 = vadd.f32 0.0, %v2642
      %v2644 = vpop.f32.mrf.mxu0
      %v2645 = vpop.f32.mrf.mxu0
      %v2646 = vadd.f32 0.0, %v2645
      %v2647 = vpop.f32.mrf.mxu0
      %2648 = vmatprep.mubr.bf16.mxu0 0
      %2649 = vmatmul.mubr.bf16.gmra.mxu0 %v2523
      %v2650 = vpop.f32.mrf.mxu0
      %v2651 = vadd.f32 0.0, %v2650
      %v2652 = vpop.f32.mrf.mxu0
      %v2653 = vpop.f32.mrf.mxu0
      %v2654 = vadd.f32 0.0, %v2653
      %v2655 = vpop.f32.mrf.mxu0
      %2656 = vmatprep.mubr.bf16.mxu0 0
      %2657 = vmatmul.mubr.bf16.gmra.mxu0 %v2524
      %v2658 = vpop.f32.mrf.mxu0
      %v2659 = vadd.f32 0.0, %v2658
      %v2660 = vpop.f32.mrf.mxu0
      %v2661 = vpop.f32.mrf.mxu0
      %v2662 = vadd.f32 0.0, %v2661
      %v2663 = vpop.f32.mrf.mxu0
      %2664 = vmatprep.mubr.bf16.mxu0 0
      %2665 = vmatmul.mubr.bf16.gmra.mxu0 %v2525
      %v2666 = vpop.f32.mrf.mxu0
      %v2667 = vadd.f32 0.0, %v2666
      %v2668 = vpop.f32.mrf.mxu0
      %v2669 = vpop.f32.mrf.mxu0
      %v2670 = vadd.f32 0.0, %v2669
      %v2671 = vpop.f32.mrf.mxu0
      %2672 = vmatprep.mubr.bf16.mxu0 0
      %2673 = vmatmul.mubr.bf16.gmra.mxu0 %v2526
      %v2674 = vpop.f32.mrf.mxu0
      %v2675 = vadd.f32 0.0, %v2674
      %v2676 = vpop.f32.mrf.mxu0
      %v2677 = vpop.f32.mrf.mxu0
      %v2678 = vadd.f32 0.0, %v2677
      %v2679 = vpop.f32.mrf.mxu0
      %2680 = vmatprep.mubr.bf16.mxu0 0
      %2681 = vmatmul.mubr.bf16.gmra.mxu0 %v2527
      %v2682 = vpop.f32.mrf.mxu0
      %v2683 = vadd.f32 0.0, %v2682
      %v2684 = vpop.f32.mrf.mxu0
      %v2685 = vpop.f32.mrf.mxu0
      %v2686 = vadd.f32 0.0, %v2685
      %v2687 = vpop.f32.mrf.mxu0
      %2688 = vmatprep.mubr.bf16.mxu0 0
      %2689 = vmatmul.mubr.bf16.gmra.mxu0 %v2528
      %v2690 = vpop.f32.mrf.mxu0
      %v2691 = vadd.f32 0.0, %v2690
      %v2692 = vpop.f32.mrf.mxu0
      %v2693 = vpop.f32.mrf.mxu0
      %v2694 = vadd.f32 0.0, %v2693
      %v2695 = vpop.f32.mrf.mxu0
      %2696 = vmatprep.mubr.bf16.mxu0 0
      %2697 = vmatmul.mubr.bf16.gmra.mxu0 %v2529
      %v2698 = vpop.f32.mrf.mxu0
      %v2699 = vadd.f32 0.0, %v2698
      %v2700 = vpop.f32.mrf.mxu0
      %v2701 = vpop.f32.mrf.mxu0
      %v2702 = vadd.f32 0.0, %v2701
      %v2703 = vpop.f32.mrf.mxu0
      %2704 = vmatprep.mubr.bf16.mxu0 0
      %2705 = vmatmul.mubr.bf16.gmra.mxu0 %v2530
      %v2706 = vpop.f32.mrf.mxu0
      %v2707 = vadd.f32 0.0, %v2706
      %v2708 = vpop.f32.mrf.mxu0
      %v2709 = vpop.f32.mrf.mxu0
      %v2710 = vadd.f32 0.0, %v2709
      %v2711 = vpop.f32.mrf.mxu0
      %2712 = vmatprep.mubr.bf16.mxu0 0
      %2713 = vmatmul.mubr.bf16.gmra.mxu0 %v2531
      %v2714 = vpop.f32.mrf.mxu0
      %v2715 = vadd.f32 0.0, %v2714
      %v2716 = vpop.f32.mrf.mxu0
      %v2717 = vpop.f32.mrf.mxu0
      %v2718 = vadd.f32 0.0, %v2717
      %v2719 = vpop.f32.mrf.mxu0
      %2720 = vmatprep.mubr.bf16.mxu0 0
      %2721 = vmatmul.mubr.bf16.gmra.mxu0 %v2532
      %v2722 = vpop.f32.mrf.mxu0
      %v2723 = vadd.f32 0.0, %v2722
      %v2724 = vpop.f32.mrf.mxu0
      %v2725 = vpop.f32.mrf.mxu0
      %v2726 = vadd.f32 0.0, %v2725
      %v2727 = vpop.f32.mrf.mxu0
      %2728 = vmatprep.mubr.bf16.mxu0 0
      %2729 = vmatmul.mubr.bf16.gmra.mxu0 %v2533
      %v2730 = vpop.f32.mrf.mxu0
      %v2731 = vadd.f32 0.0, %v2730
      %v2732 = vpop.f32.mrf.mxu0
      %v2733 = vpop.f32.mrf.mxu0
      %v2734 = vadd.f32 0.0, %v2733
      %v2735 = vpop.f32.mrf.mxu0
      %2736 = vmatprep.mubr.bf16.mxu0 0
      %2737 = vmatmul.mubr.bf16.gmra.mxu0 %v2534
      %v2738 = vpop.f32.mrf.mxu0
      %v2739 = vadd.f32 0.0, %v2738
      %v2740 = vpop.f32.mrf.mxu0
      %v2741 = vpop.f32.mrf.mxu0
      %v2742 = vadd.f32 0.0, %v2741
      %v2743 = vpop.f32.mrf.mxu0
      %2744 = vmatprep.mubr.bf16.mxu0 0
      %2745 = vmatmul.mubr.bf16.gmra.mxu0 %v2535
      %v2746 = vpop.f32.mrf.mxu0
      %v2747 = vadd.f32 0.0, %v2746
      %v2748 = vpop.f32.mrf.mxu0
      %v2749 = vpop.f32.mrf.mxu0
      %v2750 = vadd.f32 0.0, %v2749
      %v2751 = vpop.f32.mrf.mxu0
      %2752 = vmatprep.mubr.bf16.mxu0 0
      %2753 = vmatmul.mubr.bf16.gmra.mxu0 %v2536
      %v2754 = vpop.f32.mrf.mxu0
      %v2755 = vadd.f32 0.0, %v2754
      %v2756 = vpop.f32.mrf.mxu0
      %v2757 = vpop.f32.mrf.mxu0
      %v2758 = vadd.f32 0.0, %v2757
      %v2759 = vpop.f32.mrf.mxu0
      %2760 = vmatprep.mubr.bf16.mxu0 0
      %2761 = vmatmul.mubr.bf16.gmra.mxu0 %v2537
      %v2762 = vpop.f32.mrf.mxu0
      %v2763 = vadd.f32 0.0, %v2762
      %v2764 = vpop.f32.mrf.mxu0
      %v2765 = vpop.f32.mrf.mxu0
      %v2766 = vadd.f32 0.0, %v2765
      %v2767 = vpop.f32.mrf.mxu0
      %2768 = vmatprep.mubr.bf16.mxu0 0
      %2769 = vmatmul.mubr.bf16.gmra.mxu0 %v2538
      %v2770 = vpop.f32.mrf.mxu0
      %v2771 = vadd.f32 0.0, %v2770
      %v2772 = vpop.f32.mrf.mxu0
      %v2773 = vpop.f32.mrf.mxu0
      %v2774 = vadd.f32 0.0, %v2773
      %v2775 = vpop.f32.mrf.mxu0
      %2776 = vmatprep.mubr.bf16.mxu0 0
      %2777 = vmatmul.mubr.bf16.gmra.mxu0 %v2539
      %v2778 = vpop.f32.mrf.mxu0
      %v2779 = vadd.f32 0.0, %v2778
      %v2780 = vpop.f32.mrf.mxu0
      %v2781 = vpop.f32.mrf.mxu0
      %v2782 = vadd.f32 0.0, %v2781
      %v2783 = vpop.f32.mrf.mxu0
      %2784 = vmatprep.mubr.bf16.mxu0 0
      %2785 = vmatmul.mubr.bf16.gmra.mxu0 %v2540
      %v2786 = vpop.f32.mrf.mxu0
      %v2787 = vadd.f32 0.0, %v2786
      %v2788 = vpop.f32.mrf.mxu0
      %v2789 = vpop.f32.mrf.mxu0
      %v2790 = vadd.f32 0.0, %v2789
      %v2791 = vpop.f32.mrf.mxu0
      %2792 = vmatprep.mubr.bf16.mxu0 0
      %2793 = vmatmul.mubr.bf16.gmra.mxu0 %v2541
      %v2794 = vpop.f32.mrf.mxu0
      %v2795 = vadd.f32 0.0, %v2794
      %v2796 = vpop.f32.mrf.mxu0
      %v2797 = vpop.f32.mrf.mxu0
      %v2798 = vadd.f32 0.0, %v2797
      %v2799 = vpop.f32.mrf.mxu0
      %2800 = vmatprep.mubr.bf16.mxu0 0
      %2801 = vmatmul.mubr.bf16.gmra.mxu0 %v2542
      %v2802 = vpop.f32.mrf.mxu0
      %v2803 = vadd.f32 0.0, %v2802
      %v2804 = vpop.f32.mrf.mxu0
      %v2805 = vpop.f32.mrf.mxu0
      %v2806 = vpop.f32.mrf.mxu0
      %2807 = vdwg.mxu0
      %v2808 = vadd.f32 %v2440, %v2643
      %v2809 = vadd.f32 %v2441, %v2646
      %v2810 = vadd.f32 %v2442, %v2651
      %v2811 = vadd.f32 %v2443, %v2654
      %v2812 = vadd.f32 %v2444, %v2659
      %v2813 = vadd.f32 %v2445, %v2662
      %v2814 = vadd.f32 %v2446, %v2667
      %v2815 = vadd.f32 %v2447, %v2670
      %v2816 = vadd.f32 %v2448, %v2675
      %v2817 = vadd.f32 %v2449, %v2678
      %v2818 = vadd.f32 %v2450, %v2683
      %v2819 = vadd.f32 %v2451, %v2686
      %v2820 = vadd.f32 %v2452, %v2691
      %v2821 = vadd.f32 %v2453, %v2694
      %v2822 = vadd.f32 %v2454, %v2699
      %v2823 = vadd.f32 %v2455, %v2702
      %v2824 = vadd.f32 %v2456, %v2707
      %v2825 = vadd.f32 %v2457, %v2710
      %v2826 = vadd.f32 %v2458, %v2715
      %v2827 = vadd.f32 %v2459, %v2718
      %v2828 = vadd.f32 %v2460, %v2723
      %v2829 = vadd.f32 %v2461, %v2726
      %v2830 = vadd.f32 %v2462, %v2731
      %v2831 = vadd.f32 %v2463, %v2734
      %v2832 = vadd.f32 %v2464, %v2739
      %v2833 = vadd.f32 %v2465, %v2742
      %v2834 = vadd.f32 %v2466, %v2747
      %v2835 = vadd.f32 %v2467, %v2750
      %v2836 = vadd.f32 %v2468, %v2755
      %v2837 = vadd.f32 %v2469, %v2758
      %v2838 = vadd.f32 %v2470, %v2763
      %v2839 = vadd.f32 %v2471, %v2766
      %v2840 = vadd.f32 %v2472, %v2771
      %v2841 = vadd.f32 %v2473, %v2774
      %v2842 = vadd.f32 %v2474, %v2779
      %v2843 = vadd.f32 %v2475, %v2782
      %v2844 = vadd.f32 %v2476, %v2787
      %v2845 = vadd.f32 %v2477, %v2790
      %v2846 = vadd.f32 %v2478, %v2795
      %v2847 = vadd.f32 %v2479, %v2798
      %v2848 = vadd.f32 %v2480, %v2803
      %v2849 = vld [vmem:[%s314 + $0x29] sm:$0xff]
      %v2850 = vld [vmem:[%s314 + $0x31] sm:$0xff]
      %v2851 = vld [vmem:[%s314 + $0x39] sm:$0xff]
      %v2852 = vld [vmem:[%s314 + $0x41] sm:$0xff]
      %v2853 = vld [vmem:[%s314 + $0x49] sm:$0xff]
      %v2854 = vld [vmem:[%s314 + $0x51] sm:$0xff]
      %v2855 = vld [vmem:[%s314 + $0x59] sm:$0xff]
      %v2856 = vld [vmem:[%s314 + $0x61] sm:$0xff]
      %v2857 = vld [vmem:[%s314 + $0x69] sm:$0xff]
      %v2858 = vld [vmem:[%s314 + $0x71] sm:$0xff]
      %v2859 = vld [vmem:[%s314 + $0x79] sm:$0xff]
      %v2860 = vld [vmem:[%s314 + $0x81] sm:$0xff]
      %v2861 = vld [vmem:[%s314 + $0x89] sm:$0xff]
      %v2862 = vld [vmem:[%s314 + $0x91] sm:$0xff]
      %v2863 = vld [vmem:[%s314 + $0x99] sm:$0xff]
      %v2864 = vld [vmem:[%s314 + $0xa1] sm:$0xff]
      %v2865 = vld [vmem:[%s314 + $0xa9] sm:$0xff]
      %v2866 = vld [vmem:[%s314 + $0xb1] sm:$0xff]
      %v2867 = vld [vmem:[%s314 + $0xb9] sm:$0xff]
      %v2868 = vld [vmem:[%s314 + $0xc1] sm:$0xff]
      %v2869 = vld [vmem:[%s314 + $0xc9] sm:$0xff]
      %v2870 = vld [vmem:[%s314 + $0xd1] sm:$0xff]
      %v2871 = vld [vmem:[%s314 + $0xd9] sm:$0xff]
      %v2872 = vld [vmem:[%s314 + $0xe1] sm:$0xff]
      %v2873 = vld [vmem:[%s314 + $0xe9] sm:$0xff]
      %v2874 = vld [vmem:[%s314 + $0xf1] sm:$0xff]
      %v2875 = vld [vmem:[%s314 + $0xf9] sm:$0xff]
      %v2876 = vld [vmem:[%s314 + $0x101] sm:$0xff]
      %v2877 = vld [vmem:[%s314 + $0x109] sm:$0xff]
      %v2878 = vld [vmem:[%s314 + $0x111] sm:$0xff]
      %v2879 = vld [vmem:[%s314 + $0x119] sm:$0xff]
      %v2880 = vld [vmem:[%s314 + $0x121] sm:$0xff]
      %v2881 = vld [vmem:[%s314 + $0x129] sm:$0xff]
      %v2882 = vld [vmem:[%s314 + $0x131] sm:$0xff]
      %v2883 = vld [vmem:[%s314 + $0x139] sm:$0xff]
      %v2884 = vld [vmem:[%s314 + $0x141] sm:$0xff]
      %v2885 = vld [vmem:[%s314 + $0x149] sm:$0xff]
      %v2886 = vld [vmem:[%s314 + $0x151] sm:$0xff]
      %v2887 = vld [vmem:[%s314 + $0x159] sm:$0xff]
      %v2888 = vld [vmem:[%s314 + $0x161] sm:$0xff]
      %v2889 = vld [vmem:[%s314 + $0x169] sm:$0xff]
      %v2890 = vpack.c.bf16 %v2850, %v2849
      %v2891 = vpack.c.bf16 %v2852, %v2851
      %v2892 = vpack.c.bf16 %v2854, %v2853
      %v2893 = vpack.c.bf16 %v2856, %v2855
      %v2894 = vpack.c.bf16 %v2858, %v2857
      %v2895 = vpack.c.bf16 %v2860, %v2859
      %v2896 = vpack.c.bf16 %v2862, %v2861
      %v2897 = vpack.c.bf16 %v2864, %v2863
      %v2898 = vpack.c.bf16 %v2866, %v2865
      %v2899 = vpack.c.bf16 %v2868, %v2867
      %v2900 = vpack.c.bf16 %v2870, %v2869
      %v2901 = vpack.c.bf16 %v2872, %v2871
      %v2902 = vpack.c.bf16 %v2874, %v2873
      %v2903 = vpack.c.bf16 %v2876, %v2875
      %v2904 = vpack.c.bf16 %v2878, %v2877
      %v2905 = vpack.c.bf16 %v2880, %v2879
      %v2906 = vpack.c.bf16 %v2882, %v2881
      %v2907 = vpack.c.bf16 %v2884, %v2883
      %v2908 = vpack.c.bf16 %v2886, %v2885
      %v2909 = vpack.c.bf16 %v2888, %v2887
      %v2910 = vpack.c.bf16 %v2889, %v2889
      %s2911 = scalar_lea.vmem %s4, 384
      %v2912 = vld [vmem:[%s2911] sm:$0xf]
      %v2913 = vld [vmem:[%s2911 + $0x4] sm:$0xf]
      %v2914 = vld [vmem:[%s2911 + $0x8] sm:$0xf]
      %v2915 = vld [vmem:[%s2911 + $0xc] sm:$0xf]
      %v2916 = vld [vmem:[%s2911 + $0x10] sm:$0xf]
      %v2917 = vld [vmem:[%s2911 + $0x14] sm:$0xf]
      %v2918 = vld [vmem:[%s2911 + $0x18] sm:$0xf]
      %v2919 = vld [vmem:[%s2911 + $0x1c] sm:$0xf]
      %v2920 = vld [vmem:[%s2911 + $0x20] sm:$0xf]
      %v2921 = vld [vmem:[%s2911 + $0x24] sm:$0xf]
      %v2922 = vld [vmem:[%s2911 + $0x28] sm:$0xf]
      %v2923 = vld [vmem:[%s2911 + $0x2c] sm:$0xf]
      %v2924 = vld [vmem:[%s2911 + $0x30] sm:$0xf]
      %v2925 = vld [vmem:[%s2911 + $0x34] sm:$0xf]
      %v2926 = vld [vmem:[%s2911 + $0x38] sm:$0xf]
      %v2927 = vld [vmem:[%s2911 + $0x3c] sm:$0xf]
      %v2944 = vunpack.c.l.b16 %v2912
      %v2945 = vunpack.c.l.b16 %v2913
      %v2946 = vunpack.c.l.b16 %v2914
      %v2947 = vunpack.c.l.b16 %v2915
      %v2948 = vunpack.c.l.b16 %v2916
      %v2949 = vunpack.c.l.b16 %v2917
      %v2950 = vunpack.c.l.b16 %v2918
      %v2951 = vunpack.c.l.b16 %v2919
      %v2952 = vunpack.c.l.b16 %v2920
      %v2953 = vunpack.c.l.b16 %v2921
      %v2954 = vunpack.c.l.b16 %v2922
      %v2955 = vunpack.c.l.b16 %v2923
      %v2956 = vunpack.c.l.b16 %v2924
      %v2957 = vunpack.c.l.b16 %v2925
      %v2958 = vunpack.c.l.b16 %v2926
      %v2959 = vunpack.c.l.b16 %v2927
      %v2960 = vpack.c.b16 %v2945, %v2944
      %v2961 = vpack.c.b16 %v2947, %v2946
      %v2962 = vpack.c.b16 %v2949, %v2948
      %v2963 = vpack.c.b16 %v2951, %v2950
      %v2964 = vpack.c.b16 %v2953, %v2952
      %v2965 = vpack.c.b16 %v2955, %v2954
      %v2966 = vpack.c.b16 %v2957, %v2956
      %v2967 = vpack.c.b16 %v2959, %v2958
      %2976 = vmatprep.subr.bf16.mxu0 0
      %2977 = vmatpush1.bf16.msra.mxu0 %v2967
      %2978 = vmatprep.subr.bf16.mxu0 0
      %2979 = vmatpush1.bf16.msra.mxu0 %v2966
      %2980 = vmatprep.subr.bf16.mxu0 0
      %2981 = vmatpush1.bf16.msra.mxu0 %v2965
      %2982 = vmatprep.subr.bf16.mxu0 0
      %2983 = vmatpush1.bf16.msra.mxu0 %v2964
      %2984 = vmatprep.subr.bf16.mxu0 0
      %2985 = vmatpush1.bf16.msra.mxu0 %v2963
      %2986 = vmatprep.subr.bf16.mxu0 0
      %2987 = vmatpush1.bf16.msra.mxu0 %v2962
      %2988 = vmatprep.subr.bf16.mxu0 0
      %2989 = vmatpush1.bf16.msra.mxu0 %v2961
      %2990 = vmatprep.subr.bf16.mxu0 0
      %2991 = vmatpush1.bf16.msra.mxu0 %v2960
      %2992 = vmatprep.subr.bf16.mxu0 0
      %2993 = vmatpush2.bf16.msra.mxu0 0
      %2994 = vmatprep.subr.bf16.mxu0 0
      %2995 = vmatpush2.bf16.msra.mxu0 0
      %2996 = vmatprep.subr.bf16.mxu0 0
      %2997 = vmatpush2.bf16.msra.mxu0 0
      %2998 = vmatprep.subr.bf16.mxu0 0
      %2999 = vmatpush2.bf16.msra.mxu0 0
      %3000 = vmatprep.subr.bf16.mxu0 0
      %3001 = vmatpush2.bf16.msra.mxu0 0
      %3002 = vmatprep.subr.bf16.mxu0 0
      %3003 = vmatpush2.bf16.msra.mxu0 0
      %3004 = vmatprep.subr.bf16.mxu0 0
      %3005 = vmatpush2.bf16.msra.mxu0 0
      %3006 = vmatprep.subr.bf16.mxu0 0
      %3007 = vmatpush2.bf16.msra.mxu0 0
      %3008 = vmatprep.mubr.bf16.mxu0 0
      %3009 = vmatmul.mubr.bf16.gmra.mxu0 %v2890
      %v3010 = vpop.f32.mrf.mxu0
      %v3011 = vadd.f32 0.0, %v3010
      %v3012 = vpop.f32.mrf.mxu0
      %v3013 = vpop.f32.mrf.mxu0
      %v3014 = vadd.f32 0.0, %v3013
      %v3015 = vpop.f32.mrf.mxu0
      %3016 = vmatprep.mubr.bf16.mxu0 0
      %3017 = vmatmul.mubr.bf16.gmra.mxu0 %v2891
      %v3018 = vpop.f32.mrf.mxu0
      %v3019 = vadd.f32 0.0, %v3018
      %v3020 = vpop.f32.mrf.mxu0
      %v3021 = vpop.f32.mrf.mxu0
      %v3022 = vadd.f32 0.0, %v3021
      %v3023 = vpop.f32.mrf.mxu0
      %3024 = vmatprep.mubr.bf16.mxu0 0
      %3025 = vmatmul.mubr.bf16.gmra.mxu0 %v2892
      %v3026 = vpop.f32.mrf.mxu0
      %v3027 = vadd.f32 0.0, %v3026
      %v3028 = vpop.f32.mrf.mxu0
      %v3029 = vpop.f32.mrf.mxu0
      %v3030 = vadd.f32 0.0, %v3029
      %v3031 = vpop.f32.mrf.mxu0
      %3032 = vmatprep.mubr.bf16.mxu0 0
      %3033 = vmatmul.mubr.bf16.gmra.mxu0 %v2893
      %v3034 = vpop.f32.mrf.mxu0
      %v3035 = vadd.f32 0.0, %v3034
      %v3036 = vpop.f32.mrf.mxu0
      %v3037 = vpop.f32.mrf.mxu0
      %v3038 = vadd.f32 0.0, %v3037
      %v3039 = vpop.f32.mrf.mxu0
      %3040 = vmatprep.mubr.bf16.mxu0 0
      %3041 = vmatmul.mubr.bf16.gmra.mxu0 %v2894
      %v3042 = vpop.f32.mrf.mxu0
      %v3043 = vadd.f32 0.0, %v3042
      %v3044 = vpop.f32.mrf.mxu0
      %v3045 = vpop.f32.mrf.mxu0
      %v3046 = vadd.f32 0.0, %v3045
      %v3047 = vpop.f32.mrf.mxu0
      %3048 = vmatprep.mubr.bf16.mxu0 0
      %3049 = vmatmul.mubr.bf16.gmra.mxu0 %v2895
      %v3050 = vpop.f32.mrf.mxu0
      %v3051 = vadd.f32 0.0, %v3050
      %v3052 = vpop.f32.mrf.mxu0
      %v3053 = vpop.f32.mrf.mxu0
      %v3054 = vadd.f32 0.0, %v3053
      %v3055 = vpop.f32.mrf.mxu0
      %3056 = vmatprep.mubr.bf16.mxu0 0
      %3057 = vmatmul.mubr.bf16.gmra.mxu0 %v2896
      %v3058 = vpop.f32.mrf.mxu0
      %v3059 = vadd.f32 0.0, %v3058
      %v3060 = vpop.f32.mrf.mxu0
      %v3061 = vpop.f32.mrf.mxu0
      %v3062 = vadd.f32 0.0, %v3061
      %v3063 = vpop.f32.mrf.mxu0
      %3064 = vmatprep.mubr.bf16.mxu0 0
      %3065 = vmatmul.mubr.bf16.gmra.mxu0 %v2897
      %v3066 = vpop.f32.mrf.mxu0
      %v3067 = vadd.f32 0.0, %v3066
      %v3068 = vpop.f32.mrf.mxu0
      %v3069 = vpop.f32.mrf.mxu0
      %v3070 = vadd.f32 0.0, %v3069
      %v3071 = vpop.f32.mrf.mxu0
      %3072 = vmatprep.mubr.bf16.mxu0 0
      %3073 = vmatmul.mubr.bf16.gmra.mxu0 %v2898
      %v3074 = vpop.f32.mrf.mxu0
      %v3075 = vadd.f32 0.0, %v3074
      %v3076 = vpop.f32.mrf.mxu0
      %v3077 = vpop.f32.mrf.mxu0
      %v3078 = vadd.f32 0.0, %v3077
      %v3079 = vpop.f32.mrf.mxu0
      %3080 = vmatprep.mubr.bf16.mxu0 0
      %3081 = vmatmul.mubr.bf16.gmra.mxu0 %v2899
      %v3082 = vpop.f32.mrf.mxu0
      %v3083 = vadd.f32 0.0, %v3082
      %v3084 = vpop.f32.mrf.mxu0
      %v3085 = vpop.f32.mrf.mxu0
      %v3086 = vadd.f32 0.0, %v3085
      %v3087 = vpop.f32.mrf.mxu0
      %3088 = vmatprep.mubr.bf16.mxu0 0
      %3089 = vmatmul.mubr.bf16.gmra.mxu0 %v2900
      %v3090 = vpop.f32.mrf.mxu0
      %v3091 = vadd.f32 0.0, %v3090
      %v3092 = vpop.f32.mrf.mxu0
      %v3093 = vpop.f32.mrf.mxu0
      %v3094 = vadd.f32 0.0, %v3093
      %v3095 = vpop.f32.mrf.mxu0
      %3096 = vmatprep.mubr.bf16.mxu0 0
      %3097 = vmatmul.mubr.bf16.gmra.mxu0 %v2901
      %v3098 = vpop.f32.mrf.mxu0
      %v3099 = vadd.f32 0.0, %v3098
      %v3100 = vpop.f32.mrf.mxu0
      %v3101 = vpop.f32.mrf.mxu0
      %v3102 = vadd.f32 0.0, %v3101
      %v3103 = vpop.f32.mrf.mxu0
      %3104 = vmatprep.mubr.bf16.mxu0 0
      %3105 = vmatmul.mubr.bf16.gmra.mxu0 %v2902
      %v3106 = vpop.f32.mrf.mxu0
      %v3107 = vadd.f32 0.0, %v3106
      %v3108 = vpop.f32.mrf.mxu0
      %v3109 = vpop.f32.mrf.mxu0
      %v3110 = vadd.f32 0.0, %v3109
      %v3111 = vpop.f32.mrf.mxu0
      %3112 = vmatprep.mubr.bf16.mxu0 0
      %3113 = vmatmul.mubr.bf16.gmra.mxu0 %v2903
      %v3114 = vpop.f32.mrf.mxu0
      %v3115 = vadd.f32 0.0, %v3114
      %v3116 = vpop.f32.mrf.mxu0
      %v3117 = vpop.f32.mrf.mxu0
      %v3118 = vadd.f32 0.0, %v3117
      %v3119 = vpop.f32.mrf.mxu0
      %3120 = vmatprep.mubr.bf16.mxu0 0
      %3121 = vmatmul.mubr.bf16.gmra.mxu0 %v2904
      %v3122 = vpop.f32.mrf.mxu0
      %v3123 = vadd.f32 0.0, %v3122
      %v3124 = vpop.f32.mrf.mxu0
      %v3125 = vpop.f32.mrf.mxu0
      %v3126 = vadd.f32 0.0, %v3125
      %v3127 = vpop.f32.mrf.mxu0
      %3128 = vmatprep.mubr.bf16.mxu0 0
      %3129 = vmatmul.mubr.bf16.gmra.mxu0 %v2905
      %v3130 = vpop.f32.mrf.mxu0
      %v3131 = vadd.f32 0.0, %v3130
      %v3132 = vpop.f32.mrf.mxu0
      %v3133 = vpop.f32.mrf.mxu0
      %v3134 = vadd.f32 0.0, %v3133
      %v3135 = vpop.f32.mrf.mxu0
      %3136 = vmatprep.mubr.bf16.mxu0 0
      %3137 = vmatmul.mubr.bf16.gmra.mxu0 %v2906
      %v3138 = vpop.f32.mrf.mxu0
      %v3139 = vadd.f32 0.0, %v3138
      %v3140 = vpop.f32.mrf.mxu0
      %v3141 = vpop.f32.mrf.mxu0
      %v3142 = vadd.f32 0.0, %v3141
      %v3143 = vpop.f32.mrf.mxu0
      %3144 = vmatprep.mubr.bf16.mxu0 0
      %3145 = vmatmul.mubr.bf16.gmra.mxu0 %v2907
      %v3146 = vpop.f32.mrf.mxu0
      %v3147 = vadd.f32 0.0, %v3146
      %v3148 = vpop.f32.mrf.mxu0
      %v3149 = vpop.f32.mrf.mxu0
      %v3150 = vadd.f32 0.0, %v3149
      %v3151 = vpop.f32.mrf.mxu0
      %3152 = vmatprep.mubr.bf16.mxu0 0
      %3153 = vmatmul.mubr.bf16.gmra.mxu0 %v2908
      %v3154 = vpop.f32.mrf.mxu0
      %v3155 = vadd.f32 0.0, %v3154
      %v3156 = vpop.f32.mrf.mxu0
      %v3157 = vpop.f32.mrf.mxu0
      %v3158 = vadd.f32 0.0, %v3157
      %v3159 = vpop.f32.mrf.mxu0
      %3160 = vmatprep.mubr.bf16.mxu0 0
      %3161 = vmatmul.mubr.bf16.gmra.mxu0 %v2909
      %v3162 = vpop.f32.mrf.mxu0
      %v3163 = vadd.f32 0.0, %v3162
      %v3164 = vpop.f32.mrf.mxu0
      %v3165 = vpop.f32.mrf.mxu0
      %v3166 = vadd.f32 0.0, %v3165
      %v3167 = vpop.f32.mrf.mxu0
      %3168 = vmatprep.mubr.bf16.mxu0 0
      %3169 = vmatmul.mubr.bf16.gmra.mxu0 %v2910
      %v3170 = vpop.f32.mrf.mxu0
      %v3171 = vadd.f32 0.0, %v3170
      %v3172 = vpop.f32.mrf.mxu0
      %v3173 = vpop.f32.mrf.mxu0
      %v3174 = vpop.f32.mrf.mxu0
      %3175 = vdwg.mxu0
      %v3176 = vadd.f32 %v2808, %v3011
      %v3177 = vadd.f32 %v2809, %v3014
      %v3178 = vadd.f32 %v2810, %v3019
      %v3179 = vadd.f32 %v2811, %v3022
      %v3180 = vadd.f32 %v2812, %v3027
      %v3181 = vadd.f32 %v2813, %v3030
      %v3182 = vadd.f32 %v2814, %v3035
      %v3183 = vadd.f32 %v2815, %v3038
      %v3184 = vadd.f32 %v2816, %v3043
      %v3185 = vadd.f32 %v2817, %v3046
      %v3186 = vadd.f32 %v2818, %v3051
      %v3187 = vadd.f32 %v2819, %v3054
      %v3188 = vadd.f32 %v2820, %v3059
      %v3189 = vadd.f32 %v2821, %v3062
      %v3190 = vadd.f32 %v2822, %v3067
      %v3191 = vadd.f32 %v2823, %v3070
      %v3192 = vadd.f32 %v2824, %v3075
      %v3193 = vadd.f32 %v2825, %v3078
      %v3194 = vadd.f32 %v2826, %v3083
      %v3195 = vadd.f32 %v2827, %v3086
      %v3196 = vadd.f32 %v2828, %v3091
      %v3197 = vadd.f32 %v2829, %v3094
      %v3198 = vadd.f32 %v2830, %v3099
      %v3199 = vadd.f32 %v2831, %v3102
      %v3200 = vadd.f32 %v2832, %v3107
      %v3201 = vadd.f32 %v2833, %v3110
      %v3202 = vadd.f32 %v2834, %v3115
      %v3203 = vadd.f32 %v2835, %v3118
      %v3204 = vadd.f32 %v2836, %v3123
      %v3205 = vadd.f32 %v2837, %v3126
      %v3206 = vadd.f32 %v2838, %v3131
      %v3207 = vadd.f32 %v2839, %v3134
      %v3208 = vadd.f32 %v2840, %v3139
      %v3209 = vadd.f32 %v2841, %v3142
      %v3210 = vadd.f32 %v2842, %v3147
      %v3211 = vadd.f32 %v2843, %v3150
      %v3212 = vadd.f32 %v2844, %v3155
      %v3213 = vadd.f32 %v2845, %v3158
      %v3214 = vadd.f32 %v2846, %v3163
      %v3215 = vadd.f32 %v2847, %v3166
      %v3216 = vadd.f32 %v2848, %v3171
      %v3217 = vld [vmem:[%s314 + $0x2a] sm:$0xff]
      %v3218 = vld [vmem:[%s314 + $0x32] sm:$0xff]
      %v3219 = vld [vmem:[%s314 + $0x3a] sm:$0xff]
      %v3220 = vld [vmem:[%s314 + $0x42] sm:$0xff]
      %v3221 = vld [vmem:[%s314 + $0x4a] sm:$0xff]
      %v3222 = vld [vmem:[%s314 + $0x52] sm:$0xff]
      %v3223 = vld [vmem:[%s314 + $0x5a] sm:$0xff]
      %v3224 = vld [vmem:[%s314 + $0x62] sm:$0xff]
      %v3225 = vld [vmem:[%s314 + $0x6a] sm:$0xff]
      %v3226 = vld [vmem:[%s314 + $0x72] sm:$0xff]
      %v3227 = vld [vmem:[%s314 + $0x7a] sm:$0xff]
      %v3228 = vld [vmem:[%s314 + $0x82] sm:$0xff]
      %v3229 = vld [vmem:[%s314 + $0x8a] sm:$0xff]
      %v3230 = vld [vmem:[%s314 + $0x92] sm:$0xff]
      %v3231 = vld [vmem:[%s314 + $0x9a] sm:$0xff]
      %v3232 = vld [vmem:[%s314 + $0xa2] sm:$0xff]
      %v3233 = vld [vmem:[%s314 + $0xaa] sm:$0xff]
      %v3234 = vld [vmem:[%s314 + $0xb2] sm:$0xff]
      %v3235 = vld [vmem:[%s314 + $0xba] sm:$0xff]
      %v3236 = vld [vmem:[%s314 + $0xc2] sm:$0xff]
      %v3237 = vld [vmem:[%s314 + $0xca] sm:$0xff]
      %v3238 = vld [vmem:[%s314 + $0xd2] sm:$0xff]
      %v3239 = vld [vmem:[%s314 + $0xda] sm:$0xff]
      %v3240 = vld [vmem:[%s314 + $0xe2] sm:$0xff]
      %v3241 = vld [vmem:[%s314 + $0xea] sm:$0xff]
      %v3242 = vld [vmem:[%s314 + $0xf2] sm:$0xff]
      %v3243 = vld [vmem:[%s314 + $0xfa] sm:$0xff]
      %v3244 = vld [vmem:[%s314 + $0x102] sm:$0xff]
      %v3245 = vld [vmem:[%s314 + $0x10a] sm:$0xff]
      %v3246 = vld [vmem:[%s314 + $0x112] sm:$0xff]
      %v3247 = vld [vmem:[%s314 + $0x11a] sm:$0xff]
      %v3248 = vld [vmem:[%s314 + $0x122] sm:$0xff]
      %v3249 = vld [vmem:[%s314 + $0x12a] sm:$0xff]
      %v3250 = vld [vmem:[%s314 + $0x132] sm:$0xff]
      %v3251 = vld [vmem:[%s314 + $0x13a] sm:$0xff]
      %v3252 = vld [vmem:[%s314 + $0x142] sm:$0xff]
      %v3253 = vld [vmem:[%s314 + $0x14a] sm:$0xff]
      %v3254 = vld [vmem:[%s314 + $0x152] sm:$0xff]
      %v3255 = vld [vmem:[%s314 + $0x15a] sm:$0xff]
      %v3256 = vld [vmem:[%s314 + $0x162] sm:$0xff]
      %v3257 = vld [vmem:[%s314 + $0x16a] sm:$0xff]
      %v3258 = vpack.c.bf16 %v3218, %v3217
      %v3259 = vpack.c.bf16 %v3220, %v3219
      %v3260 = vpack.c.bf16 %v3222, %v3221
      %v3261 = vpack.c.bf16 %v3224, %v3223
      %v3262 = vpack.c.bf16 %v3226, %v3225
      %v3263 = vpack.c.bf16 %v3228, %v3227
      %v3264 = vpack.c.bf16 %v3230, %v3229
      %v3265 = vpack.c.bf16 %v3232, %v3231
      %v3266 = vpack.c.bf16 %v3234, %v3233
      %v3267 = vpack.c.bf16 %v3236, %v3235
      %v3268 = vpack.c.bf16 %v3238, %v3237
      %v3269 = vpack.c.bf16 %v3240, %v3239
      %v3270 = vpack.c.bf16 %v3242, %v3241
      %v3271 = vpack.c.bf16 %v3244, %v3243
      %v3272 = vpack.c.bf16 %v3246, %v3245
      %v3273 = vpack.c.bf16 %v3248, %v3247
      %v3274 = vpack.c.bf16 %v3250, %v3249
      %v3275 = vpack.c.bf16 %v3252, %v3251
      %v3276 = vpack.c.bf16 %v3254, %v3253
      %v3277 = vpack.c.bf16 %v3256, %v3255
      %v3278 = vpack.c.bf16 %v3257, %v3257
      %s3279 = scalar_lea.vmem %s4, 448
      %v3280 = vld [vmem:[%s3279] sm:$0xf]
      %v3281 = vld [vmem:[%s3279 + $0x4] sm:$0xf]
      %v3282 = vld [vmem:[%s3279 + $0x8] sm:$0xf]
      %v3283 = vld [vmem:[%s3279 + $0xc] sm:$0xf]
      %v3284 = vld [vmem:[%s3279 + $0x10] sm:$0xf]
      %v3285 = vld [vmem:[%s3279 + $0x14] sm:$0xf]
      %v3286 = vld [vmem:[%s3279 + $0x18] sm:$0xf]
      %v3287 = vld [vmem:[%s3279 + $0x1c] sm:$0xf]
      %v3288 = vld [vmem:[%s3279 + $0x20] sm:$0xf]
      %v3289 = vld [vmem:[%s3279 + $0x24] sm:$0xf]
      %v3290 = vld [vmem:[%s3279 + $0x28] sm:$0xf]
      %v3291 = vld [vmem:[%s3279 + $0x2c] sm:$0xf]
      %v3292 = vld [vmem:[%s3279 + $0x30] sm:$0xf]
      %v3293 = vld [vmem:[%s3279 + $0x34] sm:$0xf]
      %v3294 = vld [vmem:[%s3279 + $0x38] sm:$0xf]
      %v3295 = vld [vmem:[%s3279 + $0x3c] sm:$0xf]
      %v3312 = vunpack.c.l.b16 %v3280
      %v3313 = vunpack.c.l.b16 %v3281
      %v3314 = vunpack.c.l.b16 %v3282
      %v3315 = vunpack.c.l.b16 %v3283
      %v3316 = vunpack.c.l.b16 %v3284
      %v3317 = vunpack.c.l.b16 %v3285
      %v3318 = vunpack.c.l.b16 %v3286
      %v3319 = vunpack.c.l.b16 %v3287
      %v3320 = vunpack.c.l.b16 %v3288
      %v3321 = vunpack.c.l.b16 %v3289
      %v3322 = vunpack.c.l.b16 %v3290
      %v3323 = vunpack.c.l.b16 %v3291
      %v3324 = vunpack.c.l.b16 %v3292
      %v3325 = vunpack.c.l.b16 %v3293
      %v3326 = vunpack.c.l.b16 %v3294
      %v3327 = vunpack.c.l.b16 %v3295
      %v3328 = vpack.c.b16 %v3313, %v3312
      %v3329 = vpack.c.b16 %v3315, %v3314
      %v3330 = vpack.c.b16 %v3317, %v3316
      %v3331 = vpack.c.b16 %v3319, %v3318
      %v3332 = vpack.c.b16 %v3321, %v3320
      %v3333 = vpack.c.b16 %v3323, %v3322
      %v3334 = vpack.c.b16 %v3325, %v3324
      %v3335 = vpack.c.b16 %v3327, %v3326
      %3344 = vmatprep.subr.bf16.mxu0 0
      %3345 = vmatpush1.bf16.msra.mxu0 %v3335
      %3346 = vmatprep.subr.bf16.mxu0 0
      %3347 = vmatpush1.bf16.msra.mxu0 %v3334
      %3348 = vmatprep.subr.bf16.mxu0 0
      %3349 = vmatpush1.bf16.msra.mxu0 %v3333
      %3350 = vmatprep.subr.bf16.mxu0 0
      %3351 = vmatpush1.bf16.msra.mxu0 %v3332
      %3352 = vmatprep.subr.bf16.mxu0 0
      %3353 = vmatpush1.bf16.msra.mxu0 %v3331
      %3354 = vmatprep.subr.bf16.mxu0 0
      %3355 = vmatpush1.bf16.msra.mxu0 %v3330
      %3356 = vmatprep.subr.bf16.mxu0 0
      %3357 = vmatpush1.bf16.msra.mxu0 %v3329
      %3358 = vmatprep.subr.bf16.mxu0 0
      %3359 = vmatpush1.bf16.msra.mxu0 %v3328
      %3360 = vmatprep.subr.bf16.mxu0 0
      %3361 = vmatpush2.bf16.msra.mxu0 0
      %3362 = vmatprep.subr.bf16.mxu0 0
      %3363 = vmatpush2.bf16.msra.mxu0 0
      %3364 = vmatprep.subr.bf16.mxu0 0
      %3365 = vmatpush2.bf16.msra.mxu0 0
      %3366 = vmatprep.subr.bf16.mxu0 0
      %3367 = vmatpush2.bf16.msra.mxu0 0
      %3368 = vmatprep.subr.bf16.mxu0 0
      %3369 = vmatpush2.bf16.msra.mxu0 0
      %3370 = vmatprep.subr.bf16.mxu0 0
      %3371 = vmatpush2.bf16.msra.mxu0 0
      %3372 = vmatprep.subr.bf16.mxu0 0
      %3373 = vmatpush2.bf16.msra.mxu0 0
      %3374 = vmatprep.subr.bf16.mxu0 0
      %3375 = vmatpush2.bf16.msra.mxu0 0
      %3376 = vmatprep.mubr.bf16.mxu0 0
      %3377 = vmatmul.mubr.bf16.gmra.mxu0 %v3258
      %v3378 = vpop.f32.mrf.mxu0
      %v3379 = vadd.f32 0.0, %v3378
      %v3380 = vpop.f32.mrf.mxu0
      %v3381 = vpop.f32.mrf.mxu0
      %v3382 = vadd.f32 0.0, %v3381
      %v3383 = vpop.f32.mrf.mxu0
      %3384 = vmatprep.mubr.bf16.mxu0 0
      %3385 = vmatmul.mubr.bf16.gmra.mxu0 %v3259
      %v3386 = vpop.f32.mrf.mxu0
      %v3387 = vadd.f32 0.0, %v3386
      %v3388 = vpop.f32.mrf.mxu0
      %v3389 = vpop.f32.mrf.mxu0
      %v3390 = vadd.f32 0.0, %v3389
      %v3391 = vpop.f32.mrf.mxu0
      %3392 = vmatprep.mubr.bf16.mxu0 0
      %3393 = vmatmul.mubr.bf16.gmra.mxu0 %v3260
      %v3394 = vpop.f32.mrf.mxu0
      %v3395 = vadd.f32 0.0, %v3394
      %v3396 = vpop.f32.mrf.mxu0
      %v3397 = vpop.f32.mrf.mxu0
      %v3398 = vadd.f32 0.0, %v3397
      %v3399 = vpop.f32.mrf.mxu0
      %3400 = vmatprep.mubr.bf16.mxu0 0
      %3401 = vmatmul.mubr.bf16.gmra.mxu0 %v3261
      %v3402 = vpop.f32.mrf.mxu0
      %v3403 = vadd.f32 0.0, %v3402
      %v3404 = vpop.f32.mrf.mxu0
      %v3405 = vpop.f32.mrf.mxu0
      %v3406 = vadd.f32 0.0, %v3405
      %v3407 = vpop.f32.mrf.mxu0
      %3408 = vmatprep.mubr.bf16.mxu0 0
      %3409 = vmatmul.mubr.bf16.gmra.mxu0 %v3262
      %v3410 = vpop.f32.mrf.mxu0
      %v3411 = vadd.f32 0.0, %v3410
      %v3412 = vpop.f32.mrf.mxu0
      %v3413 = vpop.f32.mrf.mxu0
      %v3414 = vadd.f32 0.0, %v3413
      %v3415 = vpop.f32.mrf.mxu0
      %3416 = vmatprep.mubr.bf16.mxu0 0
      %3417 = vmatmul.mubr.bf16.gmra.mxu0 %v3263
      %v3418 = vpop.f32.mrf.mxu0
      %v3419 = vadd.f32 0.0, %v3418
      %v3420 = vpop.f32.mrf.mxu0
      %v3421 = vpop.f32.mrf.mxu0
      %v3422 = vadd.f32 0.0, %v3421
      %v3423 = vpop.f32.mrf.mxu0
      %3424 = vmatprep.mubr.bf16.mxu0 0
      %3425 = vmatmul.mubr.bf16.gmra.mxu0 %v3264
      %v3426 = vpop.f32.mrf.mxu0
      %v3427 = vadd.f32 0.0, %v3426
      %v3428 = vpop.f32.mrf.mxu0
      %v3429 = vpop.f32.mrf.mxu0
      %v3430 = vadd.f32 0.0, %v3429
      %v3431 = vpop.f32.mrf.mxu0
      %3432 = vmatprep.mubr.bf16.mxu0 0
      %3433 = vmatmul.mubr.bf16.gmra.mxu0 %v3265
      %v3434 = vpop.f32.mrf.mxu0
      %v3435 = vadd.f32 0.0, %v3434
      %v3436 = vpop.f32.mrf.mxu0
      %v3437 = vpop.f32.mrf.mxu0
      %v3438 = vadd.f32 0.0, %v3437
      %v3439 = vpop.f32.mrf.mxu0
      %3440 = vmatprep.mubr.bf16.mxu0 0
      %3441 = vmatmul.mubr.bf16.gmra.mxu0 %v3266
      %v3442 = vpop.f32.mrf.mxu0
      %v3443 = vadd.f32 0.0, %v3442
      %v3444 = vpop.f32.mrf.mxu0
      %v3445 = vpop.f32.mrf.mxu0
      %v3446 = vadd.f32 0.0, %v3445
      %v3447 = vpop.f32.mrf.mxu0
      %3448 = vmatprep.mubr.bf16.mxu0 0
      %3449 = vmatmul.mubr.bf16.gmra.mxu0 %v3267
      %v3450 = vpop.f32.mrf.mxu0
      %v3451 = vadd.f32 0.0, %v3450
      %v3452 = vpop.f32.mrf.mxu0
      %v3453 = vpop.f32.mrf.mxu0
      %v3454 = vadd.f32 0.0, %v3453
      %v3455 = vpop.f32.mrf.mxu0
      %3456 = vmatprep.mubr.bf16.mxu0 0
      %3457 = vmatmul.mubr.bf16.gmra.mxu0 %v3268
      %v3458 = vpop.f32.mrf.mxu0
      %v3459 = vadd.f32 0.0, %v3458
      %v3460 = vpop.f32.mrf.mxu0
      %v3461 = vpop.f32.mrf.mxu0
      %v3462 = vadd.f32 0.0, %v3461
      %v3463 = vpop.f32.mrf.mxu0
      %3464 = vmatprep.mubr.bf16.mxu0 0
      %3465 = vmatmul.mubr.bf16.gmra.mxu0 %v3269
      %v3466 = vpop.f32.mrf.mxu0
      %v3467 = vadd.f32 0.0, %v3466
      %v3468 = vpop.f32.mrf.mxu0
      %v3469 = vpop.f32.mrf.mxu0
      %v3470 = vadd.f32 0.0, %v3469
      %v3471 = vpop.f32.mrf.mxu0
      %3472 = vmatprep.mubr.bf16.mxu0 0
      %3473 = vmatmul.mubr.bf16.gmra.mxu0 %v3270
      %v3474 = vpop.f32.mrf.mxu0
      %v3475 = vadd.f32 0.0, %v3474
      %v3476 = vpop.f32.mrf.mxu0
      %v3477 = vpop.f32.mrf.mxu0
      %v3478 = vadd.f32 0.0, %v3477
      %v3479 = vpop.f32.mrf.mxu0
      %3480 = vmatprep.mubr.bf16.mxu0 0
      %3481 = vmatmul.mubr.bf16.gmra.mxu0 %v3271
      %v3482 = vpop.f32.mrf.mxu0
      %v3483 = vadd.f32 0.0, %v3482
      %v3484 = vpop.f32.mrf.mxu0
      %v3485 = vpop.f32.mrf.mxu0
      %v3486 = vadd.f32 0.0, %v3485
      %v3487 = vpop.f32.mrf.mxu0
      %3488 = vmatprep.mubr.bf16.mxu0 0
      %3489 = vmatmul.mubr.bf16.gmra.mxu0 %v3272
      %v3490 = vpop.f32.mrf.mxu0
      %v3491 = vadd.f32 0.0, %v3490
      %v3492 = vpop.f32.mrf.mxu0
      %v3493 = vpop.f32.mrf.mxu0
      %v3494 = vadd.f32 0.0, %v3493
      %v3495 = vpop.f32.mrf.mxu0
      %3496 = vmatprep.mubr.bf16.mxu0 0
      %3497 = vmatmul.mubr.bf16.gmra.mxu0 %v3273
      %v3498 = vpop.f32.mrf.mxu0
      %v3499 = vadd.f32 0.0, %v3498
      %v3500 = vpop.f32.mrf.mxu0
      %v3501 = vpop.f32.mrf.mxu0
      %v3502 = vadd.f32 0.0, %v3501
      %v3503 = vpop.f32.mrf.mxu0
      %3504 = vmatprep.mubr.bf16.mxu0 0
      %3505 = vmatmul.mubr.bf16.gmra.mxu0 %v3274
      %v3506 = vpop.f32.mrf.mxu0
      %v3507 = vadd.f32 0.0, %v3506
      %v3508 = vpop.f32.mrf.mxu0
      %v3509 = vpop.f32.mrf.mxu0
      %v3510 = vadd.f32 0.0, %v3509
      %v3511 = vpop.f32.mrf.mxu0
      %3512 = vmatprep.mubr.bf16.mxu0 0
      %3513 = vmatmul.mubr.bf16.gmra.mxu0 %v3275
      %v3514 = vpop.f32.mrf.mxu0
      %v3515 = vadd.f32 0.0, %v3514
      %v3516 = vpop.f32.mrf.mxu0
      %v3517 = vpop.f32.mrf.mxu0
      %v3518 = vadd.f32 0.0, %v3517
      %v3519 = vpop.f32.mrf.mxu0
      %3520 = vmatprep.mubr.bf16.mxu0 0
      %3521 = vmatmul.mubr.bf16.gmra.mxu0 %v3276
      %v3522 = vpop.f32.mrf.mxu0
      %v3523 = vadd.f32 0.0, %v3522
      %v3524 = vpop.f32.mrf.mxu0
      %v3525 = vpop.f32.mrf.mxu0
      %v3526 = vadd.f32 0.0, %v3525
      %v3527 = vpop.f32.mrf.mxu0
      %3528 = vmatprep.mubr.bf16.mxu0 0
      %3529 = vmatmul.mubr.bf16.gmra.mxu0 %v3277
      %v3530 = vpop.f32.mrf.mxu0
      %v3531 = vadd.f32 0.0, %v3530
      %v3532 = vpop.f32.mrf.mxu0
      %v3533 = vpop.f32.mrf.mxu0
      %v3534 = vadd.f32 0.0, %v3533
      %v3535 = vpop.f32.mrf.mxu0
      %3536 = vmatprep.mubr.bf16.mxu0 0
      %3537 = vmatmul.mubr.bf16.gmra.mxu0 %v3278
      %v3538 = vpop.f32.mrf.mxu0
      %v3539 = vadd.f32 0.0, %v3538
      %v3540 = vpop.f32.mrf.mxu0
      %v3541 = vpop.f32.mrf.mxu0
      %v3542 = vpop.f32.mrf.mxu0
      %3543 = vdwg.mxu0
      %v3544 = vadd.f32 %v3176, %v3379
      %v3545 = vadd.f32 %v3177, %v3382
      %v3546 = vadd.f32 %v3178, %v3387
      %v3547 = vadd.f32 %v3179, %v3390
      %v3548 = vadd.f32 %v3180, %v3395
      %v3549 = vadd.f32 %v3181, %v3398
      %v3550 = vadd.f32 %v3182, %v3403
      %v3551 = vadd.f32 %v3183, %v3406
      %v3552 = vadd.f32 %v3184, %v3411
      %v3553 = vadd.f32 %v3185, %v3414
      %v3554 = vadd.f32 %v3186, %v3419
      %v3555 = vadd.f32 %v3187, %v3422
      %v3556 = vadd.f32 %v3188, %v3427
      %v3557 = vadd.f32 %v3189, %v3430
      %v3558 = vadd.f32 %v3190, %v3435
      %v3559 = vadd.f32 %v3191, %v3438
      %v3560 = vadd.f32 %v3192, %v3443
      %v3561 = vadd.f32 %v3193, %v3446
      %v3562 = vadd.f32 %v3194, %v3451
      %v3563 = vadd.f32 %v3195, %v3454
      %v3564 = vadd.f32 %v3196, %v3459
      %v3565 = vadd.f32 %v3197, %v3462
      %v3566 = vadd.f32 %v3198, %v3467
      %v3567 = vadd.f32 %v3199, %v3470
      %v3568 = vadd.f32 %v3200, %v3475
      %v3569 = vadd.f32 %v3201, %v3478
      %v3570 = vadd.f32 %v3202, %v3483
      %v3571 = vadd.f32 %v3203, %v3486
      %v3572 = vadd.f32 %v3204, %v3491
      %v3573 = vadd.f32 %v3205, %v3494
      %v3574 = vadd.f32 %v3206, %v3499
      %v3575 = vadd.f32 %v3207, %v3502
      %v3576 = vadd.f32 %v3208, %v3507
      %v3577 = vadd.f32 %v3209, %v3510
      %v3578 = vadd.f32 %v3210, %v3515
      %v3579 = vadd.f32 %v3211, %v3518
      %v3580 = vadd.f32 %v3212, %v3523
      %v3581 = vadd.f32 %v3213, %v3526
      %v3582 = vadd.f32 %v3214, %v3531
      %v3583 = vadd.f32 %v3215, %v3534
      %v3584 = vadd.f32 %v3216, %v3539
      %v3585 = vld [vmem:[%s314 + $0x2b] sm:$0xff]
      %v3586 = vld [vmem:[%s314 + $0x33] sm:$0xff]
      %v3587 = vld [vmem:[%s314 + $0x3b] sm:$0xff]
      %v3588 = vld [vmem:[%s314 + $0x43] sm:$0xff]
      %v3589 = vld [vmem:[%s314 + $0x4b] sm:$0xff]
      %v3590 = vld [vmem:[%s314 + $0x53] sm:$0xff]
      %v3591 = vld [vmem:[%s314 + $0x5b] sm:$0xff]
      %v3592 = vld [vmem:[%s314 + $0x63] sm:$0xff]
      %v3593 = vld [vmem:[%s314 + $0x6b] sm:$0xff]
      %v3594 = vld [vmem:[%s314 + $0x73] sm:$0xff]
      %v3595 = vld [vmem:[%s314 + $0x7b] sm:$0xff]
      %v3596 = vld [vmem:[%s314 + $0x83] sm:$0xff]
      %v3597 = vld [vmem:[%s314 + $0x8b] sm:$0xff]
      %v3598 = vld [vmem:[%s314 + $0x93] sm:$0xff]
      %v3599 = vld [vmem:[%s314 + $0x9b] sm:$0xff]
      %v3600 = vld [vmem:[%s314 + $0xa3] sm:$0xff]
      %v3601 = vld [vmem:[%s314 + $0xab] sm:$0xff]
      %v3602 = vld [vmem:[%s314 + $0xb3] sm:$0xff]
      %v3603 = vld [vmem:[%s314 + $0xbb] sm:$0xff]
      %v3604 = vld [vmem:[%s314 + $0xc3] sm:$0xff]
      %v3605 = vld [vmem:[%s314 + $0xcb] sm:$0xff]
      %v3606 = vld [vmem:[%s314 + $0xd3] sm:$0xff]
      %v3607 = vld [vmem:[%s314 + $0xdb] sm:$0xff]
      %v3608 = vld [vmem:[%s314 + $0xe3] sm:$0xff]
      %v3609 = vld [vmem:[%s314 + $0xeb] sm:$0xff]
      %v3610 = vld [vmem:[%s314 + $0xf3] sm:$0xff]
      %v3611 = vld [vmem:[%s314 + $0xfb] sm:$0xff]
      %v3612 = vld [vmem:[%s314 + $0x103] sm:$0xff]
      %v3613 = vld [vmem:[%s314 + $0x10b] sm:$0xff]
      %v3614 = vld [vmem:[%s314 + $0x113] sm:$0xff]
      %v3615 = vld [vmem:[%s314 + $0x11b] sm:$0xff]
      %v3616 = vld [vmem:[%s314 + $0x123] sm:$0xff]
      %v3617 = vld [vmem:[%s314 + $0x12b] sm:$0xff]
      %v3618 = vld [vmem:[%s314 + $0x133] sm:$0xff]
      %v3619 = vld [vmem:[%s314 + $0x13b] sm:$0xff]
      %v3620 = vld [vmem:[%s314 + $0x143] sm:$0xff]
      %v3621 = vld [vmem:[%s314 + $0x14b] sm:$0xff]
      %v3622 = vld [vmem:[%s314 + $0x153] sm:$0xff]
      %v3623 = vld [vmem:[%s314 + $0x15b] sm:$0xff]
      %v3624 = vld [vmem:[%s314 + $0x163] sm:$0xff]
      %v3625 = vld [vmem:[%s314 + $0x16b] sm:$0xff]
      %v3626 = vpack.c.bf16 %v3586, %v3585
      %v3627 = vpack.c.bf16 %v3588, %v3587
      %v3628 = vpack.c.bf16 %v3590, %v3589
      %v3629 = vpack.c.bf16 %v3592, %v3591
      %v3630 = vpack.c.bf16 %v3594, %v3593
      %v3631 = vpack.c.bf16 %v3596, %v3595
      %v3632 = vpack.c.bf16 %v3598, %v3597
      %v3633 = vpack.c.bf16 %v3600, %v3599
      %v3634 = vpack.c.bf16 %v3602, %v3601
      %v3635 = vpack.c.bf16 %v3604, %v3603
      %v3636 = vpack.c.bf16 %v3606, %v3605
      %v3637 = vpack.c.bf16 %v3608, %v3607
      %v3638 = vpack.c.bf16 %v3610, %v3609
      %v3639 = vpack.c.bf16 %v3612, %v3611
      %v3640 = vpack.c.bf16 %v3614, %v3613
      %v3641 = vpack.c.bf16 %v3616, %v3615
      %v3642 = vpack.c.bf16 %v3618, %v3617
      %v3643 = vpack.c.bf16 %v3620, %v3619
      %v3644 = vpack.c.bf16 %v3622, %v3621
      %v3645 = vpack.c.bf16 %v3624, %v3623
      %v3646 = vpack.c.bf16 %v3625, %v3625
      %s3647 = scalar_lea.vmem %s4, 512
      %v3648 = vld [vmem:[%s3647] sm:$0xf]
      %v3649 = vld [vmem:[%s3647 + $0x4] sm:$0xf]
      %v3650 = vld [vmem:[%s3647 + $0x8] sm:$0xf]
      %v3651 = vld [vmem:[%s3647 + $0xc] sm:$0xf]
      %v3652 = vld [vmem:[%s3647 + $0x10] sm:$0xf]
      %v3653 = vld [vmem:[%s3647 + $0x14] sm:$0xf]
      %v3654 = vld [vmem:[%s3647 + $0x18] sm:$0xf]
      %v3655 = vld [vmem:[%s3647 + $0x1c] sm:$0xf]
      %v3656 = vld [vmem:[%s3647 + $0x20] sm:$0xf]
      %v3657 = vld [vmem:[%s3647 + $0x24] sm:$0xf]
      %v3658 = vld [vmem:[%s3647 + $0x28] sm:$0xf]
      %v3659 = vld [vmem:[%s3647 + $0x2c] sm:$0xf]
      %v3660 = vld [vmem:[%s3647 + $0x30] sm:$0xf]
      %v3661 = vld [vmem:[%s3647 + $0x34] sm:$0xf]
      %v3662 = vld [vmem:[%s3647 + $0x38] sm:$0xf]
      %v3663 = vld [vmem:[%s3647 + $0x3c] sm:$0xf]
      %v3680 = vunpack.c.l.b16 %v3648
      %v3681 = vunpack.c.l.b16 %v3649
      %v3682 = vunpack.c.l.b16 %v3650
      %v3683 = vunpack.c.l.b16 %v3651
      %v3684 = vunpack.c.l.b16 %v3652
      %v3685 = vunpack.c.l.b16 %v3653
      %v3686 = vunpack.c.l.b16 %v3654
      %v3687 = vunpack.c.l.b16 %v3655
      %v3688 = vunpack.c.l.b16 %v3656
      %v3689 = vunpack.c.l.b16 %v3657
      %v3690 = vunpack.c.l.b16 %v3658
      %v3691 = vunpack.c.l.b16 %v3659
      %v3692 = vunpack.c.l.b16 %v3660
      %v3693 = vunpack.c.l.b16 %v3661
      %v3694 = vunpack.c.l.b16 %v3662
      %v3695 = vunpack.c.l.b16 %v3663
      %v3696 = vpack.c.b16 %v3681, %v3680
      %v3697 = vpack.c.b16 %v3683, %v3682
      %v3698 = vpack.c.b16 %v3685, %v3684
      %v3699 = vpack.c.b16 %v3687, %v3686
      %v3700 = vpack.c.b16 %v3689, %v3688
      %v3701 = vpack.c.b16 %v3691, %v3690
      %v3702 = vpack.c.b16 %v3693, %v3692
      %v3703 = vpack.c.b16 %v3695, %v3694
      %3712 = vmatprep.subr.bf16.mxu0 0
      %3713 = vmatpush1.bf16.msra.mxu0 %v3703
      %3714 = vmatprep.subr.bf16.mxu0 0
      %3715 = vmatpush1.bf16.msra.mxu0 %v3702
      %3716 = vmatprep.subr.bf16.mxu0 0
      %3717 = vmatpush1.bf16.msra.mxu0 %v3701
      %3718 = vmatprep.subr.bf16.mxu0 0
      %3719 = vmatpush1.bf16.msra.mxu0 %v3700
      %3720 = vmatprep.subr.bf16.mxu0 0
      %3721 = vmatpush1.bf16.msra.mxu0 %v3699
      %3722 = vmatprep.subr.bf16.mxu0 0
      %3723 = vmatpush1.bf16.msra.mxu0 %v3698
      %3724 = vmatprep.subr.bf16.mxu0 0
      %3725 = vmatpush1.bf16.msra.mxu0 %v3697
      %3726 = vmatprep.subr.bf16.mxu0 0
      %3727 = vmatpush1.bf16.msra.mxu0 %v3696
      %3728 = vmatprep.subr.bf16.mxu0 0
      %3729 = vmatpush2.bf16.msra.mxu0 0
      %3730 = vmatprep.subr.bf16.mxu0 0
      %3731 = vmatpush2.bf16.msra.mxu0 0
      %3732 = vmatprep.subr.bf16.mxu0 0
      %3733 = vmatpush2.bf16.msra.mxu0 0
      %3734 = vmatprep.subr.bf16.mxu0 0
      %3735 = vmatpush2.bf16.msra.mxu0 0
      %3736 = vmatprep.subr.bf16.mxu0 0
      %3737 = vmatpush2.bf16.msra.mxu0 0
      %3738 = vmatprep.subr.bf16.mxu0 0
      %3739 = vmatpush2.bf16.msra.mxu0 0
      %3740 = vmatprep.subr.bf16.mxu0 0
      %3741 = vmatpush2.bf16.msra.mxu0 0
      %3742 = vmatprep.subr.bf16.mxu0 0
      %3743 = vmatpush2.bf16.msra.mxu0 0
      %3744 = vmatprep.mubr.bf16.mxu0 0
      %3745 = vmatmul.mubr.bf16.gmra.mxu0 %v3626
      %v3746 = vpop.f32.mrf.mxu0
      %v3747 = vadd.f32 0.0, %v3746
      %v3748 = vpop.f32.mrf.mxu0
      %v3749 = vpop.f32.mrf.mxu0
      %v3750 = vadd.f32 0.0, %v3749
      %v3751 = vpop.f32.mrf.mxu0
      %3752 = vmatprep.mubr.bf16.mxu0 0
      %3753 = vmatmul.mubr.bf16.gmra.mxu0 %v3627
      %v3754 = vpop.f32.mrf.mxu0
      %v3755 = vadd.f32 0.0, %v3754
      %v3756 = vpop.f32.mrf.mxu0
      %v3757 = vpop.f32.mrf.mxu0
      %v3758 = vadd.f32 0.0, %v3757
      %v3759 = vpop.f32.mrf.mxu0
      %3760 = vmatprep.mubr.bf16.mxu0 0
      %3761 = vmatmul.mubr.bf16.gmra.mxu0 %v3628
      %v3762 = vpop.f32.mrf.mxu0
      %v3763 = vadd.f32 0.0, %v3762
      %v3764 = vpop.f32.mrf.mxu0
      %v3765 = vpop.f32.mrf.mxu0
      %v3766 = vadd.f32 0.0, %v3765
      %v3767 = vpop.f32.mrf.mxu0
      %3768 = vmatprep.mubr.bf16.mxu0 0
      %3769 = vmatmul.mubr.bf16.gmra.mxu0 %v3629
      %v3770 = vpop.f32.mrf.mxu0
      %v3771 = vadd.f32 0.0, %v3770
      %v3772 = vpop.f32.mrf.mxu0
      %v3773 = vpop.f32.mrf.mxu0
      %v3774 = vadd.f32 0.0, %v3773
      %v3775 = vpop.f32.mrf.mxu0
      %3776 = vmatprep.mubr.bf16.mxu0 0
      %3777 = vmatmul.mubr.bf16.gmra.mxu0 %v3630
      %v3778 = vpop.f32.mrf.mxu0
      %v3779 = vadd.f32 0.0, %v3778
      %v3780 = vpop.f32.mrf.mxu0
      %v3781 = vpop.f32.mrf.mxu0
      %v3782 = vadd.f32 0.0, %v3781
      %v3783 = vpop.f32.mrf.mxu0
      %3784 = vmatprep.mubr.bf16.mxu0 0
      %3785 = vmatmul.mubr.bf16.gmra.mxu0 %v3631
      %v3786 = vpop.f32.mrf.mxu0
      %v3787 = vadd.f32 0.0, %v3786
      %v3788 = vpop.f32.mrf.mxu0
      %v3789 = vpop.f32.mrf.mxu0
      %v3790 = vadd.f32 0.0, %v3789
      %v3791 = vpop.f32.mrf.mxu0
      %3792 = vmatprep.mubr.bf16.mxu0 0
      %3793 = vmatmul.mubr.bf16.gmra.mxu0 %v3632
      %v3794 = vpop.f32.mrf.mxu0
      %v3795 = vadd.f32 0.0, %v3794
      %v3796 = vpop.f32.mrf.mxu0
      %v3797 = vpop.f32.mrf.mxu0
      %v3798 = vadd.f32 0.0, %v3797
      %v3799 = vpop.f32.mrf.mxu0
      %3800 = vmatprep.mubr.bf16.mxu0 0
      %3801 = vmatmul.mubr.bf16.gmra.mxu0 %v3633
      %v3802 = vpop.f32.mrf.mxu0
      %v3803 = vadd.f32 0.0, %v3802
      %v3804 = vpop.f32.mrf.mxu0
      %v3805 = vpop.f32.mrf.mxu0
      %v3806 = vadd.f32 0.0, %v3805
      %v3807 = vpop.f32.mrf.mxu0
      %3808 = vmatprep.mubr.bf16.mxu0 0
      %3809 = vmatmul.mubr.bf16.gmra.mxu0 %v3634
      %v3810 = vpop.f32.mrf.mxu0
      %v3811 = vadd.f32 0.0, %v3810
      %v3812 = vpop.f32.mrf.mxu0
      %v3813 = vpop.f32.mrf.mxu0
      %v3814 = vadd.f32 0.0, %v3813
      %v3815 = vpop.f32.mrf.mxu0
      %3816 = vmatprep.mubr.bf16.mxu0 0
      %3817 = vmatmul.mubr.bf16.gmra.mxu0 %v3635
      %v3818 = vpop.f32.mrf.mxu0
      %v3819 = vadd.f32 0.0, %v3818
      %v3820 = vpop.f32.mrf.mxu0
      %v3821 = vpop.f32.mrf.mxu0
      %v3822 = vadd.f32 0.0, %v3821
      %v3823 = vpop.f32.mrf.mxu0
      %3824 = vmatprep.mubr.bf16.mxu0 0
      %3825 = vmatmul.mubr.bf16.gmra.mxu0 %v3636
      %v3826 = vpop.f32.mrf.mxu0
      %v3827 = vadd.f32 0.0, %v3826
      %v3828 = vpop.f32.mrf.mxu0
      %v3829 = vpop.f32.mrf.mxu0
      %v3830 = vadd.f32 0.0, %v3829
      %v3831 = vpop.f32.mrf.mxu0
      %3832 = vmatprep.mubr.bf16.mxu0 0
      %3833 = vmatmul.mubr.bf16.gmra.mxu0 %v3637
      %v3834 = vpop.f32.mrf.mxu0
      %v3835 = vadd.f32 0.0, %v3834
      %v3836 = vpop.f32.mrf.mxu0
      %v3837 = vpop.f32.mrf.mxu0
      %v3838 = vadd.f32 0.0, %v3837
      %v3839 = vpop.f32.mrf.mxu0
      %3840 = vmatprep.mubr.bf16.mxu0 0
      %3841 = vmatmul.mubr.bf16.gmra.mxu0 %v3638
      %v3842 = vpop.f32.mrf.mxu0
      %v3843 = vadd.f32 0.0, %v3842
      %v3844 = vpop.f32.mrf.mxu0
      %v3845 = vpop.f32.mrf.mxu0
      %v3846 = vadd.f32 0.0, %v3845
      %v3847 = vpop.f32.mrf.mxu0
      %3848 = vmatprep.mubr.bf16.mxu0 0
      %3849 = vmatmul.mubr.bf16.gmra.mxu0 %v3639
      %v3850 = vpop.f32.mrf.mxu0
      %v3851 = vadd.f32 0.0, %v3850
      %v3852 = vpop.f32.mrf.mxu0
      %v3853 = vpop.f32.mrf.mxu0
      %v3854 = vadd.f32 0.0, %v3853
      %v3855 = vpop.f32.mrf.mxu0
      %3856 = vmatprep.mubr.bf16.mxu0 0
      %3857 = vmatmul.mubr.bf16.gmra.mxu0 %v3640
      %v3858 = vpop.f32.mrf.mxu0
      %v3859 = vadd.f32 0.0, %v3858
      %v3860 = vpop.f32.mrf.mxu0
      %v3861 = vpop.f32.mrf.mxu0
      %v3862 = vadd.f32 0.0, %v3861
      %v3863 = vpop.f32.mrf.mxu0
      %3864 = vmatprep.mubr.bf16.mxu0 0
      %3865 = vmatmul.mubr.bf16.gmra.mxu0 %v3641
      %v3866 = vpop.f32.mrf.mxu0
      %v3867 = vadd.f32 0.0, %v3866
      %v3868 = vpop.f32.mrf.mxu0
      %v3869 = vpop.f32.mrf.mxu0
      %v3870 = vadd.f32 0.0, %v3869
      %v3871 = vpop.f32.mrf.mxu0
      %3872 = vmatprep.mubr.bf16.mxu0 0
      %3873 = vmatmul.mubr.bf16.gmra.mxu0 %v3642
      %v3874 = vpop.f32.mrf.mxu0
      %v3875 = vadd.f32 0.0, %v3874
      %v3876 = vpop.f32.mrf.mxu0
      %v3877 = vpop.f32.mrf.mxu0
      %v3878 = vadd.f32 0.0, %v3877
      %v3879 = vpop.f32.mrf.mxu0
      %3880 = vmatprep.mubr.bf16.mxu0 0
      %3881 = vmatmul.mubr.bf16.gmra.mxu0 %v3643
      %v3882 = vpop.f32.mrf.mxu0
      %v3883 = vadd.f32 0.0, %v3882
      %v3884 = vpop.f32.mrf.mxu0
      %v3885 = vpop.f32.mrf.mxu0
      %v3886 = vadd.f32 0.0, %v3885
      %v3887 = vpop.f32.mrf.mxu0
      %3888 = vmatprep.mubr.bf16.mxu0 0
      %3889 = vmatmul.mubr.bf16.gmra.mxu0 %v3644
      %v3890 = vpop.f32.mrf.mxu0
      %v3891 = vadd.f32 0.0, %v3890
      %v3892 = vpop.f32.mrf.mxu0
      %v3893 = vpop.f32.mrf.mxu0
      %v3894 = vadd.f32 0.0, %v3893
      %v3895 = vpop.f32.mrf.mxu0
      %3896 = vmatprep.mubr.bf16.mxu0 0
      %3897 = vmatmul.mubr.bf16.gmra.mxu0 %v3645
      %v3898 = vpop.f32.mrf.mxu0
      %v3899 = vadd.f32 0.0, %v3898
      %v3900 = vpop.f32.mrf.mxu0
      %v3901 = vpop.f32.mrf.mxu0
      %v3902 = vadd.f32 0.0, %v3901
      %v3903 = vpop.f32.mrf.mxu0
      %3904 = vmatprep.mubr.bf16.mxu0 0
      %3905 = vmatmul.mubr.bf16.gmra.mxu0 %v3646
      %v3906 = vpop.f32.mrf.mxu0
      %v3907 = vadd.f32 0.0, %v3906
      %v3908 = vpop.f32.mrf.mxu0
      %v3909 = vpop.f32.mrf.mxu0
      %v3910 = vpop.f32.mrf.mxu0
      %3911 = vdwg.mxu0
      %v3912 = vadd.f32 %v3544, %v3747
      %v3913 = vadd.f32 %v3545, %v3750
      %v3914 = vadd.f32 %v3546, %v3755
      %v3915 = vadd.f32 %v3547, %v3758
      %v3916 = vadd.f32 %v3548, %v3763
      %v3917 = vadd.f32 %v3549, %v3766
      %v3918 = vadd.f32 %v3550, %v3771
      %v3919 = vadd.f32 %v3551, %v3774
      %v3920 = vadd.f32 %v3552, %v3779
      %v3921 = vadd.f32 %v3553, %v3782
      %v3922 = vadd.f32 %v3554, %v3787
      %v3923 = vadd.f32 %v3555, %v3790
      %v3924 = vadd.f32 %v3556, %v3795
      %v3925 = vadd.f32 %v3557, %v3798
      %v3926 = vadd.f32 %v3558, %v3803
      %v3927 = vadd.f32 %v3559, %v3806
      %v3928 = vadd.f32 %v3560, %v3811
      %v3929 = vadd.f32 %v3561, %v3814
      %v3930 = vadd.f32 %v3562, %v3819
      %v3931 = vadd.f32 %v3563, %v3822
      %v3932 = vadd.f32 %v3564, %v3827
      %v3933 = vadd.f32 %v3565, %v3830
      %v3934 = vadd.f32 %v3566, %v3835
      %v3935 = vadd.f32 %v3567, %v3838
      %v3936 = vadd.f32 %v3568, %v3843
      %v3937 = vadd.f32 %v3569, %v3846
      %v3938 = vadd.f32 %v3570, %v3851
      %v3939 = vadd.f32 %v3571, %v3854
      %v3940 = vadd.f32 %v3572, %v3859
      %v3941 = vadd.f32 %v3573, %v3862
      %v3942 = vadd.f32 %v3574, %v3867
      %v3943 = vadd.f32 %v3575, %v3870
      %v3944 = vadd.f32 %v3576, %v3875
      %v3945 = vadd.f32 %v3577, %v3878
      %v3946 = vadd.f32 %v3578, %v3883
      %v3947 = vadd.f32 %v3579, %v3886
      %v3948 = vadd.f32 %v3580, %v3891
      %v3949 = vadd.f32 %v3581, %v3894
      %v3950 = vadd.f32 %v3582, %v3899
      %v3951 = vadd.f32 %v3583, %v3902
      %v3952 = vadd.f32 %v3584, %v3907
      %v3953 = vld [vmem:[%s5] sm:$0x1]
      %v3955 = vlaneseq
      %v3956 = vshrl.u32 %v3955, 7
      %v3957 = vsub.s32 0, %v3956
      %v3958 = vrot.slane %v3953, %v3957
      %v3960 = vadd.f32 %v3912, %v3958
      %v3961 = vadd.f32 %v3913, %v3958
      %v3962 = vadd.f32 %v3914, %v3958
      %v3963 = vadd.f32 %v3915, %v3958
      %v3964 = vadd.f32 %v3916, %v3958
      %v3965 = vadd.f32 %v3917, %v3958
      %v3966 = vadd.f32 %v3918, %v3958
      %v3967 = vadd.f32 %v3919, %v3958
      %v3968 = vadd.f32 %v3920, %v3958
      %v3969 = vadd.f32 %v3921, %v3958
      %v3970 = vadd.f32 %v3922, %v3958
      %v3971 = vadd.f32 %v3923, %v3958
      %v3972 = vadd.f32 %v3924, %v3958
      %v3973 = vadd.f32 %v3925, %v3958
      %v3974 = vadd.f32 %v3926, %v3958
      %v3975 = vadd.f32 %v3927, %v3958
      %v3976 = vadd.f32 %v3928, %v3958
      %v3977 = vadd.f32 %v3929, %v3958
      %v3978 = vadd.f32 %v3930, %v3958
      %v3979 = vadd.f32 %v3931, %v3958
      %v3980 = vadd.f32 %v3932, %v3958
      %v3981 = vadd.f32 %v3933, %v3958
      %v3982 = vadd.f32 %v3934, %v3958
      %v3983 = vadd.f32 %v3935, %v3958
      %v3984 = vadd.f32 %v3936, %v3958
      %v3985 = vadd.f32 %v3937, %v3958
      %v3986 = vadd.f32 %v3938, %v3958
      %v3987 = vadd.f32 %v3939, %v3958
      %v3988 = vadd.f32 %v3940, %v3958
      %v3989 = vadd.f32 %v3941, %v3958
      %v3990 = vadd.f32 %v3942, %v3958
      %v3991 = vadd.f32 %v3943, %v3958
      %v3992 = vadd.f32 %v3944, %v3958
      %v3993 = vadd.f32 %v3945, %v3958
      %v3994 = vadd.f32 %v3946, %v3958
      %v3995 = vadd.f32 %v3947, %v3958
      %v3996 = vadd.f32 %v3948, %v3958
      %v3997 = vadd.f32 %v3949, %v3958
      %v3998 = vadd.f32 %v3950, %v3958
      %v3999 = vadd.f32 %v3951, %v3958
      %v4000 = vadd.f32 %v3952, %v3958
      %v4001 = vmax.f32 %v3960, 0.0
      %v4002 = vmax.f32 %v3961, 0.0
      %v4003 = vmax.f32 %v3962, 0.0
      %v4004 = vmax.f32 %v3963, 0.0
      %v4005 = vmax.f32 %v3964, 0.0
      %v4006 = vmax.f32 %v3965, 0.0
      %v4007 = vmax.f32 %v3966, 0.0
      %v4008 = vmax.f32 %v3967, 0.0
      %v4009 = vmax.f32 %v3968, 0.0
      %v4010 = vmax.f32 %v3969, 0.0
      %v4011 = vmax.f32 %v3970, 0.0
      %v4012 = vmax.f32 %v3971, 0.0
      %v4013 = vmax.f32 %v3972, 0.0
      %v4014 = vmax.f32 %v3973, 0.0
      %v4015 = vmax.f32 %v3974, 0.0
      %v4016 = vmax.f32 %v3975, 0.0
      %v4017 = vmax.f32 %v3976, 0.0
      %v4018 = vmax.f32 %v3977, 0.0
      %v4019 = vmax.f32 %v3978, 0.0
      %v4020 = vmax.f32 %v3979, 0.0
      %v4021 = vmax.f32 %v3980, 0.0
      %v4022 = vmax.f32 %v3981, 0.0
      %v4023 = vmax.f32 %v3982, 0.0
      %v4024 = vmax.f32 %v3983, 0.0
      %v4025 = vmax.f32 %v3984, 0.0
      %v4026 = vmax.f32 %v3985, 0.0
      %v4027 = vmax.f32 %v3986, 0.0
      %v4028 = vmax.f32 %v3987, 0.0
      %v4029 = vmax.f32 %v3988, 0.0
      %v4030 = vmax.f32 %v3989, 0.0
      %v4031 = vmax.f32 %v3990, 0.0
      %v4032 = vmax.f32 %v3991, 0.0
      %v4033 = vmax.f32 %v3992, 0.0
      %v4034 = vmax.f32 %v3993, 0.0
      %v4035 = vmax.f32 %v3994, 0.0
      %v4036 = vmax.f32 %v3995, 0.0
      %v4037 = vmax.f32 %v3996, 0.0
      %v4038 = vmax.f32 %v3997, 0.0
      %v4039 = vmax.f32 %v3998, 0.0
      %v4040 = vmax.f32 %v3999, 0.0
      %v4041 = vmax.f32 %v4000, 0.0
      %v4042 = vmul.f32 %v4001, %v330
      %v4043 = vmul.f32 %v4002, %v331
      %v4044 = vmul.f32 %v4003, %v332
      %v4045 = vmul.f32 %v4004, %v333
      %v4046 = vmul.f32 %v4005, %v334
      %v4047 = vmul.f32 %v4006, %v335
      %v4048 = vmul.f32 %v4007, %v336
      %v4049 = vmul.f32 %v4008, %v337
      %v4050 = vmul.f32 %v4009, %v338
      %v4051 = vmul.f32 %v4010, %v339
      %v4052 = vmul.f32 %v4011, %v340
      %v4053 = vmul.f32 %v4012, %v341
      %v4054 = vmul.f32 %v4013, %v342
      %v4055 = vmul.f32 %v4014, %v343
      %v4056 = vmul.f32 %v4015, %v344
      %v4057 = vmul.f32 %v4016, %v345
      %v4058 = vmul.f32 %v4017, %v346
      %v4059 = vmul.f32 %v4018, %v347
      %v4060 = vmul.f32 %v4019, %v348
      %v4061 = vmul.f32 %v4020, %v349
      %v4062 = vmul.f32 %v4021, %v350
      %v4063 = vmul.f32 %v4022, %v351
      %v4064 = vmul.f32 %v4023, %v352
      %v4065 = vmul.f32 %v4024, %v353
      %v4066 = vmul.f32 %v4025, %v354
      %v4067 = vmul.f32 %v4026, %v355
      %v4068 = vmul.f32 %v4027, %v356
      %v4069 = vmul.f32 %v4028, %v357
      %v4070 = vmul.f32 %v4029, %v358
      %v4071 = vmul.f32 %v4030, %v359
      %v4072 = vmul.f32 %v4031, %v360
      %v4073 = vmul.f32 %v4032, %v361
      %v4074 = vmul.f32 %v4033, %v362
      %v4075 = vmul.f32 %v4034, %v363
      %v4076 = vmul.f32 %v4035, %v364
      %v4077 = vmul.f32 %v4036, %v365
      %v4078 = vmul.f32 %v4037, %v366
      %v4079 = vmul.f32 %v4038, %v367
      %v4080 = vmul.f32 %v4039, %v368
      %v4081 = vmul.f32 %v4040, %v369
      %v4082 = vmul.f32 %v4041, %v370
      %v4083 = vadd.f32 %v4042, %v4043
      %v4084 = vadd.f32 %v4083, %v4044
      %v4085 = vadd.f32 %v4084, %v4045
      %v4086 = vadd.f32 %v4085, %v4046
      %v4087 = vadd.f32 %v4086, %v4047
      %v4088 = vadd.f32 %v4087, %v4048
      %v4089 = vadd.f32 %v4088, %v4049
      %v4090 = vadd.f32 %v4089, %v4050
      %v4091 = vadd.f32 %v4090, %v4051
      %v4092 = vadd.f32 %v4091, %v4052
      %v4093 = vadd.f32 %v4092, %v4053
      %v4094 = vadd.f32 %v4093, %v4054
      %v4095 = vadd.f32 %v4094, %v4055
      %v4096 = vadd.f32 %v4095, %v4056
      %v4097 = vadd.f32 %v4096, %v4057
      %v4098 = vadd.f32 %v4097, %v4058
      %v4099 = vadd.f32 %v4098, %v4059
      %v4100 = vadd.f32 %v4099, %v4060
      %v4101 = vadd.f32 %v4100, %v4061
      %v4102 = vadd.f32 %v4101, %v4062
      %v4103 = vadd.f32 %v4102, %v4063
      %v4104 = vadd.f32 %v4103, %v4064
      %v4105 = vadd.f32 %v4104, %v4065
      %v4106 = vadd.f32 %v4105, %v4066
      %v4107 = vadd.f32 %v4106, %v4067
      %v4108 = vadd.f32 %v4107, %v4068
      %v4109 = vadd.f32 %v4108, %v4069
      %v4110 = vadd.f32 %v4109, %v4070
      %v4111 = vadd.f32 %v4110, %v4071
      %v4112 = vadd.f32 %v4111, %v4072
      %v4113 = vadd.f32 %v4112, %v4073
      %v4114 = vadd.f32 %v4113, %v4074
      %v4115 = vadd.f32 %v4114, %v4075
      %v4116 = vadd.f32 %v4115, %v4076
      %v4117 = vadd.f32 %v4116, %v4077
      %v4118 = vadd.f32 %v4117, %v4078
      %v4119 = vadd.f32 %v4118, %v4079
      %v4120 = vadd.f32 %v4119, %v4080
      %v4121 = vadd.f32 %v4120, %v4081
      %v4122 = vadd.f32 %v4121, %v4082
      %v4123 = vrot.slane %v4122, 4
      %v4124 = vadd.f32 %v4122, %v4123
      %v4125 = vrot.slane %v4124, 2
      %v4126 = vadd.f32 %v4124, %v4125
      %v4127 = vrot.slane %v4126, 1
      %v4128 = vadd.f32 %v4126, %v4127
      %4129 = vst [vmem:[%s328] sm:$0x1] %v4128
      %v4130 = vmul.f32 %v4042, %v4042
      %v4131 = vmul.f32 %v4043, %v4043
      %v4132 = vmul.f32 %v4044, %v4044
      %v4133 = vmul.f32 %v4045, %v4045
      %v4134 = vmul.f32 %v4046, %v4046
      %v4135 = vmul.f32 %v4047, %v4047
      %v4136 = vmul.f32 %v4048, %v4048
      %v4137 = vmul.f32 %v4049, %v4049
      %v4138 = vmul.f32 %v4050, %v4050
      %v4139 = vmul.f32 %v4051, %v4051
      %v4140 = vmul.f32 %v4052, %v4052
      %v4141 = vmul.f32 %v4053, %v4053
      %v4142 = vmul.f32 %v4054, %v4054
      %v4143 = vmul.f32 %v4055, %v4055
      %v4144 = vmul.f32 %v4056, %v4056
      %v4145 = vmul.f32 %v4057, %v4057
      %v4146 = vmul.f32 %v4058, %v4058
      %v4147 = vmul.f32 %v4059, %v4059
      %v4148 = vmul.f32 %v4060, %v4060
      %v4149 = vmul.f32 %v4061, %v4061
      %v4150 = vmul.f32 %v4062, %v4062
      %v4151 = vmul.f32 %v4063, %v4063
      %v4152 = vmul.f32 %v4064, %v4064
      %v4153 = vmul.f32 %v4065, %v4065
      %v4154 = vmul.f32 %v4066, %v4066
      %v4155 = vmul.f32 %v4067, %v4067
      %v4156 = vmul.f32 %v4068, %v4068
      %v4157 = vmul.f32 %v4069, %v4069
      %v4158 = vmul.f32 %v4070, %v4070
      %v4159 = vmul.f32 %v4071, %v4071
      %v4160 = vmul.f32 %v4072, %v4072
      %v4161 = vmul.f32 %v4073, %v4073
      %v4162 = vmul.f32 %v4074, %v4074
      %v4163 = vmul.f32 %v4075, %v4075
      %v4164 = vmul.f32 %v4076, %v4076
      %v4165 = vmul.f32 %v4077, %v4077
      %v4166 = vmul.f32 %v4078, %v4078
      %v4167 = vmul.f32 %v4079, %v4079
      %v4168 = vmul.f32 %v4080, %v4080
      %v4169 = vmul.f32 %v4081, %v4081
      %v4170 = vmul.f32 %v4082, %v4082
      %v4171 = vadd.f32 %v4130, %v4131
      %v4172 = vadd.f32 %v4171, %v4132
      %v4173 = vadd.f32 %v4172, %v4133
      %v4174 = vadd.f32 %v4173, %v4134
      %v4175 = vadd.f32 %v4174, %v4135
      %v4176 = vadd.f32 %v4175, %v4136
      %v4177 = vadd.f32 %v4176, %v4137
      %v4178 = vadd.f32 %v4177, %v4138
      %v4179 = vadd.f32 %v4178, %v4139
      %v4180 = vadd.f32 %v4179, %v4140
      %v4181 = vadd.f32 %v4180, %v4141
      %v4182 = vadd.f32 %v4181, %v4142
      %v4183 = vadd.f32 %v4182, %v4143
      %v4184 = vadd.f32 %v4183, %v4144
      %v4185 = vadd.f32 %v4184, %v4145
      %v4186 = vadd.f32 %v4185, %v4146
      %v4187 = vadd.f32 %v4186, %v4147
      %v4188 = vadd.f32 %v4187, %v4148
      %v4189 = vadd.f32 %v4188, %v4149
      %v4190 = vadd.f32 %v4189, %v4150
      %v4191 = vadd.f32 %v4190, %v4151
      %v4192 = vadd.f32 %v4191, %v4152
      %v4193 = vadd.f32 %v4192, %v4153
      %v4194 = vadd.f32 %v4193, %v4154
      %v4195 = vadd.f32 %v4194, %v4155
      %v4196 = vadd.f32 %v4195, %v4156
      %v4197 = vadd.f32 %v4196, %v4157
      %v4198 = vadd.f32 %v4197, %v4158
      %v4199 = vadd.f32 %v4198, %v4159
      %v4200 = vadd.f32 %v4199, %v4160
      %v4201 = vadd.f32 %v4200, %v4161
      %v4202 = vadd.f32 %v4201, %v4162
      %v4203 = vadd.f32 %v4202, %v4163
      %v4204 = vadd.f32 %v4203, %v4164
      %v4205 = vadd.f32 %v4204, %v4165
      %v4206 = vadd.f32 %v4205, %v4166
      %v4207 = vadd.f32 %v4206, %v4167
      %v4208 = vadd.f32 %v4207, %v4168
      %v4209 = vadd.f32 %v4208, %v4169
      %v4210 = vadd.f32 %v4209, %v4170
      %v4211 = vrot.slane %v4210, 4
      %v4212 = vadd.f32 %v4210, %v4211
      %v4213 = vrot.slane %v4212, 2
      %v4214 = vadd.f32 %v4212, %v4213
      %v4215 = vrot.slane %v4214, 1
      %v4216 = vadd.f32 %v4214, %v4215
      %4217 = vst [vmem:[%s328 + $0x1] sm:$0x1] %v4216
      %4218 = vst [vmem:[%s328 + $0x2] sm:$0x3f] 0.0
      %4219 = vst [vmem:[%s319] sm:$0xff] 0.0
      %4220 = vst [vmem:[%s319 + $0x8] sm:$0xff] 0.0
      %4221 = vst [vmem:[%s319 + $0x10] sm:$0xff] 0.0
      %4222 = vst [vmem:[%s319 + $0x18] sm:$0xff] %v4042
      %4223 = vst [vmem:[%s319 + $0x20] sm:$0xff] %v4043
      %4224 = vst [vmem:[%s319 + $0x28] sm:$0xff] %v4044
      %4225 = vst [vmem:[%s319 + $0x30] sm:$0xff] %v4045
      %4226 = vst [vmem:[%s319 + $0x38] sm:$0xff] %v4046
      %4227 = vst [vmem:[%s319 + $0x40] sm:$0xff] %v4047
      %4228 = vst [vmem:[%s319 + $0x48] sm:$0xff] %v4048
      %4229 = vst [vmem:[%s319 + $0x50] sm:$0xff] %v4049
      %4230 = vst [vmem:[%s319 + $0x58] sm:$0xff] %v4050
      %4231 = vst [vmem:[%s319 + $0x60] sm:$0xff] %v4051
      %4232 = vst [vmem:[%s319 + $0x68] sm:$0xff] %v4052
      %4233 = vst [vmem:[%s319 + $0x70] sm:$0xff] %v4053
      %4234 = vst [vmem:[%s319 + $0x78] sm:$0xff] %v4054
      %4235 = vst [vmem:[%s319 + $0x80] sm:$0xff] %v4055
      %4236 = vst [vmem:[%s319 + $0x88] sm:$0xff] %v4056
      %4237 = vst [vmem:[%s319 + $0x90] sm:$0xff] %v4057
      %4238 = vst [vmem:[%s319 + $0x98] sm:$0xff] %v4058
      %4239 = vst [vmem:[%s319 + $0xa0] sm:$0xff] %v4059
      %4240 = vst [vmem:[%s319 + $0xa8] sm:$0xff] %v4060
      %4241 = vst [vmem:[%s319 + $0xb0] sm:$0xff] %v4061
      %4242 = vst [vmem:[%s319 + $0xb8] sm:$0xff] %v4062
      %4243 = vst [vmem:[%s319 + $0xc0] sm:$0xff] %v4063
      %4244 = vst [vmem:[%s319 + $0xc8] sm:$0xff] %v4064
      %4245 = vst [vmem:[%s319 + $0xd0] sm:$0xff] %v4065
      %4246 = vst [vmem:[%s319 + $0xd8] sm:$0xff] %v4066
      %4247 = vst [vmem:[%s319 + $0xe0] sm:$0xff] %v4067
      %4248 = vst [vmem:[%s319 + $0xe8] sm:$0xff] %v4068
      %4249 = vst [vmem:[%s319 + $0xf0] sm:$0xff] %v4069
      %4250 = vst [vmem:[%s319 + $0xf8] sm:$0xff] %v4070
      %4251 = vst [vmem:[%s319 + $0x100] sm:$0xff] %v4071
      %4252 = vst [vmem:[%s319 + $0x108] sm:$0xff] %v4072
      %4253 = vst [vmem:[%s319 + $0x110] sm:$0xff] %v4073
      %4254 = vst [vmem:[%s319 + $0x118] sm:$0xff] %v4074
      %4255 = vst [vmem:[%s319 + $0x120] sm:$0xff] %v4075
      %4256 = vst [vmem:[%s319 + $0x128] sm:$0xff] %v4076
      %4257 = vst [vmem:[%s319 + $0x130] sm:$0xff] %v4077
      %4258 = vst [vmem:[%s319 + $0x138] sm:$0xff] %v4078
      %4259 = vst [vmem:[%s319 + $0x140] sm:$0xff] %v4079
      %4260 = vst [vmem:[%s319 + $0x148] sm:$0xff] %v4080
      %4261 = vst [vmem:[%s319 + $0x150] sm:$0xff] %v4081
      %4262 = vst [vmem:[%s319 + $0x158] sm:$0xff] %v4082
      %4263 = vst [vmem:[%s319 + $0x160] sm:$0xff] 0.0
      %4264 = vst [vmem:[%s319 + $0x168] sm:$0xff] 0.0
      %4265 = vst [vmem:[%s319 + $0x170] sm:$0xff] 0.0
      %4266 = vst [vmem:[%s324] sm:$0xff] 0.0
      %4267 = vst [vmem:[%s324 + $0x8] sm:$0xff] 0.0
      %4268 = vst [vmem:[%s324 + $0x10] sm:$0xff] 0.0
      %4269 = vst [vmem:[%s324 + $0x18] sm:$0xff] %v745
      %4270 = vst [vmem:[%s324 + $0x20] sm:$0xff] %v746
      %4271 = vst [vmem:[%s324 + $0x28] sm:$0xff] %v747
      %4272 = vst [vmem:[%s324 + $0x30] sm:$0xff] %v748
      %4273 = vst [vmem:[%s324 + $0x38] sm:$0xff] %v749
      %4274 = vst [vmem:[%s324 + $0x40] sm:$0xff] %v750
      %4275 = vst [vmem:[%s324 + $0x48] sm:$0xff] %v751
      %4276 = vst [vmem:[%s324 + $0x50] sm:$0xff] %v752
      %4277 = vst [vmem:[%s324 + $0x58] sm:$0xff] %v753
      %4278 = vst [vmem:[%s324 + $0x60] sm:$0xff] %v754
      %4279 = vst [vmem:[%s324 + $0x68] sm:$0xff] %v755
      %4280 = vst [vmem:[%s324 + $0x70] sm:$0xff] %v756
      %4281 = vst [vmem:[%s324 + $0x78] sm:$0xff] %v757
      %4282 = vst [vmem:[%s324 + $0x80] sm:$0xff] %v758
      %4283 = vst [vmem:[%s324 + $0x88] sm:$0xff] %v759
      %4284 = vst [vmem:[%s324 + $0x90] sm:$0xff] %v760
      %4285 = vst [vmem:[%s324 + $0x98] sm:$0xff] %v761
      %4286 = vst [vmem:[%s324 + $0xa0] sm:$0xff] %v762
      %4287 = vst [vmem:[%s324 + $0xa8] sm:$0xff] %v763
      %4288 = vst [vmem:[%s324 + $0xb0] sm:$0xff] %v764
      %4289 = vst [vmem:[%s324 + $0xb8] sm:$0xff] %v765
      %4290 = vst [vmem:[%s324 + $0xc0] sm:$0xff] %v766
      %4291 = vst [vmem:[%s324 + $0xc8] sm:$0xff] %v767
      %4292 = vst [vmem:[%s324 + $0xd0] sm:$0xff] %v768
      %4293 = vst [vmem:[%s324 + $0xd8] sm:$0xff] %v769
      %4294 = vst [vmem:[%s324 + $0xe0] sm:$0xff] %v770
      %4295 = vst [vmem:[%s324 + $0xe8] sm:$0xff] %v771
      %4296 = vst [vmem:[%s324 + $0xf0] sm:$0xff] %v772
      %4297 = vst [vmem:[%s324 + $0xf8] sm:$0xff] %v773
      %4298 = vst [vmem:[%s324 + $0x100] sm:$0xff] %v774
      %4299 = vst [vmem:[%s324 + $0x108] sm:$0xff] %v775
      %4300 = vst [vmem:[%s324 + $0x110] sm:$0xff] %v776
      %4301 = vst [vmem:[%s324 + $0x118] sm:$0xff] %v777
      %4302 = vst [vmem:[%s324 + $0x120] sm:$0xff] %v778
      %4303 = vst [vmem:[%s324 + $0x128] sm:$0xff] %v779
      %4304 = vst [vmem:[%s324 + $0x130] sm:$0xff] %v780
      %4305 = vst [vmem:[%s324 + $0x138] sm:$0xff] %v781
      %4306 = vst [vmem:[%s324 + $0x140] sm:$0xff] %v782
      %4307 = vst [vmem:[%s324 + $0x148] sm:$0xff] %v783
      %4308 = vst [vmem:[%s324 + $0x150] sm:$0xff] %v784
      %4309 = vst [vmem:[%s324 + $0x158] sm:$0xff] %v785
      %4310 = vst [vmem:[%s324 + $0x160] sm:$0xff] 0.0
      %4311 = vst [vmem:[%s324 + $0x168] sm:$0xff] 0.0
      %4312 = vst [vmem:[%s324 + $0x170] sm:$0xff] 0.0
      %p4313 = scmp.lt.s32.totalorder %s20, 1
      %s4314 = scalar_select %p4313, %s20, 1
      %s4315 = smul.addr %s4314, 47
      %s4316 = smul.addr %s4315, 8
      %s4317 = scalar_lea.vmem %s6, %s4316
      %p4318 = scmp.lt.s32.totalorder %s20, 1
      %s4319 = scalar_select %p4318, %s20, 1
      %s4320 = smul.addr %s4319, 47
      %s4321 = smul.addr %s4320, 8
      %s4322 = scalar_lea.vmem %s7, %s4321
      %p4323 = scmp.lt.s32.totalorder %s20, 1
      %s4324 = scalar_select %p4323, %s20, 1
      %s4325 = smul.addr %s4324, 8
      %s4326 = scalar_lea.vmem %s8, %s4325
      // Predicated region
      $region45: #{residual_block_forward.3} parent=43 // pred_check
        %p4327 = pneg %p169
      $region46: #{residual_block_forward.3} parent=43 // pred_check_branch
        %4329 = sbr.rel (%p4327) target = $region48
      $region47: #{residual_block_forward.3} parent=43 // pred_region
        _
      $region48: #{residual_block_forward.3} parent=43 // pred_fallthru
        _
      // Predicated region
      $region49: #{residual_block_forward.3} parent=43 // pred_check
        %p4330 = pneg %p195
      $region50: #{residual_block_forward.3} parent=43 // pred_check_branch
        %4332 = sbr.rel (%p4330) target = $region52
      $region51: #{residual_block_forward.3} parent=43 // pred_region
        _
      $region52: #{residual_block_forward.3} parent=43 // pred_fallthru
        _
      // Predicated region
      $region53: #{residual_block_forward.3} parent=43 // pred_check
        %p4333 = pneg %p221
      $region54: #{residual_block_forward.3} parent=43 // pred_check_branch
        %4335 = sbr.rel (%p4333) target = $region56
      $region55: #{residual_block_forward.3} parent=43 // pred_region
        _
      $region56: #{residual_block_forward.3} parent=43 // pred_fallthru
        _
    $region44: #{residual_block_forward.3} parent=5 // pred_fallthru
      _
    %p4336 = scmp.le.s32.totalorder 2, %s15
    // Predicated region
    $region57: #{residual_block_forward.3} parent=5 // pred_check
      %p4337 = pneg %p4336
    $region58: #{residual_block_forward.3} parent=5 // pred_check_branch
      %4339 = sbr.rel (%p4337) target = $region60
    $region59: #{residual_block_forward.3} parent=5 // pred_region
      %s4340 = ssub.s32 %s15, 2
      // Predicated region
      $region61: #{residual_block_forward.3} parent=59 // pred_check
        %p4341 = pneg %p175
      $region62: #{residual_block_forward.3} parent=59 // pred_check_branch
        %4343 = sbr.rel (%p4341) target = $region64
      $region63: #{residual_block_forward.3} parent=59 // pred_region
        %p4344 = scmp.lt.s32.totalorder %s21, 1
        %s4345 = scalar_select %p4344, %s21, 1
        %s4346 = smul.addr %s4345, 47
        %s4347 = smul.addr %s4346, 8
        %s4348 = scalar_lea.vmem %s6, %s4347
      $region64: #{residual_block_forward.3} parent=59 // pred_fallthru
        _
      // Predicated region
      $region65: #{residual_block_forward.3} parent=59 // pred_check
        %p4349 = pneg %p201
      $region66: #{residual_block_forward.3} parent=59 // pred_check_branch
        %4351 = sbr.rel (%p4349) target = $region68
      $region67: #{residual_block_forward.3} parent=59 // pred_region
        %p4352 = scmp.lt.s32.totalorder %s21, 1
        %s4353 = scalar_select %p4352, %s21, 1
        %s4354 = smul.addr %s4353, 47
        %s4355 = smul.addr %s4354, 8
        %s4356 = scalar_lea.vmem %s7, %s4355
      $region68: #{residual_block_forward.3} parent=59 // pred_fallthru
        _
      // Predicated region
      $region69: #{residual_block_forward.3} parent=59 // pred_check
        %p4357 = pneg %p227
      $region70: #{residual_block_forward.3} parent=59 // pred_check_branch
        %4359 = sbr.rel (%p4357) target = $region72
      $region71: #{residual_block_forward.3} parent=59 // pred_region
        %p4360 = scmp.lt.s32.totalorder %s21, 1
        %s4361 = scalar_select %p4360, %s21, 1
        %s4362 = smul.addr %s4361, 8
        %s4363 = scalar_lea.vmem %s8, %s4362
      $region72: #{residual_block_forward.3} parent=59 // pred_fallthru
        _
    $region60: #{residual_block_forward.3} parent=5 // pred_fallthru
      _
  $region6: #{residual_block_forward.3} parent=0 // loop_footer
    %s19 = sadd.s32 1, %s15
  $region7: #{residual_block_forward.3} parent=0 // loop_footer_branch
    %14 = sbr.rel target = $region3
  $region8: #{residual_block_forward.3} parent=0 // loop_exit
    _

</llo_original>
